<compile_context>
chip_gen: v7x
topology: tpu7x:2x2x1
jax: 0.10.0
libtpu: 0.0.40
codegen_flags: <defaults>
</compile_context>

<pallas_src>
import functools
from typing import NamedTuple

import jax
import jax.numpy as jnp
from jax.experimental import pallas as pl
from jax.experimental.pallas import tpu as pltpu


XOFF = 8  # W-axis left-halo width in the VMEM scratches: interior stores
          # start on a sublane boundary (aligned vst instead of masked).


class BlockCfg(NamedTuple):
    inplanes: int
    planes: int
    stride: int
    pad: int
    dilation: int
    has_down: bool


def _device_kind():
    try:
        return jax.devices()[0].device_kind.lower()
    except Exception:
        return ""


_KIND = _device_kind()
# v5e has no bf16 VPU -> keep the depthwise path in f32 there; v6e/v7x VALUs
# are bf16-native -> bf16 halves VPU work, vreg pressure, VMEM and input DMA.
_DW_DTYPE = jnp.float32 if "v5" in _KIND else jnp.bfloat16
_TWO_TC = "v7" in _KIND                     # v7x: 2 TensorCores per chip


def _batch_per_step(B):
    """Samples folded into one grid step.

    1-TC chips (v5e/v6e): fold the whole batch -> one step, bigger MXU M,
    per-step overhead paid once.  v7x: keep >= 2 'parallel' steps so both
    TensorCores are fed.
    """
    if not _TWO_TC or B < 2:
        return B
    return B // 2 if B % 2 == 0 else 1


# ----------------------------------------------------------------------------
# fused Pallas kernel: the whole MobileV1_Residual block for one grid step
# ----------------------------------------------------------------------------
def _relu6(v):
    return jnp.minimum(jnp.maximum(v, 0.0), 6.0)


def _dw3x3_relu6(read_tap, offsets, w_ref, b_ref):
    """Depthwise 3x3 (+ folded-BN bias + ReLU6) over 9 shifted VMEM views.

    Weights/bias are loaded once (hoisted out of the tap loop); 3 independent
    partial accumulators break the serial FMA chain for the VLIW packer.
    """
    w = w_ref[...]                       # (9, C)  depthwise-compute dtype
    b = b_ref[...]                       # (1, C)
    accs = [None, None, None]
    for k, off in enumerate(offsets):
        v = read_tap(off) * w[k]
        j = k % 3
        accs[j] = v if accs[j] is None else accs[j] + v
    return _relu6((accs[0] + accs[1]) + accs[2] + b)


def _mv1_block_kernel(*refs, stride, dilation, p1, p2, h1, w1, h2, w2,
                      has_down, bpg, cdt):
    d = dilation
    if has_down:
        (x_in, dw1w, dw1b, pw1w, pw1b, dw2w, dw2b, pw2w, pw2b,
         dnw, dnb, o_ref, *scratch) = refs
    else:
        (x_in, dw1w, dw1b, pw1w, pw1b, dw2w, dw2b, pw2w, pw2b,
         o_ref, *scratch) = refs
        dnw = dnb = None

    cin = dw1w.shape[1]
    planes = dw2w.shape[1]

    # ---- conv1: depthwise 3x3 (stride, dilation) + folded BN + ReLU6 -------
    if stride == 1:
        xpad, scr = scratch
        H, W = x_in.shape[1], x_in.shape[2]
        hp, wp = xpad.shape[1], xpad.shape[2]
        # zero only the halo border; the interior is fully overwritten below.
        if p1:
            xpad[:, 0:p1, :, :] = jnp.zeros((bpg, p1, wp, cin), cdt)
            xpad[:, p1 + H:hp, :, :] = jnp.zeros((bpg, p1, wp, cin), cdt)
            xpad[:, :, XOFF - p1:XOFF, :] = jnp.zeros((bpg, hp, p1, cin), cdt)
            xpad[:, :, XOFF + W:wp, :] = jnp.zeros((bpg, hp, p1, cin), cdt)
        # sublane-aligned interior store (W starts at XOFF=8).
        xpad[:, p1:p1 + H, XOFF:XOFF + W, :] = x_in[...].astype(cdt)

        taps1 = [(kh * d, kw * d) for kh in range(3) for kw in range(3)]
        h = _dw3x3_relu6(
            lambda t: xpad[:, t[0]:t[0] + h1,
                           XOFF - p1 + t[1]:XOFF - p1 + t[1] + w1, :],
            taps1, dw1w, dw1b)
    else:
        # input arrives phase-decomposed (s*s contiguous sub-grids of the
        # padded image), so every tap is a contiguous static VMEM slice.
        (scr,) = scratch
        taps1 = []
        for kh in range(3):
            for kw in range(3):
                oh, ow = kh * d, kw * d
                taps1.append(((oh % stride) * stride + (ow % stride),
                              oh // stride, ow // stride))
        h = _dw3x3_relu6(
            lambda t: x_in[t[0], t[1]:t[1] + h1, t[2]:t[2] + w1, :],
            taps1, dw1w, dw1b)

    # ---- conv1: 1x1 (MXU, bf16 operands / f32 acc) + folded BN + ReLU6 -----
    y = jnp.dot(h.reshape(bpg * h1 * w1, cin).astype(jnp.bfloat16), pw1w[...],
                preferred_element_type=jnp.float32)
    y = _relu6(y + pw1b[...])

    # ---- hidden activation never leaves VMEM: zero halo + aligned store ----
    hp2, wp2 = scr.shape[1], scr.shape[2]
    if p2:
        scr[:, 0:p2, :, :] = jnp.zeros((bpg, p2, wp2, planes), cdt)
        scr[:, p2 + h1:hp2, :, :] = jnp.zeros((bpg, p2, wp2, planes), cdt)
        scr[:, :, XOFF - p2:XOFF, :] = jnp.zeros((bpg, hp2, p2, planes), cdt)
        scr[:, :, XOFF + w1:wp2, :] = jnp.zeros((bpg, hp2, p2, planes), cdt)
    scr[:, p2:p2 + h1, XOFF:XOFF + w1, :] = (
        y.astype(cdt).reshape(bpg, h1, w1, planes))

    # ---- conv2: depthwise 3x3 (stride 1, dilation) + folded BN + ReLU6 -----
    taps2 = [(kh * d, kw * d) for kh in range(3) for kw in range(3)]
    g = _dw3x3_relu6(
        lambda t: scr[:, t[0]:t[0] + h2,
                      XOFF - p2 + t[1]:XOFF - p2 + t[1] + w2, :],
        taps2, dw2w, dw2b)

    # ---- conv2: 1x1 + folded BN (no ReLU6) + residual add ------------------
    z = jnp.dot(g.reshape(bpg * h2 * w2, planes).astype(jnp.bfloat16),
                pw2w[...], preferred_element_type=jnp.float32) + pw2b[...]

    if has_down:
        if stride == 1:
            rsl = x_in[...].reshape(bpg * h2 * w2, cin)
        else:
            ph = (p1 % stride) * (stride + 1)        # phase (p1%s, p1%s)
            q0 = p1 // stride
            rsl = x_in[ph, q0:q0 + h2, q0:q0 + w2, :].reshape(h2 * w2, cin)
        res = jnp.dot(rsl.astype(jnp.bfloat16), dnw[...],
                      preferred_element_type=jnp.float32) + dnb[...]
    else:
        # identity residual re-read from the already-resident f32 input block
        res = x_in[...].reshape(bpg * h2 * w2, cin)

    o_ref[...] = (z + res).astype(o_ref.dtype).reshape(bpg, h2 * w2, planes)


# ----------------------------------------------------------------------------
# forward (single jax.jit around glue + the one pallas_call)
# ----------------------------------------------------------------------------
def _mobilev1_residual_forward(params, x_nchw, cfg):
    x = jnp.transpose(x_nchw, (0, 2, 3, 1))               # NHWC
    B, H, W, cin = x.shape
    planes = params["pw1_w"].shape[1]
    s, d = cfg.stride, cfg.dilation
    p1 = d if d > 1 else cfg.pad                           # torch padding rule
    p2 = p1
    h1 = (H + 2 * p1 - 2 * d - 1) // s + 1                 # conv1 output size
    w1 = (W + 2 * p1 - 2 * d - 1) // s + 1
    h2 = h1 + 2 * p2 - 2 * d                               # conv2 output size
    w2 = w1 + 2 * p2 - 2 * d
    m2 = h2 * w2
    cdt = _DW_DTYPE

    if s == 1:
        # raw input goes straight into the kernel; padding happens in VMEM
        # (no wrapper-side pad copy, no second HBM read for the residual).
        assert (h2, w2) == (H, W), "stride-1 block must preserve spatial dims"
        if not cfg.has_down:
            assert cin == planes, "identity residual needs inplanes == planes"
        bpg = _batch_per_step(B)
        assert B % bpg == 0
        grid = (B // bpg,)
        x_arg = x
        x_spec = pl.BlockSpec((bpg, H, W, cin), lambda b: (b, 0, 0, 0))
        scratch = [
            pltpu.VMEM((bpg, H + 2 * p1, XOFF + W + p1, cin), cdt),
            pltpu.VMEM((bpg, h1 + 2 * p2, XOFF + w1 + p2, planes), cdt),
        ]
    else:
        assert cfg.has_down, "stride > 1 requires a downsample branch"
        assert (-(-H // s), -(-W // s)) == (h2, w2)
        bpg = 1                                            # phase layout keeps
        grid = (B,)                                        # one sample / step
        s2 = s * s
        # phase-decompose the zero-padded input so the kernel never issues
        # strided VMEM reads; the downsample residual equals phase (p1%s,p1%s)
        # so no separate residual input is needed.
        hq = max((2 * d) // s + h1, p1 // s + h2)
        wq = max((2 * d) // s + w1, p1 // s + w2)
        xp = jnp.pad(x, ((0, 0), (p1, p1), (p1, p1), (0, 0)))
        phases = []
        for ph in range(s):
            for pw_ in range(s):
                sl = xp[:, ph::s, pw_::s, :][:, :hq, :wq, :]
                dh, dwp = hq - sl.shape[1], wq - sl.shape[2]
                if dh or dwp:
                    sl = jnp.pad(sl, ((0, 0), (0, dh), (0, dwp), (0, 0)))
                phases.append(sl)
        x_arg = (jnp.stack(phases, axis=1)
                 .reshape(B * s2, hq, wq, cin).astype(cdt))
        x_spec = pl.BlockSpec((s2, hq, wq, cin), lambda b: (b, 0, 0, 0))
        scratch = [pltpu.VMEM((1, h1 + 2 * p2, XOFF + w1 + p2, planes), cdt)]

    def wspec(r, c):
        return pl.BlockSpec((r, c), lambda b: (0, 0))

    in_specs = [x_spec,
                wspec(9, cin), wspec(1, cin),
                wspec(cin, planes), wspec(1, planes),
                wspec(9, planes), wspec(1, planes),
                wspec(planes, planes), wspec(1, planes)]
    args = [x_arg,
            params["dw1_w"].astype(cdt), params["dw1_b"].astype(cdt),
            params["pw1_w"], params["pw1_b"],
            params["dw2_w"].astype(cdt), params["dw2_b"].astype(cdt),
            params["pw2_w"], params["pw2_b"]]
    if cfg.has_down:
        in_specs += [wspec(cin, planes), wspec(1, planes)]
        args += [params["down_w"], params["down_b"]]

    kernel = functools.partial(
        _mv1_block_kernel, stride=s, dilation=d, p1=p1, p2=p2,
        h1=h1, w1=w1, h2=h2, w2=w2, has_down=cfg.has_down, bpg=bpg, cdt=cdt)

    # VMEM at these shapes is far below every generation's scoped default.
    out = pl.pallas_call(
        kernel,
        out_shape=jax.ShapeDtypeStruct((B, m2, planes), jnp.float32),
        grid=grid,
        in_specs=in_specs,
        out_specs=pl.BlockSpec((bpg, m2, planes), lambda b: (b, 0, 0)),
        scratch_shapes=scratch,
        compiler_params=pltpu.CompilerParams(
            dimension_semantics=("parallel",)),
    )(*args)
    return jnp.transpose(out.reshape(B, h2, w2, planes), (0, 3, 1, 2))


mobilev1_residual_forward = jax.jit(_mobilev1_residual_forward,
                                    static_argnames=("cfg",))


# ----------------------------------------------------------------------------
# pure-JAX reference (f32 throughout, same folded-BN parameters)
# ----------------------------------------------------------------------------
def _ref_forward(params, x_nchw, cfg):
    x = jnp.transpose(x_nchw, (0, 2, 3, 1)).astype(jnp.float32)
    d = cfg.dilation
    p = d if d > 1 else cfg.pad

    def dw(v, w9, b, stride):
        c = v.shape[-1]
        w = w9.reshape(3, 3, c)[:, :, None, :]            # HWIO, I=1 per group
        y = jax.lax.conv_general_dilated(
            v, w, window_strides=(stride, stride),
            padding=((p, p), (p, p)), rhs_dilation=(d, d),
            dimension_numbers=("NHWC", "HWIO", "NHWC"),
            feature_group_count=c)
        return _relu6(y + b.reshape(1, 1, 1, c))

    def pw(v, w, b):
        return (jnp.einsum("bhwc,cd->bhwd", v, w.astype(jnp.float32))
                + b.reshape(1, 1, 1, -1))

    h = dw(x, params["dw1_w"], params["dw1_b"], cfg.stride)
    h = _relu6(pw(h, params["pw1_w"], params["pw1_b"]))
    g = dw(h, params["dw2_w"], params["dw2_b"], 1)
    g = pw(g, params["pw2_w"], params["pw2_b"])
    if cfg.has_down:
        res = pw(x[:, ::cfg.stride, ::cfg.stride, :],
                 params["down_w"], params["down_b"])
    else:
        res = x
    return jnp.transpose(g + res, (0, 3, 1, 2))


# ----------------------------------------------------------------------------
# deterministic parameter construction (BN folded into weights + bias)
# ----------------------------------------------------------------------------
def make_params(key, cfg):
    keys = iter(jax.random.split(key, 32))

    def nrm(shape, scale=0.1):
        return scale * jax.random.normal(next(keys), shape, jnp.float32)

    def bn(c):
        gamma = 1.0 + 0.1 * jax.random.normal(next(keys), (c,), jnp.float32)
        beta = 0.05 * jax.random.normal(next(keys), (c,), jnp.float32)
        mean = 0.02 * jax.random.normal(next(keys), (c,), jnp.float32)
        var = 1.0 + 0.1 * jnp.abs(jax.random.normal(next(keys), (c,),
                                                    jnp.float32))
        sc = gamma * jax.lax.rsqrt(var + 1e-5)
        return sc, beta - mean * sc

    cin, cp = cfg.inplanes, cfg.planes
    p = {}
    w = nrm((3, 3, cin)); sc, b = bn(cin)
    p["dw1_w"] = (w * sc[None, None, :]).reshape(9, cin)
    p["dw1_b"] = b.reshape(1, cin)
    w = nrm((cin, cp)); sc, b = bn(cp)
    p["pw1_w"] = (w * sc[None, :]).astype(jnp.bfloat16)
    p["pw1_b"] = b.reshape(1, cp)
    w = nrm((3, 3, cp)); sc, b = bn(cp)
    p["dw2_w"] = (w * sc[None, None, :]).reshape(9, cp)
    p["dw2_b"] = b.reshape(1, cp)
    w = nrm((cp, cp)); sc, b = bn(cp)
    p["pw2_w"] = (w * sc[None, :]).astype(jnp.bfloat16)
    p["pw2_b"] = b.reshape(1, cp)
    if cfg.has_down:
        w = nrm((cin, cp)); sc, b = bn(cp)
        p["down_w"] = (w * sc[None, :]).astype(jnp.bfloat16)
        p["down_b"] = b.reshape(1, cp)
    return p


# ----------------------------------------------------------------------------
if __name__ == "__main__":
    key = jax.random.PRNGKey(0)
    kx, kp = jax.random.split(key)
    x = jax.random.normal(kx, (2, 32, 16, 16), jnp.float32)   # NCHW

    configs = [
        BlockCfg(inplanes=32, planes=32, stride=1, pad=1, dilation=1,
                 has_down=False),                    # layer1-style block
        BlockCfg(inplanes=32, planes=64, stride=2, pad=1, dilation=1,
                 has_down=True),                     # layer2-style (downsample)
        BlockCfg(inplanes=32, planes=32, stride=1, pad=1, dilation=2,
                 has_down=False),                    # layer4-style (dilated)
    ]

    for cfg in configs:
        kp, sub = jax.random.split(kp)
        params = make_params(sub, cfg)
        out = mobilev1_residual_forward(params, x, cfg=cfg)
        out = jax.block_until_ready(out)
        ref = _ref_forward(params, x, cfg)
        assert out.shape == ref.shape, (out.shape, ref.shape)
        assert bool(jnp.isfinite(out).all())
        err = float(jnp.max(jnp.abs(out - ref)))
        assert err < 5e-2, (cfg, err)

    print("KERNEL_OK")
</pallas_src>

<mosaic_0001>
module attributes {stable_mosaic.version = 11 : i64} {
  func.func @_mv1_block_kernel(%arg0: i32, %arg1: memref<2x16x16x32xf32, #tpu.memory_space<vmem>>, %arg2: memref<9x32xbf16, #tpu.memory_space<vmem>>, %arg3: memref<1x32xbf16, #tpu.memory_space<vmem>>, %arg4: memref<32x32xbf16, #tpu.memory_space<vmem>>, %arg5: memref<1x32xf32, #tpu.memory_space<vmem>>, %arg6: memref<9x32xbf16, #tpu.memory_space<vmem>>, %arg7: memref<1x32xbf16, #tpu.memory_space<vmem>>, %arg8: memref<32x32xbf16, #tpu.memory_space<vmem>>, %arg9: memref<1x32xf32, #tpu.memory_space<vmem>>, %arg10: memref<2x256x32xf32, #tpu.memory_space<vmem>>, %arg11: memref<2x18x25x32xbf16, #tpu.memory_space<vmem>>, %arg12: memref<2x18x25x32xbf16, #tpu.memory_space<vmem>>) attributes {dimension_semantics = [#tpu.dimension_semantics<parallel>], iteration_bounds = array<i64: 1>, scalar_prefetch = 0 : i64, scratch_operands = 2 : i64, tpu.core_type = #tpu.core_type<tc>, window_params = [{transform_indices = @transform_0, window_bounds = array<i64: 2, 16, 16, 32>}, {pipeline_mode = #tpu.pipeline_mode<synchronous>, transform_indices = @transform_1, window_bounds = array<i64: 9, 32>}, {pipeline_mode = #tpu.pipeline_mode<synchronous>, transform_indices = @transform_2, window_bounds = array<i64: 1, 32>}, {pipeline_mode = #tpu.pipeline_mode<synchronous>, transform_indices = @transform_3, window_bounds = array<i64: 32, 32>}, {pipeline_mode = #tpu.pipeline_mode<synchronous>, transform_indices = @transform_4, window_bounds = array<i64: 1, 32>}, {pipeline_mode = #tpu.pipeline_mode<synchronous>, transform_indices = @transform_5, window_bounds = array<i64: 9, 32>}, {pipeline_mode = #tpu.pipeline_mode<synchronous>, transform_indices = @transform_6, window_bounds = array<i64: 1, 32>}, {pipeline_mode = #tpu.pipeline_mode<synchronous>, transform_indices = @transform_7, window_bounds = array<i64: 32, 32>}, {pipeline_mode = #tpu.pipeline_mode<synchronous>, transform_indices = @transform_8, window_bounds = array<i64: 1, 32>}, {transform_indices = @transform_9, window_bounds = array<i64: 2, 256, 32>}]} {
    %cst = arith.constant 0.000000e+00 : bf16
    %0 = vector.broadcast %cst : bf16 to vector<2x1x25x32xbf16>
    %c0 = arith.constant 0 : index
    %c0_0 = arith.constant 0 : index
    %c0_1 = arith.constant 0 : index
    %c0_2 = arith.constant 0 : index
    %1 = vector.load %arg11[%c0, %c0_0, %c0_1, %c0_2] : memref<2x18x25x32xbf16, #tpu.memory_space<vmem>>, vector<2x1x25x32xbf16>
    tpu.vector_store %arg11[%c0, %c0_0, %c0_1, %c0_2], %0 {strides = array<i32>} : memref<2x18x25x32xbf16, #tpu.memory_space<vmem>>, vector<2x1x25x32xbf16>,
    %cst_3 = arith.constant 0.000000e+00 : bf16
    %2 = vector.broadcast %cst_3 : bf16 to vector<2x1x25x32xbf16>
    %c0_4 = arith.constant 0 : index
    %c17 = arith.constant 17 : index
    %c0_5 = arith.constant 0 : index
    %c0_6 = arith.constant 0 : index
    %3 = vector.load %arg11[%c0_4, %c17, %c0_5, %c0_6] : memref<2x18x25x32xbf16, #tpu.memory_space<vmem>>, vector<2x1x25x32xbf16>
    tpu.vector_store %arg11[%c0_4, %c17, %c0_5, %c0_6], %2 {strides = array<i32>} : memref<2x18x25x32xbf16, #tpu.memory_space<vmem>>, vector<2x1x25x32xbf16>,
    %cst_7 = arith.constant 0.000000e+00 : bf16
    %4 = vector.broadcast %cst_7 : bf16 to vector<2x18x1x32xbf16>
    %c0_8 = arith.constant 0 : index
    %c0_9 = arith.constant 0 : index
    %c7 = arith.constant 7 : index
    %c0_10 = arith.constant 0 : index
    %5 = vector.load %arg11[%c0_8, %c0_9, %c7, %c0_10] : memref<2x18x25x32xbf16, #tpu.memory_space<vmem>>, vector<2x18x1x32xbf16>
    tpu.vector_store %arg11[%c0_8, %c0_9, %c7, %c0_10], %4 {strides = array<i32>} : memref<2x18x25x32xbf16, #tpu.memory_space<vmem>>, vector<2x18x1x32xbf16>,
    %cst_11 = arith.constant 0.000000e+00 : bf16
    %6 = vector.broadcast %cst_11 : bf16 to vector<2x18x1x32xbf16>
    %c0_12 = arith.constant 0 : index
    %c0_13 = arith.constant 0 : index
    %c24 = arith.constant 24 : index
    %c0_14 = arith.constant 0 : index
    %7 = vector.load %arg11[%c0_12, %c0_13, %c24, %c0_14] : memref<2x18x25x32xbf16, #tpu.memory_space<vmem>>, vector<2x18x1x32xbf16>
    tpu.vector_store %arg11[%c0_12, %c0_13, %c24, %c0_14], %6 {strides = array<i32>} : memref<2x18x25x32xbf16, #tpu.memory_space<vmem>>, vector<2x18x1x32xbf16>,
    %c0_15 = arith.constant 0 : index
    %c0_16 = arith.constant 0 : index
    %c0_17 = arith.constant 0 : index
    %c0_18 = arith.constant 0 : index
    %8 = vector.load %arg1[%c0_15, %c0_16, %c0_17, %c0_18] : memref<2x16x16x32xf32, #tpu.memory_space<vmem>>, vector<2x16x16x32xf32>
    %9 = arith.truncf %8 : vector<2x16x16x32xf32> to vector<2x16x16x32xbf16>
    %c0_19 = arith.constant 0 : index
    %c1 = arith.constant 1 : index
    %c8 = arith.constant 8 : index
    %c0_20 = arith.constant 0 : index
    %10 = vector.load %arg11[%c0_19, %c1, %c8, %c0_20] : memref<2x18x25x32xbf16, #tpu.memory_space<vmem>>, vector<2x16x16x32xbf16>
    tpu.vector_store %arg11[%c0_19, %c1, %c8, %c0_20], %9 {strides = array<i32>} : memref<2x18x25x32xbf16, #tpu.memory_space<vmem>>, vector<2x16x16x32xbf16>,
    %c0_21 = arith.constant 0 : index
    %c0_22 = arith.constant 0 : index
    %11 = vector.load %arg2[%c0_21, %c0_22] : memref<9x32xbf16, #tpu.memory_space<vmem>>, vector<9x32xbf16>
    %c0_23 = arith.constant 0 : index
    %c0_24 = arith.constant 0 : index
    %12 = vector.load %arg3[%c0_23, %c0_24] : memref<1x32xbf16, #tpu.memory_space<vmem>>, vector<1x32xbf16>
    %c0_25 = arith.constant 0 : index
    %c0_26 = arith.constant 0 : index
    %c7_27 = arith.constant 7 : index
    %c0_28 = arith.constant 0 : index
    %13 = vector.load %arg11[%c0_25, %c0_26, %c7_27, %c0_28] : memref<2x18x25x32xbf16, #tpu.memory_space<vmem>>, vector<2x16x16x32xbf16>
    %14 = vector.extract_strided_slice %11 {offsets = [0, 0], sizes = [1, 32], strides = [1, 1]} : vector<9x32xbf16> to vector<1x32xbf16>
    %15 = vector.shape_cast %14 : vector<1x32xbf16> to vector<32xbf16>
    %16 = vector.shape_cast %15 : vector<32xbf16> to vector<1x1x1x32xbf16>
    %17 = vector.broadcast %16 : vector<1x1x1x32xbf16> to vector<2x16x16x32xbf16>
    %18 = arith.mulf %13, %17 : vector<2x16x16x32xbf16>
    %c0_29 = arith.constant 0 : index
    %c0_30 = arith.constant 0 : index
    %c8_31 = arith.constant 8 : index
    %c0_32 = arith.constant 0 : index
    %19 = vector.load %arg11[%c0_29, %c0_30, %c8_31, %c0_32] : memref<2x18x25x32xbf16, #tpu.memory_space<vmem>>, vector<2x16x16x32xbf16>
    %20 = vector.extract_strided_slice %11 {offsets = [1, 0], sizes = [1, 32], strides = [1, 1]} : vector<9x32xbf16> to vector<1x32xbf16>
    %21 = vector.shape_cast %20 : vector<1x32xbf16> to vector<32xbf16>
    %22 = vector.shape_cast %21 : vector<32xbf16> to vector<1x1x1x32xbf16>
    %23 = vector.broadcast %22 : vector<1x1x1x32xbf16> to vector<2x16x16x32xbf16>
    %24 = arith.mulf %19, %23 : vector<2x16x16x32xbf16>
    %c0_33 = arith.constant 0 : index
    %c0_34 = arith.constant 0 : index
    %c9 = arith.constant 9 : index
    %c0_35 = arith.constant 0 : index
    %25 = vector.load %arg11[%c0_33, %c0_34, %c9, %c0_35] : memref<2x18x25x32xbf16, #tpu.memory_space<vmem>>, vector<2x16x16x32xbf16>
    %26 = vector.extract_strided_slice %11 {offsets = [2, 0], sizes = [1, 32], strides = [1, 1]} : vector<9x32xbf16> to vector<1x32xbf16>
    %27 = vector.shape_cast %26 : vector<1x32xbf16> to vector<32xbf16>
    %28 = vector.shape_cast %27 : vector<32xbf16> to vector<1x1x1x32xbf16>
    %29 = vector.broadcast %28 : vector<1x1x1x32xbf16> to vector<2x16x16x32xbf16>
    %30 = arith.mulf %25, %29 : vector<2x16x16x32xbf16>
    %c0_36 = arith.constant 0 : index
    %c1_37 = arith.constant 1 : index
    %c7_38 = arith.constant 7 : index
    %c0_39 = arith.constant 0 : index
    %31 = vector.load %arg11[%c0_36, %c1_37, %c7_38, %c0_39] : memref<2x18x25x32xbf16, #tpu.memory_space<vmem>>, vector<2x16x16x32xbf16>
    %32 = vector.extract_strided_slice %11 {offsets = [3, 0], sizes = [1, 32], strides = [1, 1]} : vector<9x32xbf16> to vector<1x32xbf16>
    %33 = vector.shape_cast %32 : vector<1x32xbf16> to vector<32xbf16>
    %34 = vector.shape_cast %33 : vector<32xbf16> to vector<1x1x1x32xbf16>
    %35 = vector.broadcast %34 : vector<1x1x1x32xbf16> to vector<2x16x16x32xbf16>
    %36 = arith.mulf %31, %35 : vector<2x16x16x32xbf16>
    %37 = arith.addf %18, %36 : vector<2x16x16x32xbf16>
    %c0_40 = arith.constant 0 : index
    %c1_41 = arith.constant 1 : index
    %c8_42 = arith.constant 8 : index
    %c0_43 = arith.constant 0 : index
    %38 = vector.load %arg11[%c0_40, %c1_41, %c8_42, %c0_43] : memref<2x18x25x32xbf16, #tpu.memory_space<vmem>>, vector<2x16x16x32xbf16>
    %39 = vector.extract_strided_slice %11 {offsets = [4, 0], sizes = [1, 32], strides = [1, 1]} : vector<9x32xbf16> to vector<1x32xbf16>
    %40 = vector.shape_cast %39 : vector<1x32xbf16> to vector<32xbf16>
    %41 = vector.shape_cast %40 : vector<32xbf16> to vector<1x1x1x32xbf16>
    %42 = vector.broadcast %41 : vector<1x1x1x32xbf16> to vector<2x16x16x32xbf16>
    %43 = arith.mulf %38, %42 : vector<2x16x16x32xbf16>
    %44 = arith.addf %24, %43 : vector<2x16x16x32xbf16>
    %c0_44 = arith.constant 0 : index
    %c1_45 = arith.constant 1 : index
    %c9_46 = arith.constant 9 : index
    %c0_47 = arith.constant 0 : index
    %45 = vector.load %arg11[%c0_44, %c1_45, %c9_46, %c0_47] : memref<2x18x25x32xbf16, #tpu.memory_space<vmem>>, vector<2x16x16x32xbf16>
    %46 = vector.extract_strided_slice %11 {offsets = [5, 0], sizes = [1, 32], strides = [1, 1]} : vector<9x32xbf16> to vector<1x32xbf16>
    %47 = vector.shape_cast %46 : vector<1x32xbf16> to vector<32xbf16>
    %48 = vector.shape_cast %47 : vector<32xbf16> to vector<1x1x1x32xbf16>
    %49 = vector.broadcast %48 : vector<1x1x1x32xbf16> to vector<2x16x16x32xbf16>
    %50 = arith.mulf %45, %49 : vector<2x16x16x32xbf16>
    %51 = arith.addf %30, %50 : vector<2x16x16x32xbf16>
    %c0_48 = arith.constant 0 : index
    %c2 = arith.constant 2 : index
    %c7_49 = arith.constant 7 : index
    %c0_50 = arith.constant 0 : index
    %52 = vector.load %arg11[%c0_48, %c2, %c7_49, %c0_50] : memref<2x18x25x32xbf16, #tpu.memory_space<vmem>>, vector<2x16x16x32xbf16>
    %53 = vector.extract_strided_slice %11 {offsets = [6, 0], sizes = [1, 32], strides = [1, 1]} : vector<9x32xbf16> to vector<1x32xbf16>
    %54 = vector.shape_cast %53 : vector<1x32xbf16> to vector<32xbf16>
    %55 = vector.shape_cast %54 : vector<32xbf16> to vector<1x1x1x32xbf16>
    %56 = vector.broadcast %55 : vector<1x1x1x32xbf16> to vector<2x16x16x32xbf16>
    %57 = arith.mulf %52, %56 : vector<2x16x16x32xbf16>
    %58 = arith.addf %37, %57 : vector<2x16x16x32xbf16>
    %c0_51 = arith.constant 0 : index
    %c2_52 = arith.constant 2 : index
    %c8_53 = arith.constant 8 : index
    %c0_54 = arith.constant 0 : index
    %59 = vector.load %arg11[%c0_51, %c2_52, %c8_53, %c0_54] : memref<2x18x25x32xbf16, #tpu.memory_space<vmem>>, vector<2x16x16x32xbf16>
    %60 = vector.extract_strided_slice %11 {offsets = [7, 0], sizes = [1, 32], strides = [1, 1]} : vector<9x32xbf16> to vector<1x32xbf16>
    %61 = vector.shape_cast %60 : vector<1x32xbf16> to vector<32xbf16>
    %62 = vector.shape_cast %61 : vector<32xbf16> to vector<1x1x1x32xbf16>
    %63 = vector.broadcast %62 : vector<1x1x1x32xbf16> to vector<2x16x16x32xbf16>
    %64 = arith.mulf %59, %63 : vector<2x16x16x32xbf16>
    %65 = arith.addf %44, %64 : vector<2x16x16x32xbf16>
    %c0_55 = arith.constant 0 : index
    %c2_56 = arith.constant 2 : index
    %c9_57 = arith.constant 9 : index
    %c0_58 = arith.constant 0 : index
    %66 = vector.load %arg11[%c0_55, %c2_56, %c9_57, %c0_58] : memref<2x18x25x32xbf16, #tpu.memory_space<vmem>>, vector<2x16x16x32xbf16>
    %67 = vector.extract_strided_slice %11 {offsets = [8, 0], sizes = [1, 32], strides = [1, 1]} : vector<9x32xbf16> to vector<1x32xbf16>
    %68 = vector.shape_cast %67 : vector<1x32xbf16> to vector<32xbf16>
    %69 = vector.shape_cast %68 : vector<32xbf16> to vector<1x1x1x32xbf16>
    %70 = vector.broadcast %69 : vector<1x1x1x32xbf16> to vector<2x16x16x32xbf16>
    %71 = arith.mulf %66, %70 : vector<2x16x16x32xbf16>
    %72 = arith.addf %51, %71 : vector<2x16x16x32xbf16>
    %73 = arith.addf %58, %65 : vector<2x16x16x32xbf16>
    %74 = arith.addf %73, %72 : vector<2x16x16x32xbf16>
    %75 = vector.shape_cast %12 : vector<1x32xbf16> to vector<1x1x1x32xbf16>
    %76 = vector.broadcast %75 : vector<1x1x1x32xbf16> to vector<2x16x16x32xbf16>
    %77 = arith.addf %74, %76 : vector<2x16x16x32xbf16>
    %cst_59 = arith.constant 0.000000e+00 : bf16
    %78 = vector.broadcast %cst_59 : bf16 to vector<2x16x16x32xbf16>
    %79 = arith.maximumf %77, %78 : vector<2x16x16x32xbf16>
    %cst_60 = arith.constant 6.000000e+00 : bf16
    %80 = vector.broadcast %cst_60 : bf16 to vector<2x16x16x32xbf16>
    %81 = arith.minimumf %79, %80 : vector<2x16x16x32xbf16>
    %82 = vector.shape_cast %81 : vector<2x16x16x32xbf16> to vector<512x32xbf16>
    %c0_61 = arith.constant 0 : index
    %c0_62 = arith.constant 0 : index
    %83 = vector.load %arg4[%c0_61, %c0_62] : memref<32x32xbf16, #tpu.memory_space<vmem>>, vector<32x32xbf16>
    %cst_63 = arith.constant dense<0.000000e+00> : vector<512x32xf32>
    %84 = tpu.matmul %82, %83, %cst_63 {dimension_numbers = #tpu.dot_dimension_numbers<[1], [0], [0], [1], [0, 0, 1, 1], [], []>} : vector<512x32xbf16>, vector<32x32xbf16>, vector<512x32xf32> -> vector<512x32xf32>
    %c0_64 = arith.constant 0 : index
    %c0_65 = arith.constant 0 : index
    %85 = vector.load %arg5[%c0_64, %c0_65] : memref<1x32xf32, #tpu.memory_space<vmem>>, vector<1x32xf32>
    %86 = vector.broadcast %85 : vector<1x32xf32> to vector<512x32xf32>
    %87 = arith.addf %84, %86 : vector<512x32xf32>
    %cst_66 = arith.constant 0.000000e+00 : f32
    %88 = vector.broadcast %cst_66 : f32 to vector<512x32xf32>
    %89 = arith.maximumf %87, %88 : vector<512x32xf32>
    %cst_67 = arith.constant 6.000000e+00 : f32
    %90 = vector.broadcast %cst_67 : f32 to vector<512x32xf32>
    %91 = arith.minimumf %89, %90 : vector<512x32xf32>
    %cst_68 = arith.constant 0.000000e+00 : bf16
    %92 = vector.broadcast %cst_68 : bf16 to vector<2x1x25x32xbf16>
    %c0_69 = arith.constant 0 : index
    %c0_70 = arith.constant 0 : index
    %c0_71 = arith.constant 0 : index
    %c0_72 = arith.constant 0 : index
    %93 = vector.load %arg12[%c0_69, %c0_70, %c0_71, %c0_72] : memref<2x18x25x32xbf16, #tpu.memory_space<vmem>>, vector<2x1x25x32xbf16>
    tpu.vector_store %arg12[%c0_69, %c0_70, %c0_71, %c0_72], %92 {strides = array<i32>} : memref<2x18x25x32xbf16, #tpu.memory_space<vmem>>, vector<2x1x25x32xbf16>,
    %cst_73 = arith.constant 0.000000e+00 : bf16
    %94 = vector.broadcast %cst_73 : bf16 to vector<2x1x25x32xbf16>
    %c0_74 = arith.constant 0 : index
    %c17_75 = arith.constant 17 : index
    %c0_76 = arith.constant 0 : index
    %c0_77 = arith.constant 0 : index
    %95 = vector.load %arg12[%c0_74, %c17_75, %c0_76, %c0_77] : memref<2x18x25x32xbf16, #tpu.memory_space<vmem>>, vector<2x1x25x32xbf16>
    tpu.vector_store %arg12[%c0_74, %c17_75, %c0_76, %c0_77], %94 {strides = array<i32>} : memref<2x18x25x32xbf16, #tpu.memory_space<vmem>>, vector<2x1x25x32xbf16>,
    %cst_78 = arith.constant 0.000000e+00 : bf16
    %96 = vector.broadcast %cst_78 : bf16 to vector<2x18x1x32xbf16>
    %c0_79 = arith.constant 0 : index
    %c0_80 = arith.constant 0 : index
    %c7_81 = arith.constant 7 : index
    %c0_82 = arith.constant 0 : index
    %97 = vector.load %arg12[%c0_79, %c0_80, %c7_81, %c0_82] : memref<2x18x25x32xbf16, #tpu.memory_space<vmem>>, vector<2x18x1x32xbf16>
    tpu.vector_store %arg12[%c0_79, %c0_80, %c7_81, %c0_82], %96 {strides = array<i32>} : memref<2x18x25x32xbf16, #tpu.memory_space<vmem>>, vector<2x18x1x32xbf16>,
    %cst_83 = arith.constant 0.000000e+00 : bf16
    %98 = vector.broadcast %cst_83 : bf16 to vector<2x18x1x32xbf16>
    %c0_84 = arith.constant 0 : index
    %c0_85 = arith.constant 0 : index
    %c24_86 = arith.constant 24 : index
    %c0_87 = arith.constant 0 : index
    %99 = vector.load %arg12[%c0_84, %c0_85, %c24_86, %c0_87] : memref<2x18x25x32xbf16, #tpu.memory_space<vmem>>, vector<2x18x1x32xbf16>
    tpu.vector_store %arg12[%c0_84, %c0_85, %c24_86, %c0_87], %98 {strides = array<i32>} : memref<2x18x25x32xbf16, #tpu.memory_space<vmem>>, vector<2x18x1x32xbf16>,
    %100 = arith.truncf %91 : vector<512x32xf32> to vector<512x32xbf16>
    %101 = vector.shape_cast %100 : vector<512x32xbf16> to vector<2x16x16x32xbf16>
    %c0_88 = arith.constant 0 : index
    %c1_89 = arith.constant 1 : index
    %c8_90 = arith.constant 8 : index
    %c0_91 = arith.constant 0 : index
    %102 = vector.load %arg12[%c0_88, %c1_89, %c8_90, %c0_91] : memref<2x18x25x32xbf16, #tpu.memory_space<vmem>>, vector<2x16x16x32xbf16>
    tpu.vector_store %arg12[%c0_88, %c1_89, %c8_90, %c0_91], %101 {strides = array<i32>} : memref<2x18x25x32xbf16, #tpu.memory_space<vmem>>, vector<2x16x16x32xbf16>,
    %c0_92 = arith.constant 0 : index
    %c0_93 = arith.constant 0 : index
    %103 = vector.load %arg6[%c0_92, %c0_93] : memref<9x32xbf16, #tpu.memory_space<vmem>>, vector<9x32xbf16>
    %c0_94 = arith.constant 0 : index
    %c0_95 = arith.constant 0 : index
    %104 = vector.load %arg7[%c0_94, %c0_95] : memref<1x32xbf16, #tpu.memory_space<vmem>>, vector<1x32xbf16>
    %c0_96 = arith.constant 0 : index
    %c0_97 = arith.constant 0 : index
    %c7_98 = arith.constant 7 : index
    %c0_99 = arith.constant 0 : index
    %105 = vector.load %arg12[%c0_96, %c0_97, %c7_98, %c0_99] : memref<2x18x25x32xbf16, #tpu.memory_space<vmem>>, vector<2x16x16x32xbf16>
    %106 = vector.extract_strided_slice %103 {offsets = [0, 0], sizes = [1, 32], strides = [1, 1]} : vector<9x32xbf16> to vector<1x32xbf16>
    %107 = vector.shape_cast %106 : vector<1x32xbf16> to vector<32xbf16>
    %108 = vector.shape_cast %107 : vector<32xbf16> to vector<1x1x1x32xbf16>
    %109 = vector.broadcast %108 : vector<1x1x1x32xbf16> to vector<2x16x16x32xbf16>
    %110 = arith.mulf %105, %109 : vector<2x16x16x32xbf16>
    %c0_100 = arith.constant 0 : index
    %c0_101 = arith.constant 0 : index
    %c8_102 = arith.constant 8 : index
    %c0_103 = arith.constant 0 : index
    %111 = vector.load %arg12[%c0_100, %c0_101, %c8_102, %c0_103] : memref<2x18x25x32xbf16, #tpu.memory_space<vmem>>, vector<2x16x16x32xbf16>
    %112 = vector.extract_strided_slice %103 {offsets = [1, 0], sizes = [1, 32], strides = [1, 1]} : vector<9x32xbf16> to vector<1x32xbf16>
    %113 = vector.shape_cast %112 : vector<1x32xbf16> to vector<32xbf16>
    %114 = vector.shape_cast %113 : vector<32xbf16> to vector<1x1x1x32xbf16>
    %115 = vector.broadcast %114 : vector<1x1x1x32xbf16> to vector<2x16x16x32xbf16>
    %116 = arith.mulf %111, %115 : vector<2x16x16x32xbf16>
    %c0_104 = arith.constant 0 : index
    %c0_105 = arith.constant 0 : index
    %c9_106 = arith.constant 9 : index
    %c0_107 = arith.constant 0 : index
    %117 = vector.load %arg12[%c0_104, %c0_105, %c9_106, %c0_107] : memref<2x18x25x32xbf16, #tpu.memory_space<vmem>>, vector<2x16x16x32xbf16>
    %118 = vector.extract_strided_slice %103 {offsets = [2, 0], sizes = [1, 32], strides = [1, 1]} : vector<9x32xbf16> to vector<1x32xbf16>
    %119 = vector.shape_cast %118 : vector<1x32xbf16> to vector<32xbf16>
    %120 = vector.shape_cast %119 : vector<32xbf16> to vector<1x1x1x32xbf16>
    %121 = vector.broadcast %120 : vector<1x1x1x32xbf16> to vector<2x16x16x32xbf16>
    %122 = arith.mulf %117, %121 : vector<2x16x16x32xbf16>
    %c0_108 = arith.constant 0 : index
    %c1_109 = arith.constant 1 : index
    %c7_110 = arith.constant 7 : index
    %c0_111 = arith.constant 0 : index
    %123 = vector.load %arg12[%c0_108, %c1_109, %c7_110, %c0_111] : memref<2x18x25x32xbf16, #tpu.memory_space<vmem>>, vector<2x16x16x32xbf16>
    %124 = vector.extract_strided_slice %103 {offsets = [3, 0], sizes = [1, 32], strides = [1, 1]} : vector<9x32xbf16> to vector<1x32xbf16>
    %125 = vector.shape_cast %124 : vector<1x32xbf16> to vector<32xbf16>
    %126 = vector.shape_cast %125 : vector<32xbf16> to vector<1x1x1x32xbf16>
    %127 = vector.broadcast %126 : vector<1x1x1x32xbf16> to vector<2x16x16x32xbf16>
    %128 = arith.mulf %123, %127 : vector<2x16x16x32xbf16>
    %129 = arith.addf %110, %128 : vector<2x16x16x32xbf16>
    %c0_112 = arith.constant 0 : index
    %c1_113 = arith.constant 1 : index
    %c8_114 = arith.constant 8 : index
    %c0_115 = arith.constant 0 : index
    %130 = vector.load %arg12[%c0_112, %c1_113, %c8_114, %c0_115] : memref<2x18x25x32xbf16, #tpu.memory_space<vmem>>, vector<2x16x16x32xbf16>
    %131 = vector.extract_strided_slice %103 {offsets = [4, 0], sizes = [1, 32], strides = [1, 1]} : vector<9x32xbf16> to vector<1x32xbf16>
    %132 = vector.shape_cast %131 : vector<1x32xbf16> to vector<32xbf16>
    %133 = vector.shape_cast %132 : vector<32xbf16> to vector<1x1x1x32xbf16>
    %134 = vector.broadcast %133 : vector<1x1x1x32xbf16> to vector<2x16x16x32xbf16>
    %135 = arith.mulf %130, %134 : vector<2x16x16x32xbf16>
    %136 = arith.addf %116, %135 : vector<2x16x16x32xbf16>
    %c0_116 = arith.constant 0 : index
    %c1_117 = arith.constant 1 : index
    %c9_118 = arith.constant 9 : index
    %c0_119 = arith.constant 0 : index
    %137 = vector.load %arg12[%c0_116, %c1_117, %c9_118, %c0_119] : memref<2x18x25x32xbf16, #tpu.memory_space<vmem>>, vector<2x16x16x32xbf16>
    %138 = vector.extract_strided_slice %103 {offsets = [5, 0], sizes = [1, 32], strides = [1, 1]} : vector<9x32xbf16> to vector<1x32xbf16>
    %139 = vector.shape_cast %138 : vector<1x32xbf16> to vector<32xbf16>
    %140 = vector.shape_cast %139 : vector<32xbf16> to vector<1x1x1x32xbf16>
    %141 = vector.broadcast %140 : vector<1x1x1x32xbf16> to vector<2x16x16x32xbf16>
    %142 = arith.mulf %137, %141 : vector<2x16x16x32xbf16>
    %143 = arith.addf %122, %142 : vector<2x16x16x32xbf16>
    %c0_120 = arith.constant 0 : index
    %c2_121 = arith.constant 2 : index
    %c7_122 = arith.constant 7 : index
    %c0_123 = arith.constant 0 : index
    %144 = vector.load %arg12[%c0_120, %c2_121, %c7_122, %c0_123] : memref<2x18x25x32xbf16, #tpu.memory_space<vmem>>, vector<2x16x16x32xbf16>
    %145 = vector.extract_strided_slice %103 {offsets = [6, 0], sizes = [1, 32], strides = [1, 1]} : vector<9x32xbf16> to vector<1x32xbf16>
    %146 = vector.shape_cast %145 : vector<1x32xbf16> to vector<32xbf16>
    %147 = vector.shape_cast %146 : vector<32xbf16> to vector<1x1x1x32xbf16>
    %148 = vector.broadcast %147 : vector<1x1x1x32xbf16> to vector<2x16x16x32xbf16>
    %149 = arith.mulf %144, %148 : vector<2x16x16x32xbf16>
    %150 = arith.addf %129, %149 : vector<2x16x16x32xbf16>
    %c0_124 = arith.constant 0 : index
    %c2_125 = arith.constant 2 : index
    %c8_126 = arith.constant 8 : index
    %c0_127 = arith.constant 0 : index
    %151 = vector.load %arg12[%c0_124, %c2_125, %c8_126, %c0_127] : memref<2x18x25x32xbf16, #tpu.memory_space<vmem>>, vector<2x16x16x32xbf16>
    %152 = vector.extract_strided_slice %103 {offsets = [7, 0], sizes = [1, 32], strides = [1, 1]} : vector<9x32xbf16> to vector<1x32xbf16>
    %153 = vector.shape_cast %152 : vector<1x32xbf16> to vector<32xbf16>
    %154 = vector.shape_cast %153 : vector<32xbf16> to vector<1x1x1x32xbf16>
    %155 = vector.broadcast %154 : vector<1x1x1x32xbf16> to vector<2x16x16x32xbf16>
    %156 = arith.mulf %151, %155 : vector<2x16x16x32xbf16>
    %157 = arith.addf %136, %156 : vector<2x16x16x32xbf16>
    %c0_128 = arith.constant 0 : index
    %c2_129 = arith.constant 2 : index
    %c9_130 = arith.constant 9 : index
    %c0_131 = arith.constant 0 : index
    %158 = vector.load %arg12[%c0_128, %c2_129, %c9_130, %c0_131] : memref<2x18x25x32xbf16, #tpu.memory_space<vmem>>, vector<2x16x16x32xbf16>
    %159 = vector.extract_strided_slice %103 {offsets = [8, 0], sizes = [1, 32], strides = [1, 1]} : vector<9x32xbf16> to vector<1x32xbf16>
    %160 = vector.shape_cast %159 : vector<1x32xbf16> to vector<32xbf16>
    %161 = vector.shape_cast %160 : vector<32xbf16> to vector<1x1x1x32xbf16>
    %162 = vector.broadcast %161 : vector<1x1x1x32xbf16> to vector<2x16x16x32xbf16>
    %163 = arith.mulf %158, %162 : vector<2x16x16x32xbf16>
    %164 = arith.addf %143, %163 : vector<2x16x16x32xbf16>
    %165 = arith.addf %150, %157 : vector<2x16x16x32xbf16>
    %166 = arith.addf %165, %164 : vector<2x16x16x32xbf16>
    %167 = vector.shape_cast %104 : vector<1x32xbf16> to vector<1x1x1x32xbf16>
    %168 = vector.broadcast %167 : vector<1x1x1x32xbf16> to vector<2x16x16x32xbf16>
    %169 = arith.addf %166, %168 : vector<2x16x16x32xbf16>
    %cst_132 = arith.constant 0.000000e+00 : bf16
    %170 = vector.broadcast %cst_132 : bf16 to vector<2x16x16x32xbf16>
    %171 = arith.maximumf %169, %170 : vector<2x16x16x32xbf16>
    %cst_133 = arith.constant 6.000000e+00 : bf16
    %172 = vector.broadcast %cst_133 : bf16 to vector<2x16x16x32xbf16>
    %173 = arith.minimumf %171, %172 : vector<2x16x16x32xbf16>
    %174 = vector.shape_cast %173 : vector<2x16x16x32xbf16> to vector<512x32xbf16>
    %c0_134 = arith.constant 0 : index
    %c0_135 = arith.constant 0 : index
    %175 = vector.load %arg8[%c0_134, %c0_135] : memref<32x32xbf16, #tpu.memory_space<vmem>>, vector<32x32xbf16>
    %cst_136 = arith.constant dense<0.000000e+00> : vector<512x32xf32>
    %176 = tpu.matmul %174, %175, %cst_136 {dimension_numbers = #tpu.dot_dimension_numbers<[1], [0], [0], [1], [0, 0, 1, 1], [], []>} : vector<512x32xbf16>, vector<32x32xbf16>, vector<512x32xf32> -> vector<512x32xf32>
    %c0_137 = arith.constant 0 : index
    %c0_138 = arith.constant 0 : index
    %177 = vector.load %arg9[%c0_137, %c0_138] : memref<1x32xf32, #tpu.memory_space<vmem>>, vector<1x32xf32>
    %178 = vector.broadcast %177 : vector<1x32xf32> to vector<512x32xf32>
    %179 = arith.addf %176, %178 : vector<512x32xf32>
    %c0_139 = arith.constant 0 : index
    %c0_140 = arith.constant 0 : index
    %c0_141 = arith.constant 0 : index
    %c0_142 = arith.constant 0 : index
    %180 = vector.load %arg1[%c0_139, %c0_140, %c0_141, %c0_142] : memref<2x16x16x32xf32, #tpu.memory_space<vmem>>, vector<2x16x16x32xf32>
    %181 = vector.shape_cast %180 : vector<2x16x16x32xf32> to vector<512x32xf32>
    %182 = arith.addf %179, %181 : vector<512x32xf32>
    %183 = vector.shape_cast %182 : vector<512x32xf32> to vector<2x256x32xf32>
    %c0_143 = arith.constant 0 : index
    %c0_144 = arith.constant 0 : index
    %c0_145 = arith.constant 0 : index
    %184 = vector.load %arg10[%c0_143, %c0_144, %c0_145] : memref<2x256x32xf32, #tpu.memory_space<vmem>>, vector<2x256x32xf32>
    tpu.vector_store %arg10[%c0_143, %c0_144, %c0_145], %183 {strides = array<i32>} : memref<2x256x32xf32, #tpu.memory_space<vmem>>, vector<2x256x32xf32>,
    return
  }
  func.func @transform_0(%arg0: i32) -> (i32, i32, i32, i32) {
    %c0_i32 = arith.constant 0 : i32
    %c0_i32_0 = arith.constant 0 : i32
    %c0_i32_1 = arith.constant 0 : i32
    %c0_i32_2 = arith.constant 0 : i32
    return %arg0, %c0_i32, %c0_i32_0, %c0_i32_1 : i32, i32, i32, i32
  }
  func.func @transform_1(%arg0: i32) -> (i32, i32) {
    %c0_i32 = arith.constant 0 : i32
    %c0_i32_0 = arith.constant 0 : i32
    %c0_i32_1 = arith.constant 0 : i32
    return %c0_i32, %c0_i32_0 : i32, i32
  }
  func.func @transform_2(%arg0: i32) -> (i32, i32) {
    %c0_i32 = arith.constant 0 : i32
    %c0_i32_0 = arith.constant 0 : i32
    %c0_i32_1 = arith.constant 0 : i32
    return %c0_i32, %c0_i32_0 : i32, i32
  }
  func.func @transform_3(%arg0: i32) -> (i32, i32) {
    %c0_i32 = arith.constant 0 : i32
    %c0_i32_0 = arith.constant 0 : i32
    %c0_i32_1 = arith.constant 0 : i32
    return %c0_i32, %c0_i32_0 : i32, i32
  }
  func.func @transform_4(%arg0: i32) -> (i32, i32) {
    %c0_i32 = arith.constant 0 : i32
    %c0_i32_0 = arith.constant 0 : i32
    %c0_i32_1 = arith.constant 0 : i32
    return %c0_i32, %c0_i32_0 : i32, i32
  }
  func.func @transform_5(%arg0: i32) -> (i32, i32) {
    %c0_i32 = arith.constant 0 : i32
    %c0_i32_0 = arith.constant 0 : i32
    %c0_i32_1 = arith.constant 0 : i32
    return %c0_i32, %c0_i32_0 : i32, i32
  }
  func.func @transform_6(%arg0: i32) -> (i32, i32) {
    %c0_i32 = arith.constant 0 : i32
    %c0_i32_0 = arith.constant 0 : i32
    %c0_i32_1 = arith.constant 0 : i32
    return %c0_i32, %c0_i32_0 : i32, i32
  }
  func.func @transform_7(%arg0: i32) -> (i32, i32) {
    %c0_i32 = arith.constant 0 : i32
    %c0_i32_0 = arith.constant 0 : i32
    %c0_i32_1 = arith.constant 0 : i32
    return %c0_i32, %c0_i32_0 : i32, i32
  }
  func.func @transform_8(%arg0: i32) -> (i32, i32) {
    %c0_i32 = arith.constant 0 : i32
    %c0_i32_0 = arith.constant 0 : i32
    %c0_i32_1 = arith.constant 0 : i32
    return %c0_i32, %c0_i32_0 : i32, i32
  }
  func.func @transform_9(%arg0: i32) -> (i32, i32, i32) {
    %c0_i32 = arith.constant 0 : i32
    %c0_i32_0 = arith.constant 0 : i32
    %c0_i32_1 = arith.constant 0 : i32
    return %arg0, %c0_i32, %c0_i32_0 : i32, i32, i32
  }
}

</mosaic_0001>

<llo_original>
// kernel: _mobilev1_residual_forward.1
$region0: #{_mobilev1_residual_forward.1}
  #allocation0 [shape = 'u32[]', space=smem, size = 0x4, offset = 0x4, fixed_abs, tag = 'smem constant byte address 0x4 - core index']
  #allocation1 [shape = 'u32[144,128]{1,0:T(1,128)}', space=vmem, size = 0x12000, scoped, tag = 'internal scratch']
  #allocation2 [shape = 'bf16[2,18,25,32]{3,2,1,0:T(8,128)(2,1)}', space=vmem, size = 0x48000, scoped, tag = 'scratch operand']
  #allocation3 [shape = 'bf16[2,18,25,32]{3,2,1,0:T(8,128)(2,1)}', space=vmem, size = 0x48000, scoped, tag = 'scratch operand']
  %s0 = inlined_call_operand.hbm [shape: f32[2,16,16,32], index: 0, kind: input, shape index: {}]
  %s1 = inlined_call_operand.vmem [shape: bf16[9,32], index: 1, kind: input, shape index: {}]
  %s2 = inlined_call_operand.vmem [shape: bf16[1,32], index: 2, kind: input, shape index: {}]
  %s3 = inlined_call_operand.vmem [shape: bf16[32,32], index: 3, kind: input, shape index: {}]
  %s4 = inlined_call_operand.vmem [shape: f32[1,32], index: 4, kind: input, shape index: {}]
  %s5 = inlined_call_operand.vmem [shape: bf16[9,32], index: 5, kind: input, shape index: {}]
  %s6 = inlined_call_operand.vmem [shape: bf16[1,32], index: 6, kind: input, shape index: {}]
  %s7 = inlined_call_operand.vmem [shape: bf16[32,32], index: 7, kind: input, shape index: {}]
  %s8 = inlined_call_operand.vmem [shape: f32[1,32], index: 8, kind: input, shape index: {}]
  %s9 = inlined_call_operand.hbm [shape: f32[2,256,32], index: 9, kind: output, shape index: {}]
  %s10 = sld [smem:[#allocation0]]
  $region50: #{_mobilev1_residual_forward.1} parent=0
    _
  %s12 = ssub.s32 1, %s10
  %s13 = scalar_select 0, %s12, %s10
  $region1: #{_mobilev1_residual_forward.1} parent=0
    #allocation4 [shape = 'u8[262144]{0}', space=vmem, size = 0x40000, scoped, tag = 'input window, operand 0, single buffered']
    #allocation5 [shape = 's32[1]{0}', space=sflag, size = 0x4, scoped, tag = 'scoped memory for _mobilev1_residual_forward.1']
    #allocation6 [shape = 's32[1]{0}', space=sflag, size = 0x4, scoped, tag = 'scoped memory for _mobilev1_residual_forward.1']
    #allocation7 [shape = 'u8[262144]{0}', space=vmem, size = 0x40000, scoped, tag = 'output window, operand 0, single buffered']
    %14 = vsyncpa [#allocation5], 0
    %15 = vsyncpa [#allocation6], 0
    // Predicated region
    $region2: #{_mobilev1_residual_forward.1} parent=1 // pred_check
      _
    $region3: #{_mobilev1_residual_forward.1} parent=1 // pred_check_branch
      %17 = sbr.rel (0) target = $region5
    $region4: #{_mobilev1_residual_forward.1} parent=1 // pred_region
      %s19 = ssub.s32 8192, 8192
      %20 = vsyncadd [#allocation5], %s19
      %s21 = sshll.u32 [#allocation4], 4
      %s22 = int_to_ptr.vmem [resolvable:$true] %s21
      %27 = dma.hbm_to_vmem [thread:$0]  %s0, 8192, %s22, [#allocation5], 128, 128, 8
    $region5: #{_mobilev1_residual_forward.1} parent=1 // pred_fallthru
      _
    // Predicated region
    $region6: #{_mobilev1_residual_forward.1} parent=1 // pred_check
      _
    $region7: #{_mobilev1_residual_forward.1} parent=1 // pred_check_branch
      %29 = sbr.rel (0) target = $region9
    $region8: #{_mobilev1_residual_forward.1} parent=1 // pred_region
      _
    $region9: #{_mobilev1_residual_forward.1} parent=1 // pred_fallthru
      _
    // Predicated region
    $region10: #{_mobilev1_residual_forward.1} parent=1 // pred_check
      _
    $region11: #{_mobilev1_residual_forward.1} parent=1 // pred_check_branch
      %31 = sbr.rel (0) target = $region13
    $region12: #{_mobilev1_residual_forward.1} parent=1 // pred_region
      _
    $region13: #{_mobilev1_residual_forward.1} parent=1 // pred_fallthru
      _
    // Predicated region
    $region14: #{_mobilev1_residual_forward.1} parent=1 // pred_check
      _
    $region15: #{_mobilev1_residual_forward.1} parent=1 // pred_check_branch
      %33 = sbr.rel (0) target = $region17
    $region16: #{_mobilev1_residual_forward.1} parent=1 // pred_region
      _
    $region17: #{_mobilev1_residual_forward.1} parent=1 // pred_fallthru
      _
    // Predicated region
    $region18: #{_mobilev1_residual_forward.1} parent=1 // pred_check
      _
    $region19: #{_mobilev1_residual_forward.1} parent=1 // pred_check_branch
      %35 = sbr.rel (0) target = $region21
    $region20: #{_mobilev1_residual_forward.1} parent=1 // pred_region
      _
    $region21: #{_mobilev1_residual_forward.1} parent=1 // pred_fallthru
      _
    // Predicated region
    $region22: #{_mobilev1_residual_forward.1} parent=1 // pred_check
      _
    $region23: #{_mobilev1_residual_forward.1} parent=1 // pred_check_branch
      %37 = sbr.rel (0) target = $region25
    $region24: #{_mobilev1_residual_forward.1} parent=1 // pred_region
      _
    $region25: #{_mobilev1_residual_forward.1} parent=1 // pred_fallthru
      _
    // Predicated region
    $region26: #{_mobilev1_residual_forward.1} parent=1 // pred_check
      _
    $region27: #{_mobilev1_residual_forward.1} parent=1 // pred_check_branch
      %39 = sbr.rel (0) target = $region29
    $region28: #{_mobilev1_residual_forward.1} parent=1 // pred_region
      _
    $region29: #{_mobilev1_residual_forward.1} parent=1 // pred_fallthru
      _
    // Predicated region
    $region30: #{_mobilev1_residual_forward.1} parent=1 // pred_check
      _
    $region31: #{_mobilev1_residual_forward.1} parent=1 // pred_check_branch
      %41 = sbr.rel (0) target = $region33
    $region32: #{_mobilev1_residual_forward.1} parent=1 // pred_region
      _
    $region33: #{_mobilev1_residual_forward.1} parent=1 // pred_fallthru
      _
    // Predicated region
    $region34: #{_mobilev1_residual_forward.1} parent=1 // pred_check
      _
    $region35: #{_mobilev1_residual_forward.1} parent=1 // pred_check_branch
      %43 = sbr.rel (0) target = $region37
    $region36: #{_mobilev1_residual_forward.1} parent=1 // pred_region
      _
    $region37: #{_mobilev1_residual_forward.1} parent=1 // pred_fallthru
      _
    // Predicated region
    $region38: #{_mobilev1_residual_forward.1} parent=1 // pred_check
      _
    $region39: #{_mobilev1_residual_forward.1} parent=1 // pred_check_branch
      %45 = sbr.rel (0) target = $region41
    $region40: #{_mobilev1_residual_forward.1} parent=1 // pred_region
      %46 = dma.done [#allocation5], 8192
    $region41: #{_mobilev1_residual_forward.1} parent=1 // pred_fallthru
      _
    %vm49 = vcmask 257024
    %50 = vst.msk [vmem:[#allocation2] sm:$0xf] %vm49, 0
    %51 = vst.msk [vmem:[#allocation2 + $0x4] sm:$0xf] %vm49, 0
    %52 = vst.msk [vmem:[#allocation2 + $0x8] sm:$0xf] %vm49, 0
    %vm53 = vcmask 253952
    %vm54 = vsmask.f32 256
    %vm55 = vmand %vm53, %vm54
    %v56 = vld [vmem:[#allocation2 + $0xc] sm:$0x1]
    %v57 = vsel %vm55, 0, %v56
    %58 = vst [vmem:[#allocation2 + $0xc] sm:$0x1] %v57
    %59 = vst.msk [vmem:[#allocation2 + $0x120] sm:$0xf] %vm49, 0
    %60 = vst.msk [vmem:[#allocation2 + $0x124] sm:$0xf] %vm49, 0
    %61 = vst.msk [vmem:[#allocation2 + $0x128] sm:$0xf] %vm49, 0
    %v62 = vld [vmem:[#allocation2 + $0x12c] sm:$0x1]
    %v63 = vsel %vm55, 0, %v62
    %64 = vst [vmem:[#allocation2 + $0x12c] sm:$0x1] %v63
    %s65 = scalar_lea.vmem [#allocation2], 272
    %66 = vst.msk [vmem:[%s65] sm:$0xf] %vm49, 0
    %67 = vst.msk [vmem:[%s65 + $0x4] sm:$0xf] %vm49, 0
    %68 = vst.msk [vmem:[%s65 + $0x8] sm:$0xf] %vm49, 0
    %v69 = vld [vmem:[%s65 + $0xc] sm:$0x1]
    %v70 = vsel %vm55, 0, %v69
    %71 = vst [vmem:[%s65 + $0xc] sm:$0x1] %v70
    %72 = vst.msk [vmem:[%s65 + $0x120] sm:$0xf] %vm49, 0
    %73 = vst.msk [vmem:[%s65 + $0x124] sm:$0xf] %vm49, 0
    %74 = vst.msk [vmem:[%s65 + $0x128] sm:$0xf] %vm49, 0
    %v75 = vld [vmem:[%s65 + $0x12c] sm:$0x1]
    %v76 = vsel %vm55, 0, %v75
    %77 = vst [vmem:[%s65 + $0x12c] sm:$0x1] %v76
    %vm78 = vcmask 257027
    %vm79 = vsmask.f32 7950
    %vm80 = vmand %vm78, %vm79
    %v81 = vld [vmem:[#allocation2] sm:$0x8]
    %v82 = vsel %vm80, 0, %v81
    %83 = vst [vmem:[#allocation2] sm:$0x8] %v82
    %v84 = vld [vmem:[#allocation2 + $0x10] sm:$0x8]
    %v85 = vsel %vm80, 0, %v84
    %86 = vst [vmem:[#allocation2 + $0x10] sm:$0x8] %v85
    %v87 = vld [vmem:[#allocation2 + $0x20] sm:$0x8]
    %v88 = vsel %vm80, 0, %v87
    %89 = vst [vmem:[#allocation2 + $0x20] sm:$0x8] %v88
    %v90 = vld [vmem:[#allocation2 + $0x30] sm:$0x8]
    %v91 = vsel %vm80, 0, %v90
    %92 = vst [vmem:[#allocation2 + $0x30] sm:$0x8] %v91
    %v93 = vld [vmem:[#allocation2 + $0x40] sm:$0x8]
    %v94 = vsel %vm80, 0, %v93
    %95 = vst [vmem:[#allocation2 + $0x40] sm:$0x8] %v94
    %v96 = vld [vmem:[#allocation2 + $0x50] sm:$0x8]
    %v97 = vsel %vm80, 0, %v96
    %98 = vst [vmem:[#allocation2 + $0x50] sm:$0x8] %v97
    %v99 = vld [vmem:[#allocation2 + $0x60] sm:$0x8]
    %v100 = vsel %vm80, 0, %v99
    %101 = vst [vmem:[#allocation2 + $0x60] sm:$0x8] %v100
    %v102 = vld [vmem:[#allocation2 + $0x70] sm:$0x8]
    %v103 = vsel %vm80, 0, %v102
    %104 = vst [vmem:[#allocation2 + $0x70] sm:$0x8] %v103
    %v105 = vld [vmem:[#allocation2 + $0x80] sm:$0x8]
    %v106 = vsel %vm80, 0, %v105
    %107 = vst [vmem:[#allocation2 + $0x80] sm:$0x8] %v106
    %v108 = vld [vmem:[#allocation2 + $0x90] sm:$0x8]
    %v109 = vsel %vm80, 0, %v108
    %110 = vst [vmem:[#allocation2 + $0x90] sm:$0x8] %v109
    %v111 = vld [vmem:[#allocation2 + $0xa0] sm:$0x8]
    %v112 = vsel %vm80, 0, %v111
    %113 = vst [vmem:[#allocation2 + $0xa0] sm:$0x8] %v112
    %v114 = vld [vmem:[#allocation2 + $0xb0] sm:$0x8]
    %v115 = vsel %vm80, 0, %v114
    %116 = vst [vmem:[#allocation2 + $0xb0] sm:$0x8] %v115
    %v117 = vld [vmem:[#allocation2 + $0xc0] sm:$0x8]
    %v118 = vsel %vm80, 0, %v117
    %119 = vst [vmem:[#allocation2 + $0xc0] sm:$0x8] %v118
    %v120 = vld [vmem:[#allocation2 + $0xd0] sm:$0x8]
    %v121 = vsel %vm80, 0, %v120
    %122 = vst [vmem:[#allocation2 + $0xd0] sm:$0x8] %v121
    %v123 = vld [vmem:[#allocation2 + $0xe0] sm:$0x8]
    %v124 = vsel %vm80, 0, %v123
    %125 = vst [vmem:[#allocation2 + $0xe0] sm:$0x8] %v124
    %v126 = vld [vmem:[#allocation2 + $0xf0] sm:$0x8]
    %v127 = vsel %vm80, 0, %v126
    %128 = vst [vmem:[#allocation2 + $0xf0] sm:$0x8] %v127
    %v129 = vld [vmem:[#allocation2 + $0x100] sm:$0x8]
    %v130 = vsel %vm80, 0, %v129
    %131 = vst [vmem:[#allocation2 + $0x100] sm:$0x8] %v130
    %v132 = vld [vmem:[#allocation2 + $0x110] sm:$0x8]
    %v133 = vsel %vm80, 0, %v132
    %134 = vst [vmem:[#allocation2 + $0x110] sm:$0x8] %v133
    %v135 = vld [vmem:[#allocation2 + $0x120] sm:$0x8]
    %v136 = vsel %vm80, 0, %v135
    %137 = vst [vmem:[#allocation2 + $0x120] sm:$0x8] %v136
    %v138 = vld [vmem:[#allocation2 + $0x130] sm:$0x8]
    %v139 = vsel %vm80, 0, %v138
    %140 = vst [vmem:[#allocation2 + $0x130] sm:$0x8] %v139
    %v141 = vld [vmem:[#allocation2 + $0x140] sm:$0x8]
    %v142 = vsel %vm80, 0, %v141
    %143 = vst [vmem:[#allocation2 + $0x140] sm:$0x8] %v142
    %v144 = vld [vmem:[#allocation2 + $0x150] sm:$0x8]
    %v145 = vsel %vm80, 0, %v144
    %146 = vst [vmem:[#allocation2 + $0x150] sm:$0x8] %v145
    %v147 = vld [vmem:[#allocation2 + $0x160] sm:$0x8]
    %v148 = vsel %vm80, 0, %v147
    %149 = vst [vmem:[#allocation2 + $0x160] sm:$0x8] %v148
    %v150 = vld [vmem:[#allocation2 + $0x170] sm:$0x8]
    %v151 = vsel %vm80, 0, %v150
    %152 = vst [vmem:[#allocation2 + $0x170] sm:$0x8] %v151
    %v153 = vld [vmem:[#allocation2 + $0x180] sm:$0x8]
    %v154 = vsel %vm80, 0, %v153
    %155 = vst [vmem:[#allocation2 + $0x180] sm:$0x8] %v154
    %v156 = vld [vmem:[#allocation2 + $0x190] sm:$0x8]
    %v157 = vsel %vm80, 0, %v156
    %158 = vst [vmem:[#allocation2 + $0x190] sm:$0x8] %v157
    %v159 = vld [vmem:[#allocation2 + $0x1a0] sm:$0x8]
    %v160 = vsel %vm80, 0, %v159
    %161 = vst [vmem:[#allocation2 + $0x1a0] sm:$0x8] %v160
    %v162 = vld [vmem:[#allocation2 + $0x1b0] sm:$0x8]
    %v163 = vsel %vm80, 0, %v162
    %164 = vst [vmem:[#allocation2 + $0x1b0] sm:$0x8] %v163
    %v165 = vld [vmem:[#allocation2 + $0x1c0] sm:$0x8]
    %v166 = vsel %vm80, 0, %v165
    %167 = vst [vmem:[#allocation2 + $0x1c0] sm:$0x8] %v166
    %v168 = vld [vmem:[#allocation2 + $0x1d0] sm:$0x8]
    %v169 = vsel %vm80, 0, %v168
    %170 = vst [vmem:[#allocation2 + $0x1d0] sm:$0x8] %v169
    %v171 = vld [vmem:[#allocation2 + $0x1e0] sm:$0x8]
    %v172 = vsel %vm80, 0, %v171
    %173 = vst [vmem:[#allocation2 + $0x1e0] sm:$0x8] %v172
    %v174 = vld [vmem:[#allocation2 + $0x1f0] sm:$0x8]
    %v175 = vsel %vm80, 0, %v174
    %176 = vst [vmem:[#allocation2 + $0x1f0] sm:$0x8] %v175
    %v177 = vld [vmem:[#allocation2 + $0x200] sm:$0x8]
    %v178 = vsel %vm80, 0, %v177
    %179 = vst [vmem:[#allocation2 + $0x200] sm:$0x8] %v178
    %v180 = vld [vmem:[#allocation2 + $0x210] sm:$0x8]
    %v181 = vsel %vm80, 0, %v180
    %182 = vst [vmem:[#allocation2 + $0x210] sm:$0x8] %v181
    %v183 = vld [vmem:[#allocation2 + $0x220] sm:$0x8]
    %v184 = vsel %vm80, 0, %v183
    %185 = vst [vmem:[#allocation2 + $0x220] sm:$0x8] %v184
    %v186 = vld [vmem:[#allocation2 + $0x230] sm:$0x8]
    %v187 = vsel %vm80, 0, %v186
    %188 = vst [vmem:[#allocation2 + $0x230] sm:$0x8] %v187
    %v189 = vld [vmem:[#allocation2 + $0xc] sm:$0x1]
    %v190 = vsel %vm55, 0, %v189
    %191 = vst [vmem:[#allocation2 + $0xc] sm:$0x1] %v190
    %v192 = vld [vmem:[#allocation2 + $0x1c] sm:$0x1]
    %v193 = vsel %vm55, 0, %v192
    %194 = vst [vmem:[#allocation2 + $0x1c] sm:$0x1] %v193
    %v195 = vld [vmem:[#allocation2 + $0x2c] sm:$0x1]
    %v196 = vsel %vm55, 0, %v195
    %197 = vst [vmem:[#allocation2 + $0x2c] sm:$0x1] %v196
    %v198 = vld [vmem:[#allocation2 + $0x3c] sm:$0x1]
    %v199 = vsel %vm55, 0, %v198
    %200 = vst [vmem:[#allocation2 + $0x3c] sm:$0x1] %v199
    %v201 = vld [vmem:[#allocation2 + $0x4c] sm:$0x1]
    %v202 = vsel %vm55, 0, %v201
    %203 = vst [vmem:[#allocation2 + $0x4c] sm:$0x1] %v202
    %v204 = vld [vmem:[#allocation2 + $0x5c] sm:$0x1]
    %v205 = vsel %vm55, 0, %v204
    %206 = vst [vmem:[#allocation2 + $0x5c] sm:$0x1] %v205
    %v207 = vld [vmem:[#allocation2 + $0x6c] sm:$0x1]
    %v208 = vsel %vm55, 0, %v207
    %209 = vst [vmem:[#allocation2 + $0x6c] sm:$0x1] %v208
    %v210 = vld [vmem:[#allocation2 + $0x7c] sm:$0x1]
    %v211 = vsel %vm55, 0, %v210
    %212 = vst [vmem:[#allocation2 + $0x7c] sm:$0x1] %v211
    %v213 = vld [vmem:[#allocation2 + $0x8c] sm:$0x1]
    %v214 = vsel %vm55, 0, %v213
    %215 = vst [vmem:[#allocation2 + $0x8c] sm:$0x1] %v214
    %v216 = vld [vmem:[#allocation2 + $0x9c] sm:$0x1]
    %v217 = vsel %vm55, 0, %v216
    %218 = vst [vmem:[#allocation2 + $0x9c] sm:$0x1] %v217
    %v219 = vld [vmem:[#allocation2 + $0xac] sm:$0x1]
    %v220 = vsel %vm55, 0, %v219
    %221 = vst [vmem:[#allocation2 + $0xac] sm:$0x1] %v220
    %v222 = vld [vmem:[#allocation2 + $0xbc] sm:$0x1]
    %v223 = vsel %vm55, 0, %v222
    %224 = vst [vmem:[#allocation2 + $0xbc] sm:$0x1] %v223
    %v225 = vld [vmem:[#allocation2 + $0xcc] sm:$0x1]
    %v226 = vsel %vm55, 0, %v225
    %227 = vst [vmem:[#allocation2 + $0xcc] sm:$0x1] %v226
    %v228 = vld [vmem:[#allocation2 + $0xdc] sm:$0x1]
    %v229 = vsel %vm55, 0, %v228
    %230 = vst [vmem:[#allocation2 + $0xdc] sm:$0x1] %v229
    %v231 = vld [vmem:[#allocation2 + $0xec] sm:$0x1]
    %v232 = vsel %vm55, 0, %v231
    %233 = vst [vmem:[#allocation2 + $0xec] sm:$0x1] %v232
    %v234 = vld [vmem:[#allocation2 + $0xfc] sm:$0x1]
    %v235 = vsel %vm55, 0, %v234
    %236 = vst [vmem:[#allocation2 + $0xfc] sm:$0x1] %v235
    %v237 = vld [vmem:[#allocation2 + $0x10c] sm:$0x1]
    %v238 = vsel %vm55, 0, %v237
    %239 = vst [vmem:[#allocation2 + $0x10c] sm:$0x1] %v238
    %v240 = vld [vmem:[#allocation2 + $0x11c] sm:$0x1]
    %v241 = vsel %vm55, 0, %v240
    %242 = vst [vmem:[#allocation2 + $0x11c] sm:$0x1] %v241
    %v243 = vld [vmem:[#allocation2 + $0x12c] sm:$0x1]
    %v244 = vsel %vm55, 0, %v243
    %245 = vst [vmem:[#allocation2 + $0x12c] sm:$0x1] %v244
    %v246 = vld [vmem:[#allocation2 + $0x13c] sm:$0x1]
    %v247 = vsel %vm55, 0, %v246
    %248 = vst [vmem:[#allocation2 + $0x13c] sm:$0x1] %v247
    %v249 = vld [vmem:[#allocation2 + $0x14c] sm:$0x1]
    %v250 = vsel %vm55, 0, %v249
    %251 = vst [vmem:[#allocation2 + $0x14c] sm:$0x1] %v250
    %v252 = vld [vmem:[#allocation2 + $0x15c] sm:$0x1]
    %v253 = vsel %vm55, 0, %v252
    %254 = vst [vmem:[#allocation2 + $0x15c] sm:$0x1] %v253
    %v255 = vld [vmem:[#allocation2 + $0x16c] sm:$0x1]
    %v256 = vsel %vm55, 0, %v255
    %257 = vst [vmem:[#allocation2 + $0x16c] sm:$0x1] %v256
    %v258 = vld [vmem:[#allocation2 + $0x17c] sm:$0x1]
    %v259 = vsel %vm55, 0, %v258
    %260 = vst [vmem:[#allocation2 + $0x17c] sm:$0x1] %v259
    %v261 = vld [vmem:[#allocation2 + $0x18c] sm:$0x1]
    %v262 = vsel %vm55, 0, %v261
    %263 = vst [vmem:[#allocation2 + $0x18c] sm:$0x1] %v262
    %v264 = vld [vmem:[#allocation2 + $0x19c] sm:$0x1]
    %v265 = vsel %vm55, 0, %v264
    %266 = vst [vmem:[#allocation2 + $0x19c] sm:$0x1] %v265
    %v267 = vld [vmem:[#allocation2 + $0x1ac] sm:$0x1]
    %v268 = vsel %vm55, 0, %v267
    %269 = vst [vmem:[#allocation2 + $0x1ac] sm:$0x1] %v268
    %v270 = vld [vmem:[#allocation2 + $0x1bc] sm:$0x1]
    %v271 = vsel %vm55, 0, %v270
    %272 = vst [vmem:[#allocation2 + $0x1bc] sm:$0x1] %v271
    %v273 = vld [vmem:[#allocation2 + $0x1cc] sm:$0x1]
    %v274 = vsel %vm55, 0, %v273
    %275 = vst [vmem:[#allocation2 + $0x1cc] sm:$0x1] %v274
    %v276 = vld [vmem:[#allocation2 + $0x1dc] sm:$0x1]
    %v277 = vsel %vm55, 0, %v276
    %278 = vst [vmem:[#allocation2 + $0x1dc] sm:$0x1] %v277
    %v279 = vld [vmem:[#allocation2 + $0x1ec] sm:$0x1]
    %v280 = vsel %vm55, 0, %v279
    %281 = vst [vmem:[#allocation2 + $0x1ec] sm:$0x1] %v280
    %v282 = vld [vmem:[#allocation2 + $0x1fc] sm:$0x1]
    %v283 = vsel %vm55, 0, %v282
    %284 = vst [vmem:[#allocation2 + $0x1fc] sm:$0x1] %v283
    %v285 = vld [vmem:[#allocation2 + $0x20c] sm:$0x1]
    %v286 = vsel %vm55, 0, %v285
    %287 = vst [vmem:[#allocation2 + $0x20c] sm:$0x1] %v286
    %v288 = vld [vmem:[#allocation2 + $0x21c] sm:$0x1]
    %v289 = vsel %vm55, 0, %v288
    %290 = vst [vmem:[#allocation2 + $0x21c] sm:$0x1] %v289
    %v291 = vld [vmem:[#allocation2 + $0x22c] sm:$0x1]
    %v292 = vsel %vm55, 0, %v291
    %293 = vst [vmem:[#allocation2 + $0x22c] sm:$0x1] %v292
    %v294 = vld [vmem:[#allocation2 + $0x23c] sm:$0x1]
    %v295 = vsel %vm55, 0, %v294
    %296 = vst [vmem:[#allocation2 + $0x23c] sm:$0x1] %v295
    %v297 = vld [vmem:[#allocation4] sm:$0xff]
    %v298 = vld [vmem:[#allocation4 + $0x8] sm:$0xff]
    %v299 = vld [vmem:[#allocation4 + $0x10] sm:$0xff]
    %v300 = vld [vmem:[#allocation4 + $0x18] sm:$0xff]
    %v301 = vld [vmem:[#allocation4 + $0x20] sm:$0xff]
    %v302 = vld [vmem:[#allocation4 + $0x28] sm:$0xff]
    %v303 = vld [vmem:[#allocation4 + $0x30] sm:$0xff]
    %v304 = vld [vmem:[#allocation4 + $0x38] sm:$0xff]
    %v305 = vld [vmem:[#allocation4 + $0x40] sm:$0xff]
    %v306 = vld [vmem:[#allocation4 + $0x48] sm:$0xff]
    %v307 = vld [vmem:[#allocation4 + $0x50] sm:$0xff]
    %v308 = vld [vmem:[#allocation4 + $0x58] sm:$0xff]
    %v309 = vld [vmem:[#allocation4 + $0x60] sm:$0xff]
    %v310 = vld [vmem:[#allocation4 + $0x68] sm:$0xff]
    %v311 = vld [vmem:[#allocation4 + $0x70] sm:$0xff]
    %v312 = vld [vmem:[#allocation4 + $0x78] sm:$0xff]
    %v313 = vld [vmem:[#allocation4 + $0x80] sm:$0xff]
    %v314 = vld [vmem:[#allocation4 + $0x88] sm:$0xff]
    %v315 = vld [vmem:[#allocation4 + $0x90] sm:$0xff]
    %v316 = vld [vmem:[#allocation4 + $0x98] sm:$0xff]
    %v317 = vld [vmem:[#allocation4 + $0xa0] sm:$0xff]
    %v318 = vld [vmem:[#allocation4 + $0xa8] sm:$0xff]
    %v319 = vld [vmem:[#allocation4 + $0xb0] sm:$0xff]
    %v320 = vld [vmem:[#allocation4 + $0xb8] sm:$0xff]
    %v321 = vld [vmem:[#allocation4 + $0xc0] sm:$0xff]
    %v322 = vld [vmem:[#allocation4 + $0xc8] sm:$0xff]
    %v323 = vld [vmem:[#allocation4 + $0xd0] sm:$0xff]
    %v324 = vld [vmem:[#allocation4 + $0xd8] sm:$0xff]
    %v325 = vld [vmem:[#allocation4 + $0xe0] sm:$0xff]
    %v326 = vld [vmem:[#allocation4 + $0xe8] sm:$0xff]
    %v327 = vld [vmem:[#allocation4 + $0xf0] sm:$0xff]
    %v328 = vld [vmem:[#allocation4 + $0xf8] sm:$0xff]
    %v329 = vld [vmem:[#allocation4 + $0x100] sm:$0xff]
    %v330 = vld [vmem:[#allocation4 + $0x108] sm:$0xff]
    %v331 = vld [vmem:[#allocation4 + $0x110] sm:$0xff]
    %v332 = vld [vmem:[#allocation4 + $0x118] sm:$0xff]
    %v333 = vld [vmem:[#allocation4 + $0x120] sm:$0xff]
    %v334 = vld [vmem:[#allocation4 + $0x128] sm:$0xff]
    %v335 = vld [vmem:[#allocation4 + $0x130] sm:$0xff]
    %v336 = vld [vmem:[#allocation4 + $0x138] sm:$0xff]
    %v337 = vld [vmem:[#allocation4 + $0x140] sm:$0xff]
    %v338 = vld [vmem:[#allocation4 + $0x148] sm:$0xff]
    %v339 = vld [vmem:[#allocation4 + $0x150] sm:$0xff]
    %v340 = vld [vmem:[#allocation4 + $0x158] sm:$0xff]
    %v341 = vld [vmem:[#allocation4 + $0x160] sm:$0xff]
    %v342 = vld [vmem:[#allocation4 + $0x168] sm:$0xff]
    %v343 = vld [vmem:[#allocation4 + $0x170] sm:$0xff]
    %v344 = vld [vmem:[#allocation4 + $0x178] sm:$0xff]
    %v345 = vld [vmem:[#allocation4 + $0x180] sm:$0xff]
    %v346 = vld [vmem:[#allocation4 + $0x188] sm:$0xff]
    %v347 = vld [vmem:[#allocation4 + $0x190] sm:$0xff]
    %v348 = vld [vmem:[#allocation4 + $0x198] sm:$0xff]
    %v349 = vld [vmem:[#allocation4 + $0x1a0] sm:$0xff]
    %v350 = vld [vmem:[#allocation4 + $0x1a8] sm:$0xff]
    %v351 = vld [vmem:[#allocation4 + $0x1b0] sm:$0xff]
    %v352 = vld [vmem:[#allocation4 + $0x1b8] sm:$0xff]
    %v353 = vld [vmem:[#allocation4 + $0x1c0] sm:$0xff]
    %v354 = vld [vmem:[#allocation4 + $0x1c8] sm:$0xff]
    %v355 = vld [vmem:[#allocation4 + $0x1d0] sm:$0xff]
    %v356 = vld [vmem:[#allocation4 + $0x1d8] sm:$0xff]
    %v357 = vld [vmem:[#allocation4 + $0x1e0] sm:$0xff]
    %v358 = vld [vmem:[#allocation4 + $0x1e8] sm:$0xff]
    %v359 = vld [vmem:[#allocation4 + $0x1f0] sm:$0xff]
    %v360 = vld [vmem:[#allocation4 + $0x1f8] sm:$0xff]
    %v361 = vpack.c.bf16 %v298, %v297
    %v362 = vpack.c.bf16 %v300, %v299
    %v363 = vpack.c.bf16 %v302, %v301
    %v364 = vpack.c.bf16 %v304, %v303
    %v365 = vpack.c.bf16 %v306, %v305
    %v366 = vpack.c.bf16 %v308, %v307
    %v367 = vpack.c.bf16 %v310, %v309
    %v368 = vpack.c.bf16 %v312, %v311
    %v369 = vpack.c.bf16 %v314, %v313
    %v370 = vpack.c.bf16 %v316, %v315
    %v371 = vpack.c.bf16 %v318, %v317
    %v372 = vpack.c.bf16 %v320, %v319
    %v373 = vpack.c.bf16 %v322, %v321
    %v374 = vpack.c.bf16 %v324, %v323
    %v375 = vpack.c.bf16 %v326, %v325
    %v376 = vpack.c.bf16 %v328, %v327
    %v377 = vpack.c.bf16 %v330, %v329
    %v378 = vpack.c.bf16 %v332, %v331
    %v379 = vpack.c.bf16 %v334, %v333
    %v380 = vpack.c.bf16 %v336, %v335
    %v381 = vpack.c.bf16 %v338, %v337
    %v382 = vpack.c.bf16 %v340, %v339
    %v383 = vpack.c.bf16 %v342, %v341
    %v384 = vpack.c.bf16 %v344, %v343
    %v385 = vpack.c.bf16 %v346, %v345
    %v386 = vpack.c.bf16 %v348, %v347
    %v387 = vpack.c.bf16 %v350, %v349
    %v388 = vpack.c.bf16 %v352, %v351
    %v389 = vpack.c.bf16 %v354, %v353
    %v390 = vpack.c.bf16 %v356, %v355
    %v391 = vpack.c.bf16 %v358, %v357
    %v392 = vpack.c.bf16 %v360, %v359
    %v425 = vunpack.c.l.b16 %v361
    %v426 = vunpack.c.h.b16 %v361
    %v427 = vunpack.c.l.b16 %v362
    %v428 = vunpack.c.h.b16 %v362
    %v429 = vunpack.c.l.b16 %v363
    %v430 = vunpack.c.h.b16 %v363
    %v431 = vunpack.c.l.b16 %v364
    %v432 = vunpack.c.h.b16 %v364
    %v433 = vunpack.c.l.b16 %v365
    %v434 = vunpack.c.h.b16 %v365
    %v435 = vunpack.c.l.b16 %v366
    %v436 = vunpack.c.h.b16 %v366
    %v437 = vunpack.c.l.b16 %v367
    %v438 = vunpack.c.h.b16 %v367
    %v439 = vunpack.c.l.b16 %v368
    %v440 = vunpack.c.h.b16 %v368
    %v441 = vunpack.c.l.b16 %v369
    %v442 = vunpack.c.h.b16 %v369
    %v443 = vunpack.c.l.b16 %v370
    %v444 = vunpack.c.h.b16 %v370
    %v445 = vunpack.c.l.b16 %v371
    %v446 = vunpack.c.h.b16 %v371
    %v447 = vunpack.c.l.b16 %v372
    %v448 = vunpack.c.h.b16 %v372
    %v449 = vunpack.c.l.b16 %v373
    %v450 = vunpack.c.h.b16 %v373
    %v451 = vunpack.c.l.b16 %v374
    %v452 = vunpack.c.h.b16 %v374
    %v453 = vunpack.c.l.b16 %v375
    %v454 = vunpack.c.h.b16 %v375
    %v455 = vunpack.c.l.b16 %v376
    %v456 = vunpack.c.h.b16 %v376
    %v457 = vunpack.c.l.b16 %v377
    %v458 = vunpack.c.h.b16 %v377
    %v459 = vunpack.c.l.b16 %v378
    %v460 = vunpack.c.h.b16 %v378
    %v461 = vunpack.c.l.b16 %v379
    %v462 = vunpack.c.h.b16 %v379
    %v463 = vunpack.c.l.b16 %v380
    %v464 = vunpack.c.h.b16 %v380
    %v465 = vunpack.c.l.b16 %v381
    %v466 = vunpack.c.h.b16 %v381
    %v467 = vunpack.c.l.b16 %v382
    %v468 = vunpack.c.h.b16 %v382
    %v469 = vunpack.c.l.b16 %v383
    %v470 = vunpack.c.h.b16 %v383
    %v471 = vunpack.c.l.b16 %v384
    %v472 = vunpack.c.h.b16 %v384
    %v473 = vunpack.c.l.b16 %v385
    %v474 = vunpack.c.h.b16 %v385
    %v475 = vunpack.c.l.b16 %v386
    %v476 = vunpack.c.h.b16 %v386
    %v477 = vunpack.c.l.b16 %v387
    %v478 = vunpack.c.h.b16 %v387
    %v479 = vunpack.c.l.b16 %v388
    %v480 = vunpack.c.h.b16 %v388
    %v481 = vunpack.c.l.b16 %v389
    %v482 = vunpack.c.h.b16 %v389
    %v483 = vunpack.c.l.b16 %v390
    %v484 = vunpack.c.h.b16 %v390
    %v485 = vunpack.c.l.b16 %v391
    %v486 = vunpack.c.h.b16 %v391
    %v487 = vunpack.c.l.b16 %v392
    %v488 = vunpack.c.h.b16 %v392
    %v489 = vpack.c.b16 %v425, %v425
    %v490 = vpack.c.b16 %v426, %v426
    %v491 = vpack.c.b16 %v427, %v427
    %v492 = vpack.c.b16 %v428, %v428
    %v493 = vpack.c.b16 %v429, %v429
    %v494 = vpack.c.b16 %v430, %v430
    %v495 = vpack.c.b16 %v431, %v431
    %v496 = vpack.c.b16 %v432, %v432
    %v497 = vpack.c.b16 %v433, %v433
    %v498 = vpack.c.b16 %v434, %v434
    %v499 = vpack.c.b16 %v435, %v435
    %v500 = vpack.c.b16 %v436, %v436
    %v501 = vpack.c.b16 %v437, %v437
    %v502 = vpack.c.b16 %v438, %v438
    %v503 = vpack.c.b16 %v439, %v439
    %v504 = vpack.c.b16 %v440, %v440
    %v505 = vpack.c.b16 %v441, %v441
    %v506 = vpack.c.b16 %v442, %v442
    %v507 = vpack.c.b16 %v443, %v443
    %v508 = vpack.c.b16 %v444, %v444
    %v509 = vpack.c.b16 %v445, %v445
    %v510 = vpack.c.b16 %v446, %v446
    %v511 = vpack.c.b16 %v447, %v447
    %v512 = vpack.c.b16 %v448, %v448
    %v513 = vpack.c.b16 %v449, %v449
    %v514 = vpack.c.b16 %v450, %v450
    %v515 = vpack.c.b16 %v451, %v451
    %v516 = vpack.c.b16 %v452, %v452
    %v517 = vpack.c.b16 %v453, %v453
    %v518 = vpack.c.b16 %v454, %v454
    %v519 = vpack.c.b16 %v455, %v455
    %v520 = vpack.c.b16 %v456, %v456
    %v521 = vpack.c.b16 %v457, %v457
    %v522 = vpack.c.b16 %v458, %v458
    %v523 = vpack.c.b16 %v459, %v459
    %v524 = vpack.c.b16 %v460, %v460
    %v525 = vpack.c.b16 %v461, %v461
    %v526 = vpack.c.b16 %v462, %v462
    %v527 = vpack.c.b16 %v463, %v463
    %v528 = vpack.c.b16 %v464, %v464
    %v529 = vpack.c.b16 %v465, %v465
    %v530 = vpack.c.b16 %v466, %v466
    %v531 = vpack.c.b16 %v467, %v467
    %v532 = vpack.c.b16 %v468, %v468
    %v533 = vpack.c.b16 %v469, %v469
    %v534 = vpack.c.b16 %v470, %v470
    %v535 = vpack.c.b16 %v471, %v471
    %v536 = vpack.c.b16 %v472, %v472
    %v537 = vpack.c.b16 %v473, %v473
    %v538 = vpack.c.b16 %v474, %v474
    %v539 = vpack.c.b16 %v475, %v475
    %v540 = vpack.c.b16 %v476, %v476
    %v541 = vpack.c.b16 %v477, %v477
    %v542 = vpack.c.b16 %v478, %v478
    %v543 = vpack.c.b16 %v479, %v479
    %v544 = vpack.c.b16 %v480, %v480
    %v545 = vpack.c.b16 %v481, %v481
    %v546 = vpack.c.b16 %v482, %v482
    %v547 = vpack.c.b16 %v483, %v483
    %v548 = vpack.c.b16 %v484, %v484
    %v549 = vpack.c.b16 %v485, %v485
    %v550 = vpack.c.b16 %v486, %v486
    %v551 = vpack.c.b16 %v487, %v487
    %v552 = vpack.c.b16 %v488, %v488
    %s617 = scalar_lea.vmem [#allocation2], 16
    %618 = vst.msk [vmem:[%s617 + $0x4] sm:$0xf] %vm49, %v489
    %619 = vst.msk [vmem:[%s617 + $0x8] sm:$0xf] %vm49, %v490
    %620 = vst.msk [vmem:[%s617 + $0x14] sm:$0xf] %vm49, %v491
    %621 = vst.msk [vmem:[%s617 + $0x18] sm:$0xf] %vm49, %v492
    %622 = vst.msk [vmem:[%s617 + $0x24] sm:$0xf] %vm49, %v493
    %623 = vst.msk [vmem:[%s617 + $0x28] sm:$0xf] %vm49, %v494
    %624 = vst.msk [vmem:[%s617 + $0x34] sm:$0xf] %vm49, %v495
    %625 = vst.msk [vmem:[%s617 + $0x38] sm:$0xf] %vm49, %v496
    %626 = vst.msk [vmem:[%s617 + $0x44] sm:$0xf] %vm49, %v497
    %627 = vst.msk [vmem:[%s617 + $0x48] sm:$0xf] %vm49, %v498
    %628 = vst.msk [vmem:[%s617 + $0x54] sm:$0xf] %vm49, %v499
    %629 = vst.msk [vmem:[%s617 + $0x58] sm:$0xf] %vm49, %v500
    %630 = vst.msk [vmem:[%s617 + $0x64] sm:$0xf] %vm49, %v501
    %631 = vst.msk [vmem:[%s617 + $0x68] sm:$0xf] %vm49, %v502
    %632 = vst.msk [vmem:[%s617 + $0x74] sm:$0xf] %vm49, %v503
    %633 = vst.msk [vmem:[%s617 + $0x78] sm:$0xf] %vm49, %v504
    %634 = vst.msk [vmem:[%s617 + $0x84] sm:$0xf] %vm49, %v505
    %635 = vst.msk [vmem:[%s617 + $0x88] sm:$0xf] %vm49, %v506
    %636 = vst.msk [vmem:[%s617 + $0x94] sm:$0xf] %vm49, %v507
    %637 = vst.msk [vmem:[%s617 + $0x98] sm:$0xf] %vm49, %v508
    %638 = vst.msk [vmem:[%s617 + $0xa4] sm:$0xf] %vm49, %v509
    %639 = vst.msk [vmem:[%s617 + $0xa8] sm:$0xf] %vm49, %v510
    %640 = vst.msk [vmem:[%s617 + $0xb4] sm:$0xf] %vm49, %v511
    %641 = vst.msk [vmem:[%s617 + $0xb8] sm:$0xf] %vm49, %v512
    %642 = vst.msk [vmem:[%s617 + $0xc4] sm:$0xf] %vm49, %v513
    %643 = vst.msk [vmem:[%s617 + $0xc8] sm:$0xf] %vm49, %v514
    %644 = vst.msk [vmem:[%s617 + $0xd4] sm:$0xf] %vm49, %v515
    %645 = vst.msk [vmem:[%s617 + $0xd8] sm:$0xf] %vm49, %v516
    %646 = vst.msk [vmem:[%s617 + $0xe4] sm:$0xf] %vm49, %v517
    %647 = vst.msk [vmem:[%s617 + $0xe8] sm:$0xf] %vm49, %v518
    %648 = vst.msk [vmem:[%s617 + $0xf4] sm:$0xf] %vm49, %v519
    %649 = vst.msk [vmem:[%s617 + $0xf8] sm:$0xf] %vm49, %v520
    %650 = vst.msk [vmem:[%s617 + $0x124] sm:$0xf] %vm49, %v521
    %651 = vst.msk [vmem:[%s617 + $0x128] sm:$0xf] %vm49, %v522
    %652 = vst.msk [vmem:[%s617 + $0x134] sm:$0xf] %vm49, %v523
    %653 = vst.msk [vmem:[%s617 + $0x138] sm:$0xf] %vm49, %v524
    %654 = vst.msk [vmem:[%s617 + $0x144] sm:$0xf] %vm49, %v525
    %655 = vst.msk [vmem:[%s617 + $0x148] sm:$0xf] %vm49, %v526
    %656 = vst.msk [vmem:[%s617 + $0x154] sm:$0xf] %vm49, %v527
    %657 = vst.msk [vmem:[%s617 + $0x158] sm:$0xf] %vm49, %v528
    %658 = vst.msk [vmem:[%s617 + $0x164] sm:$0xf] %vm49, %v529
    %659 = vst.msk [vmem:[%s617 + $0x168] sm:$0xf] %vm49, %v530
    %660 = vst.msk [vmem:[%s617 + $0x174] sm:$0xf] %vm49, %v531
    %661 = vst.msk [vmem:[%s617 + $0x178] sm:$0xf] %vm49, %v532
    %662 = vst.msk [vmem:[%s617 + $0x184] sm:$0xf] %vm49, %v533
    %663 = vst.msk [vmem:[%s617 + $0x188] sm:$0xf] %vm49, %v534
    %664 = vst.msk [vmem:[%s617 + $0x194] sm:$0xf] %vm49, %v535
    %665 = vst.msk [vmem:[%s617 + $0x198] sm:$0xf] %vm49, %v536
    %666 = vst.msk [vmem:[%s617 + $0x1a4] sm:$0xf] %vm49, %v537
    %667 = vst.msk [vmem:[%s617 + $0x1a8] sm:$0xf] %vm49, %v538
    %668 = vst.msk [vmem:[%s617 + $0x1b4] sm:$0xf] %vm49, %v539
    %669 = vst.msk [vmem:[%s617 + $0x1b8] sm:$0xf] %vm49, %v540
    %670 = vst.msk [vmem:[%s617 + $0x1c4] sm:$0xf] %vm49, %v541
    %671 = vst.msk [vmem:[%s617 + $0x1c8] sm:$0xf] %vm49, %v542
    %672 = vst.msk [vmem:[%s617 + $0x1d4] sm:$0xf] %vm49, %v543
    %673 = vst.msk [vmem:[%s617 + $0x1d8] sm:$0xf] %vm49, %v544
    %674 = vst.msk [vmem:[%s617 + $0x1e4] sm:$0xf] %vm49, %v545
    %675 = vst.msk [vmem:[%s617 + $0x1e8] sm:$0xf] %vm49, %v546
    %676 = vst.msk [vmem:[%s617 + $0x1f4] sm:$0xf] %vm49, %v547
    %677 = vst.msk [vmem:[%s617 + $0x1f8] sm:$0xf] %vm49, %v548
    %678 = vst.msk [vmem:[%s617 + $0x204] sm:$0xf] %vm49, %v549
    %679 = vst.msk [vmem:[%s617 + $0x208] sm:$0xf] %vm49, %v550
    %680 = vst.msk [vmem:[%s617 + $0x214] sm:$0xf] %vm49, %v551
    %681 = vst.msk [vmem:[%s617 + $0x218] sm:$0xf] %vm49, %v552
    %v682 = vld [vmem:[%s1] sm:$0xf]
    %v683 = vld [vmem:[%s1 + $0x4] sm:$0x1]
    %v684 = vld [vmem:[%s2] sm:$0x1]
    %v685 = vld [vmem:[#allocation2] sm:$0x8]
    %v686 = vld [vmem:[#allocation2 + $0x4] sm:$0xf]
    %v687 = vld [vmem:[#allocation2 + $0x8] sm:$0xf]
    %v688 = vld [vmem:[#allocation2 + $0x10] sm:$0x8]
    %v689 = vld [vmem:[#allocation2 + $0x14] sm:$0xf]
    %v690 = vld [vmem:[#allocation2 + $0x18] sm:$0xf]
    %v691 = vld [vmem:[#allocation2 + $0x20] sm:$0x8]
    %v692 = vld [vmem:[#allocation2 + $0x24] sm:$0xf]
    %v693 = vld [vmem:[#allocation2 + $0x28] sm:$0xf]
    %v694 = vld [vmem:[#allocation2 + $0x30] sm:$0x8]
    %v695 = vld [vmem:[#allocation2 + $0x34] sm:$0xf]
    %v696 = vld [vmem:[#allocation2 + $0x38] sm:$0xf]
    %v697 = vld [vmem:[#allocation2 + $0x40] sm:$0x8]
    %v698 = vld [vmem:[#allocation2 + $0x44] sm:$0xf]
    %v699 = vld [vmem:[#allocation2 + $0x48] sm:$0xf]
    %v700 = vld [vmem:[#allocation2 + $0x50] sm:$0x8]
    %v701 = vld [vmem:[#allocation2 + $0x54] sm:$0xf]
    %v702 = vld [vmem:[#allocation2 + $0x58] sm:$0xf]
    %v703 = vld [vmem:[#allocation2 + $0x60] sm:$0x8]
    %v704 = vld [vmem:[#allocation2 + $0x64] sm:$0xf]
    %v705 = vld [vmem:[#allocation2 + $0x68] sm:$0xf]
    %v706 = vld [vmem:[#allocation2 + $0x70] sm:$0x8]
    %v707 = vld [vmem:[#allocation2 + $0x74] sm:$0xf]
    %v708 = vld [vmem:[#allocation2 + $0x78] sm:$0xf]
    %v709 = vld [vmem:[#allocation2 + $0x80] sm:$0x8]
    %v710 = vld [vmem:[#allocation2 + $0x84] sm:$0xf]
    %v711 = vld [vmem:[#allocation2 + $0x88] sm:$0xf]
    %v712 = vld [vmem:[#allocation2 + $0x90] sm:$0x8]
    %v713 = vld [vmem:[#allocation2 + $0x94] sm:$0xf]
    %v714 = vld [vmem:[#allocation2 + $0x98] sm:$0xf]
    %v715 = vld [vmem:[#allocation2 + $0xa0] sm:$0x8]
    %v716 = vld [vmem:[#allocation2 + $0xa4] sm:$0xf]
    %v717 = vld [vmem:[#allocation2 + $0xa8] sm:$0xf]
    %v718 = vld [vmem:[#allocation2 + $0xb0] sm:$0x8]
    %v719 = vld [vmem:[#allocation2 + $0xb4] sm:$0xf]
    %v720 = vld [vmem:[#allocation2 + $0xb8] sm:$0xf]
    %v721 = vld [vmem:[#allocation2 + $0xc0] sm:$0x8]
    %v722 = vld [vmem:[#allocation2 + $0xc4] sm:$0xf]
    %v723 = vld [vmem:[#allocation2 + $0xc8] sm:$0xf]
    %v724 = vld [vmem:[#allocation2 + $0xd0] sm:$0x8]
    %v725 = vld [vmem:[#allocation2 + $0xd4] sm:$0xf]
    %v726 = vld [vmem:[#allocation2 + $0xd8] sm:$0xf]
    %v727 = vld [vmem:[#allocation2 + $0xe0] sm:$0x8]
    %v728 = vld [vmem:[#allocation2 + $0xe4] sm:$0xf]
    %v729 = vld [vmem:[#allocation2 + $0xe8] sm:$0xf]
    %v730 = vld [vmem:[#allocation2 + $0xf0] sm:$0x8]
    %v731 = vld [vmem:[#allocation2 + $0xf4] sm:$0xf]
    %v732 = vld [vmem:[#allocation2 + $0xf8] sm:$0xf]
    %v733 = vld [vmem:[#allocation2 + $0x120] sm:$0x8]
    %v734 = vld [vmem:[#allocation2 + $0x124] sm:$0xf]
    %v735 = vld [vmem:[#allocation2 + $0x128] sm:$0xf]
    %v736 = vld [vmem:[#allocation2 + $0x130] sm:$0x8]
    %v737 = vld [vmem:[#allocation2 + $0x134] sm:$0xf]
    %v738 = vld [vmem:[#allocation2 + $0x138] sm:$0xf]
    %v739 = vld [vmem:[#allocation2 + $0x140] sm:$0x8]
    %v740 = vld [vmem:[#allocation2 + $0x144] sm:$0xf]
    %v741 = vld [vmem:[#allocation2 + $0x148] sm:$0xf]
    %v742 = vld [vmem:[#allocation2 + $0x150] sm:$0x8]
    %v743 = vld [vmem:[#allocation2 + $0x154] sm:$0xf]
    %v744 = vld [vmem:[#allocation2 + $0x158] sm:$0xf]
    %v745 = vld [vmem:[#allocation2 + $0x160] sm:$0x8]
    %v746 = vld [vmem:[#allocation2 + $0x164] sm:$0xf]
    %v747 = vld [vmem:[#allocation2 + $0x168] sm:$0xf]
    %v748 = vld [vmem:[#allocation2 + $0x170] sm:$0x8]
    %v749 = vld [vmem:[#allocation2 + $0x174] sm:$0xf]
    %v750 = vld [vmem:[#allocation2 + $0x178] sm:$0xf]
    %v751 = vld [vmem:[#allocation2 + $0x180] sm:$0x8]
    %v752 = vld [vmem:[#allocation2 + $0x184] sm:$0xf]
    %v753 = vld [vmem:[#allocation2 + $0x188] sm:$0xf]
    %v754 = vld [vmem:[#allocation2 + $0x190] sm:$0x8]
    %v755 = vld [vmem:[#allocation2 + $0x194] sm:$0xf]
    %v756 = vld [vmem:[#allocation2 + $0x198] sm:$0xf]
    %v757 = vld [vmem:[#allocation2 + $0x1a0] sm:$0x8]
    %v758 = vld [vmem:[#allocation2 + $0x1a4] sm:$0xf]
    %v759 = vld [vmem:[#allocation2 + $0x1a8] sm:$0xf]
    %v760 = vld [vmem:[#allocation2 + $0x1b0] sm:$0x8]
    %v761 = vld [vmem:[#allocation2 + $0x1b4] sm:$0xf]
    %v762 = vld [vmem:[#allocation2 + $0x1b8] sm:$0xf]
    %v763 = vld [vmem:[#allocation2 + $0x1c0] sm:$0x8]
    %v764 = vld [vmem:[#allocation2 + $0x1c4] sm:$0xf]
    %v765 = vld [vmem:[#allocation2 + $0x1c8] sm:$0xf]
    %v766 = vld [vmem:[#allocation2 + $0x1d0] sm:$0x8]
    %v767 = vld [vmem:[#allocation2 + $0x1d4] sm:$0xf]
    %v768 = vld [vmem:[#allocation2 + $0x1d8] sm:$0xf]
    %v769 = vld [vmem:[#allocation2 + $0x1e0] sm:$0x8]
    %v770 = vld [vmem:[#allocation2 + $0x1e4] sm:$0xf]
    %v771 = vld [vmem:[#allocation2 + $0x1e8] sm:$0xf]
    %v772 = vld [vmem:[#allocation2 + $0x1f0] sm:$0x8]
    %v773 = vld [vmem:[#allocation2 + $0x1f4] sm:$0xf]
    %v774 = vld [vmem:[#allocation2 + $0x1f8] sm:$0xf]
    %v775 = vld [vmem:[#allocation2 + $0x200] sm:$0x8]
    %v776 = vld [vmem:[#allocation2 + $0x204] sm:$0xf]
    %v777 = vld [vmem:[#allocation2 + $0x208] sm:$0xf]
    %v778 = vld [vmem:[#allocation2 + $0x210] sm:$0x8]
    %v779 = vld [vmem:[#allocation2 + $0x214] sm:$0xf]
    %v780 = vld [vmem:[#allocation2 + $0x218] sm:$0xf]
    %v782 = vpack.i.b16 %v682, %v682
    %v784 = vlaneseq
    %v785 = vshrl.u32 %v784, 7
    %v786 = vsub.s32 0, %v785
    %v787 = vrot.slane %v782, %v786
    %v789 = vunpack.c.l.b16 %v787
    %v790 = vpack.c.b16 %v789, %v789
    %v792 = vmul.bf16 %v685, %v790
    %v793 = vmul.bf16 %v686, %v790
    %v794 = vmul.bf16 %v687, %v790
    %v795 = vmul.bf16 %v688, %v790
    %v796 = vmul.bf16 %v689, %v790
    %v797 = vmul.bf16 %v690, %v790
    %v798 = vmul.bf16 %v691, %v790
    %v799 = vmul.bf16 %v692, %v790
    %v800 = vmul.bf16 %v693, %v790
    %v801 = vmul.bf16 %v694, %v790
    %v802 = vmul.bf16 %v695, %v790
    %v803 = vmul.bf16 %v696, %v790
    %v804 = vmul.bf16 %v697, %v790
    %v805 = vmul.bf16 %v698, %v790
    %v806 = vmul.bf16 %v699, %v790
    %v807 = vmul.bf16 %v700, %v790
    %v808 = vmul.bf16 %v701, %v790
    %v809 = vmul.bf16 %v702, %v790
    %v810 = vmul.bf16 %v703, %v790
    %v811 = vmul.bf16 %v704, %v790
    %v812 = vmul.bf16 %v705, %v790
    %v813 = vmul.bf16 %v706, %v790
    %v814 = vmul.bf16 %v707, %v790
    %v815 = vmul.bf16 %v708, %v790
    %v816 = vmul.bf16 %v709, %v790
    %v817 = vmul.bf16 %v710, %v790
    %v818 = vmul.bf16 %v711, %v790
    %v819 = vmul.bf16 %v712, %v790
    %v820 = vmul.bf16 %v713, %v790
    %v821 = vmul.bf16 %v714, %v790
    %v822 = vmul.bf16 %v715, %v790
    %v823 = vmul.bf16 %v716, %v790
    %v824 = vmul.bf16 %v717, %v790
    %v825 = vmul.bf16 %v718, %v790
    %v826 = vmul.bf16 %v719, %v790
    %v827 = vmul.bf16 %v720, %v790
    %v828 = vmul.bf16 %v721, %v790
    %v829 = vmul.bf16 %v722, %v790
    %v830 = vmul.bf16 %v723, %v790
    %v831 = vmul.bf16 %v724, %v790
    %v832 = vmul.bf16 %v725, %v790
    %v833 = vmul.bf16 %v726, %v790
    %v834 = vmul.bf16 %v727, %v790
    %v835 = vmul.bf16 %v728, %v790
    %v836 = vmul.bf16 %v729, %v790
    %v837 = vmul.bf16 %v730, %v790
    %v838 = vmul.bf16 %v731, %v790
    %v839 = vmul.bf16 %v732, %v790
    %v840 = vmul.bf16 %v733, %v790
    %v841 = vmul.bf16 %v734, %v790
    %v842 = vmul.bf16 %v735, %v790
    %v843 = vmul.bf16 %v736, %v790
    %v844 = vmul.bf16 %v737, %v790
    %v845 = vmul.bf16 %v738, %v790
    %v846 = vmul.bf16 %v739, %v790
    %v847 = vmul.bf16 %v740, %v790
    %v848 = vmul.bf16 %v741, %v790
    %v849 = vmul.bf16 %v742, %v790
    %v850 = vmul.bf16 %v743, %v790
    %v851 = vmul.bf16 %v744, %v790
    %v852 = vmul.bf16 %v745, %v790
    %v853 = vmul.bf16 %v746, %v790
    %v854 = vmul.bf16 %v747, %v790
    %v855 = vmul.bf16 %v748, %v790
    %v856 = vmul.bf16 %v749, %v790
    %v857 = vmul.bf16 %v750, %v790
    %v858 = vmul.bf16 %v751, %v790
    %v859 = vmul.bf16 %v752, %v790
    %v860 = vmul.bf16 %v753, %v790
    %v861 = vmul.bf16 %v754, %v790
    %v862 = vmul.bf16 %v755, %v790
    %v863 = vmul.bf16 %v756, %v790
    %v864 = vmul.bf16 %v757, %v790
    %v865 = vmul.bf16 %v758, %v790
    %v866 = vmul.bf16 %v759, %v790
    %v867 = vmul.bf16 %v760, %v790
    %v868 = vmul.bf16 %v761, %v790
    %v869 = vmul.bf16 %v762, %v790
    %v870 = vmul.bf16 %v763, %v790
    %v871 = vmul.bf16 %v764, %v790
    %v872 = vmul.bf16 %v765, %v790
    %v873 = vmul.bf16 %v766, %v790
    %v874 = vmul.bf16 %v767, %v790
    %v875 = vmul.bf16 %v768, %v790
    %v876 = vmul.bf16 %v769, %v790
    %v877 = vmul.bf16 %v770, %v790
    %v878 = vmul.bf16 %v771, %v790
    %v879 = vmul.bf16 %v772, %v790
    %v880 = vmul.bf16 %v773, %v790
    %v881 = vmul.bf16 %v774, %v790
    %v882 = vmul.bf16 %v775, %v790
    %v883 = vmul.bf16 %v776, %v790
    %v884 = vmul.bf16 %v777, %v790
    %v885 = vmul.bf16 %v778, %v790
    %v886 = vmul.bf16 %v779, %v790
    %v887 = vmul.bf16 %v780, %v790
    %v888 = vshrl.u32 %v682, 16
    %v889 = vpack.i.b16 %v888, %v888
    %v891 = vlaneseq
    %v892 = vshrl.u32 %v891, 7
    %v893 = vsub.s32 0, %v892
    %v894 = vrot.slane %v889, %v893
    %v896 = vunpack.c.l.b16 %v894
    %v897 = vpack.c.b16 %v896, %v896
    %v899 = vmul.bf16 %v686, %v897
    %v900 = vmul.bf16 %v687, %v897
    %v901 = vmul.bf16 %v689, %v897
    %v902 = vmul.bf16 %v690, %v897
    %v903 = vmul.bf16 %v692, %v897
    %v904 = vmul.bf16 %v693, %v897
    %v905 = vmul.bf16 %v695, %v897
    %v906 = vmul.bf16 %v696, %v897
    %v907 = vmul.bf16 %v698, %v897
    %v908 = vmul.bf16 %v699, %v897
    %v909 = vmul.bf16 %v701, %v897
    %v910 = vmul.bf16 %v702, %v897
    %v911 = vmul.bf16 %v704, %v897
    %v912 = vmul.bf16 %v705, %v897
    %v913 = vmul.bf16 %v707, %v897
    %v914 = vmul.bf16 %v708, %v897
    %v915 = vmul.bf16 %v710, %v897
    %v916 = vmul.bf16 %v711, %v897
    %v917 = vmul.bf16 %v713, %v897
    %v918 = vmul.bf16 %v714, %v897
    %v919 = vmul.bf16 %v716, %v897
    %v920 = vmul.bf16 %v717, %v897
    %v921 = vmul.bf16 %v719, %v897
    %v922 = vmul.bf16 %v720, %v897
    %v923 = vmul.bf16 %v722, %v897
    %v924 = vmul.bf16 %v723, %v897
    %v925 = vmul.bf16 %v725, %v897
    %v926 = vmul.bf16 %v726, %v897
    %v927 = vmul.bf16 %v728, %v897
    %v928 = vmul.bf16 %v729, %v897
    %v929 = vmul.bf16 %v731, %v897
    %v930 = vmul.bf16 %v732, %v897
    %v931 = vmul.bf16 %v734, %v897
    %v932 = vmul.bf16 %v735, %v897
    %v933 = vmul.bf16 %v737, %v897
    %v934 = vmul.bf16 %v738, %v897
    %v935 = vmul.bf16 %v740, %v897
    %v936 = vmul.bf16 %v741, %v897
    %v937 = vmul.bf16 %v743, %v897
    %v938 = vmul.bf16 %v744, %v897
    %v939 = vmul.bf16 %v746, %v897
    %v940 = vmul.bf16 %v747, %v897
    %v941 = vmul.bf16 %v749, %v897
    %v942 = vmul.bf16 %v750, %v897
    %v943 = vmul.bf16 %v752, %v897
    %v944 = vmul.bf16 %v753, %v897
    %v945 = vmul.bf16 %v755, %v897
    %v946 = vmul.bf16 %v756, %v897
    %v947 = vmul.bf16 %v758, %v897
    %v948 = vmul.bf16 %v759, %v897
    %v949 = vmul.bf16 %v761, %v897
    %v950 = vmul.bf16 %v762, %v897
    %v951 = vmul.bf16 %v764, %v897
    %v952 = vmul.bf16 %v765, %v897
    %v953 = vmul.bf16 %v767, %v897
    %v954 = vmul.bf16 %v768, %v897
    %v955 = vmul.bf16 %v770, %v897
    %v956 = vmul.bf16 %v771, %v897
    %v957 = vmul.bf16 %v773, %v897
    %v958 = vmul.bf16 %v774, %v897
    %v959 = vmul.bf16 %v776, %v897
    %v960 = vmul.bf16 %v777, %v897
    %v961 = vmul.bf16 %v779, %v897
    %v962 = vmul.bf16 %v780, %v897
    %v963 = vld [vmem:[#allocation2 + $0xc] sm:$0x1]
    %v964 = vld [vmem:[#allocation2 + $0x1c] sm:$0x1]
    %v965 = vld [vmem:[#allocation2 + $0x2c] sm:$0x1]
    %v966 = vld [vmem:[#allocation2 + $0x3c] sm:$0x1]
    %v967 = vld [vmem:[#allocation2 + $0x4c] sm:$0x1]
    %v968 = vld [vmem:[#allocation2 + $0x5c] sm:$0x1]
    %v969 = vld [vmem:[#allocation2 + $0x6c] sm:$0x1]
    %v970 = vld [vmem:[#allocation2 + $0x7c] sm:$0x1]
    %v971 = vld [vmem:[#allocation2 + $0x8c] sm:$0x1]
    %v972 = vld [vmem:[#allocation2 + $0x9c] sm:$0x1]
    %v973 = vld [vmem:[#allocation2 + $0xac] sm:$0x1]
    %v974 = vld [vmem:[#allocation2 + $0xbc] sm:$0x1]
    %v975 = vld [vmem:[#allocation2 + $0xcc] sm:$0x1]
    %v976 = vld [vmem:[#allocation2 + $0xdc] sm:$0x1]
    %v977 = vld [vmem:[#allocation2 + $0xec] sm:$0x1]
    %v978 = vld [vmem:[#allocation2 + $0xfc] sm:$0x1]
    %v979 = vld [vmem:[#allocation2 + $0x12c] sm:$0x1]
    %v980 = vld [vmem:[#allocation2 + $0x13c] sm:$0x1]
    %v981 = vld [vmem:[#allocation2 + $0x14c] sm:$0x1]
    %v982 = vld [vmem:[#allocation2 + $0x15c] sm:$0x1]
    %v983 = vld [vmem:[#allocation2 + $0x16c] sm:$0x1]
    %v984 = vld [vmem:[#allocation2 + $0x17c] sm:$0x1]
    %v985 = vld [vmem:[#allocation2 + $0x18c] sm:$0x1]
    %v986 = vld [vmem:[#allocation2 + $0x19c] sm:$0x1]
    %v987 = vld [vmem:[#allocation2 + $0x1ac] sm:$0x1]
    %v988 = vld [vmem:[#allocation2 + $0x1bc] sm:$0x1]
    %v989 = vld [vmem:[#allocation2 + $0x1cc] sm:$0x1]
    %v990 = vld [vmem:[#allocation2 + $0x1dc] sm:$0x1]
    %v991 = vld [vmem:[#allocation2 + $0x1ec] sm:$0x1]
    %v992 = vld [vmem:[#allocation2 + $0x1fc] sm:$0x1]
    %v993 = vld [vmem:[#allocation2 + $0x20c] sm:$0x1]
    %v994 = vld [vmem:[#allocation2 + $0x21c] sm:$0x1]
    %v995 = vlaneseq
    %v996 = vshrl.u32 %v995, 7
    %v997 = vsub.s32 1, %v996
    %v998 = vrot.slane %v782, %v997
    %v1000 = vunpack.c.l.b16 %v998
    %v1001 = vpack.c.b16 %v1000, %v1000
    %v1003 = vmul.bf16 %v686, %v1001
    %v1004 = vmul.bf16 %v687, %v1001
    %v1005 = vmul.bf16 %v963, %v1001
    %v1006 = vmul.bf16 %v689, %v1001
    %v1007 = vmul.bf16 %v690, %v1001
    %v1008 = vmul.bf16 %v964, %v1001
    %v1009 = vmul.bf16 %v692, %v1001
    %v1010 = vmul.bf16 %v693, %v1001
    %v1011 = vmul.bf16 %v965, %v1001
    %v1012 = vmul.bf16 %v695, %v1001
    %v1013 = vmul.bf16 %v696, %v1001
    %v1014 = vmul.bf16 %v966, %v1001
    %v1015 = vmul.bf16 %v698, %v1001
    %v1016 = vmul.bf16 %v699, %v1001
    %v1017 = vmul.bf16 %v967, %v1001
    %v1018 = vmul.bf16 %v701, %v1001
    %v1019 = vmul.bf16 %v702, %v1001
    %v1020 = vmul.bf16 %v968, %v1001
    %v1021 = vmul.bf16 %v704, %v1001
    %v1022 = vmul.bf16 %v705, %v1001
    %v1023 = vmul.bf16 %v969, %v1001
    %v1024 = vmul.bf16 %v707, %v1001
    %v1025 = vmul.bf16 %v708, %v1001
    %v1026 = vmul.bf16 %v970, %v1001
    %v1027 = vmul.bf16 %v710, %v1001
    %v1028 = vmul.bf16 %v711, %v1001
    %v1029 = vmul.bf16 %v971, %v1001
    %v1030 = vmul.bf16 %v713, %v1001
    %v1031 = vmul.bf16 %v714, %v1001
    %v1032 = vmul.bf16 %v972, %v1001
    %v1033 = vmul.bf16 %v716, %v1001
    %v1034 = vmul.bf16 %v717, %v1001
    %v1035 = vmul.bf16 %v973, %v1001
    %v1036 = vmul.bf16 %v719, %v1001
    %v1037 = vmul.bf16 %v720, %v1001
    %v1038 = vmul.bf16 %v974, %v1001
    %v1039 = vmul.bf16 %v722, %v1001
    %v1040 = vmul.bf16 %v723, %v1001
    %v1041 = vmul.bf16 %v975, %v1001
    %v1042 = vmul.bf16 %v725, %v1001
    %v1043 = vmul.bf16 %v726, %v1001
    %v1044 = vmul.bf16 %v976, %v1001
    %v1045 = vmul.bf16 %v728, %v1001
    %v1046 = vmul.bf16 %v729, %v1001
    %v1047 = vmul.bf16 %v977, %v1001
    %v1048 = vmul.bf16 %v731, %v1001
    %v1049 = vmul.bf16 %v732, %v1001
    %v1050 = vmul.bf16 %v978, %v1001
    %v1051 = vmul.bf16 %v734, %v1001
    %v1052 = vmul.bf16 %v735, %v1001
    %v1053 = vmul.bf16 %v979, %v1001
    %v1054 = vmul.bf16 %v737, %v1001
    %v1055 = vmul.bf16 %v738, %v1001
    %v1056 = vmul.bf16 %v980, %v1001
    %v1057 = vmul.bf16 %v740, %v1001
    %v1058 = vmul.bf16 %v741, %v1001
    %v1059 = vmul.bf16 %v981, %v1001
    %v1060 = vmul.bf16 %v743, %v1001
    %v1061 = vmul.bf16 %v744, %v1001
    %v1062 = vmul.bf16 %v982, %v1001
    %v1063 = vmul.bf16 %v746, %v1001
    %v1064 = vmul.bf16 %v747, %v1001
    %v1065 = vmul.bf16 %v983, %v1001
    %v1066 = vmul.bf16 %v749, %v1001
    %v1067 = vmul.bf16 %v750, %v1001
    %v1068 = vmul.bf16 %v984, %v1001
    %v1069 = vmul.bf16 %v752, %v1001
    %v1070 = vmul.bf16 %v753, %v1001
    %v1071 = vmul.bf16 %v985, %v1001
    %v1072 = vmul.bf16 %v755, %v1001
    %v1073 = vmul.bf16 %v756, %v1001
    %v1074 = vmul.bf16 %v986, %v1001
    %v1075 = vmul.bf16 %v758, %v1001
    %v1076 = vmul.bf16 %v759, %v1001
    %v1077 = vmul.bf16 %v987, %v1001
    %v1078 = vmul.bf16 %v761, %v1001
    %v1079 = vmul.bf16 %v762, %v1001
    %v1080 = vmul.bf16 %v988, %v1001
    %v1081 = vmul.bf16 %v764, %v1001
    %v1082 = vmul.bf16 %v765, %v1001
    %v1083 = vmul.bf16 %v989, %v1001
    %v1084 = vmul.bf16 %v767, %v1001
    %v1085 = vmul.bf16 %v768, %v1001
    %v1086 = vmul.bf16 %v990, %v1001
    %v1087 = vmul.bf16 %v770, %v1001
    %v1088 = vmul.bf16 %v771, %v1001
    %v1089 = vmul.bf16 %v991, %v1001
    %v1090 = vmul.bf16 %v773, %v1001
    %v1091 = vmul.bf16 %v774, %v1001
    %v1092 = vmul.bf16 %v992, %v1001
    %v1093 = vmul.bf16 %v776, %v1001
    %v1094 = vmul.bf16 %v777, %v1001
    %v1095 = vmul.bf16 %v993, %v1001
    %v1096 = vmul.bf16 %v779, %v1001
    %v1097 = vmul.bf16 %v780, %v1001
    %v1098 = vmul.bf16 %v994, %v1001
    %v1099 = vld [vmem:[%s617] sm:$0x8]
    %v1100 = vld [vmem:[%s617 + $0x4] sm:$0xf]
    %v1101 = vld [vmem:[%s617 + $0x8] sm:$0xf]
    %v1102 = vld [vmem:[%s617 + $0x10] sm:$0x8]
    %v1103 = vld [vmem:[%s617 + $0x14] sm:$0xf]
    %v1104 = vld [vmem:[%s617 + $0x18] sm:$0xf]
    %v1105 = vld [vmem:[%s617 + $0x20] sm:$0x8]
    %v1106 = vld [vmem:[%s617 + $0x24] sm:$0xf]
    %v1107 = vld [vmem:[%s617 + $0x28] sm:$0xf]
    %v1108 = vld [vmem:[%s617 + $0x30] sm:$0x8]
    %v1109 = vld [vmem:[%s617 + $0x34] sm:$0xf]
    %v1110 = vld [vmem:[%s617 + $0x38] sm:$0xf]
    %v1111 = vld [vmem:[%s617 + $0x40] sm:$0x8]
    %v1112 = vld [vmem:[%s617 + $0x44] sm:$0xf]
    %v1113 = vld [vmem:[%s617 + $0x48] sm:$0xf]
    %v1114 = vld [vmem:[%s617 + $0x50] sm:$0x8]
    %v1115 = vld [vmem:[%s617 + $0x54] sm:$0xf]
    %v1116 = vld [vmem:[%s617 + $0x58] sm:$0xf]
    %v1117 = vld [vmem:[%s617 + $0x60] sm:$0x8]
    %v1118 = vld [vmem:[%s617 + $0x64] sm:$0xf]
    %v1119 = vld [vmem:[%s617 + $0x68] sm:$0xf]
    %v1120 = vld [vmem:[%s617 + $0x70] sm:$0x8]
    %v1121 = vld [vmem:[%s617 + $0x74] sm:$0xf]
    %v1122 = vld [vmem:[%s617 + $0x78] sm:$0xf]
    %v1123 = vld [vmem:[%s617 + $0x80] sm:$0x8]
    %v1124 = vld [vmem:[%s617 + $0x84] sm:$0xf]
    %v1125 = vld [vmem:[%s617 + $0x88] sm:$0xf]
    %v1126 = vld [vmem:[%s617 + $0x90] sm:$0x8]
    %v1127 = vld [vmem:[%s617 + $0x94] sm:$0xf]
    %v1128 = vld [vmem:[%s617 + $0x98] sm:$0xf]
    %v1129 = vld [vmem:[%s617 + $0xa0] sm:$0x8]
    %v1130 = vld [vmem:[%s617 + $0xa4] sm:$0xf]
    %v1131 = vld [vmem:[%s617 + $0xa8] sm:$0xf]
    %v1132 = vld [vmem:[%s617 + $0xb0] sm:$0x8]
    %v1133 = vld [vmem:[%s617 + $0xb4] sm:$0xf]
    %v1134 = vld [vmem:[%s617 + $0xb8] sm:$0xf]
    %v1135 = vld [vmem:[%s617 + $0xc0] sm:$0x8]
    %v1136 = vld [vmem:[%s617 + $0xc4] sm:$0xf]
    %v1137 = vld [vmem:[%s617 + $0xc8] sm:$0xf]
    %v1138 = vld [vmem:[%s617 + $0xd0] sm:$0x8]
    %v1139 = vld [vmem:[%s617 + $0xd4] sm:$0xf]
    %v1140 = vld [vmem:[%s617 + $0xd8] sm:$0xf]
    %v1141 = vld [vmem:[%s617 + $0xe0] sm:$0x8]
    %v1142 = vld [vmem:[%s617 + $0xe4] sm:$0xf]
    %v1143 = vld [vmem:[%s617 + $0xe8] sm:$0xf]
    %v1144 = vld [vmem:[%s617 + $0xf0] sm:$0x8]
    %v1145 = vld [vmem:[%s617 + $0xf4] sm:$0xf]
    %v1146 = vld [vmem:[%s617 + $0xf8] sm:$0xf]
    %v1147 = vld [vmem:[%s617 + $0x120] sm:$0x8]
    %v1148 = vld [vmem:[%s617 + $0x124] sm:$0xf]
    %v1149 = vld [vmem:[%s617 + $0x128] sm:$0xf]
    %v1150 = vld [vmem:[%s617 + $0x130] sm:$0x8]
    %v1151 = vld [vmem:[%s617 + $0x134] sm:$0xf]
    %v1152 = vld [vmem:[%s617 + $0x138] sm:$0xf]
    %v1153 = vld [vmem:[%s617 + $0x140] sm:$0x8]
    %v1154 = vld [vmem:[%s617 + $0x144] sm:$0xf]
    %v1155 = vld [vmem:[%s617 + $0x148] sm:$0xf]
    %v1156 = vld [vmem:[%s617 + $0x150] sm:$0x8]
    %v1157 = vld [vmem:[%s617 + $0x154] sm:$0xf]
    %v1158 = vld [vmem:[%s617 + $0x158] sm:$0xf]
    %v1159 = vld [vmem:[%s617 + $0x160] sm:$0x8]
    %v1160 = vld [vmem:[%s617 + $0x164] sm:$0xf]
    %v1161 = vld [vmem:[%s617 + $0x168] sm:$0xf]
    %v1162 = vld [vmem:[%s617 + $0x170] sm:$0x8]
    %v1163 = vld [vmem:[%s617 + $0x174] sm:$0xf]
    %v1164 = vld [vmem:[%s617 + $0x178] sm:$0xf]
    %v1165 = vld [vmem:[%s617 + $0x180] sm:$0x8]
    %v1166 = vld [vmem:[%s617 + $0x184] sm:$0xf]
    %v1167 = vld [vmem:[%s617 + $0x188] sm:$0xf]
    %v1168 = vld [vmem:[%s617 + $0x190] sm:$0x8]
    %v1169 = vld [vmem:[%s617 + $0x194] sm:$0xf]
    %v1170 = vld [vmem:[%s617 + $0x198] sm:$0xf]
    %v1171 = vld [vmem:[%s617 + $0x1a0] sm:$0x8]
    %v1172 = vld [vmem:[%s617 + $0x1a4] sm:$0xf]
    %v1173 = vld [vmem:[%s617 + $0x1a8] sm:$0xf]
    %v1174 = vld [vmem:[%s617 + $0x1b0] sm:$0x8]
    %v1175 = vld [vmem:[%s617 + $0x1b4] sm:$0xf]
    %v1176 = vld [vmem:[%s617 + $0x1b8] sm:$0xf]
    %v1177 = vld [vmem:[%s617 + $0x1c0] sm:$0x8]
    %v1178 = vld [vmem:[%s617 + $0x1c4] sm:$0xf]
    %v1179 = vld [vmem:[%s617 + $0x1c8] sm:$0xf]
    %v1180 = vld [vmem:[%s617 + $0x1d0] sm:$0x8]
    %v1181 = vld [vmem:[%s617 + $0x1d4] sm:$0xf]
    %v1182 = vld [vmem:[%s617 + $0x1d8] sm:$0xf]
    %v1183 = vld [vmem:[%s617 + $0x1e0] sm:$0x8]
    %v1184 = vld [vmem:[%s617 + $0x1e4] sm:$0xf]
    %v1185 = vld [vmem:[%s617 + $0x1e8] sm:$0xf]
    %v1186 = vld [vmem:[%s617 + $0x1f0] sm:$0x8]
    %v1187 = vld [vmem:[%s617 + $0x1f4] sm:$0xf]
    %v1188 = vld [vmem:[%s617 + $0x1f8] sm:$0xf]
    %v1189 = vld [vmem:[%s617 + $0x200] sm:$0x8]
    %v1190 = vld [vmem:[%s617 + $0x204] sm:$0xf]
    %v1191 = vld [vmem:[%s617 + $0x208] sm:$0xf]
    %v1192 = vld [vmem:[%s617 + $0x210] sm:$0x8]
    %v1193 = vld [vmem:[%s617 + $0x214] sm:$0xf]
    %v1194 = vld [vmem:[%s617 + $0x218] sm:$0xf]
    %v1195 = vlaneseq
    %v1196 = vshrl.u32 %v1195, 7
    %v1197 = vsub.s32 1, %v1196
    %v1198 = vrot.slane %v889, %v1197
    %v1200 = vunpack.c.l.b16 %v1198
    %v1201 = vpack.c.b16 %v1200, %v1200
    %v1203 = vmul.bf16 %v1099, %v1201
    %v1204 = vmul.bf16 %v1100, %v1201
    %v1205 = vmul.bf16 %v1101, %v1201
    %v1206 = vmul.bf16 %v1102, %v1201
    %v1207 = vmul.bf16 %v1103, %v1201
    %v1208 = vmul.bf16 %v1104, %v1201
    %v1209 = vmul.bf16 %v1105, %v1201
    %v1210 = vmul.bf16 %v1106, %v1201
    %v1211 = vmul.bf16 %v1107, %v1201
    %v1212 = vmul.bf16 %v1108, %v1201
    %v1213 = vmul.bf16 %v1109, %v1201
    %v1214 = vmul.bf16 %v1110, %v1201
    %v1215 = vmul.bf16 %v1111, %v1201
    %v1216 = vmul.bf16 %v1112, %v1201
    %v1217 = vmul.bf16 %v1113, %v1201
    %v1218 = vmul.bf16 %v1114, %v1201
    %v1219 = vmul.bf16 %v1115, %v1201
    %v1220 = vmul.bf16 %v1116, %v1201
    %v1221 = vmul.bf16 %v1117, %v1201
    %v1222 = vmul.bf16 %v1118, %v1201
    %v1223 = vmul.bf16 %v1119, %v1201
    %v1224 = vmul.bf16 %v1120, %v1201
    %v1225 = vmul.bf16 %v1121, %v1201
    %v1226 = vmul.bf16 %v1122, %v1201
    %v1227 = vmul.bf16 %v1123, %v1201
    %v1228 = vmul.bf16 %v1124, %v1201
    %v1229 = vmul.bf16 %v1125, %v1201
    %v1230 = vmul.bf16 %v1126, %v1201
    %v1231 = vmul.bf16 %v1127, %v1201
    %v1232 = vmul.bf16 %v1128, %v1201
    %v1233 = vmul.bf16 %v1129, %v1201
    %v1234 = vmul.bf16 %v1130, %v1201
    %v1235 = vmul.bf16 %v1131, %v1201
    %v1236 = vmul.bf16 %v1132, %v1201
    %v1237 = vmul.bf16 %v1133, %v1201
    %v1238 = vmul.bf16 %v1134, %v1201
    %v1239 = vmul.bf16 %v1135, %v1201
    %v1240 = vmul.bf16 %v1136, %v1201
    %v1241 = vmul.bf16 %v1137, %v1201
    %v1242 = vmul.bf16 %v1138, %v1201
    %v1243 = vmul.bf16 %v1139, %v1201
    %v1244 = vmul.bf16 %v1140, %v1201
    %v1245 = vmul.bf16 %v1141, %v1201
    %v1246 = vmul.bf16 %v1142, %v1201
    %v1247 = vmul.bf16 %v1143, %v1201
    %v1248 = vmul.bf16 %v1144, %v1201
    %v1249 = vmul.bf16 %v1145, %v1201
    %v1250 = vmul.bf16 %v1146, %v1201
    %v1251 = vmul.bf16 %v1147, %v1201
    %v1252 = vmul.bf16 %v1148, %v1201
    %v1253 = vmul.bf16 %v1149, %v1201
    %v1254 = vmul.bf16 %v1150, %v1201
    %v1255 = vmul.bf16 %v1151, %v1201
    %v1256 = vmul.bf16 %v1152, %v1201
    %v1257 = vmul.bf16 %v1153, %v1201
    %v1258 = vmul.bf16 %v1154, %v1201
    %v1259 = vmul.bf16 %v1155, %v1201
    %v1260 = vmul.bf16 %v1156, %v1201
    %v1261 = vmul.bf16 %v1157, %v1201
    %v1262 = vmul.bf16 %v1158, %v1201
    %v1263 = vmul.bf16 %v1159, %v1201
    %v1264 = vmul.bf16 %v1160, %v1201
    %v1265 = vmul.bf16 %v1161, %v1201
    %v1266 = vmul.bf16 %v1162, %v1201
    %v1267 = vmul.bf16 %v1163, %v1201
    %v1268 = vmul.bf16 %v1164, %v1201
    %v1269 = vmul.bf16 %v1165, %v1201
    %v1270 = vmul.bf16 %v1166, %v1201
    %v1271 = vmul.bf16 %v1167, %v1201
    %v1272 = vmul.bf16 %v1168, %v1201
    %v1273 = vmul.bf16 %v1169, %v1201
    %v1274 = vmul.bf16 %v1170, %v1201
    %v1275 = vmul.bf16 %v1171, %v1201
    %v1276 = vmul.bf16 %v1172, %v1201
    %v1277 = vmul.bf16 %v1173, %v1201
    %v1278 = vmul.bf16 %v1174, %v1201
    %v1279 = vmul.bf16 %v1175, %v1201
    %v1280 = vmul.bf16 %v1176, %v1201
    %v1281 = vmul.bf16 %v1177, %v1201
    %v1282 = vmul.bf16 %v1178, %v1201
    %v1283 = vmul.bf16 %v1179, %v1201
    %v1284 = vmul.bf16 %v1180, %v1201
    %v1285 = vmul.bf16 %v1181, %v1201
    %v1286 = vmul.bf16 %v1182, %v1201
    %v1287 = vmul.bf16 %v1183, %v1201
    %v1288 = vmul.bf16 %v1184, %v1201
    %v1289 = vmul.bf16 %v1185, %v1201
    %v1290 = vmul.bf16 %v1186, %v1201
    %v1291 = vmul.bf16 %v1187, %v1201
    %v1292 = vmul.bf16 %v1188, %v1201
    %v1293 = vmul.bf16 %v1189, %v1201
    %v1294 = vmul.bf16 %v1190, %v1201
    %v1295 = vmul.bf16 %v1191, %v1201
    %v1296 = vmul.bf16 %v1192, %v1201
    %v1297 = vmul.bf16 %v1193, %v1201
    %v1298 = vmul.bf16 %v1194, %v1201
    %v1299 = vadd.bf16 %v792, %v1203
    %v1300 = vadd.bf16 %v793, %v1204
    %v1301 = vadd.bf16 %v794, %v1205
    %v1302 = vadd.bf16 %v795, %v1206
    %v1303 = vadd.bf16 %v796, %v1207
    %v1304 = vadd.bf16 %v797, %v1208
    %v1305 = vadd.bf16 %v798, %v1209
    %v1306 = vadd.bf16 %v799, %v1210
    %v1307 = vadd.bf16 %v800, %v1211
    %v1308 = vadd.bf16 %v801, %v1212
    %v1309 = vadd.bf16 %v802, %v1213
    %v1310 = vadd.bf16 %v803, %v1214
    %v1311 = vadd.bf16 %v804, %v1215
    %v1312 = vadd.bf16 %v805, %v1216
    %v1313 = vadd.bf16 %v806, %v1217
    %v1314 = vadd.bf16 %v807, %v1218
    %v1315 = vadd.bf16 %v808, %v1219
    %v1316 = vadd.bf16 %v809, %v1220
    %v1317 = vadd.bf16 %v810, %v1221
    %v1318 = vadd.bf16 %v811, %v1222
    %v1319 = vadd.bf16 %v812, %v1223
    %v1320 = vadd.bf16 %v813, %v1224
    %v1321 = vadd.bf16 %v814, %v1225
    %v1322 = vadd.bf16 %v815, %v1226
    %v1323 = vadd.bf16 %v816, %v1227
    %v1324 = vadd.bf16 %v817, %v1228
    %v1325 = vadd.bf16 %v818, %v1229
    %v1326 = vadd.bf16 %v819, %v1230
    %v1327 = vadd.bf16 %v820, %v1231
    %v1328 = vadd.bf16 %v821, %v1232
    %v1329 = vadd.bf16 %v822, %v1233
    %v1330 = vadd.bf16 %v823, %v1234
    %v1331 = vadd.bf16 %v824, %v1235
    %v1332 = vadd.bf16 %v825, %v1236
    %v1333 = vadd.bf16 %v826, %v1237
    %v1334 = vadd.bf16 %v827, %v1238
    %v1335 = vadd.bf16 %v828, %v1239
    %v1336 = vadd.bf16 %v829, %v1240
    %v1337 = vadd.bf16 %v830, %v1241
    %v1338 = vadd.bf16 %v831, %v1242
    %v1339 = vadd.bf16 %v832, %v1243
    %v1340 = vadd.bf16 %v833, %v1244
    %v1341 = vadd.bf16 %v834, %v1245
    %v1342 = vadd.bf16 %v835, %v1246
    %v1343 = vadd.bf16 %v836, %v1247
    %v1344 = vadd.bf16 %v837, %v1248
    %v1345 = vadd.bf16 %v838, %v1249
    %v1346 = vadd.bf16 %v839, %v1250
    %v1347 = vadd.bf16 %v840, %v1251
    %v1348 = vadd.bf16 %v841, %v1252
    %v1349 = vadd.bf16 %v842, %v1253
    %v1350 = vadd.bf16 %v843, %v1254
    %v1351 = vadd.bf16 %v844, %v1255
    %v1352 = vadd.bf16 %v845, %v1256
    %v1353 = vadd.bf16 %v846, %v1257
    %v1354 = vadd.bf16 %v847, %v1258
    %v1355 = vadd.bf16 %v848, %v1259
    %v1356 = vadd.bf16 %v849, %v1260
    %v1357 = vadd.bf16 %v850, %v1261
    %v1358 = vadd.bf16 %v851, %v1262
    %v1359 = vadd.bf16 %v852, %v1263
    %v1360 = vadd.bf16 %v853, %v1264
    %v1361 = vadd.bf16 %v854, %v1265
    %v1362 = vadd.bf16 %v855, %v1266
    %v1363 = vadd.bf16 %v856, %v1267
    %v1364 = vadd.bf16 %v857, %v1268
    %v1365 = vadd.bf16 %v858, %v1269
    %v1366 = vadd.bf16 %v859, %v1270
    %v1367 = vadd.bf16 %v860, %v1271
    %v1368 = vadd.bf16 %v861, %v1272
    %v1369 = vadd.bf16 %v862, %v1273
    %v1370 = vadd.bf16 %v863, %v1274
    %v1371 = vadd.bf16 %v864, %v1275
    %v1372 = vadd.bf16 %v865, %v1276
    %v1373 = vadd.bf16 %v866, %v1277
    %v1374 = vadd.bf16 %v867, %v1278
    %v1375 = vadd.bf16 %v868, %v1279
    %v1376 = vadd.bf16 %v869, %v1280
    %v1377 = vadd.bf16 %v870, %v1281
    %v1378 = vadd.bf16 %v871, %v1282
    %v1379 = vadd.bf16 %v872, %v1283
    %v1380 = vadd.bf16 %v873, %v1284
    %v1381 = vadd.bf16 %v874, %v1285
    %v1382 = vadd.bf16 %v875, %v1286
    %v1383 = vadd.bf16 %v876, %v1287
    %v1384 = vadd.bf16 %v877, %v1288
    %v1385 = vadd.bf16 %v878, %v1289
    %v1386 = vadd.bf16 %v879, %v1290
    %v1387 = vadd.bf16 %v880, %v1291
    %v1388 = vadd.bf16 %v881, %v1292
    %v1389 = vadd.bf16 %v882, %v1293
    %v1390 = vadd.bf16 %v883, %v1294
    %v1391 = vadd.bf16 %v884, %v1295
    %v1392 = vadd.bf16 %v885, %v1296
    %v1393 = vadd.bf16 %v886, %v1297
    %v1394 = vadd.bf16 %v887, %v1298
    %v1395 = vlaneseq
    %v1396 = vshrl.u32 %v1395, 7
    %v1397 = vsub.s32 2, %v1396
    %v1398 = vrot.slane %v782, %v1397
    %v1400 = vunpack.c.l.b16 %v1398
    %v1401 = vpack.c.b16 %v1400, %v1400
    %v1403 = vmul.bf16 %v1100, %v1401
    %v1404 = vmul.bf16 %v1101, %v1401
    %v1405 = vmul.bf16 %v1103, %v1401
    %v1406 = vmul.bf16 %v1104, %v1401
    %v1407 = vmul.bf16 %v1106, %v1401
    %v1408 = vmul.bf16 %v1107, %v1401
    %v1409 = vmul.bf16 %v1109, %v1401
    %v1410 = vmul.bf16 %v1110, %v1401
    %v1411 = vmul.bf16 %v1112, %v1401
    %v1412 = vmul.bf16 %v1113, %v1401
    %v1413 = vmul.bf16 %v1115, %v1401
    %v1414 = vmul.bf16 %v1116, %v1401
    %v1415 = vmul.bf16 %v1118, %v1401
    %v1416 = vmul.bf16 %v1119, %v1401
    %v1417 = vmul.bf16 %v1121, %v1401
    %v1418 = vmul.bf16 %v1122, %v1401
    %v1419 = vmul.bf16 %v1124, %v1401
    %v1420 = vmul.bf16 %v1125, %v1401
    %v1421 = vmul.bf16 %v1127, %v1401
    %v1422 = vmul.bf16 %v1128, %v1401
    %v1423 = vmul.bf16 %v1130, %v1401
    %v1424 = vmul.bf16 %v1131, %v1401
    %v1425 = vmul.bf16 %v1133, %v1401
    %v1426 = vmul.bf16 %v1134, %v1401
    %v1427 = vmul.bf16 %v1136, %v1401
    %v1428 = vmul.bf16 %v1137, %v1401
    %v1429 = vmul.bf16 %v1139, %v1401
    %v1430 = vmul.bf16 %v1140, %v1401
    %v1431 = vmul.bf16 %v1142, %v1401
    %v1432 = vmul.bf16 %v1143, %v1401
    %v1433 = vmul.bf16 %v1145, %v1401
    %v1434 = vmul.bf16 %v1146, %v1401
    %v1435 = vmul.bf16 %v1148, %v1401
    %v1436 = vmul.bf16 %v1149, %v1401
    %v1437 = vmul.bf16 %v1151, %v1401
    %v1438 = vmul.bf16 %v1152, %v1401
    %v1439 = vmul.bf16 %v1154, %v1401
    %v1440 = vmul.bf16 %v1155, %v1401
    %v1441 = vmul.bf16 %v1157, %v1401
    %v1442 = vmul.bf16 %v1158, %v1401
    %v1443 = vmul.bf16 %v1160, %v1401
    %v1444 = vmul.bf16 %v1161, %v1401
    %v1445 = vmul.bf16 %v1163, %v1401
    %v1446 = vmul.bf16 %v1164, %v1401
    %v1447 = vmul.bf16 %v1166, %v1401
    %v1448 = vmul.bf16 %v1167, %v1401
    %v1449 = vmul.bf16 %v1169, %v1401
    %v1450 = vmul.bf16 %v1170, %v1401
    %v1451 = vmul.bf16 %v1172, %v1401
    %v1452 = vmul.bf16 %v1173, %v1401
    %v1453 = vmul.bf16 %v1175, %v1401
    %v1454 = vmul.bf16 %v1176, %v1401
    %v1455 = vmul.bf16 %v1178, %v1401
    %v1456 = vmul.bf16 %v1179, %v1401
    %v1457 = vmul.bf16 %v1181, %v1401
    %v1458 = vmul.bf16 %v1182, %v1401
    %v1459 = vmul.bf16 %v1184, %v1401
    %v1460 = vmul.bf16 %v1185, %v1401
    %v1461 = vmul.bf16 %v1187, %v1401
    %v1462 = vmul.bf16 %v1188, %v1401
    %v1463 = vmul.bf16 %v1190, %v1401
    %v1464 = vmul.bf16 %v1191, %v1401
    %v1465 = vmul.bf16 %v1193, %v1401
    %v1466 = vmul.bf16 %v1194, %v1401
    %v1467 = vadd.bf16 %v899, %v1403
    %v1468 = vadd.bf16 %v900, %v1404
    %v1469 = vadd.bf16 %v901, %v1405
    %v1470 = vadd.bf16 %v902, %v1406
    %v1471 = vadd.bf16 %v903, %v1407
    %v1472 = vadd.bf16 %v904, %v1408
    %v1473 = vadd.bf16 %v905, %v1409
    %v1474 = vadd.bf16 %v906, %v1410
    %v1475 = vadd.bf16 %v907, %v1411
    %v1476 = vadd.bf16 %v908, %v1412
    %v1477 = vadd.bf16 %v909, %v1413
    %v1478 = vadd.bf16 %v910, %v1414
    %v1479 = vadd.bf16 %v911, %v1415
    %v1480 = vadd.bf16 %v912, %v1416
    %v1481 = vadd.bf16 %v913, %v1417
    %v1482 = vadd.bf16 %v914, %v1418
    %v1483 = vadd.bf16 %v915, %v1419
    %v1484 = vadd.bf16 %v916, %v1420
    %v1485 = vadd.bf16 %v917, %v1421
    %v1486 = vadd.bf16 %v918, %v1422
    %v1487 = vadd.bf16 %v919, %v1423
    %v1488 = vadd.bf16 %v920, %v1424
    %v1489 = vadd.bf16 %v921, %v1425
    %v1490 = vadd.bf16 %v922, %v1426
    %v1491 = vadd.bf16 %v923, %v1427
    %v1492 = vadd.bf16 %v924, %v1428
    %v1493 = vadd.bf16 %v925, %v1429
    %v1494 = vadd.bf16 %v926, %v1430
    %v1495 = vadd.bf16 %v927, %v1431
    %v1496 = vadd.bf16 %v928, %v1432
    %v1497 = vadd.bf16 %v929, %v1433
    %v1498 = vadd.bf16 %v930, %v1434
    %v1499 = vadd.bf16 %v931, %v1435
    %v1500 = vadd.bf16 %v932, %v1436
    %v1501 = vadd.bf16 %v933, %v1437
    %v1502 = vadd.bf16 %v934, %v1438
    %v1503 = vadd.bf16 %v935, %v1439
    %v1504 = vadd.bf16 %v936, %v1440
    %v1505 = vadd.bf16 %v937, %v1441
    %v1506 = vadd.bf16 %v938, %v1442
    %v1507 = vadd.bf16 %v939, %v1443
    %v1508 = vadd.bf16 %v940, %v1444
    %v1509 = vadd.bf16 %v941, %v1445
    %v1510 = vadd.bf16 %v942, %v1446
    %v1511 = vadd.bf16 %v943, %v1447
    %v1512 = vadd.bf16 %v944, %v1448
    %v1513 = vadd.bf16 %v945, %v1449
    %v1514 = vadd.bf16 %v946, %v1450
    %v1515 = vadd.bf16 %v947, %v1451
    %v1516 = vadd.bf16 %v948, %v1452
    %v1517 = vadd.bf16 %v949, %v1453
    %v1518 = vadd.bf16 %v950, %v1454
    %v1519 = vadd.bf16 %v951, %v1455
    %v1520 = vadd.bf16 %v952, %v1456
    %v1521 = vadd.bf16 %v953, %v1457
    %v1522 = vadd.bf16 %v954, %v1458
    %v1523 = vadd.bf16 %v955, %v1459
    %v1524 = vadd.bf16 %v956, %v1460
    %v1525 = vadd.bf16 %v957, %v1461
    %v1526 = vadd.bf16 %v958, %v1462
    %v1527 = vadd.bf16 %v959, %v1463
    %v1528 = vadd.bf16 %v960, %v1464
    %v1529 = vadd.bf16 %v961, %v1465
    %v1530 = vadd.bf16 %v962, %v1466
    %v1531 = vld [vmem:[%s617 + $0xc] sm:$0x1]
    %v1532 = vld [vmem:[%s617 + $0x1c] sm:$0x1]
    %v1533 = vld [vmem:[%s617 + $0x2c] sm:$0x1]
    %v1534 = vld [vmem:[%s617 + $0x3c] sm:$0x1]
    %v1535 = vld [vmem:[%s617 + $0x4c] sm:$0x1]
    %v1536 = vld [vmem:[%s617 + $0x5c] sm:$0x1]
    %v1537 = vld [vmem:[%s617 + $0x6c] sm:$0x1]
    %v1538 = vld [vmem:[%s617 + $0x7c] sm:$0x1]
    %v1539 = vld [vmem:[%s617 + $0x8c] sm:$0x1]
    %v1540 = vld [vmem:[%s617 + $0x9c] sm:$0x1]
    %v1541 = vld [vmem:[%s617 + $0xac] sm:$0x1]
    %v1542 = vld [vmem:[%s617 + $0xbc] sm:$0x1]
    %v1543 = vld [vmem:[%s617 + $0xcc] sm:$0x1]
    %v1544 = vld [vmem:[%s617 + $0xdc] sm:$0x1]
    %v1545 = vld [vmem:[%s617 + $0xec] sm:$0x1]
    %v1546 = vld [vmem:[%s617 + $0xfc] sm:$0x1]
    %v1547 = vld [vmem:[%s617 + $0x12c] sm:$0x1]
    %v1548 = vld [vmem:[%s617 + $0x13c] sm:$0x1]
    %v1549 = vld [vmem:[%s617 + $0x14c] sm:$0x1]
    %v1550 = vld [vmem:[%s617 + $0x15c] sm:$0x1]
    %v1551 = vld [vmem:[%s617 + $0x16c] sm:$0x1]
    %v1552 = vld [vmem:[%s617 + $0x17c] sm:$0x1]
    %v1553 = vld [vmem:[%s617 + $0x18c] sm:$0x1]
    %v1554 = vld [vmem:[%s617 + $0x19c] sm:$0x1]
    %v1555 = vld [vmem:[%s617 + $0x1ac] sm:$0x1]
    %v1556 = vld [vmem:[%s617 + $0x1bc] sm:$0x1]
    %v1557 = vld [vmem:[%s617 + $0x1cc] sm:$0x1]
    %v1558 = vld [vmem:[%s617 + $0x1dc] sm:$0x1]
    %v1559 = vld [vmem:[%s617 + $0x1ec] sm:$0x1]
    %v1560 = vld [vmem:[%s617 + $0x1fc] sm:$0x1]
    %v1561 = vld [vmem:[%s617 + $0x20c] sm:$0x1]
    %v1562 = vld [vmem:[%s617 + $0x21c] sm:$0x1]
    %v1563 = vlaneseq
    %v1564 = vshrl.u32 %v1563, 7
    %v1565 = vsub.s32 2, %v1564
    %v1566 = vrot.slane %v889, %v1565
    %v1568 = vunpack.c.l.b16 %v1566
    %v1569 = vpack.c.b16 %v1568, %v1568
    %v1571 = vmul.bf16 %v1100, %v1569
    %v1572 = vmul.bf16 %v1101, %v1569
    %v1573 = vmul.bf16 %v1531, %v1569
    %v1574 = vmul.bf16 %v1103, %v1569
    %v1575 = vmul.bf16 %v1104, %v1569
    %v1576 = vmul.bf16 %v1532, %v1569
    %v1577 = vmul.bf16 %v1106, %v1569
    %v1578 = vmul.bf16 %v1107, %v1569
    %v1579 = vmul.bf16 %v1533, %v1569
    %v1580 = vmul.bf16 %v1109, %v1569
    %v1581 = vmul.bf16 %v1110, %v1569
    %v1582 = vmul.bf16 %v1534, %v1569
    %v1583 = vmul.bf16 %v1112, %v1569
    %v1584 = vmul.bf16 %v1113, %v1569
    %v1585 = vmul.bf16 %v1535, %v1569
    %v1586 = vmul.bf16 %v1115, %v1569
    %v1587 = vmul.bf16 %v1116, %v1569
    %v1588 = vmul.bf16 %v1536, %v1569
    %v1589 = vmul.bf16 %v1118, %v1569
    %v1590 = vmul.bf16 %v1119, %v1569
    %v1591 = vmul.bf16 %v1537, %v1569
    %v1592 = vmul.bf16 %v1121, %v1569
    %v1593 = vmul.bf16 %v1122, %v1569
    %v1594 = vmul.bf16 %v1538, %v1569
    %v1595 = vmul.bf16 %v1124, %v1569
    %v1596 = vmul.bf16 %v1125, %v1569
    %v1597 = vmul.bf16 %v1539, %v1569
    %v1598 = vmul.bf16 %v1127, %v1569
    %v1599 = vmul.bf16 %v1128, %v1569
    %v1600 = vmul.bf16 %v1540, %v1569
    %v1601 = vmul.bf16 %v1130, %v1569
    %v1602 = vmul.bf16 %v1131, %v1569
    %v1603 = vmul.bf16 %v1541, %v1569
    %v1604 = vmul.bf16 %v1133, %v1569
    %v1605 = vmul.bf16 %v1134, %v1569
    %v1606 = vmul.bf16 %v1542, %v1569
    %v1607 = vmul.bf16 %v1136, %v1569
    %v1608 = vmul.bf16 %v1137, %v1569
    %v1609 = vmul.bf16 %v1543, %v1569
    %v1610 = vmul.bf16 %v1139, %v1569
    %v1611 = vmul.bf16 %v1140, %v1569
    %v1612 = vmul.bf16 %v1544, %v1569
    %v1613 = vmul.bf16 %v1142, %v1569
    %v1614 = vmul.bf16 %v1143, %v1569
    %v1615 = vmul.bf16 %v1545, %v1569
    %v1616 = vmul.bf16 %v1145, %v1569
    %v1617 = vmul.bf16 %v1146, %v1569
    %v1618 = vmul.bf16 %v1546, %v1569
    %v1619 = vmul.bf16 %v1148, %v1569
    %v1620 = vmul.bf16 %v1149, %v1569
    %v1621 = vmul.bf16 %v1547, %v1569
    %v1622 = vmul.bf16 %v1151, %v1569
    %v1623 = vmul.bf16 %v1152, %v1569
    %v1624 = vmul.bf16 %v1548, %v1569
    %v1625 = vmul.bf16 %v1154, %v1569
    %v1626 = vmul.bf16 %v1155, %v1569
    %v1627 = vmul.bf16 %v1549, %v1569
    %v1628 = vmul.bf16 %v1157, %v1569
    %v1629 = vmul.bf16 %v1158, %v1569
    %v1630 = vmul.bf16 %v1550, %v1569
    %v1631 = vmul.bf16 %v1160, %v1569
    %v1632 = vmul.bf16 %v1161, %v1569
    %v1633 = vmul.bf16 %v1551, %v1569
    %v1634 = vmul.bf16 %v1163, %v1569
    %v1635 = vmul.bf16 %v1164, %v1569
    %v1636 = vmul.bf16 %v1552, %v1569
    %v1637 = vmul.bf16 %v1166, %v1569
    %v1638 = vmul.bf16 %v1167, %v1569
    %v1639 = vmul.bf16 %v1553, %v1569
    %v1640 = vmul.bf16 %v1169, %v1569
    %v1641 = vmul.bf16 %v1170, %v1569
    %v1642 = vmul.bf16 %v1554, %v1569
    %v1643 = vmul.bf16 %v1172, %v1569
    %v1644 = vmul.bf16 %v1173, %v1569
    %v1645 = vmul.bf16 %v1555, %v1569
    %v1646 = vmul.bf16 %v1175, %v1569
    %v1647 = vmul.bf16 %v1176, %v1569
    %v1648 = vmul.bf16 %v1556, %v1569
    %v1649 = vmul.bf16 %v1178, %v1569
    %v1650 = vmul.bf16 %v1179, %v1569
    %v1651 = vmul.bf16 %v1557, %v1569
    %v1652 = vmul.bf16 %v1181, %v1569
    %v1653 = vmul.bf16 %v1182, %v1569
    %v1654 = vmul.bf16 %v1558, %v1569
    %v1655 = vmul.bf16 %v1184, %v1569
    %v1656 = vmul.bf16 %v1185, %v1569
    %v1657 = vmul.bf16 %v1559, %v1569
    %v1658 = vmul.bf16 %v1187, %v1569
    %v1659 = vmul.bf16 %v1188, %v1569
    %v1660 = vmul.bf16 %v1560, %v1569
    %v1661 = vmul.bf16 %v1190, %v1569
    %v1662 = vmul.bf16 %v1191, %v1569
    %v1663 = vmul.bf16 %v1561, %v1569
    %v1664 = vmul.bf16 %v1193, %v1569
    %v1665 = vmul.bf16 %v1194, %v1569
    %v1666 = vmul.bf16 %v1562, %v1569
    %v1667 = vadd.bf16 %v1003, %v1571
    %v1668 = vadd.bf16 %v1004, %v1572
    %v1669 = vadd.bf16 %v1005, %v1573
    %v1670 = vadd.bf16 %v1006, %v1574
    %v1671 = vadd.bf16 %v1007, %v1575
    %v1672 = vadd.bf16 %v1008, %v1576
    %v1673 = vadd.bf16 %v1009, %v1577
    %v1674 = vadd.bf16 %v1010, %v1578
    %v1675 = vadd.bf16 %v1011, %v1579
    %v1676 = vadd.bf16 %v1012, %v1580
    %v1677 = vadd.bf16 %v1013, %v1581
    %v1678 = vadd.bf16 %v1014, %v1582
    %v1679 = vadd.bf16 %v1015, %v1583
    %v1680 = vadd.bf16 %v1016, %v1584
    %v1681 = vadd.bf16 %v1017, %v1585
    %v1682 = vadd.bf16 %v1018, %v1586
    %v1683 = vadd.bf16 %v1019, %v1587
    %v1684 = vadd.bf16 %v1020, %v1588
    %v1685 = vadd.bf16 %v1021, %v1589
    %v1686 = vadd.bf16 %v1022, %v1590
    %v1687 = vadd.bf16 %v1023, %v1591
    %v1688 = vadd.bf16 %v1024, %v1592
    %v1689 = vadd.bf16 %v1025, %v1593
    %v1690 = vadd.bf16 %v1026, %v1594
    %v1691 = vadd.bf16 %v1027, %v1595
    %v1692 = vadd.bf16 %v1028, %v1596
    %v1693 = vadd.bf16 %v1029, %v1597
    %v1694 = vadd.bf16 %v1030, %v1598
    %v1695 = vadd.bf16 %v1031, %v1599
    %v1696 = vadd.bf16 %v1032, %v1600
    %v1697 = vadd.bf16 %v1033, %v1601
    %v1698 = vadd.bf16 %v1034, %v1602
    %v1699 = vadd.bf16 %v1035, %v1603
    %v1700 = vadd.bf16 %v1036, %v1604
    %v1701 = vadd.bf16 %v1037, %v1605
    %v1702 = vadd.bf16 %v1038, %v1606
    %v1703 = vadd.bf16 %v1039, %v1607
    %v1704 = vadd.bf16 %v1040, %v1608
    %v1705 = vadd.bf16 %v1041, %v1609
    %v1706 = vadd.bf16 %v1042, %v1610
    %v1707 = vadd.bf16 %v1043, %v1611
    %v1708 = vadd.bf16 %v1044, %v1612
    %v1709 = vadd.bf16 %v1045, %v1613
    %v1710 = vadd.bf16 %v1046, %v1614
    %v1711 = vadd.bf16 %v1047, %v1615
    %v1712 = vadd.bf16 %v1048, %v1616
    %v1713 = vadd.bf16 %v1049, %v1617
    %v1714 = vadd.bf16 %v1050, %v1618
    %v1715 = vadd.bf16 %v1051, %v1619
    %v1716 = vadd.bf16 %v1052, %v1620
    %v1717 = vadd.bf16 %v1053, %v1621
    %v1718 = vadd.bf16 %v1054, %v1622
    %v1719 = vadd.bf16 %v1055, %v1623
    %v1720 = vadd.bf16 %v1056, %v1624
    %v1721 = vadd.bf16 %v1057, %v1625
    %v1722 = vadd.bf16 %v1058, %v1626
    %v1723 = vadd.bf16 %v1059, %v1627
    %v1724 = vadd.bf16 %v1060, %v1628
    %v1725 = vadd.bf16 %v1061, %v1629
    %v1726 = vadd.bf16 %v1062, %v1630
    %v1727 = vadd.bf16 %v1063, %v1631
    %v1728 = vadd.bf16 %v1064, %v1632
    %v1729 = vadd.bf16 %v1065, %v1633
    %v1730 = vadd.bf16 %v1066, %v1634
    %v1731 = vadd.bf16 %v1067, %v1635
    %v1732 = vadd.bf16 %v1068, %v1636
    %v1733 = vadd.bf16 %v1069, %v1637
    %v1734 = vadd.bf16 %v1070, %v1638
    %v1735 = vadd.bf16 %v1071, %v1639
    %v1736 = vadd.bf16 %v1072, %v1640
    %v1737 = vadd.bf16 %v1073, %v1641
    %v1738 = vadd.bf16 %v1074, %v1642
    %v1739 = vadd.bf16 %v1075, %v1643
    %v1740 = vadd.bf16 %v1076, %v1644
    %v1741 = vadd.bf16 %v1077, %v1645
    %v1742 = vadd.bf16 %v1078, %v1646
    %v1743 = vadd.bf16 %v1079, %v1647
    %v1744 = vadd.bf16 %v1080, %v1648
    %v1745 = vadd.bf16 %v1081, %v1649
    %v1746 = vadd.bf16 %v1082, %v1650
    %v1747 = vadd.bf16 %v1083, %v1651
    %v1748 = vadd.bf16 %v1084, %v1652
    %v1749 = vadd.bf16 %v1085, %v1653
    %v1750 = vadd.bf16 %v1086, %v1654
    %v1751 = vadd.bf16 %v1087, %v1655
    %v1752 = vadd.bf16 %v1088, %v1656
    %v1753 = vadd.bf16 %v1089, %v1657
    %v1754 = vadd.bf16 %v1090, %v1658
    %v1755 = vadd.bf16 %v1091, %v1659
    %v1756 = vadd.bf16 %v1092, %v1660
    %v1757 = vadd.bf16 %v1093, %v1661
    %v1758 = vadd.bf16 %v1094, %v1662
    %v1759 = vadd.bf16 %v1095, %v1663
    %v1760 = vadd.bf16 %v1096, %v1664
    %v1761 = vadd.bf16 %v1097, %v1665
    %v1762 = vadd.bf16 %v1098, %v1666
    %s1763 = scalar_lea.vmem [#allocation2], 32
    %v1764 = vld [vmem:[%s1763] sm:$0x8]
    %v1765 = vld [vmem:[%s1763 + $0x4] sm:$0xf]
    %v1766 = vld [vmem:[%s1763 + $0x8] sm:$0xf]
    %v1767 = vld [vmem:[%s1763 + $0x10] sm:$0x8]
    %v1768 = vld [vmem:[%s1763 + $0x14] sm:$0xf]
    %v1769 = vld [vmem:[%s1763 + $0x18] sm:$0xf]
    %v1770 = vld [vmem:[%s1763 + $0x20] sm:$0x8]
    %v1771 = vld [vmem:[%s1763 + $0x24] sm:$0xf]
    %v1772 = vld [vmem:[%s1763 + $0x28] sm:$0xf]
    %v1773 = vld [vmem:[%s1763 + $0x30] sm:$0x8]
    %v1774 = vld [vmem:[%s1763 + $0x34] sm:$0xf]
    %v1775 = vld [vmem:[%s1763 + $0x38] sm:$0xf]
    %v1776 = vld [vmem:[%s1763 + $0x40] sm:$0x8]
    %v1777 = vld [vmem:[%s1763 + $0x44] sm:$0xf]
    %v1778 = vld [vmem:[%s1763 + $0x48] sm:$0xf]
    %v1779 = vld [vmem:[%s1763 + $0x50] sm:$0x8]
    %v1780 = vld [vmem:[%s1763 + $0x54] sm:$0xf]
    %v1781 = vld [vmem:[%s1763 + $0x58] sm:$0xf]
    %v1782 = vld [vmem:[%s1763 + $0x60] sm:$0x8]
    %v1783 = vld [vmem:[%s1763 + $0x64] sm:$0xf]
    %v1784 = vld [vmem:[%s1763 + $0x68] sm:$0xf]
    %v1785 = vld [vmem:[%s1763 + $0x70] sm:$0x8]
    %v1786 = vld [vmem:[%s1763 + $0x74] sm:$0xf]
    %v1787 = vld [vmem:[%s1763 + $0x78] sm:$0xf]
    %v1788 = vld [vmem:[%s1763 + $0x80] sm:$0x8]
    %v1789 = vld [vmem:[%s1763 + $0x84] sm:$0xf]
    %v1790 = vld [vmem:[%s1763 + $0x88] sm:$0xf]
    %v1791 = vld [vmem:[%s1763 + $0x90] sm:$0x8]
    %v1792 = vld [vmem:[%s1763 + $0x94] sm:$0xf]
    %v1793 = vld [vmem:[%s1763 + $0x98] sm:$0xf]
    %v1794 = vld [vmem:[%s1763 + $0xa0] sm:$0x8]
    %v1795 = vld [vmem:[%s1763 + $0xa4] sm:$0xf]
    %v1796 = vld [vmem:[%s1763 + $0xa8] sm:$0xf]
    %v1797 = vld [vmem:[%s1763 + $0xb0] sm:$0x8]
    %v1798 = vld [vmem:[%s1763 + $0xb4] sm:$0xf]
    %v1799 = vld [vmem:[%s1763 + $0xb8] sm:$0xf]
    %v1800 = vld [vmem:[%s1763 + $0xc0] sm:$0x8]
    %v1801 = vld [vmem:[%s1763 + $0xc4] sm:$0xf]
    %v1802 = vld [vmem:[%s1763 + $0xc8] sm:$0xf]
    %v1803 = vld [vmem:[%s1763 + $0xd0] sm:$0x8]
    %v1804 = vld [vmem:[%s1763 + $0xd4] sm:$0xf]
    %v1805 = vld [vmem:[%s1763 + $0xd8] sm:$0xf]
    %v1806 = vld [vmem:[%s1763 + $0xe0] sm:$0x8]
    %v1807 = vld [vmem:[%s1763 + $0xe4] sm:$0xf]
    %v1808 = vld [vmem:[%s1763 + $0xe8] sm:$0xf]
    %v1809 = vld [vmem:[%s1763 + $0xf0] sm:$0x8]
    %v1810 = vld [vmem:[%s1763 + $0xf4] sm:$0xf]
    %v1811 = vld [vmem:[%s1763 + $0xf8] sm:$0xf]
    %v1812 = vld [vmem:[%s1763 + $0x120] sm:$0x8]
    %v1813 = vld [vmem:[%s1763 + $0x124] sm:$0xf]
    %v1814 = vld [vmem:[%s1763 + $0x128] sm:$0xf]
    %v1815 = vld [vmem:[%s1763 + $0x130] sm:$0x8]
    %v1816 = vld [vmem:[%s1763 + $0x134] sm:$0xf]
    %v1817 = vld [vmem:[%s1763 + $0x138] sm:$0xf]
    %v1818 = vld [vmem:[%s1763 + $0x140] sm:$0x8]
    %v1819 = vld [vmem:[%s1763 + $0x144] sm:$0xf]
    %v1820 = vld [vmem:[%s1763 + $0x148] sm:$0xf]
    %v1821 = vld [vmem:[%s1763 + $0x150] sm:$0x8]
    %v1822 = vld [vmem:[%s1763 + $0x154] sm:$0xf]
    %v1823 = vld [vmem:[%s1763 + $0x158] sm:$0xf]
    %v1824 = vld [vmem:[%s1763 + $0x160] sm:$0x8]
    %v1825 = vld [vmem:[%s1763 + $0x164] sm:$0xf]
    %v1826 = vld [vmem:[%s1763 + $0x168] sm:$0xf]
    %v1827 = vld [vmem:[%s1763 + $0x170] sm:$0x8]
    %v1828 = vld [vmem:[%s1763 + $0x174] sm:$0xf]
    %v1829 = vld [vmem:[%s1763 + $0x178] sm:$0xf]
    %v1830 = vld [vmem:[%s1763 + $0x180] sm:$0x8]
    %v1831 = vld [vmem:[%s1763 + $0x184] sm:$0xf]
    %v1832 = vld [vmem:[%s1763 + $0x188] sm:$0xf]
    %v1833 = vld [vmem:[%s1763 + $0x190] sm:$0x8]
    %v1834 = vld [vmem:[%s1763 + $0x194] sm:$0xf]
    %v1835 = vld [vmem:[%s1763 + $0x198] sm:$0xf]
    %v1836 = vld [vmem:[%s1763 + $0x1a0] sm:$0x8]
    %v1837 = vld [vmem:[%s1763 + $0x1a4] sm:$0xf]
    %v1838 = vld [vmem:[%s1763 + $0x1a8] sm:$0xf]
    %v1839 = vld [vmem:[%s1763 + $0x1b0] sm:$0x8]
    %v1840 = vld [vmem:[%s1763 + $0x1b4] sm:$0xf]
    %v1841 = vld [vmem:[%s1763 + $0x1b8] sm:$0xf]
    %v1842 = vld [vmem:[%s1763 + $0x1c0] sm:$0x8]
    %v1843 = vld [vmem:[%s1763 + $0x1c4] sm:$0xf]
    %v1844 = vld [vmem:[%s1763 + $0x1c8] sm:$0xf]
    %v1845 = vld [vmem:[%s1763 + $0x1d0] sm:$0x8]
    %v1846 = vld [vmem:[%s1763 + $0x1d4] sm:$0xf]
    %v1847 = vld [vmem:[%s1763 + $0x1d8] sm:$0xf]
    %v1848 = vld [vmem:[%s1763 + $0x1e0] sm:$0x8]
    %v1849 = vld [vmem:[%s1763 + $0x1e4] sm:$0xf]
    %v1850 = vld [vmem:[%s1763 + $0x1e8] sm:$0xf]
    %v1851 = vld [vmem:[%s1763 + $0x1f0] sm:$0x8]
    %v1852 = vld [vmem:[%s1763 + $0x1f4] sm:$0xf]
    %v1853 = vld [vmem:[%s1763 + $0x1f8] sm:$0xf]
    %v1854 = vld [vmem:[%s1763 + $0x200] sm:$0x8]
    %v1855 = vld [vmem:[%s1763 + $0x204] sm:$0xf]
    %v1856 = vld [vmem:[%s1763 + $0x208] sm:$0xf]
    %v1857 = vld [vmem:[%s1763 + $0x210] sm:$0x8]
    %v1858 = vld [vmem:[%s1763 + $0x214] sm:$0xf]
    %v1859 = vld [vmem:[%s1763 + $0x218] sm:$0xf]
    %v1860 = vlaneseq
    %v1861 = vshrl.u32 %v1860, 7
    %v1862 = vsub.s32 3, %v1861
    %v1863 = vrot.slane %v782, %v1862
    %v1865 = vunpack.c.l.b16 %v1863
    %v1866 = vpack.c.b16 %v1865, %v1865
    %v1868 = vmul.bf16 %v1764, %v1866
    %v1869 = vmul.bf16 %v1765, %v1866
    %v1870 = vmul.bf16 %v1766, %v1866
    %v1871 = vmul.bf16 %v1767, %v1866
    %v1872 = vmul.bf16 %v1768, %v1866
    %v1873 = vmul.bf16 %v1769, %v1866
    %v1874 = vmul.bf16 %v1770, %v1866
    %v1875 = vmul.bf16 %v1771, %v1866
    %v1876 = vmul.bf16 %v1772, %v1866
    %v1877 = vmul.bf16 %v1773, %v1866
    %v1878 = vmul.bf16 %v1774, %v1866
    %v1879 = vmul.bf16 %v1775, %v1866
    %v1880 = vmul.bf16 %v1776, %v1866
    %v1881 = vmul.bf16 %v1777, %v1866
    %v1882 = vmul.bf16 %v1778, %v1866
    %v1883 = vmul.bf16 %v1779, %v1866
    %v1884 = vmul.bf16 %v1780, %v1866
    %v1885 = vmul.bf16 %v1781, %v1866
    %v1886 = vmul.bf16 %v1782, %v1866
    %v1887 = vmul.bf16 %v1783, %v1866
    %v1888 = vmul.bf16 %v1784, %v1866
    %v1889 = vmul.bf16 %v1785, %v1866
    %v1890 = vmul.bf16 %v1786, %v1866
    %v1891 = vmul.bf16 %v1787, %v1866
    %v1892 = vmul.bf16 %v1788, %v1866
    %v1893 = vmul.bf16 %v1789, %v1866
    %v1894 = vmul.bf16 %v1790, %v1866
    %v1895 = vmul.bf16 %v1791, %v1866
    %v1896 = vmul.bf16 %v1792, %v1866
    %v1897 = vmul.bf16 %v1793, %v1866
    %v1898 = vmul.bf16 %v1794, %v1866
    %v1899 = vmul.bf16 %v1795, %v1866
    %v1900 = vmul.bf16 %v1796, %v1866
    %v1901 = vmul.bf16 %v1797, %v1866
    %v1902 = vmul.bf16 %v1798, %v1866
    %v1903 = vmul.bf16 %v1799, %v1866
    %v1904 = vmul.bf16 %v1800, %v1866
    %v1905 = vmul.bf16 %v1801, %v1866
    %v1906 = vmul.bf16 %v1802, %v1866
    %v1907 = vmul.bf16 %v1803, %v1866
    %v1908 = vmul.bf16 %v1804, %v1866
    %v1909 = vmul.bf16 %v1805, %v1866
    %v1910 = vmul.bf16 %v1806, %v1866
    %v1911 = vmul.bf16 %v1807, %v1866
    %v1912 = vmul.bf16 %v1808, %v1866
    %v1913 = vmul.bf16 %v1809, %v1866
    %v1914 = vmul.bf16 %v1810, %v1866
    %v1915 = vmul.bf16 %v1811, %v1866
    %v1916 = vmul.bf16 %v1812, %v1866
    %v1917 = vmul.bf16 %v1813, %v1866
    %v1918 = vmul.bf16 %v1814, %v1866
    %v1919 = vmul.bf16 %v1815, %v1866
    %v1920 = vmul.bf16 %v1816, %v1866
    %v1921 = vmul.bf16 %v1817, %v1866
    %v1922 = vmul.bf16 %v1818, %v1866
    %v1923 = vmul.bf16 %v1819, %v1866
    %v1924 = vmul.bf16 %v1820, %v1866
    %v1925 = vmul.bf16 %v1821, %v1866
    %v1926 = vmul.bf16 %v1822, %v1866
    %v1927 = vmul.bf16 %v1823, %v1866
    %v1928 = vmul.bf16 %v1824, %v1866
    %v1929 = vmul.bf16 %v1825, %v1866
    %v1930 = vmul.bf16 %v1826, %v1866
    %v1931 = vmul.bf16 %v1827, %v1866
    %v1932 = vmul.bf16 %v1828, %v1866
    %v1933 = vmul.bf16 %v1829, %v1866
    %v1934 = vmul.bf16 %v1830, %v1866
    %v1935 = vmul.bf16 %v1831, %v1866
    %v1936 = vmul.bf16 %v1832, %v1866
    %v1937 = vmul.bf16 %v1833, %v1866
    %v1938 = vmul.bf16 %v1834, %v1866
    %v1939 = vmul.bf16 %v1835, %v1866
    %v1940 = vmul.bf16 %v1836, %v1866
    %v1941 = vmul.bf16 %v1837, %v1866
    %v1942 = vmul.bf16 %v1838, %v1866
    %v1943 = vmul.bf16 %v1839, %v1866
    %v1944 = vmul.bf16 %v1840, %v1866
    %v1945 = vmul.bf16 %v1841, %v1866
    %v1946 = vmul.bf16 %v1842, %v1866
    %v1947 = vmul.bf16 %v1843, %v1866
    %v1948 = vmul.bf16 %v1844, %v1866
    %v1949 = vmul.bf16 %v1845, %v1866
    %v1950 = vmul.bf16 %v1846, %v1866
    %v1951 = vmul.bf16 %v1847, %v1866
    %v1952 = vmul.bf16 %v1848, %v1866
    %v1953 = vmul.bf16 %v1849, %v1866
    %v1954 = vmul.bf16 %v1850, %v1866
    %v1955 = vmul.bf16 %v1851, %v1866
    %v1956 = vmul.bf16 %v1852, %v1866
    %v1957 = vmul.bf16 %v1853, %v1866
    %v1958 = vmul.bf16 %v1854, %v1866
    %v1959 = vmul.bf16 %v1855, %v1866
    %v1960 = vmul.bf16 %v1856, %v1866
    %v1961 = vmul.bf16 %v1857, %v1866
    %v1962 = vmul.bf16 %v1858, %v1866
    %v1963 = vmul.bf16 %v1859, %v1866
    %v1964 = vadd.bf16 %v1299, %v1868
    %v1965 = vadd.bf16 %v1300, %v1869
    %v1966 = vadd.bf16 %v1301, %v1870
    %v1967 = vadd.bf16 %v1302, %v1871
    %v1968 = vadd.bf16 %v1303, %v1872
    %v1969 = vadd.bf16 %v1304, %v1873
    %v1970 = vadd.bf16 %v1305, %v1874
    %v1971 = vadd.bf16 %v1306, %v1875
    %v1972 = vadd.bf16 %v1307, %v1876
    %v1973 = vadd.bf16 %v1308, %v1877
    %v1974 = vadd.bf16 %v1309, %v1878
    %v1975 = vadd.bf16 %v1310, %v1879
    %v1976 = vadd.bf16 %v1311, %v1880
    %v1977 = vadd.bf16 %v1312, %v1881
    %v1978 = vadd.bf16 %v1313, %v1882
    %v1979 = vadd.bf16 %v1314, %v1883
    %v1980 = vadd.bf16 %v1315, %v1884
    %v1981 = vadd.bf16 %v1316, %v1885
    %v1982 = vadd.bf16 %v1317, %v1886
    %v1983 = vadd.bf16 %v1318, %v1887
    %v1984 = vadd.bf16 %v1319, %v1888
    %v1985 = vadd.bf16 %v1320, %v1889
    %v1986 = vadd.bf16 %v1321, %v1890
    %v1987 = vadd.bf16 %v1322, %v1891
    %v1988 = vadd.bf16 %v1323, %v1892
    %v1989 = vadd.bf16 %v1324, %v1893
    %v1990 = vadd.bf16 %v1325, %v1894
    %v1991 = vadd.bf16 %v1326, %v1895
    %v1992 = vadd.bf16 %v1327, %v1896
    %v1993 = vadd.bf16 %v1328, %v1897
    %v1994 = vadd.bf16 %v1329, %v1898
    %v1995 = vadd.bf16 %v1330, %v1899
    %v1996 = vadd.bf16 %v1331, %v1900
    %v1997 = vadd.bf16 %v1332, %v1901
    %v1998 = vadd.bf16 %v1333, %v1902
    %v1999 = vadd.bf16 %v1334, %v1903
    %v2000 = vadd.bf16 %v1335, %v1904
    %v2001 = vadd.bf16 %v1336, %v1905
    %v2002 = vadd.bf16 %v1337, %v1906
    %v2003 = vadd.bf16 %v1338, %v1907
    %v2004 = vadd.bf16 %v1339, %v1908
    %v2005 = vadd.bf16 %v1340, %v1909
    %v2006 = vadd.bf16 %v1341, %v1910
    %v2007 = vadd.bf16 %v1342, %v1911
    %v2008 = vadd.bf16 %v1343, %v1912
    %v2009 = vadd.bf16 %v1344, %v1913
    %v2010 = vadd.bf16 %v1345, %v1914
    %v2011 = vadd.bf16 %v1346, %v1915
    %v2012 = vadd.bf16 %v1347, %v1916
    %v2013 = vadd.bf16 %v1348, %v1917
    %v2014 = vadd.bf16 %v1349, %v1918
    %v2015 = vadd.bf16 %v1350, %v1919
    %v2016 = vadd.bf16 %v1351, %v1920
    %v2017 = vadd.bf16 %v1352, %v1921
    %v2018 = vadd.bf16 %v1353, %v1922
    %v2019 = vadd.bf16 %v1354, %v1923
    %v2020 = vadd.bf16 %v1355, %v1924
    %v2021 = vadd.bf16 %v1356, %v1925
    %v2022 = vadd.bf16 %v1357, %v1926
    %v2023 = vadd.bf16 %v1358, %v1927
    %v2024 = vadd.bf16 %v1359, %v1928
    %v2025 = vadd.bf16 %v1360, %v1929
    %v2026 = vadd.bf16 %v1361, %v1930
    %v2027 = vadd.bf16 %v1362, %v1931
    %v2028 = vadd.bf16 %v1363, %v1932
    %v2029 = vadd.bf16 %v1364, %v1933
    %v2030 = vadd.bf16 %v1365, %v1934
    %v2031 = vadd.bf16 %v1366, %v1935
    %v2032 = vadd.bf16 %v1367, %v1936
    %v2033 = vadd.bf16 %v1368, %v1937
    %v2034 = vadd.bf16 %v1369, %v1938
    %v2035 = vadd.bf16 %v1370, %v1939
    %v2036 = vadd.bf16 %v1371, %v1940
    %v2037 = vadd.bf16 %v1372, %v1941
    %v2038 = vadd.bf16 %v1373, %v1942
    %v2039 = vadd.bf16 %v1374, %v1943
    %v2040 = vadd.bf16 %v1375, %v1944
    %v2041 = vadd.bf16 %v1376, %v1945
    %v2042 = vadd.bf16 %v1377, %v1946
    %v2043 = vadd.bf16 %v1378, %v1947
    %v2044 = vadd.bf16 %v1379, %v1948
    %v2045 = vadd.bf16 %v1380, %v1949
    %v2046 = vadd.bf16 %v1381, %v1950
    %v2047 = vadd.bf16 %v1382, %v1951
    %v2048 = vadd.bf16 %v1383, %v1952
    %v2049 = vadd.bf16 %v1384, %v1953
    %v2050 = vadd.bf16 %v1385, %v1954
    %v2051 = vadd.bf16 %v1386, %v1955
    %v2052 = vadd.bf16 %v1387, %v1956
    %v2053 = vadd.bf16 %v1388, %v1957
    %v2054 = vadd.bf16 %v1389, %v1958
    %v2055 = vadd.bf16 %v1390, %v1959
    %v2056 = vadd.bf16 %v1391, %v1960
    %v2057 = vadd.bf16 %v1392, %v1961
    %v2058 = vadd.bf16 %v1393, %v1962
    %v2059 = vadd.bf16 %v1394, %v1963
    %v2060 = vlaneseq
    %v2061 = vshrl.u32 %v2060, 7
    %v2062 = vsub.s32 3, %v2061
    %v2063 = vrot.slane %v889, %v2062
    %v2065 = vunpack.c.l.b16 %v2063
    %v2066 = vpack.c.b16 %v2065, %v2065
    %v2068 = vmul.bf16 %v1765, %v2066
    %v2069 = vmul.bf16 %v1766, %v2066
    %v2070 = vmul.bf16 %v1768, %v2066
    %v2071 = vmul.bf16 %v1769, %v2066
    %v2072 = vmul.bf16 %v1771, %v2066
    %v2073 = vmul.bf16 %v1772, %v2066
    %v2074 = vmul.bf16 %v1774, %v2066
    %v2075 = vmul.bf16 %v1775, %v2066
    %v2076 = vmul.bf16 %v1777, %v2066
    %v2077 = vmul.bf16 %v1778, %v2066
    %v2078 = vmul.bf16 %v1780, %v2066
    %v2079 = vmul.bf16 %v1781, %v2066
    %v2080 = vmul.bf16 %v1783, %v2066
    %v2081 = vmul.bf16 %v1784, %v2066
    %v2082 = vmul.bf16 %v1786, %v2066
    %v2083 = vmul.bf16 %v1787, %v2066
    %v2084 = vmul.bf16 %v1789, %v2066
    %v2085 = vmul.bf16 %v1790, %v2066
    %v2086 = vmul.bf16 %v1792, %v2066
    %v2087 = vmul.bf16 %v1793, %v2066
    %v2088 = vmul.bf16 %v1795, %v2066
    %v2089 = vmul.bf16 %v1796, %v2066
    %v2090 = vmul.bf16 %v1798, %v2066
    %v2091 = vmul.bf16 %v1799, %v2066
    %v2092 = vmul.bf16 %v1801, %v2066
    %v2093 = vmul.bf16 %v1802, %v2066
    %v2094 = vmul.bf16 %v1804, %v2066
    %v2095 = vmul.bf16 %v1805, %v2066
    %v2096 = vmul.bf16 %v1807, %v2066
    %v2097 = vmul.bf16 %v1808, %v2066
    %v2098 = vmul.bf16 %v1810, %v2066
    %v2099 = vmul.bf16 %v1811, %v2066
    %v2100 = vmul.bf16 %v1813, %v2066
    %v2101 = vmul.bf16 %v1814, %v2066
    %v2102 = vmul.bf16 %v1816, %v2066
    %v2103 = vmul.bf16 %v1817, %v2066
    %v2104 = vmul.bf16 %v1819, %v2066
    %v2105 = vmul.bf16 %v1820, %v2066
    %v2106 = vmul.bf16 %v1822, %v2066
    %v2107 = vmul.bf16 %v1823, %v2066
    %v2108 = vmul.bf16 %v1825, %v2066
    %v2109 = vmul.bf16 %v1826, %v2066
    %v2110 = vmul.bf16 %v1828, %v2066
    %v2111 = vmul.bf16 %v1829, %v2066
    %v2112 = vmul.bf16 %v1831, %v2066
    %v2113 = vmul.bf16 %v1832, %v2066
    %v2114 = vmul.bf16 %v1834, %v2066
    %v2115 = vmul.bf16 %v1835, %v2066
    %v2116 = vmul.bf16 %v1837, %v2066
    %v2117 = vmul.bf16 %v1838, %v2066
    %v2118 = vmul.bf16 %v1840, %v2066
    %v2119 = vmul.bf16 %v1841, %v2066
    %v2120 = vmul.bf16 %v1843, %v2066
    %v2121 = vmul.bf16 %v1844, %v2066
    %v2122 = vmul.bf16 %v1846, %v2066
    %v2123 = vmul.bf16 %v1847, %v2066
    %v2124 = vmul.bf16 %v1849, %v2066
    %v2125 = vmul.bf16 %v1850, %v2066
    %v2126 = vmul.bf16 %v1852, %v2066
    %v2127 = vmul.bf16 %v1853, %v2066
    %v2128 = vmul.bf16 %v1855, %v2066
    %v2129 = vmul.bf16 %v1856, %v2066
    %v2130 = vmul.bf16 %v1858, %v2066
    %v2131 = vmul.bf16 %v1859, %v2066
    %v2132 = vadd.bf16 %v1467, %v2068
    %v2133 = vadd.bf16 %v1468, %v2069
    %v2134 = vadd.bf16 %v1469, %v2070
    %v2135 = vadd.bf16 %v1470, %v2071
    %v2136 = vadd.bf16 %v1471, %v2072
    %v2137 = vadd.bf16 %v1472, %v2073
    %v2138 = vadd.bf16 %v1473, %v2074
    %v2139 = vadd.bf16 %v1474, %v2075
    %v2140 = vadd.bf16 %v1475, %v2076
    %v2141 = vadd.bf16 %v1476, %v2077
    %v2142 = vadd.bf16 %v1477, %v2078
    %v2143 = vadd.bf16 %v1478, %v2079
    %v2144 = vadd.bf16 %v1479, %v2080
    %v2145 = vadd.bf16 %v1480, %v2081
    %v2146 = vadd.bf16 %v1481, %v2082
    %v2147 = vadd.bf16 %v1482, %v2083
    %v2148 = vadd.bf16 %v1483, %v2084
    %v2149 = vadd.bf16 %v1484, %v2085
    %v2150 = vadd.bf16 %v1485, %v2086
    %v2151 = vadd.bf16 %v1486, %v2087
    %v2152 = vadd.bf16 %v1487, %v2088
    %v2153 = vadd.bf16 %v1488, %v2089
    %v2154 = vadd.bf16 %v1489, %v2090
    %v2155 = vadd.bf16 %v1490, %v2091
    %v2156 = vadd.bf16 %v1491, %v2092
    %v2157 = vadd.bf16 %v1492, %v2093
    %v2158 = vadd.bf16 %v1493, %v2094
    %v2159 = vadd.bf16 %v1494, %v2095
    %v2160 = vadd.bf16 %v1495, %v2096
    %v2161 = vadd.bf16 %v1496, %v2097
    %v2162 = vadd.bf16 %v1497, %v2098
    %v2163 = vadd.bf16 %v1498, %v2099
    %v2164 = vadd.bf16 %v1499, %v2100
    %v2165 = vadd.bf16 %v1500, %v2101
    %v2166 = vadd.bf16 %v1501, %v2102
    %v2167 = vadd.bf16 %v1502, %v2103
    %v2168 = vadd.bf16 %v1503, %v2104
    %v2169 = vadd.bf16 %v1504, %v2105
    %v2170 = vadd.bf16 %v1505, %v2106
    %v2171 = vadd.bf16 %v1506, %v2107
    %v2172 = vadd.bf16 %v1507, %v2108
    %v2173 = vadd.bf16 %v1508, %v2109
    %v2174 = vadd.bf16 %v1509, %v2110
    %v2175 = vadd.bf16 %v1510, %v2111
    %v2176 = vadd.bf16 %v1511, %v2112
    %v2177 = vadd.bf16 %v1512, %v2113
    %v2178 = vadd.bf16 %v1513, %v2114
    %v2179 = vadd.bf16 %v1514, %v2115
    %v2180 = vadd.bf16 %v1515, %v2116
    %v2181 = vadd.bf16 %v1516, %v2117
    %v2182 = vadd.bf16 %v1517, %v2118
    %v2183 = vadd.bf16 %v1518, %v2119
    %v2184 = vadd.bf16 %v1519, %v2120
    %v2185 = vadd.bf16 %v1520, %v2121
    %v2186 = vadd.bf16 %v1521, %v2122
    %v2187 = vadd.bf16 %v1522, %v2123
    %v2188 = vadd.bf16 %v1523, %v2124
    %v2189 = vadd.bf16 %v1524, %v2125
    %v2190 = vadd.bf16 %v1525, %v2126
    %v2191 = vadd.bf16 %v1526, %v2127
    %v2192 = vadd.bf16 %v1527, %v2128
    %v2193 = vadd.bf16 %v1528, %v2129
    %v2194 = vadd.bf16 %v1529, %v2130
    %v2195 = vadd.bf16 %v1530, %v2131
    %v2196 = vld [vmem:[%s1763 + $0xc] sm:$0x1]
    %v2197 = vld [vmem:[%s1763 + $0x1c] sm:$0x1]
    %v2198 = vld [vmem:[%s1763 + $0x2c] sm:$0x1]
    %v2199 = vld [vmem:[%s1763 + $0x3c] sm:$0x1]
    %v2200 = vld [vmem:[%s1763 + $0x4c] sm:$0x1]
    %v2201 = vld [vmem:[%s1763 + $0x5c] sm:$0x1]
    %v2202 = vld [vmem:[%s1763 + $0x6c] sm:$0x1]
    %v2203 = vld [vmem:[%s1763 + $0x7c] sm:$0x1]
    %v2204 = vld [vmem:[%s1763 + $0x8c] sm:$0x1]
    %v2205 = vld [vmem:[%s1763 + $0x9c] sm:$0x1]
    %v2206 = vld [vmem:[%s1763 + $0xac] sm:$0x1]
    %v2207 = vld [vmem:[%s1763 + $0xbc] sm:$0x1]
    %v2208 = vld [vmem:[%s1763 + $0xcc] sm:$0x1]
    %v2209 = vld [vmem:[%s1763 + $0xdc] sm:$0x1]
    %v2210 = vld [vmem:[%s1763 + $0xec] sm:$0x1]
    %v2211 = vld [vmem:[%s1763 + $0xfc] sm:$0x1]
    %v2212 = vld [vmem:[%s1763 + $0x12c] sm:$0x1]
    %v2213 = vld [vmem:[%s1763 + $0x13c] sm:$0x1]
    %v2214 = vld [vmem:[%s1763 + $0x14c] sm:$0x1]
    %v2215 = vld [vmem:[%s1763 + $0x15c] sm:$0x1]
    %v2216 = vld [vmem:[%s1763 + $0x16c] sm:$0x1]
    %v2217 = vld [vmem:[%s1763 + $0x17c] sm:$0x1]
    %v2218 = vld [vmem:[%s1763 + $0x18c] sm:$0x1]
    %v2219 = vld [vmem:[%s1763 + $0x19c] sm:$0x1]
    %v2220 = vld [vmem:[%s1763 + $0x1ac] sm:$0x1]
    %v2221 = vld [vmem:[%s1763 + $0x1bc] sm:$0x1]
    %v2222 = vld [vmem:[%s1763 + $0x1cc] sm:$0x1]
    %v2223 = vld [vmem:[%s1763 + $0x1dc] sm:$0x1]
    %v2224 = vld [vmem:[%s1763 + $0x1ec] sm:$0x1]
    %v2225 = vld [vmem:[%s1763 + $0x1fc] sm:$0x1]
    %v2226 = vld [vmem:[%s1763 + $0x20c] sm:$0x1]
    %v2227 = vld [vmem:[%s1763 + $0x21c] sm:$0x1]
    %v2229 = vpack.i.b16 %v683, %v683
    %v2231 = vlaneseq
    %v2232 = vshrl.u32 %v2231, 7
    %v2233 = vsub.s32 0, %v2232
    %v2234 = vrot.slane %v2229, %v2233
    %v2236 = vunpack.c.l.b16 %v2234
    %v2237 = vpack.c.b16 %v2236, %v2236
    %v2239 = vmul.bf16 %v1765, %v2237
    %v2240 = vmul.bf16 %v1766, %v2237
    %v2241 = vmul.bf16 %v2196, %v2237
    %v2242 = vmul.bf16 %v1768, %v2237
    %v2243 = vmul.bf16 %v1769, %v2237
    %v2244 = vmul.bf16 %v2197, %v2237
    %v2245 = vmul.bf16 %v1771, %v2237
    %v2246 = vmul.bf16 %v1772, %v2237
    %v2247 = vmul.bf16 %v2198, %v2237
    %v2248 = vmul.bf16 %v1774, %v2237
    %v2249 = vmul.bf16 %v1775, %v2237
    %v2250 = vmul.bf16 %v2199, %v2237
    %v2251 = vmul.bf16 %v1777, %v2237
    %v2252 = vmul.bf16 %v1778, %v2237
    %v2253 = vmul.bf16 %v2200, %v2237
    %v2254 = vmul.bf16 %v1780, %v2237
    %v2255 = vmul.bf16 %v1781, %v2237
    %v2256 = vmul.bf16 %v2201, %v2237
    %v2257 = vmul.bf16 %v1783, %v2237
    %v2258 = vmul.bf16 %v1784, %v2237
    %v2259 = vmul.bf16 %v2202, %v2237
    %v2260 = vmul.bf16 %v1786, %v2237
    %v2261 = vmul.bf16 %v1787, %v2237
    %v2262 = vmul.bf16 %v2203, %v2237
    %v2263 = vmul.bf16 %v1789, %v2237
    %v2264 = vmul.bf16 %v1790, %v2237
    %v2265 = vmul.bf16 %v2204, %v2237
    %v2266 = vmul.bf16 %v1792, %v2237
    %v2267 = vmul.bf16 %v1793, %v2237
    %v2268 = vmul.bf16 %v2205, %v2237
    %v2269 = vmul.bf16 %v1795, %v2237
    %v2270 = vmul.bf16 %v1796, %v2237
    %v2271 = vmul.bf16 %v2206, %v2237
    %v2272 = vmul.bf16 %v1798, %v2237
    %v2273 = vmul.bf16 %v1799, %v2237
    %v2274 = vmul.bf16 %v2207, %v2237
    %v2275 = vmul.bf16 %v1801, %v2237
    %v2276 = vmul.bf16 %v1802, %v2237
    %v2277 = vmul.bf16 %v2208, %v2237
    %v2278 = vmul.bf16 %v1804, %v2237
    %v2279 = vmul.bf16 %v1805, %v2237
    %v2280 = vmul.bf16 %v2209, %v2237
    %v2281 = vmul.bf16 %v1807, %v2237
    %v2282 = vmul.bf16 %v1808, %v2237
    %v2283 = vmul.bf16 %v2210, %v2237
    %v2284 = vmul.bf16 %v1810, %v2237
    %v2285 = vmul.bf16 %v1811, %v2237
    %v2286 = vmul.bf16 %v2211, %v2237
    %v2287 = vmul.bf16 %v1813, %v2237
    %v2288 = vmul.bf16 %v1814, %v2237
    %v2289 = vmul.bf16 %v2212, %v2237
    %v2290 = vmul.bf16 %v1816, %v2237
    %v2291 = vmul.bf16 %v1817, %v2237
    %v2292 = vmul.bf16 %v2213, %v2237
    %v2293 = vmul.bf16 %v1819, %v2237
    %v2294 = vmul.bf16 %v1820, %v2237
    %v2295 = vmul.bf16 %v2214, %v2237
    %v2296 = vmul.bf16 %v1822, %v2237
    %v2297 = vmul.bf16 %v1823, %v2237
    %v2298 = vmul.bf16 %v2215, %v2237
    %v2299 = vmul.bf16 %v1825, %v2237
    %v2300 = vmul.bf16 %v1826, %v2237
    %v2301 = vmul.bf16 %v2216, %v2237
    %v2302 = vmul.bf16 %v1828, %v2237
    %v2303 = vmul.bf16 %v1829, %v2237
    %v2304 = vmul.bf16 %v2217, %v2237
    %v2305 = vmul.bf16 %v1831, %v2237
    %v2306 = vmul.bf16 %v1832, %v2237
    %v2307 = vmul.bf16 %v2218, %v2237
    %v2308 = vmul.bf16 %v1834, %v2237
    %v2309 = vmul.bf16 %v1835, %v2237
    %v2310 = vmul.bf16 %v2219, %v2237
    %v2311 = vmul.bf16 %v1837, %v2237
    %v2312 = vmul.bf16 %v1838, %v2237
    %v2313 = vmul.bf16 %v2220, %v2237
    %v2314 = vmul.bf16 %v1840, %v2237
    %v2315 = vmul.bf16 %v1841, %v2237
    %v2316 = vmul.bf16 %v2221, %v2237
    %v2317 = vmul.bf16 %v1843, %v2237
    %v2318 = vmul.bf16 %v1844, %v2237
    %v2319 = vmul.bf16 %v2222, %v2237
    %v2320 = vmul.bf16 %v1846, %v2237
    %v2321 = vmul.bf16 %v1847, %v2237
    %v2322 = vmul.bf16 %v2223, %v2237
    %v2323 = vmul.bf16 %v1849, %v2237
    %v2324 = vmul.bf16 %v1850, %v2237
    %v2325 = vmul.bf16 %v2224, %v2237
    %v2326 = vmul.bf16 %v1852, %v2237
    %v2327 = vmul.bf16 %v1853, %v2237
    %v2328 = vmul.bf16 %v2225, %v2237
    %v2329 = vmul.bf16 %v1855, %v2237
    %v2330 = vmul.bf16 %v1856, %v2237
    %v2331 = vmul.bf16 %v2226, %v2237
    %v2332 = vmul.bf16 %v1858, %v2237
    %v2333 = vmul.bf16 %v1859, %v2237
    %v2334 = vmul.bf16 %v2227, %v2237
    %v2335 = vadd.bf16 %v1667, %v2239
    %v2336 = vadd.bf16 %v1668, %v2240
    %v2337 = vadd.bf16 %v1669, %v2241
    %v2338 = vadd.bf16 %v1670, %v2242
    %v2339 = vadd.bf16 %v1671, %v2243
    %v2340 = vadd.bf16 %v1672, %v2244
    %v2341 = vadd.bf16 %v1673, %v2245
    %v2342 = vadd.bf16 %v1674, %v2246
    %v2343 = vadd.bf16 %v1675, %v2247
    %v2344 = vadd.bf16 %v1676, %v2248
    %v2345 = vadd.bf16 %v1677, %v2249
    %v2346 = vadd.bf16 %v1678, %v2250
    %v2347 = vadd.bf16 %v1679, %v2251
    %v2348 = vadd.bf16 %v1680, %v2252
    %v2349 = vadd.bf16 %v1681, %v2253
    %v2350 = vadd.bf16 %v1682, %v2254
    %v2351 = vadd.bf16 %v1683, %v2255
    %v2352 = vadd.bf16 %v1684, %v2256
    %v2353 = vadd.bf16 %v1685, %v2257
    %v2354 = vadd.bf16 %v1686, %v2258
    %v2355 = vadd.bf16 %v1687, %v2259
    %v2356 = vadd.bf16 %v1688, %v2260
    %v2357 = vadd.bf16 %v1689, %v2261
    %v2358 = vadd.bf16 %v1690, %v2262
    %v2359 = vadd.bf16 %v1691, %v2263
    %v2360 = vadd.bf16 %v1692, %v2264
    %v2361 = vadd.bf16 %v1693, %v2265
    %v2362 = vadd.bf16 %v1694, %v2266
    %v2363 = vadd.bf16 %v1695, %v2267
    %v2364 = vadd.bf16 %v1696, %v2268
    %v2365 = vadd.bf16 %v1697, %v2269
    %v2366 = vadd.bf16 %v1698, %v2270
    %v2367 = vadd.bf16 %v1699, %v2271
    %v2368 = vadd.bf16 %v1700, %v2272
    %v2369 = vadd.bf16 %v1701, %v2273
    %v2370 = vadd.bf16 %v1702, %v2274
    %v2371 = vadd.bf16 %v1703, %v2275
    %v2372 = vadd.bf16 %v1704, %v2276
    %v2373 = vadd.bf16 %v1705, %v2277
    %v2374 = vadd.bf16 %v1706, %v2278
    %v2375 = vadd.bf16 %v1707, %v2279
    %v2376 = vadd.bf16 %v1708, %v2280
    %v2377 = vadd.bf16 %v1709, %v2281
    %v2378 = vadd.bf16 %v1710, %v2282
    %v2379 = vadd.bf16 %v1711, %v2283
    %v2380 = vadd.bf16 %v1712, %v2284
    %v2381 = vadd.bf16 %v1713, %v2285
    %v2382 = vadd.bf16 %v1714, %v2286
    %v2383 = vadd.bf16 %v1715, %v2287
    %v2384 = vadd.bf16 %v1716, %v2288
    %v2385 = vadd.bf16 %v1717, %v2289
    %v2386 = vadd.bf16 %v1718, %v2290
    %v2387 = vadd.bf16 %v1719, %v2291
    %v2388 = vadd.bf16 %v1720, %v2292
    %v2389 = vadd.bf16 %v1721, %v2293
    %v2390 = vadd.bf16 %v1722, %v2294
    %v2391 = vadd.bf16 %v1723, %v2295
    %v2392 = vadd.bf16 %v1724, %v2296
    %v2393 = vadd.bf16 %v1725, %v2297
    %v2394 = vadd.bf16 %v1726, %v2298
    %v2395 = vadd.bf16 %v1727, %v2299
    %v2396 = vadd.bf16 %v1728, %v2300
    %v2397 = vadd.bf16 %v1729, %v2301
    %v2398 = vadd.bf16 %v1730, %v2302
    %v2399 = vadd.bf16 %v1731, %v2303
    %v2400 = vadd.bf16 %v1732, %v2304
    %v2401 = vadd.bf16 %v1733, %v2305
    %v2402 = vadd.bf16 %v1734, %v2306
    %v2403 = vadd.bf16 %v1735, %v2307
    %v2404 = vadd.bf16 %v1736, %v2308
    %v2405 = vadd.bf16 %v1737, %v2309
    %v2406 = vadd.bf16 %v1738, %v2310
    %v2407 = vadd.bf16 %v1739, %v2311
    %v2408 = vadd.bf16 %v1740, %v2312
    %v2409 = vadd.bf16 %v1741, %v2313
    %v2410 = vadd.bf16 %v1742, %v2314
    %v2411 = vadd.bf16 %v1743, %v2315
    %v2412 = vadd.bf16 %v1744, %v2316
    %v2413 = vadd.bf16 %v1745, %v2317
    %v2414 = vadd.bf16 %v1746, %v2318
    %v2415 = vadd.bf16 %v1747, %v2319
    %v2416 = vadd.bf16 %v1748, %v2320
    %v2417 = vadd.bf16 %v1749, %v2321
    %v2418 = vadd.bf16 %v1750, %v2322
    %v2419 = vadd.bf16 %v1751, %v2323
    %v2420 = vadd.bf16 %v1752, %v2324
    %v2421 = vadd.bf16 %v1753, %v2325
    %v2422 = vadd.bf16 %v1754, %v2326
    %v2423 = vadd.bf16 %v1755, %v2327
    %v2424 = vadd.bf16 %v1756, %v2328
    %v2425 = vadd.bf16 %v1757, %v2329
    %v2426 = vadd.bf16 %v1758, %v2330
    %v2427 = vadd.bf16 %v1759, %v2331
    %v2428 = vadd.bf16 %v1760, %v2332
    %v2429 = vadd.bf16 %v1761, %v2333
    %v2430 = vadd.bf16 %v1762, %v2334
    %vm2431 = vsmask.f32 3328
    %vm2432 = vsmask.f32 7440
    %vm2433 = vmor %vm2431, %vm2432
    %v2435 = vshll.u32 %v2132, 16
    %v2437 = vrot.slane %v2435, 5
    %v2438 = vshrl.u32 %v2132, 16
    %v2440 = vrot.slane %v2438, 4
    %v2441 = vor.u32 %v2440, %v2437
    %v2442 = vrot.slane %v2441, 4
    %v2444 = vshll.u32 %v2133, 16
    %v2446 = vrot.slane %v2444, 5
    %v2447 = vsel %vm2433, %v2442, %v2446
    %v2448 = vshrl.u32 %v2133, 16
    %v2450 = vrot.slane %v2448, 4
    %v2451 = vor.u32 %v2450, %v2446
    %v2452 = vrot.slane %v2451, 4
    %v2454 = vshll.u32 %v2134, 16
    %v2456 = vrot.slane %v2454, 5
    %v2457 = vshrl.u32 %v2134, 16
    %v2459 = vrot.slane %v2457, 4
    %v2460 = vor.u32 %v2459, %v2456
    %v2461 = vrot.slane %v2460, 4
    %v2463 = vshll.u32 %v2135, 16
    %v2465 = vrot.slane %v2463, 5
    %v2466 = vsel %vm2433, %v2461, %v2465
    %v2467 = vshrl.u32 %v2135, 16
    %v2469 = vrot.slane %v2467, 4
    %v2470 = vor.u32 %v2469, %v2465
    %v2471 = vrot.slane %v2470, 4
    %v2473 = vshll.u32 %v2136, 16
    %v2475 = vrot.slane %v2473, 5
    %v2476 = vshrl.u32 %v2136, 16
    %v2478 = vrot.slane %v2476, 4
    %v2479 = vor.u32 %v2478, %v2475
    %v2480 = vrot.slane %v2479, 4
    %v2482 = vshll.u32 %v2137, 16
    %v2484 = vrot.slane %v2482, 5
    %v2485 = vsel %vm2433, %v2480, %v2484
    %v2486 = vshrl.u32 %v2137, 16
    %v2488 = vrot.slane %v2486, 4
    %v2489 = vor.u32 %v2488, %v2484
    %v2490 = vrot.slane %v2489, 4
    %v2492 = vshll.u32 %v2138, 16
    %v2494 = vrot.slane %v2492, 5
    %v2495 = vshrl.u32 %v2138, 16
    %v2497 = vrot.slane %v2495, 4
    %v2498 = vor.u32 %v2497, %v2494
    %v2499 = vrot.slane %v2498, 4
    %v2501 = vshll.u32 %v2139, 16
    %v2503 = vrot.slane %v2501, 5
    %v2504 = vsel %vm2433, %v2499, %v2503
    %v2505 = vshrl.u32 %v2139, 16
    %v2507 = vrot.slane %v2505, 4
    %v2508 = vor.u32 %v2507, %v2503
    %v2509 = vrot.slane %v2508, 4
    %v2511 = vshll.u32 %v2140, 16
    %v2513 = vrot.slane %v2511, 5
    %v2514 = vshrl.u32 %v2140, 16
    %v2516 = vrot.slane %v2514, 4
    %v2517 = vor.u32 %v2516, %v2513
    %v2518 = vrot.slane %v2517, 4
    %v2520 = vshll.u32 %v2141, 16
    %v2522 = vrot.slane %v2520, 5
    %v2523 = vsel %vm2433, %v2518, %v2522
    %v2524 = vshrl.u32 %v2141, 16
    %v2526 = vrot.slane %v2524, 4
    %v2527 = vor.u32 %v2526, %v2522
    %v2528 = vrot.slane %v2527, 4
    %v2530 = vshll.u32 %v2142, 16
    %v2532 = vrot.slane %v2530, 5
    %v2533 = vshrl.u32 %v2142, 16
    %v2535 = vrot.slane %v2533, 4
    %v2536 = vor.u32 %v2535, %v2532
    %v2537 = vrot.slane %v2536, 4
    %v2539 = vshll.u32 %v2143, 16
    %v2541 = vrot.slane %v2539, 5
    %v2542 = vsel %vm2433, %v2537, %v2541
    %v2543 = vshrl.u32 %v2143, 16
    %v2545 = vrot.slane %v2543, 4
    %v2546 = vor.u32 %v2545, %v2541
    %v2547 = vrot.slane %v2546, 4
    %v2549 = vshll.u32 %v2144, 16
    %v2551 = vrot.slane %v2549, 5
    %v2552 = vshrl.u32 %v2144, 16
    %v2554 = vrot.slane %v2552, 4
    %v2555 = vor.u32 %v2554, %v2551
    %v2556 = vrot.slane %v2555, 4
    %v2558 = vshll.u32 %v2145, 16
    %v2560 = vrot.slane %v2558, 5
    %v2561 = vsel %vm2433, %v2556, %v2560
    %v2562 = vshrl.u32 %v2145, 16
    %v2564 = vrot.slane %v2562, 4
    %v2565 = vor.u32 %v2564, %v2560
    %v2566 = vrot.slane %v2565, 4
    %v2568 = vshll.u32 %v2146, 16
    %v2570 = vrot.slane %v2568, 5
    %v2571 = vshrl.u32 %v2146, 16
    %v2573 = vrot.slane %v2571, 4
    %v2574 = vor.u32 %v2573, %v2570
    %v2575 = vrot.slane %v2574, 4
    %v2577 = vshll.u32 %v2147, 16
    %v2579 = vrot.slane %v2577, 5
    %v2580 = vsel %vm2433, %v2575, %v2579
    %v2581 = vshrl.u32 %v2147, 16
    %v2583 = vrot.slane %v2581, 4
    %v2584 = vor.u32 %v2583, %v2579
    %v2585 = vrot.slane %v2584, 4
    %v2587 = vshll.u32 %v2148, 16
    %v2589 = vrot.slane %v2587, 5
    %v2590 = vshrl.u32 %v2148, 16
    %v2592 = vrot.slane %v2590, 4
    %v2593 = vor.u32 %v2592, %v2589
    %v2594 = vrot.slane %v2593, 4
    %v2596 = vshll.u32 %v2149, 16
    %v2598 = vrot.slane %v2596, 5
    %v2599 = vsel %vm2433, %v2594, %v2598
    %v2600 = vshrl.u32 %v2149, 16
    %v2602 = vrot.slane %v2600, 4
    %v2603 = vor.u32 %v2602, %v2598
    %v2604 = vrot.slane %v2603, 4
    %v2606 = vshll.u32 %v2150, 16
    %v2608 = vrot.slane %v2606, 5
    %v2609 = vshrl.u32 %v2150, 16
    %v2611 = vrot.slane %v2609, 4
    %v2612 = vor.u32 %v2611, %v2608
    %v2613 = vrot.slane %v2612, 4
    %v2615 = vshll.u32 %v2151, 16
    %v2617 = vrot.slane %v2615, 5
    %v2618 = vsel %vm2433, %v2613, %v2617
    %v2619 = vshrl.u32 %v2151, 16
    %v2621 = vrot.slane %v2619, 4
    %v2622 = vor.u32 %v2621, %v2617
    %v2623 = vrot.slane %v2622, 4
    %v2625 = vshll.u32 %v2152, 16
    %v2627 = vrot.slane %v2625, 5
    %v2628 = vshrl.u32 %v2152, 16
    %v2630 = vrot.slane %v2628, 4
    %v2631 = vor.u32 %v2630, %v2627
    %v2632 = vrot.slane %v2631, 4
    %v2634 = vshll.u32 %v2153, 16
    %v2636 = vrot.slane %v2634, 5
    %v2637 = vsel %vm2433, %v2632, %v2636
    %v2638 = vshrl.u32 %v2153, 16
    %v2640 = vrot.slane %v2638, 4
    %v2641 = vor.u32 %v2640, %v2636
    %v2642 = vrot.slane %v2641, 4
    %v2644 = vshll.u32 %v2154, 16
    %v2646 = vrot.slane %v2644, 5
    %v2647 = vshrl.u32 %v2154, 16
    %v2649 = vrot.slane %v2647, 4
    %v2650 = vor.u32 %v2649, %v2646
    %v2651 = vrot.slane %v2650, 4
    %v2653 = vshll.u32 %v2155, 16
    %v2655 = vrot.slane %v2653, 5
    %v2656 = vsel %vm2433, %v2651, %v2655
    %v2657 = vshrl.u32 %v2155, 16
    %v2659 = vrot.slane %v2657, 4
    %v2660 = vor.u32 %v2659, %v2655
    %v2661 = vrot.slane %v2660, 4
    %v2663 = vshll.u32 %v2156, 16
    %v2665 = vrot.slane %v2663, 5
    %v2666 = vshrl.u32 %v2156, 16
    %v2668 = vrot.slane %v2666, 4
    %v2669 = vor.u32 %v2668, %v2665
    %v2670 = vrot.slane %v2669, 4
    %v2672 = vshll.u32 %v2157, 16
    %v2674 = vrot.slane %v2672, 5
    %v2675 = vsel %vm2433, %v2670, %v2674
    %v2676 = vshrl.u32 %v2157, 16
    %v2678 = vrot.slane %v2676, 4
    %v2679 = vor.u32 %v2678, %v2674
    %v2680 = vrot.slane %v2679, 4
    %v2682 = vshll.u32 %v2158, 16
    %v2684 = vrot.slane %v2682, 5
    %v2685 = vshrl.u32 %v2158, 16
    %v2687 = vrot.slane %v2685, 4
    %v2688 = vor.u32 %v2687, %v2684
    %v2689 = vrot.slane %v2688, 4
    %v2691 = vshll.u32 %v2159, 16
    %v2693 = vrot.slane %v2691, 5
    %v2694 = vsel %vm2433, %v2689, %v2693
    %v2695 = vshrl.u32 %v2159, 16
    %v2697 = vrot.slane %v2695, 4
    %v2698 = vor.u32 %v2697, %v2693
    %v2699 = vrot.slane %v2698, 4
    %v2701 = vshll.u32 %v2160, 16
    %v2703 = vrot.slane %v2701, 5
    %v2704 = vshrl.u32 %v2160, 16
    %v2706 = vrot.slane %v2704, 4
    %v2707 = vor.u32 %v2706, %v2703
    %v2708 = vrot.slane %v2707, 4
    %v2710 = vshll.u32 %v2161, 16
    %v2712 = vrot.slane %v2710, 5
    %v2713 = vsel %vm2433, %v2708, %v2712
    %v2714 = vshrl.u32 %v2161, 16
    %v2716 = vrot.slane %v2714, 4
    %v2717 = vor.u32 %v2716, %v2712
    %v2718 = vrot.slane %v2717, 4
    %v2720 = vshll.u32 %v2162, 16
    %v2722 = vrot.slane %v2720, 5
    %v2723 = vshrl.u32 %v2162, 16
    %v2725 = vrot.slane %v2723, 4
    %v2726 = vor.u32 %v2725, %v2722
    %v2727 = vrot.slane %v2726, 4
    %v2729 = vshll.u32 %v2163, 16
    %v2731 = vrot.slane %v2729, 5
    %v2732 = vsel %vm2433, %v2727, %v2731
    %v2733 = vshrl.u32 %v2163, 16
    %v2735 = vrot.slane %v2733, 4
    %v2736 = vor.u32 %v2735, %v2731
    %v2737 = vrot.slane %v2736, 4
    %v2739 = vshll.u32 %v2164, 16
    %v2741 = vrot.slane %v2739, 5
    %v2742 = vshrl.u32 %v2164, 16
    %v2744 = vrot.slane %v2742, 4
    %v2745 = vor.u32 %v2744, %v2741
    %v2746 = vrot.slane %v2745, 4
    %v2748 = vshll.u32 %v2165, 16
    %v2750 = vrot.slane %v2748, 5
    %v2751 = vsel %vm2433, %v2746, %v2750
    %v2752 = vshrl.u32 %v2165, 16
    %v2754 = vrot.slane %v2752, 4
    %v2755 = vor.u32 %v2754, %v2750
    %v2756 = vrot.slane %v2755, 4
    %v2758 = vshll.u32 %v2166, 16
    %v2760 = vrot.slane %v2758, 5
    %v2761 = vshrl.u32 %v2166, 16
    %v2763 = vrot.slane %v2761, 4
    %v2764 = vor.u32 %v2763, %v2760
    %v2765 = vrot.slane %v2764, 4
    %v2767 = vshll.u32 %v2167, 16
    %v2769 = vrot.slane %v2767, 5
    %v2770 = vsel %vm2433, %v2765, %v2769
    %v2771 = vshrl.u32 %v2167, 16
    %v2773 = vrot.slane %v2771, 4
    %v2774 = vor.u32 %v2773, %v2769
    %v2775 = vrot.slane %v2774, 4
    %v2777 = vshll.u32 %v2168, 16
    %v2779 = vrot.slane %v2777, 5
    %v2780 = vshrl.u32 %v2168, 16
    %v2782 = vrot.slane %v2780, 4
    %v2783 = vor.u32 %v2782, %v2779
    %v2784 = vrot.slane %v2783, 4
    %v2786 = vshll.u32 %v2169, 16
    %v2788 = vrot.slane %v2786, 5
    %v2789 = vsel %vm2433, %v2784, %v2788
    %v2790 = vshrl.u32 %v2169, 16
    %v2792 = vrot.slane %v2790, 4
    %v2793 = vor.u32 %v2792, %v2788
    %v2794 = vrot.slane %v2793, 4
    %v2796 = vshll.u32 %v2170, 16
    %v2798 = vrot.slane %v2796, 5
    %v2799 = vshrl.u32 %v2170, 16
    %v2801 = vrot.slane %v2799, 4
    %v2802 = vor.u32 %v2801, %v2798
    %v2803 = vrot.slane %v2802, 4
    %v2805 = vshll.u32 %v2171, 16
    %v2807 = vrot.slane %v2805, 5
    %v2808 = vsel %vm2433, %v2803, %v2807
    %v2809 = vshrl.u32 %v2171, 16
    %v2811 = vrot.slane %v2809, 4
    %v2812 = vor.u32 %v2811, %v2807
    %v2813 = vrot.slane %v2812, 4
    %v2815 = vshll.u32 %v2172, 16
    %v2817 = vrot.slane %v2815, 5
    %v2818 = vshrl.u32 %v2172, 16
    %v2820 = vrot.slane %v2818, 4
    %v2821 = vor.u32 %v2820, %v2817
    %v2822 = vrot.slane %v2821, 4
    %v2824 = vshll.u32 %v2173, 16
    %v2826 = vrot.slane %v2824, 5
    %v2827 = vsel %vm2433, %v2822, %v2826
    %v2828 = vshrl.u32 %v2173, 16
    %v2830 = vrot.slane %v2828, 4
    %v2831 = vor.u32 %v2830, %v2826
    %v2832 = vrot.slane %v2831, 4
    %v2834 = vshll.u32 %v2174, 16
    %v2836 = vrot.slane %v2834, 5
    %v2837 = vshrl.u32 %v2174, 16
    %v2839 = vrot.slane %v2837, 4
    %v2840 = vor.u32 %v2839, %v2836
    %v2841 = vrot.slane %v2840, 4
    %v2843 = vshll.u32 %v2175, 16
    %v2845 = vrot.slane %v2843, 5
    %v2846 = vsel %vm2433, %v2841, %v2845
    %v2847 = vshrl.u32 %v2175, 16
    %v2849 = vrot.slane %v2847, 4
    %v2850 = vor.u32 %v2849, %v2845
    %v2851 = vrot.slane %v2850, 4
    %v2853 = vshll.u32 %v2176, 16
    %v2855 = vrot.slane %v2853, 5
    %v2856 = vshrl.u32 %v2176, 16
    %v2858 = vrot.slane %v2856, 4
    %v2859 = vor.u32 %v2858, %v2855
    %v2860 = vrot.slane %v2859, 4
    %v2862 = vshll.u32 %v2177, 16
    %v2864 = vrot.slane %v2862, 5
    %v2865 = vsel %vm2433, %v2860, %v2864
    %v2866 = vshrl.u32 %v2177, 16
    %v2868 = vrot.slane %v2866, 4
    %v2869 = vor.u32 %v2868, %v2864
    %v2870 = vrot.slane %v2869, 4
    %v2872 = vshll.u32 %v2178, 16
    %v2874 = vrot.slane %v2872, 5
    %v2875 = vshrl.u32 %v2178, 16
    %v2877 = vrot.slane %v2875, 4
    %v2878 = vor.u32 %v2877, %v2874
    %v2879 = vrot.slane %v2878, 4
    %v2881 = vshll.u32 %v2179, 16
    %v2883 = vrot.slane %v2881, 5
    %v2884 = vsel %vm2433, %v2879, %v2883
    %v2885 = vshrl.u32 %v2179, 16
    %v2887 = vrot.slane %v2885, 4
    %v2888 = vor.u32 %v2887, %v2883
    %v2889 = vrot.slane %v2888, 4
    %v2891 = vshll.u32 %v2180, 16
    %v2893 = vrot.slane %v2891, 5
    %v2894 = vshrl.u32 %v2180, 16
    %v2896 = vrot.slane %v2894, 4
    %v2897 = vor.u32 %v2896, %v2893
    %v2898 = vrot.slane %v2897, 4
    %v2900 = vshll.u32 %v2181, 16
    %v2902 = vrot.slane %v2900, 5
    %v2903 = vsel %vm2433, %v2898, %v2902
    %v2904 = vshrl.u32 %v2181, 16
    %v2906 = vrot.slane %v2904, 4
    %v2907 = vor.u32 %v2906, %v2902
    %v2908 = vrot.slane %v2907, 4
    %v2910 = vshll.u32 %v2182, 16
    %v2912 = vrot.slane %v2910, 5
    %v2913 = vshrl.u32 %v2182, 16
    %v2915 = vrot.slane %v2913, 4
    %v2916 = vor.u32 %v2915, %v2912
    %v2917 = vrot.slane %v2916, 4
    %v2919 = vshll.u32 %v2183, 16
    %v2921 = vrot.slane %v2919, 5
    %v2922 = vsel %vm2433, %v2917, %v2921
    %v2923 = vshrl.u32 %v2183, 16
    %v2925 = vrot.slane %v2923, 4
    %v2926 = vor.u32 %v2925, %v2921
    %v2927 = vrot.slane %v2926, 4
    %v2929 = vshll.u32 %v2184, 16
    %v2931 = vrot.slane %v2929, 5
    %v2932 = vshrl.u32 %v2184, 16
    %v2934 = vrot.slane %v2932, 4
    %v2935 = vor.u32 %v2934, %v2931
    %v2936 = vrot.slane %v2935, 4
    %v2938 = vshll.u32 %v2185, 16
    %v2940 = vrot.slane %v2938, 5
    %v2941 = vsel %vm2433, %v2936, %v2940
    %v2942 = vshrl.u32 %v2185, 16
    %v2944 = vrot.slane %v2942, 4
    %v2945 = vor.u32 %v2944, %v2940
    %v2946 = vrot.slane %v2945, 4
    %v2948 = vshll.u32 %v2186, 16
    %v2950 = vrot.slane %v2948, 5
    %v2951 = vshrl.u32 %v2186, 16
    %v2953 = vrot.slane %v2951, 4
    %v2954 = vor.u32 %v2953, %v2950
    %v2955 = vrot.slane %v2954, 4
    %v2957 = vshll.u32 %v2187, 16
    %v2959 = vrot.slane %v2957, 5
    %v2960 = vsel %vm2433, %v2955, %v2959
    %v2961 = vshrl.u32 %v2187, 16
    %v2963 = vrot.slane %v2961, 4
    %v2964 = vor.u32 %v2963, %v2959
    %v2965 = vrot.slane %v2964, 4
    %v2967 = vshll.u32 %v2188, 16
    %v2969 = vrot.slane %v2967, 5
    %v2970 = vshrl.u32 %v2188, 16
    %v2972 = vrot.slane %v2970, 4
    %v2973 = vor.u32 %v2972, %v2969
    %v2974 = vrot.slane %v2973, 4
    %v2976 = vshll.u32 %v2189, 16
    %v2978 = vrot.slane %v2976, 5
    %v2979 = vsel %vm2433, %v2974, %v2978
    %v2980 = vshrl.u32 %v2189, 16
    %v2982 = vrot.slane %v2980, 4
    %v2983 = vor.u32 %v2982, %v2978
    %v2984 = vrot.slane %v2983, 4
    %v2986 = vshll.u32 %v2190, 16
    %v2988 = vrot.slane %v2986, 5
    %v2989 = vshrl.u32 %v2190, 16
    %v2991 = vrot.slane %v2989, 4
    %v2992 = vor.u32 %v2991, %v2988
    %v2993 = vrot.slane %v2992, 4
    %v2995 = vshll.u32 %v2191, 16
    %v2997 = vrot.slane %v2995, 5
    %v2998 = vsel %vm2433, %v2993, %v2997
    %v2999 = vshrl.u32 %v2191, 16
    %v3001 = vrot.slane %v2999, 4
    %v3002 = vor.u32 %v3001, %v2997
    %v3003 = vrot.slane %v3002, 4
    %v3005 = vshll.u32 %v2192, 16
    %v3007 = vrot.slane %v3005, 5
    %v3008 = vshrl.u32 %v2192, 16
    %v3010 = vrot.slane %v3008, 4
    %v3011 = vor.u32 %v3010, %v3007
    %v3012 = vrot.slane %v3011, 4
    %v3014 = vshll.u32 %v2193, 16
    %v3016 = vrot.slane %v3014, 5
    %v3017 = vsel %vm2433, %v3012, %v3016
    %v3018 = vshrl.u32 %v2193, 16
    %v3020 = vrot.slane %v3018, 4
    %v3021 = vor.u32 %v3020, %v3016
    %v3022 = vrot.slane %v3021, 4
    %v3024 = vshll.u32 %v2194, 16
    %v3026 = vrot.slane %v3024, 5
    %v3027 = vshrl.u32 %v2194, 16
    %v3029 = vrot.slane %v3027, 4
    %v3030 = vor.u32 %v3029, %v3026
    %v3031 = vrot.slane %v3030, 4
    %v3033 = vshll.u32 %v2195, 16
    %v3035 = vrot.slane %v3033, 5
    %v3036 = vsel %vm2433, %v3031, %v3035
    %v3037 = vshrl.u32 %v2195, 16
    %v3039 = vrot.slane %v3037, 4
    %v3040 = vor.u32 %v3039, %v3035
    %v3041 = vrot.slane %v3040, 4
    %v3138 = vadd.bf16 %v1964, %v2437
    %v3139 = vadd.bf16 %v1965, %v2447
    %v3140 = vadd.bf16 %v1966, %v2452
    %v3141 = vadd.bf16 %v1967, %v2456
    %v3142 = vadd.bf16 %v1968, %v2466
    %v3143 = vadd.bf16 %v1969, %v2471
    %v3144 = vadd.bf16 %v1970, %v2475
    %v3145 = vadd.bf16 %v1971, %v2485
    %v3146 = vadd.bf16 %v1972, %v2490
    %v3147 = vadd.bf16 %v1973, %v2494
    %v3148 = vadd.bf16 %v1974, %v2504
    %v3149 = vadd.bf16 %v1975, %v2509
    %v3150 = vadd.bf16 %v1976, %v2513
    %v3151 = vadd.bf16 %v1977, %v2523
    %v3152 = vadd.bf16 %v1978, %v2528
    %v3153 = vadd.bf16 %v1979, %v2532
    %v3154 = vadd.bf16 %v1980, %v2542
    %v3155 = vadd.bf16 %v1981, %v2547
    %v3156 = vadd.bf16 %v1982, %v2551
    %v3157 = vadd.bf16 %v1983, %v2561
    %v3158 = vadd.bf16 %v1984, %v2566
    %v3159 = vadd.bf16 %v1985, %v2570
    %v3160 = vadd.bf16 %v1986, %v2580
    %v3161 = vadd.bf16 %v1987, %v2585
    %v3162 = vadd.bf16 %v1988, %v2589
    %v3163 = vadd.bf16 %v1989, %v2599
    %v3164 = vadd.bf16 %v1990, %v2604
    %v3165 = vadd.bf16 %v1991, %v2608
    %v3166 = vadd.bf16 %v1992, %v2618
    %v3167 = vadd.bf16 %v1993, %v2623
    %v3168 = vadd.bf16 %v1994, %v2627
    %v3169 = vadd.bf16 %v1995, %v2637
    %v3170 = vadd.bf16 %v1996, %v2642
    %v3171 = vadd.bf16 %v1997, %v2646
    %v3172 = vadd.bf16 %v1998, %v2656
    %v3173 = vadd.bf16 %v1999, %v2661
    %v3174 = vadd.bf16 %v2000, %v2665
    %v3175 = vadd.bf16 %v2001, %v2675
    %v3176 = vadd.bf16 %v2002, %v2680
    %v3177 = vadd.bf16 %v2003, %v2684
    %v3178 = vadd.bf16 %v2004, %v2694
    %v3179 = vadd.bf16 %v2005, %v2699
    %v3180 = vadd.bf16 %v2006, %v2703
    %v3181 = vadd.bf16 %v2007, %v2713
    %v3182 = vadd.bf16 %v2008, %v2718
    %v3183 = vadd.bf16 %v2009, %v2722
    %v3184 = vadd.bf16 %v2010, %v2732
    %v3185 = vadd.bf16 %v2011, %v2737
    %v3186 = vadd.bf16 %v2012, %v2741
    %v3187 = vadd.bf16 %v2013, %v2751
    %v3188 = vadd.bf16 %v2014, %v2756
    %v3189 = vadd.bf16 %v2015, %v2760
    %v3190 = vadd.bf16 %v2016, %v2770
    %v3191 = vadd.bf16 %v2017, %v2775
    %v3192 = vadd.bf16 %v2018, %v2779
    %v3193 = vadd.bf16 %v2019, %v2789
    %v3194 = vadd.bf16 %v2020, %v2794
    %v3195 = vadd.bf16 %v2021, %v2798
    %v3196 = vadd.bf16 %v2022, %v2808
    %v3197 = vadd.bf16 %v2023, %v2813
    %v3198 = vadd.bf16 %v2024, %v2817
    %v3199 = vadd.bf16 %v2025, %v2827
    %v3200 = vadd.bf16 %v2026, %v2832
    %v3201 = vadd.bf16 %v2027, %v2836
    %v3202 = vadd.bf16 %v2028, %v2846
    %v3203 = vadd.bf16 %v2029, %v2851
    %v3204 = vadd.bf16 %v2030, %v2855
    %v3205 = vadd.bf16 %v2031, %v2865
    %v3206 = vadd.bf16 %v2032, %v2870
    %v3207 = vadd.bf16 %v2033, %v2874
    %v3208 = vadd.bf16 %v2034, %v2884
    %v3209 = vadd.bf16 %v2035, %v2889
    %v3210 = vadd.bf16 %v2036, %v2893
    %v3211 = vadd.bf16 %v2037, %v2903
    %v3212 = vadd.bf16 %v2038, %v2908
    %v3213 = vadd.bf16 %v2039, %v2912
    %v3214 = vadd.bf16 %v2040, %v2922
    %v3215 = vadd.bf16 %v2041, %v2927
    %v3216 = vadd.bf16 %v2042, %v2931
    %v3217 = vadd.bf16 %v2043, %v2941
    %v3218 = vadd.bf16 %v2044, %v2946
    %v3219 = vadd.bf16 %v2045, %v2950
    %v3220 = vadd.bf16 %v2046, %v2960
    %v3221 = vadd.bf16 %v2047, %v2965
    %v3222 = vadd.bf16 %v2048, %v2969
    %v3223 = vadd.bf16 %v2049, %v2979
    %v3224 = vadd.bf16 %v2050, %v2984
    %v3225 = vadd.bf16 %v2051, %v2988
    %v3226 = vadd.bf16 %v2052, %v2998
    %v3227 = vadd.bf16 %v2053, %v3003
    %v3228 = vadd.bf16 %v2054, %v3007
    %v3229 = vadd.bf16 %v2055, %v3017
    %v3230 = vadd.bf16 %v2056, %v3022
    %v3231 = vadd.bf16 %v2057, %v3026
    %v3232 = vadd.bf16 %v2058, %v3036
    %v3233 = vadd.bf16 %v2059, %v3041
    %vm3330 = vcmask 1042432
    %vm3331 = vcmask 1046532
    %vm3332 = vmor %vm3330, %vm3331
    %v3333 = vrot.slane %v2335, 5
    %v3334 = vrot.slane %v3333, 4
    %v3335 = vrot.slane %v2336, 5
    %v3336 = vsel %vm3332, %v3334, %v3335
    %v3337 = vrot.slane %v3335, 4
    %v3338 = vrot.slane %v2337, 5
    %v3339 = vsel %vm3332, %v3337, %v3338
    %v3340 = vrot.slane %v2338, 5
    %v3341 = vrot.slane %v3340, 4
    %v3342 = vrot.slane %v2339, 5
    %v3343 = vsel %vm3332, %v3341, %v3342
    %v3344 = vrot.slane %v3342, 4
    %v3345 = vrot.slane %v2340, 5
    %v3346 = vsel %vm3332, %v3344, %v3345
    %v3347 = vrot.slane %v2341, 5
    %v3348 = vrot.slane %v3347, 4
    %v3349 = vrot.slane %v2342, 5
    %v3350 = vsel %vm3332, %v3348, %v3349
    %v3351 = vrot.slane %v3349, 4
    %v3352 = vrot.slane %v2343, 5
    %v3353 = vsel %vm3332, %v3351, %v3352
    %v3354 = vrot.slane %v2344, 5
    %v3355 = vrot.slane %v3354, 4
    %v3356 = vrot.slane %v2345, 5
    %v3357 = vsel %vm3332, %v3355, %v3356
    %v3358 = vrot.slane %v3356, 4
    %v3359 = vrot.slane %v2346, 5
    %v3360 = vsel %vm3332, %v3358, %v3359
    %v3361 = vrot.slane %v2347, 5
    %v3362 = vrot.slane %v3361, 4
    %v3363 = vrot.slane %v2348, 5
    %v3364 = vsel %vm3332, %v3362, %v3363
    %v3365 = vrot.slane %v3363, 4
    %v3366 = vrot.slane %v2349, 5
    %v3367 = vsel %vm3332, %v3365, %v3366
    %v3368 = vrot.slane %v2350, 5
    %v3369 = vrot.slane %v3368, 4
    %v3370 = vrot.slane %v2351, 5
    %v3371 = vsel %vm3332, %v3369, %v3370
    %v3372 = vrot.slane %v3370, 4
    %v3373 = vrot.slane %v2352, 5
    %v3374 = vsel %vm3332, %v3372, %v3373
    %v3375 = vrot.slane %v2353, 5
    %v3376 = vrot.slane %v3375, 4
    %v3377 = vrot.slane %v2354, 5
    %v3378 = vsel %vm3332, %v3376, %v3377
    %v3379 = vrot.slane %v3377, 4
    %v3380 = vrot.slane %v2355, 5
    %v3381 = vsel %vm3332, %v3379, %v3380
    %v3382 = vrot.slane %v2356, 5
    %v3383 = vrot.slane %v3382, 4
    %v3384 = vrot.slane %v2357, 5
    %v3385 = vsel %vm3332, %v3383, %v3384
    %v3386 = vrot.slane %v3384, 4
    %v3387 = vrot.slane %v2358, 5
    %v3388 = vsel %vm3332, %v3386, %v3387
    %v3389 = vrot.slane %v2359, 5
    %v3390 = vrot.slane %v3389, 4
    %v3391 = vrot.slane %v2360, 5
    %v3392 = vsel %vm3332, %v3390, %v3391
    %v3393 = vrot.slane %v3391, 4
    %v3394 = vrot.slane %v2361, 5
    %v3395 = vsel %vm3332, %v3393, %v3394
    %v3396 = vrot.slane %v2362, 5
    %v3397 = vrot.slane %v3396, 4
    %v3398 = vrot.slane %v2363, 5
    %v3399 = vsel %vm3332, %v3397, %v3398
    %v3400 = vrot.slane %v3398, 4
    %v3401 = vrot.slane %v2364, 5
    %v3402 = vsel %vm3332, %v3400, %v3401
    %v3403 = vrot.slane %v2365, 5
    %v3404 = vrot.slane %v3403, 4
    %v3405 = vrot.slane %v2366, 5
    %v3406 = vsel %vm3332, %v3404, %v3405
    %v3407 = vrot.slane %v3405, 4
    %v3408 = vrot.slane %v2367, 5
    %v3409 = vsel %vm3332, %v3407, %v3408
    %v3410 = vrot.slane %v2368, 5
    %v3411 = vrot.slane %v3410, 4
    %v3412 = vrot.slane %v2369, 5
    %v3413 = vsel %vm3332, %v3411, %v3412
    %v3414 = vrot.slane %v3412, 4
    %v3415 = vrot.slane %v2370, 5
    %v3416 = vsel %vm3332, %v3414, %v3415
    %v3417 = vrot.slane %v2371, 5
    %v3418 = vrot.slane %v3417, 4
    %v3419 = vrot.slane %v2372, 5
    %v3420 = vsel %vm3332, %v3418, %v3419
    %v3421 = vrot.slane %v3419, 4
    %v3422 = vrot.slane %v2373, 5
    %v3423 = vsel %vm3332, %v3421, %v3422
    %v3424 = vrot.slane %v2374, 5
    %v3425 = vrot.slane %v3424, 4
    %v3426 = vrot.slane %v2375, 5
    %v3427 = vsel %vm3332, %v3425, %v3426
    %v3428 = vrot.slane %v3426, 4
    %v3429 = vrot.slane %v2376, 5
    %v3430 = vsel %vm3332, %v3428, %v3429
    %v3431 = vrot.slane %v2377, 5
    %v3432 = vrot.slane %v3431, 4
    %v3433 = vrot.slane %v2378, 5
    %v3434 = vsel %vm3332, %v3432, %v3433
    %v3435 = vrot.slane %v3433, 4
    %v3436 = vrot.slane %v2379, 5
    %v3437 = vsel %vm3332, %v3435, %v3436
    %v3438 = vrot.slane %v2380, 5
    %v3439 = vrot.slane %v3438, 4
    %v3440 = vrot.slane %v2381, 5
    %v3441 = vsel %vm3332, %v3439, %v3440
    %v3442 = vrot.slane %v3440, 4
    %v3443 = vrot.slane %v2382, 5
    %v3444 = vsel %vm3332, %v3442, %v3443
    %v3445 = vrot.slane %v2383, 5
    %v3446 = vrot.slane %v3445, 4
    %v3447 = vrot.slane %v2384, 5
    %v3448 = vsel %vm3332, %v3446, %v3447
    %v3449 = vrot.slane %v3447, 4
    %v3450 = vrot.slane %v2385, 5
    %v3451 = vsel %vm3332, %v3449, %v3450
    %v3452 = vrot.slane %v2386, 5
    %v3453 = vrot.slane %v3452, 4
    %v3454 = vrot.slane %v2387, 5
    %v3455 = vsel %vm3332, %v3453, %v3454
    %v3456 = vrot.slane %v3454, 4
    %v3457 = vrot.slane %v2388, 5
    %v3458 = vsel %vm3332, %v3456, %v3457
    %v3459 = vrot.slane %v2389, 5
    %v3460 = vrot.slane %v3459, 4
    %v3461 = vrot.slane %v2390, 5
    %v3462 = vsel %vm3332, %v3460, %v3461
    %v3463 = vrot.slane %v3461, 4
    %v3464 = vrot.slane %v2391, 5
    %v3465 = vsel %vm3332, %v3463, %v3464
    %v3466 = vrot.slane %v2392, 5
    %v3467 = vrot.slane %v3466, 4
    %v3468 = vrot.slane %v2393, 5
    %v3469 = vsel %vm3332, %v3467, %v3468
    %v3470 = vrot.slane %v3468, 4
    %v3471 = vrot.slane %v2394, 5
    %v3472 = vsel %vm3332, %v3470, %v3471
    %v3473 = vrot.slane %v2395, 5
    %v3474 = vrot.slane %v3473, 4
    %v3475 = vrot.slane %v2396, 5
    %v3476 = vsel %vm3332, %v3474, %v3475
    %v3477 = vrot.slane %v3475, 4
    %v3478 = vrot.slane %v2397, 5
    %v3479 = vsel %vm3332, %v3477, %v3478
    %v3480 = vrot.slane %v2398, 5
    %v3481 = vrot.slane %v3480, 4
    %v3482 = vrot.slane %v2399, 5
    %v3483 = vsel %vm3332, %v3481, %v3482
    %v3484 = vrot.slane %v3482, 4
    %v3485 = vrot.slane %v2400, 5
    %v3486 = vsel %vm3332, %v3484, %v3485
    %v3487 = vrot.slane %v2401, 5
    %v3488 = vrot.slane %v3487, 4
    %v3489 = vrot.slane %v2402, 5
    %v3490 = vsel %vm3332, %v3488, %v3489
    %v3491 = vrot.slane %v3489, 4
    %v3492 = vrot.slane %v2403, 5
    %v3493 = vsel %vm3332, %v3491, %v3492
    %v3494 = vrot.slane %v2404, 5
    %v3495 = vrot.slane %v3494, 4
    %v3496 = vrot.slane %v2405, 5
    %v3497 = vsel %vm3332, %v3495, %v3496
    %v3498 = vrot.slane %v3496, 4
    %v3499 = vrot.slane %v2406, 5
    %v3500 = vsel %vm3332, %v3498, %v3499
    %v3501 = vrot.slane %v2407, 5
    %v3502 = vrot.slane %v3501, 4
    %v3503 = vrot.slane %v2408, 5
    %v3504 = vsel %vm3332, %v3502, %v3503
    %v3505 = vrot.slane %v3503, 4
    %v3506 = vrot.slane %v2409, 5
    %v3507 = vsel %vm3332, %v3505, %v3506
    %v3508 = vrot.slane %v2410, 5
    %v3509 = vrot.slane %v3508, 4
    %v3510 = vrot.slane %v2411, 5
    %v3511 = vsel %vm3332, %v3509, %v3510
    %v3512 = vrot.slane %v3510, 4
    %v3513 = vrot.slane %v2412, 5
    %v3514 = vsel %vm3332, %v3512, %v3513
    %v3515 = vrot.slane %v2413, 5
    %v3516 = vrot.slane %v3515, 4
    %v3517 = vrot.slane %v2414, 5
    %v3518 = vsel %vm3332, %v3516, %v3517
    %v3519 = vrot.slane %v3517, 4
    %v3520 = vrot.slane %v2415, 5
    %v3521 = vsel %vm3332, %v3519, %v3520
    %v3522 = vrot.slane %v2416, 5
    %v3523 = vrot.slane %v3522, 4
    %v3524 = vrot.slane %v2417, 5
    %v3525 = vsel %vm3332, %v3523, %v3524
    %v3526 = vrot.slane %v3524, 4
    %v3527 = vrot.slane %v2418, 5
    %v3528 = vsel %vm3332, %v3526, %v3527
    %v3529 = vrot.slane %v2419, 5
    %v3530 = vrot.slane %v3529, 4
    %v3531 = vrot.slane %v2420, 5
    %v3532 = vsel %vm3332, %v3530, %v3531
    %v3533 = vrot.slane %v3531, 4
    %v3534 = vrot.slane %v2421, 5
    %v3535 = vsel %vm3332, %v3533, %v3534
    %v3536 = vrot.slane %v2422, 5
    %v3537 = vrot.slane %v3536, 4
    %v3538 = vrot.slane %v2423, 5
    %v3539 = vsel %vm3332, %v3537, %v3538
    %v3540 = vrot.slane %v3538, 4
    %v3541 = vrot.slane %v2424, 5
    %v3542 = vsel %vm3332, %v3540, %v3541
    %v3543 = vrot.slane %v2425, 5
    %v3544 = vrot.slane %v3543, 4
    %v3545 = vrot.slane %v2426, 5
    %v3546 = vsel %vm3332, %v3544, %v3545
    %v3547 = vrot.slane %v3545, 4
    %v3548 = vrot.slane %v2427, 5
    %v3549 = vsel %vm3332, %v3547, %v3548
    %v3550 = vrot.slane %v2428, 5
    %v3551 = vrot.slane %v3550, 4
    %v3552 = vrot.slane %v2429, 5
    %v3553 = vsel %vm3332, %v3551, %v3552
    %v3554 = vrot.slane %v3552, 4
    %v3555 = vrot.slane %v2430, 5
    %v3556 = vsel %vm3332, %v3554, %v3555
    %v3653 = vadd.bf16 %v3138, %v3333
    %v3654 = vadd.bf16 %v3139, %v3336
    %v3655 = vadd.bf16 %v3140, %v3339
    %v3656 = vadd.bf16 %v3141, %v3340
    %v3657 = vadd.bf16 %v3142, %v3343
    %v3658 = vadd.bf16 %v3143, %v3346
    %v3659 = vadd.bf16 %v3144, %v3347
    %v3660 = vadd.bf16 %v3145, %v3350
    %v3661 = vadd.bf16 %v3146, %v3353
    %v3662 = vadd.bf16 %v3147, %v3354
    %v3663 = vadd.bf16 %v3148, %v3357
    %v3664 = vadd.bf16 %v3149, %v3360
    %v3665 = vadd.bf16 %v3150, %v3361
    %v3666 = vadd.bf16 %v3151, %v3364
    %v3667 = vadd.bf16 %v3152, %v3367
    %v3668 = vadd.bf16 %v3153, %v3368
    %v3669 = vadd.bf16 %v3154, %v3371
    %v3670 = vadd.bf16 %v3155, %v3374
    %v3671 = vadd.bf16 %v3156, %v3375
    %v3672 = vadd.bf16 %v3157, %v3378
    %v3673 = vadd.bf16 %v3158, %v3381
    %v3674 = vadd.bf16 %v3159, %v3382
    %v3675 = vadd.bf16 %v3160, %v3385
    %v3676 = vadd.bf16 %v3161, %v3388
    %v3677 = vadd.bf16 %v3162, %v3389
    %v3678 = vadd.bf16 %v3163, %v3392
    %v3679 = vadd.bf16 %v3164, %v3395
    %v3680 = vadd.bf16 %v3165, %v3396
    %v3681 = vadd.bf16 %v3166, %v3399
    %v3682 = vadd.bf16 %v3167, %v3402
    %v3683 = vadd.bf16 %v3168, %v3403
    %v3684 = vadd.bf16 %v3169, %v3406
    %v3685 = vadd.bf16 %v3170, %v3409
    %v3686 = vadd.bf16 %v3171, %v3410
    %v3687 = vadd.bf16 %v3172, %v3413
    %v3688 = vadd.bf16 %v3173, %v3416
    %v3689 = vadd.bf16 %v3174, %v3417
    %v3690 = vadd.bf16 %v3175, %v3420
    %v3691 = vadd.bf16 %v3176, %v3423
    %v3692 = vadd.bf16 %v3177, %v3424
    %v3693 = vadd.bf16 %v3178, %v3427
    %v3694 = vadd.bf16 %v3179, %v3430
    %v3695 = vadd.bf16 %v3180, %v3431
    %v3696 = vadd.bf16 %v3181, %v3434
    %v3697 = vadd.bf16 %v3182, %v3437
    %v3698 = vadd.bf16 %v3183, %v3438
    %v3699 = vadd.bf16 %v3184, %v3441
    %v3700 = vadd.bf16 %v3185, %v3444
    %v3701 = vadd.bf16 %v3186, %v3445
    %v3702 = vadd.bf16 %v3187, %v3448
    %v3703 = vadd.bf16 %v3188, %v3451
    %v3704 = vadd.bf16 %v3189, %v3452
    %v3705 = vadd.bf16 %v3190, %v3455
    %v3706 = vadd.bf16 %v3191, %v3458
    %v3707 = vadd.bf16 %v3192, %v3459
    %v3708 = vadd.bf16 %v3193, %v3462
    %v3709 = vadd.bf16 %v3194, %v3465
    %v3710 = vadd.bf16 %v3195, %v3466
    %v3711 = vadd.bf16 %v3196, %v3469
    %v3712 = vadd.bf16 %v3197, %v3472
    %v3713 = vadd.bf16 %v3198, %v3473
    %v3714 = vadd.bf16 %v3199, %v3476
    %v3715 = vadd.bf16 %v3200, %v3479
    %v3716 = vadd.bf16 %v3201, %v3480
    %v3717 = vadd.bf16 %v3202, %v3483
    %v3718 = vadd.bf16 %v3203, %v3486
    %v3719 = vadd.bf16 %v3204, %v3487
    %v3720 = vadd.bf16 %v3205, %v3490
    %v3721 = vadd.bf16 %v3206, %v3493
    %v3722 = vadd.bf16 %v3207, %v3494
    %v3723 = vadd.bf16 %v3208, %v3497
    %v3724 = vadd.bf16 %v3209, %v3500
    %v3725 = vadd.bf16 %v3210, %v3501
    %v3726 = vadd.bf16 %v3211, %v3504
    %v3727 = vadd.bf16 %v3212, %v3507
    %v3728 = vadd.bf16 %v3213, %v3508
    %v3729 = vadd.bf16 %v3214, %v3511
    %v3730 = vadd.bf16 %v3215, %v3514
    %v3731 = vadd.bf16 %v3216, %v3515
    %v3732 = vadd.bf16 %v3217, %v3518
    %v3733 = vadd.bf16 %v3218, %v3521
    %v3734 = vadd.bf16 %v3219, %v3522
    %v3735 = vadd.bf16 %v3220, %v3525
    %v3736 = vadd.bf16 %v3221, %v3528
    %v3737 = vadd.bf16 %v3222, %v3529
    %v3738 = vadd.bf16 %v3223, %v3532
    %v3739 = vadd.bf16 %v3224, %v3535
    %v3740 = vadd.bf16 %v3225, %v3536
    %v3741 = vadd.bf16 %v3226, %v3539
    %v3742 = vadd.bf16 %v3227, %v3542
    %v3743 = vadd.bf16 %v3228, %v3543
    %v3744 = vadd.bf16 %v3229, %v3546
    %v3745 = vadd.bf16 %v3230, %v3549
    %v3746 = vadd.bf16 %v3231, %v3550
    %v3747 = vadd.bf16 %v3232, %v3553
    %v3748 = vadd.bf16 %v3233, %v3556
    %v3750 = vpack.i.b16 %v684, %v684
    %v3752 = vlaneseq
    %v3753 = vshrl.u32 %v3752, 7
    %v3754 = vsub.s32 0, %v3753
    %v3755 = vrot.slane %v3750, %v3754
    %v3757 = vunpack.c.l.b16 %v3755
    %v3758 = vpack.c.b16 %v3757, %v3757
    %v3760 = vadd.bf16 %v3653, %v3758
    %v3761 = vadd.bf16 %v3654, %v3758
    %v3762 = vadd.bf16 %v3655, %v3758
    %v3763 = vadd.bf16 %v3656, %v3758
    %v3764 = vadd.bf16 %v3657, %v3758
    %v3765 = vadd.bf16 %v3658, %v3758
    %v3766 = vadd.bf16 %v3659, %v3758
    %v3767 = vadd.bf16 %v3660, %v3758
    %v3768 = vadd.bf16 %v3661, %v3758
    %v3769 = vadd.bf16 %v3662, %v3758
    %v3770 = vadd.bf16 %v3663, %v3758
    %v3771 = vadd.bf16 %v3664, %v3758
    %v3772 = vadd.bf16 %v3665, %v3758
    %v3773 = vadd.bf16 %v3666, %v3758
    %v3774 = vadd.bf16 %v3667, %v3758
    %v3775 = vadd.bf16 %v3668, %v3758
    %v3776 = vadd.bf16 %v3669, %v3758
    %v3777 = vadd.bf16 %v3670, %v3758
    %v3778 = vadd.bf16 %v3671, %v3758
    %v3779 = vadd.bf16 %v3672, %v3758
    %v3780 = vadd.bf16 %v3673, %v3758
    %v3781 = vadd.bf16 %v3674, %v3758
    %v3782 = vadd.bf16 %v3675, %v3758
    %v3783 = vadd.bf16 %v3676, %v3758
    %v3784 = vadd.bf16 %v3677, %v3758
    %v3785 = vadd.bf16 %v3678, %v3758
    %v3786 = vadd.bf16 %v3679, %v3758
    %v3787 = vadd.bf16 %v3680, %v3758
    %v3788 = vadd.bf16 %v3681, %v3758
    %v3789 = vadd.bf16 %v3682, %v3758
    %v3790 = vadd.bf16 %v3683, %v3758
    %v3791 = vadd.bf16 %v3684, %v3758
    %v3792 = vadd.bf16 %v3685, %v3758
    %v3793 = vadd.bf16 %v3686, %v3758
    %v3794 = vadd.bf16 %v3687, %v3758
    %v3795 = vadd.bf16 %v3688, %v3758
    %v3796 = vadd.bf16 %v3689, %v3758
    %v3797 = vadd.bf16 %v3690, %v3758
    %v3798 = vadd.bf16 %v3691, %v3758
    %v3799 = vadd.bf16 %v3692, %v3758
    %v3800 = vadd.bf16 %v3693, %v3758
    %v3801 = vadd.bf16 %v3694, %v3758
    %v3802 = vadd.bf16 %v3695, %v3758
    %v3803 = vadd.bf16 %v3696, %v3758
    %v3804 = vadd.bf16 %v3697, %v3758
    %v3805 = vadd.bf16 %v3698, %v3758
    %v3806 = vadd.bf16 %v3699, %v3758
    %v3807 = vadd.bf16 %v3700, %v3758
    %v3808 = vadd.bf16 %v3701, %v3758
    %v3809 = vadd.bf16 %v3702, %v3758
    %v3810 = vadd.bf16 %v3703, %v3758
    %v3811 = vadd.bf16 %v3704, %v3758
    %v3812 = vadd.bf16 %v3705, %v3758
    %v3813 = vadd.bf16 %v3706, %v3758
    %v3814 = vadd.bf16 %v3707, %v3758
    %v3815 = vadd.bf16 %v3708, %v3758
    %v3816 = vadd.bf16 %v3709, %v3758
    %v3817 = vadd.bf16 %v3710, %v3758
    %v3818 = vadd.bf16 %v3711, %v3758
    %v3819 = vadd.bf16 %v3712, %v3758
    %v3820 = vadd.bf16 %v3713, %v3758
    %v3821 = vadd.bf16 %v3714, %v3758
    %v3822 = vadd.bf16 %v3715, %v3758
    %v3823 = vadd.bf16 %v3716, %v3758
    %v3824 = vadd.bf16 %v3717, %v3758
    %v3825 = vadd.bf16 %v3718, %v3758
    %v3826 = vadd.bf16 %v3719, %v3758
    %v3827 = vadd.bf16 %v3720, %v3758
    %v3828 = vadd.bf16 %v3721, %v3758
    %v3829 = vadd.bf16 %v3722, %v3758
    %v3830 = vadd.bf16 %v3723, %v3758
    %v3831 = vadd.bf16 %v3724, %v3758
    %v3832 = vadd.bf16 %v3725, %v3758
    %v3833 = vadd.bf16 %v3726, %v3758
    %v3834 = vadd.bf16 %v3727, %v3758
    %v3835 = vadd.bf16 %v3728, %v3758
    %v3836 = vadd.bf16 %v3729, %v3758
    %v3837 = vadd.bf16 %v3730, %v3758
    %v3838 = vadd.bf16 %v3731, %v3758
    %v3839 = vadd.bf16 %v3732, %v3758
    %v3840 = vadd.bf16 %v3733, %v3758
    %v3841 = vadd.bf16 %v3734, %v3758
    %v3842 = vadd.bf16 %v3735, %v3758
    %v3843 = vadd.bf16 %v3736, %v3758
    %v3844 = vadd.bf16 %v3737, %v3758
    %v3845 = vadd.bf16 %v3738, %v3758
    %v3846 = vadd.bf16 %v3739, %v3758
    %v3847 = vadd.bf16 %v3740, %v3758
    %v3848 = vadd.bf16 %v3741, %v3758
    %v3849 = vadd.bf16 %v3742, %v3758
    %v3850 = vadd.bf16 %v3743, %v3758
    %v3851 = vadd.bf16 %v3744, %v3758
    %v3852 = vadd.bf16 %v3745, %v3758
    %v3853 = vadd.bf16 %v3746, %v3758
    %v3854 = vadd.bf16 %v3747, %v3758
    %v3855 = vadd.bf16 %v3748, %v3758
    %v3856 = vmax.bf16 %v3760, 0
    %v3857 = vmax.bf16 %v3761, 0
    %v3858 = vmax.bf16 %v3762, 0
    %v3859 = vmax.bf16 %v3763, 0
    %v3860 = vmax.bf16 %v3764, 0
    %v3861 = vmax.bf16 %v3765, 0
    %v3862 = vmax.bf16 %v3766, 0
    %v3863 = vmax.bf16 %v3767, 0
    %v3864 = vmax.bf16 %v3768, 0
    %v3865 = vmax.bf16 %v3769, 0
    %v3866 = vmax.bf16 %v3770, 0
    %v3867 = vmax.bf16 %v3771, 0
    %v3868 = vmax.bf16 %v3772, 0
    %v3869 = vmax.bf16 %v3773, 0
    %v3870 = vmax.bf16 %v3774, 0
    %v3871 = vmax.bf16 %v3775, 0
    %v3872 = vmax.bf16 %v3776, 0
    %v3873 = vmax.bf16 %v3777, 0
    %v3874 = vmax.bf16 %v3778, 0
    %v3875 = vmax.bf16 %v3779, 0
    %v3876 = vmax.bf16 %v3780, 0
    %v3877 = vmax.bf16 %v3781, 0
    %v3878 = vmax.bf16 %v3782, 0
    %v3879 = vmax.bf16 %v3783, 0
    %v3880 = vmax.bf16 %v3784, 0
    %v3881 = vmax.bf16 %v3785, 0
    %v3882 = vmax.bf16 %v3786, 0
    %v3883 = vmax.bf16 %v3787, 0
    %v3884 = vmax.bf16 %v3788, 0
    %v3885 = vmax.bf16 %v3789, 0
    %v3886 = vmax.bf16 %v3790, 0
    %v3887 = vmax.bf16 %v3791, 0
    %v3888 = vmax.bf16 %v3792, 0
    %v3889 = vmax.bf16 %v3793, 0
    %v3890 = vmax.bf16 %v3794, 0
    %v3891 = vmax.bf16 %v3795, 0
    %v3892 = vmax.bf16 %v3796, 0
    %v3893 = vmax.bf16 %v3797, 0
    %v3894 = vmax.bf16 %v3798, 0
    %v3895 = vmax.bf16 %v3799, 0
    %v3896 = vmax.bf16 %v3800, 0
    %v3897 = vmax.bf16 %v3801, 0
    %v3898 = vmax.bf16 %v3802, 0
    %v3899 = vmax.bf16 %v3803, 0
    %v3900 = vmax.bf16 %v3804, 0
    %v3901 = vmax.bf16 %v3805, 0
    %v3902 = vmax.bf16 %v3806, 0
    %v3903 = vmax.bf16 %v3807, 0
    %v3904 = vmax.bf16 %v3808, 0
    %v3905 = vmax.bf16 %v3809, 0
    %v3906 = vmax.bf16 %v3810, 0
    %v3907 = vmax.bf16 %v3811, 0
    %v3908 = vmax.bf16 %v3812, 0
    %v3909 = vmax.bf16 %v3813, 0
    %v3910 = vmax.bf16 %v3814, 0
    %v3911 = vmax.bf16 %v3815, 0
    %v3912 = vmax.bf16 %v3816, 0
    %v3913 = vmax.bf16 %v3817, 0
    %v3914 = vmax.bf16 %v3818, 0
    %v3915 = vmax.bf16 %v3819, 0
    %v3916 = vmax.bf16 %v3820, 0
    %v3917 = vmax.bf16 %v3821, 0
    %v3918 = vmax.bf16 %v3822, 0
    %v3919 = vmax.bf16 %v3823, 0
    %v3920 = vmax.bf16 %v3824, 0
    %v3921 = vmax.bf16 %v3825, 0
    %v3922 = vmax.bf16 %v3826, 0
    %v3923 = vmax.bf16 %v3827, 0
    %v3924 = vmax.bf16 %v3828, 0
    %v3925 = vmax.bf16 %v3829, 0
    %v3926 = vmax.bf16 %v3830, 0
    %v3927 = vmax.bf16 %v3831, 0
    %v3928 = vmax.bf16 %v3832, 0
    %v3929 = vmax.bf16 %v3833, 0
    %v3930 = vmax.bf16 %v3834, 0
    %v3931 = vmax.bf16 %v3835, 0
    %v3932 = vmax.bf16 %v3836, 0
    %v3933 = vmax.bf16 %v3837, 0
    %v3934 = vmax.bf16 %v3838, 0
    %v3935 = vmax.bf16 %v3839, 0
    %v3936 = vmax.bf16 %v3840, 0
    %v3937 = vmax.bf16 %v3841, 0
    %v3938 = vmax.bf16 %v3842, 0
    %v3939 = vmax.bf16 %v3843, 0
    %v3940 = vmax.bf16 %v3844, 0
    %v3941 = vmax.bf16 %v3845, 0
    %v3942 = vmax.bf16 %v3846, 0
    %v3943 = vmax.bf16 %v3847, 0
    %v3944 = vmax.bf16 %v3848, 0
    %v3945 = vmax.bf16 %v3849, 0
    %v3946 = vmax.bf16 %v3850, 0
    %v3947 = vmax.bf16 %v3851, 0
    %v3948 = vmax.bf16 %v3852, 0
    %v3949 = vmax.bf16 %v3853, 0
    %v3950 = vmax.bf16 %v3854, 0
    %v3951 = vmax.bf16 %v3855, 0
    %v3952 = vmin.bf16 %v3856, 1086341312
    %v3953 = vmin.bf16 %v3857, 1086341312
    %v3954 = vmin.bf16 %v3858, 1086341312
    %v3955 = vmin.bf16 %v3859, 1086341312
    %v3956 = vmin.bf16 %v3860, 1086341312
    %v3957 = vmin.bf16 %v3861, 1086341312
    %v3958 = vmin.bf16 %v3862, 1086341312
    %v3959 = vmin.bf16 %v3863, 1086341312
    %v3960 = vmin.bf16 %v3864, 1086341312
    %v3961 = vmin.bf16 %v3865, 1086341312
    %v3962 = vmin.bf16 %v3866, 1086341312
    %v3963 = vmin.bf16 %v3867, 1086341312
    %v3964 = vmin.bf16 %v3868, 1086341312
    %v3965 = vmin.bf16 %v3869, 1086341312
    %v3966 = vmin.bf16 %v3870, 1086341312
    %v3967 = vmin.bf16 %v3871, 1086341312
    %v3968 = vmin.bf16 %v3872, 1086341312
    %v3969 = vmin.bf16 %v3873, 1086341312
    %v3970 = vmin.bf16 %v3874, 1086341312
    %v3971 = vmin.bf16 %v3875, 1086341312
    %v3972 = vmin.bf16 %v3876, 1086341312
    %v3973 = vmin.bf16 %v3877, 1086341312
    %v3974 = vmin.bf16 %v3878, 1086341312
    %v3975 = vmin.bf16 %v3879, 1086341312
    %v3976 = vmin.bf16 %v3880, 1086341312
    %v3977 = vmin.bf16 %v3881, 1086341312
    %v3978 = vmin.bf16 %v3882, 1086341312
    %v3979 = vmin.bf16 %v3883, 1086341312
    %v3980 = vmin.bf16 %v3884, 1086341312
    %v3981 = vmin.bf16 %v3885, 1086341312
    %v3982 = vmin.bf16 %v3886, 1086341312
    %v3983 = vmin.bf16 %v3887, 1086341312
    %v3984 = vmin.bf16 %v3888, 1086341312
    %v3985 = vmin.bf16 %v3889, 1086341312
    %v3986 = vmin.bf16 %v3890, 1086341312
    %v3987 = vmin.bf16 %v3891, 1086341312
    %v3988 = vmin.bf16 %v3892, 1086341312
    %v3989 = vmin.bf16 %v3893, 1086341312
    %v3990 = vmin.bf16 %v3894, 1086341312
    %v3991 = vmin.bf16 %v3895, 1086341312
    %v3992 = vmin.bf16 %v3896, 1086341312
    %v3993 = vmin.bf16 %v3897, 1086341312
    %v3994 = vmin.bf16 %v3898, 1086341312
    %v3995 = vmin.bf16 %v3899, 1086341312
    %v3996 = vmin.bf16 %v3900, 1086341312
    %v3997 = vmin.bf16 %v3901, 1086341312
    %v3998 = vmin.bf16 %v3902, 1086341312
    %v3999 = vmin.bf16 %v3903, 1086341312
    %v4000 = vmin.bf16 %v3904, 1086341312
    %v4001 = vmin.bf16 %v3905, 1086341312
    %v4002 = vmin.bf16 %v3906, 1086341312
    %v4003 = vmin.bf16 %v3907, 1086341312
    %v4004 = vmin.bf16 %v3908, 1086341312
    %v4005 = vmin.bf16 %v3909, 1086341312
    %v4006 = vmin.bf16 %v3910, 1086341312
    %v4007 = vmin.bf16 %v3911, 1086341312
    %v4008 = vmin.bf16 %v3912, 1086341312
    %v4009 = vmin.bf16 %v3913, 1086341312
    %v4010 = vmin.bf16 %v3914, 1086341312
    %v4011 = vmin.bf16 %v3915, 1086341312
    %v4012 = vmin.bf16 %v3916, 1086341312
    %v4013 = vmin.bf16 %v3917, 1086341312
    %v4014 = vmin.bf16 %v3918, 1086341312
    %v4015 = vmin.bf16 %v3919, 1086341312
    %v4016 = vmin.bf16 %v3920, 1086341312
    %v4017 = vmin.bf16 %v3921, 1086341312
    %v4018 = vmin.bf16 %v3922, 1086341312
    %v4019 = vmin.bf16 %v3923, 1086341312
    %v4020 = vmin.bf16 %v3924, 1086341312
    %v4021 = vmin.bf16 %v3925, 1086341312
    %v4022 = vmin.bf16 %v3926, 1086341312
    %v4023 = vmin.bf16 %v3927, 1086341312
    %v4024 = vmin.bf16 %v3928, 1086341312
    %v4025 = vmin.bf16 %v3929, 1086341312
    %v4026 = vmin.bf16 %v3930, 1086341312
    %v4027 = vmin.bf16 %v3931, 1086341312
    %v4028 = vmin.bf16 %v3932, 1086341312
    %v4029 = vmin.bf16 %v3933, 1086341312
    %v4030 = vmin.bf16 %v3934, 1086341312
    %v4031 = vmin.bf16 %v3935, 1086341312
    %v4032 = vmin.bf16 %v3936, 1086341312
    %v4033 = vmin.bf16 %v3937, 1086341312
    %v4034 = vmin.bf16 %v3938, 1086341312
    %v4035 = vmin.bf16 %v3939, 1086341312
    %v4036 = vmin.bf16 %v3940, 1086341312
    %v4037 = vmin.bf16 %v3941, 1086341312
    %v4038 = vmin.bf16 %v3942, 1086341312
    %v4039 = vmin.bf16 %v3943, 1086341312
    %v4040 = vmin.bf16 %v3944, 1086341312
    %v4041 = vmin.bf16 %v3945, 1086341312
    %v4042 = vmin.bf16 %v3946, 1086341312
    %v4043 = vmin.bf16 %v3947, 1086341312
    %v4044 = vmin.bf16 %v3948, 1086341312
    %v4045 = vmin.bf16 %v3949, 1086341312
    %v4046 = vmin.bf16 %v3950, 1086341312
    %v4047 = vmin.bf16 %v3951, 1086341312
    %vm4048 = vsmask.f32 4368
    %vm4049 = vmor %vm54, %vm4048
    %v4051 = vshrl.u32 %v3952, 16
    %v4053 = vrot.slane %v4051, 7
    %v4054 = vrot.slane %v4053, 4
    %v4056 = vshrl.u32 %v3953, 16
    %v4058 = vrot.slane %v4056, 7
    %v4059 = vshll.u32 %v3953, 16
    %v4061 = vor.u32 %v4058, %v4059
    %v4062 = vsel %vm4049, %v4054, %v4061
    %v4063 = vrot.slane %v4058, 4
    %v4065 = vshrl.u32 %v3954, 16
    %v4067 = vrot.slane %v4065, 7
    %v4068 = vshll.u32 %v3954, 16
    %v4070 = vor.u32 %v4067, %v4068
    %v4071 = vsel %vm4049, %v4063, %v4070
    %v4073 = vshrl.u32 %v3955, 16
    %v4075 = vrot.slane %v4073, 7
    %v4076 = vrot.slane %v4075, 4
    %v4078 = vshrl.u32 %v3956, 16
    %v4080 = vrot.slane %v4078, 7
    %v4081 = vshll.u32 %v3956, 16
    %v4083 = vor.u32 %v4080, %v4081
    %v4084 = vsel %vm4049, %v4076, %v4083
    %v4085 = vrot.slane %v4080, 4
    %v4087 = vshrl.u32 %v3957, 16
    %v4089 = vrot.slane %v4087, 7
    %v4090 = vshll.u32 %v3957, 16
    %v4092 = vor.u32 %v4089, %v4090
    %v4093 = vsel %vm4049, %v4085, %v4092
    %v4095 = vshrl.u32 %v3958, 16
    %v4097 = vrot.slane %v4095, 7
    %v4098 = vrot.slane %v4097, 4
    %v4100 = vshrl.u32 %v3959, 16
    %v4102 = vrot.slane %v4100, 7
    %v4103 = vshll.u32 %v3959, 16
    %v4105 = vor.u32 %v4102, %v4103
    %v4106 = vsel %vm4049, %v4098, %v4105
    %v4107 = vrot.slane %v4102, 4
    %v4109 = vshrl.u32 %v3960, 16
    %v4111 = vrot.slane %v4109, 7
    %v4112 = vshll.u32 %v3960, 16
    %v4114 = vor.u32 %v4111, %v4112
    %v4115 = vsel %vm4049, %v4107, %v4114
    %v4117 = vshrl.u32 %v3961, 16
    %v4119 = vrot.slane %v4117, 7
    %v4120 = vrot.slane %v4119, 4
    %v4122 = vshrl.u32 %v3962, 16
    %v4124 = vrot.slane %v4122, 7
    %v4125 = vshll.u32 %v3962, 16
    %v4127 = vor.u32 %v4124, %v4125
    %v4128 = vsel %vm4049, %v4120, %v4127
    %v4129 = vrot.slane %v4124, 4
    %v4131 = vshrl.u32 %v3963, 16
    %v4133 = vrot.slane %v4131, 7
    %v4134 = vshll.u32 %v3963, 16
    %v4136 = vor.u32 %v4133, %v4134
    %v4137 = vsel %vm4049, %v4129, %v4136
    %v4139 = vshrl.u32 %v3964, 16
    %v4141 = vrot.slane %v4139, 7
    %v4142 = vrot.slane %v4141, 4
    %v4144 = vshrl.u32 %v3965, 16
    %v4146 = vrot.slane %v4144, 7
    %v4147 = vshll.u32 %v3965, 16
    %v4149 = vor.u32 %v4146, %v4147
    %v4150 = vsel %vm4049, %v4142, %v4149
    %v4151 = vrot.slane %v4146, 4
    %v4153 = vshrl.u32 %v3966, 16
    %v4155 = vrot.slane %v4153, 7
    %v4156 = vshll.u32 %v3966, 16
    %v4158 = vor.u32 %v4155, %v4156
    %v4159 = vsel %vm4049, %v4151, %v4158
    %v4161 = vshrl.u32 %v3967, 16
    %v4163 = vrot.slane %v4161, 7
    %v4164 = vrot.slane %v4163, 4
    %v4166 = vshrl.u32 %v3968, 16
    %v4168 = vrot.slane %v4166, 7
    %v4169 = vshll.u32 %v3968, 16
    %v4171 = vor.u32 %v4168, %v4169
    %v4172 = vsel %vm4049, %v4164, %v4171
    %v4173 = vrot.slane %v4168, 4
    %v4175 = vshrl.u32 %v3969, 16
    %v4177 = vrot.slane %v4175, 7
    %v4178 = vshll.u32 %v3969, 16
    %v4180 = vor.u32 %v4177, %v4178
    %v4181 = vsel %vm4049, %v4173, %v4180
    %v4183 = vshrl.u32 %v3970, 16
    %v4185 = vrot.slane %v4183, 7
    %v4186 = vrot.slane %v4185, 4
    %v4188 = vshrl.u32 %v3971, 16
    %v4190 = vrot.slane %v4188, 7
    %v4191 = vshll.u32 %v3971, 16
    %v4193 = vor.u32 %v4190, %v4191
    %v4194 = vsel %vm4049, %v4186, %v4193
    %v4195 = vrot.slane %v4190, 4
    %v4197 = vshrl.u32 %v3972, 16
    %v4199 = vrot.slane %v4197, 7
    %v4200 = vshll.u32 %v3972, 16
    %v4202 = vor.u32 %v4199, %v4200
    %v4203 = vsel %vm4049, %v4195, %v4202
    %v4205 = vshrl.u32 %v3973, 16
    %v4207 = vrot.slane %v4205, 7
    %v4208 = vrot.slane %v4207, 4
    %v4210 = vshrl.u32 %v3974, 16
    %v4212 = vrot.slane %v4210, 7
    %v4213 = vshll.u32 %v3974, 16
    %v4215 = vor.u32 %v4212, %v4213
    %v4216 = vsel %vm4049, %v4208, %v4215
    %v4217 = vrot.slane %v4212, 4
    %v4219 = vshrl.u32 %v3975, 16
    %v4221 = vrot.slane %v4219, 7
    %v4222 = vshll.u32 %v3975, 16
    %v4224 = vor.u32 %v4221, %v4222
    %v4225 = vsel %vm4049, %v4217, %v4224
    %v4227 = vshrl.u32 %v3976, 16
    %v4229 = vrot.slane %v4227, 7
    %v4230 = vrot.slane %v4229, 4
    %v4232 = vshrl.u32 %v3977, 16
    %v4234 = vrot.slane %v4232, 7
    %v4235 = vshll.u32 %v3977, 16
    %v4237 = vor.u32 %v4234, %v4235
    %v4238 = vsel %vm4049, %v4230, %v4237
    %v4239 = vrot.slane %v4234, 4
    %v4241 = vshrl.u32 %v3978, 16
    %v4243 = vrot.slane %v4241, 7
    %v4244 = vshll.u32 %v3978, 16
    %v4246 = vor.u32 %v4243, %v4244
    %v4247 = vsel %vm4049, %v4239, %v4246
    %v4249 = vshrl.u32 %v3979, 16
    %v4251 = vrot.slane %v4249, 7
    %v4252 = vrot.slane %v4251, 4
    %v4254 = vshrl.u32 %v3980, 16
    %v4256 = vrot.slane %v4254, 7
    %v4257 = vshll.u32 %v3980, 16
    %v4259 = vor.u32 %v4256, %v4257
    %v4260 = vsel %vm4049, %v4252, %v4259
    %v4261 = vrot.slane %v4256, 4
    %v4263 = vshrl.u32 %v3981, 16
    %v4265 = vrot.slane %v4263, 7
    %v4266 = vshll.u32 %v3981, 16
    %v4268 = vor.u32 %v4265, %v4266
    %v4269 = vsel %vm4049, %v4261, %v4268
    %v4271 = vshrl.u32 %v3982, 16
    %v4273 = vrot.slane %v4271, 7
    %v4274 = vrot.slane %v4273, 4
    %v4276 = vshrl.u32 %v3983, 16
    %v4278 = vrot.slane %v4276, 7
    %v4279 = vshll.u32 %v3983, 16
    %v4281 = vor.u32 %v4278, %v4279
    %v4282 = vsel %vm4049, %v4274, %v4281
    %v4283 = vrot.slane %v4278, 4
    %v4285 = vshrl.u32 %v3984, 16
    %v4287 = vrot.slane %v4285, 7
    %v4288 = vshll.u32 %v3984, 16
    %v4290 = vor.u32 %v4287, %v4288
    %v4291 = vsel %vm4049, %v4283, %v4290
    %v4293 = vshrl.u32 %v3985, 16
    %v4295 = vrot.slane %v4293, 7
    %v4296 = vrot.slane %v4295, 4
    %v4298 = vshrl.u32 %v3986, 16
    %v4300 = vrot.slane %v4298, 7
    %v4301 = vshll.u32 %v3986, 16
    %v4303 = vor.u32 %v4300, %v4301
    %v4304 = vsel %vm4049, %v4296, %v4303
    %v4305 = vrot.slane %v4300, 4
    %v4307 = vshrl.u32 %v3987, 16
    %v4309 = vrot.slane %v4307, 7
    %v4310 = vshll.u32 %v3987, 16
    %v4312 = vor.u32 %v4309, %v4310
    %v4313 = vsel %vm4049, %v4305, %v4312
    %v4315 = vshrl.u32 %v3988, 16
    %v4317 = vrot.slane %v4315, 7
    %v4318 = vrot.slane %v4317, 4
    %v4320 = vshrl.u32 %v3989, 16
    %v4322 = vrot.slane %v4320, 7
    %v4323 = vshll.u32 %v3989, 16
    %v4325 = vor.u32 %v4322, %v4323
    %v4326 = vsel %vm4049, %v4318, %v4325
    %v4327 = vrot.slane %v4322, 4
    %v4329 = vshrl.u32 %v3990, 16
    %v4331 = vrot.slane %v4329, 7
    %v4332 = vshll.u32 %v3990, 16
    %v4334 = vor.u32 %v4331, %v4332
    %v4335 = vsel %vm4049, %v4327, %v4334
    %v4337 = vshrl.u32 %v3991, 16
    %v4339 = vrot.slane %v4337, 7
    %v4340 = vrot.slane %v4339, 4
    %v4342 = vshrl.u32 %v3992, 16
    %v4344 = vrot.slane %v4342, 7
    %v4345 = vshll.u32 %v3992, 16
    %v4347 = vor.u32 %v4344, %v4345
    %v4348 = vsel %vm4049, %v4340, %v4347
    %v4349 = vrot.slane %v4344, 4
    %v4351 = vshrl.u32 %v3993, 16
    %v4353 = vrot.slane %v4351, 7
    %v4354 = vshll.u32 %v3993, 16
    %v4356 = vor.u32 %v4353, %v4354
    %v4357 = vsel %vm4049, %v4349, %v4356
    %v4359 = vshrl.u32 %v3994, 16
    %v4361 = vrot.slane %v4359, 7
    %v4362 = vrot.slane %v4361, 4
    %v4364 = vshrl.u32 %v3995, 16
    %v4366 = vrot.slane %v4364, 7
    %v4367 = vshll.u32 %v3995, 16
    %v4369 = vor.u32 %v4366, %v4367
    %v4370 = vsel %vm4049, %v4362, %v4369
    %v4371 = vrot.slane %v4366, 4
    %v4373 = vshrl.u32 %v3996, 16
    %v4375 = vrot.slane %v4373, 7
    %v4376 = vshll.u32 %v3996, 16
    %v4378 = vor.u32 %v4375, %v4376
    %v4379 = vsel %vm4049, %v4371, %v4378
    %v4381 = vshrl.u32 %v3997, 16
    %v4383 = vrot.slane %v4381, 7
    %v4384 = vrot.slane %v4383, 4
    %v4386 = vshrl.u32 %v3998, 16
    %v4388 = vrot.slane %v4386, 7
    %v4389 = vshll.u32 %v3998, 16
    %v4391 = vor.u32 %v4388, %v4389
    %v4392 = vsel %vm4049, %v4384, %v4391
    %v4393 = vrot.slane %v4388, 4
    %v4395 = vshrl.u32 %v3999, 16
    %v4397 = vrot.slane %v4395, 7
    %v4398 = vshll.u32 %v3999, 16
    %v4400 = vor.u32 %v4397, %v4398
    %v4401 = vsel %vm4049, %v4393, %v4400
    %v4403 = vshrl.u32 %v4000, 16
    %v4405 = vrot.slane %v4403, 7
    %v4406 = vrot.slane %v4405, 4
    %v4408 = vshrl.u32 %v4001, 16
    %v4410 = vrot.slane %v4408, 7
    %v4411 = vshll.u32 %v4001, 16
    %v4413 = vor.u32 %v4410, %v4411
    %v4414 = vsel %vm4049, %v4406, %v4413
    %v4415 = vrot.slane %v4410, 4
    %v4417 = vshrl.u32 %v4002, 16
    %v4419 = vrot.slane %v4417, 7
    %v4420 = vshll.u32 %v4002, 16
    %v4422 = vor.u32 %v4419, %v4420
    %v4423 = vsel %vm4049, %v4415, %v4422
    %v4425 = vshrl.u32 %v4003, 16
    %v4427 = vrot.slane %v4425, 7
    %v4428 = vrot.slane %v4427, 4
    %v4430 = vshrl.u32 %v4004, 16
    %v4432 = vrot.slane %v4430, 7
    %v4433 = vshll.u32 %v4004, 16
    %v4435 = vor.u32 %v4432, %v4433
    %v4436 = vsel %vm4049, %v4428, %v4435
    %v4437 = vrot.slane %v4432, 4
    %v4439 = vshrl.u32 %v4005, 16
    %v4441 = vrot.slane %v4439, 7
    %v4442 = vshll.u32 %v4005, 16
    %v4444 = vor.u32 %v4441, %v4442
    %v4445 = vsel %vm4049, %v4437, %v4444
    %v4447 = vshrl.u32 %v4006, 16
    %v4449 = vrot.slane %v4447, 7
    %v4450 = vrot.slane %v4449, 4
    %v4452 = vshrl.u32 %v4007, 16
    %v4454 = vrot.slane %v4452, 7
    %v4455 = vshll.u32 %v4007, 16
    %v4457 = vor.u32 %v4454, %v4455
    %v4458 = vsel %vm4049, %v4450, %v4457
    %v4459 = vrot.slane %v4454, 4
    %v4461 = vshrl.u32 %v4008, 16
    %v4463 = vrot.slane %v4461, 7
    %v4464 = vshll.u32 %v4008, 16
    %v4466 = vor.u32 %v4463, %v4464
    %v4467 = vsel %vm4049, %v4459, %v4466
    %v4469 = vshrl.u32 %v4009, 16
    %v4471 = vrot.slane %v4469, 7
    %v4472 = vrot.slane %v4471, 4
    %v4474 = vshrl.u32 %v4010, 16
    %v4476 = vrot.slane %v4474, 7
    %v4477 = vshll.u32 %v4010, 16
    %v4479 = vor.u32 %v4476, %v4477
    %v4480 = vsel %vm4049, %v4472, %v4479
    %v4481 = vrot.slane %v4476, 4
    %v4483 = vshrl.u32 %v4011, 16
    %v4485 = vrot.slane %v4483, 7
    %v4486 = vshll.u32 %v4011, 16
    %v4488 = vor.u32 %v4485, %v4486
    %v4489 = vsel %vm4049, %v4481, %v4488
    %v4491 = vshrl.u32 %v4012, 16
    %v4493 = vrot.slane %v4491, 7
    %v4494 = vrot.slane %v4493, 4
    %v4496 = vshrl.u32 %v4013, 16
    %v4498 = vrot.slane %v4496, 7
    %v4499 = vshll.u32 %v4013, 16
    %v4501 = vor.u32 %v4498, %v4499
    %v4502 = vsel %vm4049, %v4494, %v4501
    %v4503 = vrot.slane %v4498, 4
    %v4505 = vshrl.u32 %v4014, 16
    %v4507 = vrot.slane %v4505, 7
    %v4508 = vshll.u32 %v4014, 16
    %v4510 = vor.u32 %v4507, %v4508
    %v4511 = vsel %vm4049, %v4503, %v4510
    %v4513 = vshrl.u32 %v4015, 16
    %v4515 = vrot.slane %v4513, 7
    %v4516 = vrot.slane %v4515, 4
    %v4518 = vshrl.u32 %v4016, 16
    %v4520 = vrot.slane %v4518, 7
    %v4521 = vshll.u32 %v4016, 16
    %v4523 = vor.u32 %v4520, %v4521
    %v4524 = vsel %vm4049, %v4516, %v4523
    %v4525 = vrot.slane %v4520, 4
    %v4527 = vshrl.u32 %v4017, 16
    %v4529 = vrot.slane %v4527, 7
    %v4530 = vshll.u32 %v4017, 16
    %v4532 = vor.u32 %v4529, %v4530
    %v4533 = vsel %vm4049, %v4525, %v4532
    %v4535 = vshrl.u32 %v4018, 16
    %v4537 = vrot.slane %v4535, 7
    %v4538 = vrot.slane %v4537, 4
    %v4540 = vshrl.u32 %v4019, 16
    %v4542 = vrot.slane %v4540, 7
    %v4543 = vshll.u32 %v4019, 16
    %v4545 = vor.u32 %v4542, %v4543
    %v4546 = vsel %vm4049, %v4538, %v4545
    %v4547 = vrot.slane %v4542, 4
    %v4549 = vshrl.u32 %v4020, 16
    %v4551 = vrot.slane %v4549, 7
    %v4552 = vshll.u32 %v4020, 16
    %v4554 = vor.u32 %v4551, %v4552
    %v4555 = vsel %vm4049, %v4547, %v4554
    %v4557 = vshrl.u32 %v4021, 16
    %v4559 = vrot.slane %v4557, 7
    %v4560 = vrot.slane %v4559, 4
    %v4562 = vshrl.u32 %v4022, 16
    %v4564 = vrot.slane %v4562, 7
    %v4565 = vshll.u32 %v4022, 16
    %v4567 = vor.u32 %v4564, %v4565
    %v4568 = vsel %vm4049, %v4560, %v4567
    %v4569 = vrot.slane %v4564, 4
    %v4571 = vshrl.u32 %v4023, 16
    %v4573 = vrot.slane %v4571, 7
    %v4574 = vshll.u32 %v4023, 16
    %v4576 = vor.u32 %v4573, %v4574
    %v4577 = vsel %vm4049, %v4569, %v4576
    %v4579 = vshrl.u32 %v4024, 16
    %v4581 = vrot.slane %v4579, 7
    %v4582 = vrot.slane %v4581, 4
    %v4584 = vshrl.u32 %v4025, 16
    %v4586 = vrot.slane %v4584, 7
    %v4587 = vshll.u32 %v4025, 16
    %v4589 = vor.u32 %v4586, %v4587
    %v4590 = vsel %vm4049, %v4582, %v4589
    %v4591 = vrot.slane %v4586, 4
    %v4593 = vshrl.u32 %v4026, 16
    %v4595 = vrot.slane %v4593, 7
    %v4596 = vshll.u32 %v4026, 16
    %v4598 = vor.u32 %v4595, %v4596
    %v4599 = vsel %vm4049, %v4591, %v4598
    %v4601 = vshrl.u32 %v4027, 16
    %v4603 = vrot.slane %v4601, 7
    %v4604 = vrot.slane %v4603, 4
    %v4606 = vshrl.u32 %v4028, 16
    %v4608 = vrot.slane %v4606, 7
    %v4609 = vshll.u32 %v4028, 16
    %v4611 = vor.u32 %v4608, %v4609
    %v4612 = vsel %vm4049, %v4604, %v4611
    %v4613 = vrot.slane %v4608, 4
    %v4615 = vshrl.u32 %v4029, 16
    %v4617 = vrot.slane %v4615, 7
    %v4618 = vshll.u32 %v4029, 16
    %v4620 = vor.u32 %v4617, %v4618
    %v4621 = vsel %vm4049, %v4613, %v4620
    %v4623 = vshrl.u32 %v4030, 16
    %v4625 = vrot.slane %v4623, 7
    %v4626 = vrot.slane %v4625, 4
    %v4628 = vshrl.u32 %v4031, 16
    %v4630 = vrot.slane %v4628, 7
    %v4631 = vshll.u32 %v4031, 16
    %v4633 = vor.u32 %v4630, %v4631
    %v4634 = vsel %vm4049, %v4626, %v4633
    %v4635 = vrot.slane %v4630, 4
    %v4637 = vshrl.u32 %v4032, 16
    %v4639 = vrot.slane %v4637, 7
    %v4640 = vshll.u32 %v4032, 16
    %v4642 = vor.u32 %v4639, %v4640
    %v4643 = vsel %vm4049, %v4635, %v4642
    %v4645 = vshrl.u32 %v4033, 16
    %v4647 = vrot.slane %v4645, 7
    %v4648 = vrot.slane %v4647, 4
    %v4650 = vshrl.u32 %v4034, 16
    %v4652 = vrot.slane %v4650, 7
    %v4653 = vshll.u32 %v4034, 16
    %v4655 = vor.u32 %v4652, %v4653
    %v4656 = vsel %vm4049, %v4648, %v4655
    %v4657 = vrot.slane %v4652, 4
    %v4659 = vshrl.u32 %v4035, 16
    %v4661 = vrot.slane %v4659, 7
    %v4662 = vshll.u32 %v4035, 16
    %v4664 = vor.u32 %v4661, %v4662
    %v4665 = vsel %vm4049, %v4657, %v4664
    %v4667 = vshrl.u32 %v4036, 16
    %v4669 = vrot.slane %v4667, 7
    %v4670 = vrot.slane %v4669, 4
    %v4672 = vshrl.u32 %v4037, 16
    %v4674 = vrot.slane %v4672, 7
    %v4675 = vshll.u32 %v4037, 16
    %v4677 = vor.u32 %v4674, %v4675
    %v4678 = vsel %vm4049, %v4670, %v4677
    %v4679 = vrot.slane %v4674, 4
    %v4681 = vshrl.u32 %v4038, 16
    %v4683 = vrot.slane %v4681, 7
    %v4684 = vshll.u32 %v4038, 16
    %v4686 = vor.u32 %v4683, %v4684
    %v4687 = vsel %vm4049, %v4679, %v4686
    %v4689 = vshrl.u32 %v4039, 16
    %v4691 = vrot.slane %v4689, 7
    %v4692 = vrot.slane %v4691, 4
    %v4694 = vshrl.u32 %v4040, 16
    %v4696 = vrot.slane %v4694, 7
    %v4697 = vshll.u32 %v4040, 16
    %v4699 = vor.u32 %v4696, %v4697
    %v4700 = vsel %vm4049, %v4692, %v4699
    %v4701 = vrot.slane %v4696, 4
    %v4703 = vshrl.u32 %v4041, 16
    %v4705 = vrot.slane %v4703, 7
    %v4706 = vshll.u32 %v4041, 16
    %v4708 = vor.u32 %v4705, %v4706
    %v4709 = vsel %vm4049, %v4701, %v4708
    %v4711 = vshrl.u32 %v4042, 16
    %v4713 = vrot.slane %v4711, 7
    %v4714 = vrot.slane %v4713, 4
    %v4716 = vshrl.u32 %v4043, 16
    %v4718 = vrot.slane %v4716, 7
    %v4719 = vshll.u32 %v4043, 16
    %v4721 = vor.u32 %v4718, %v4719
    %v4722 = vsel %vm4049, %v4714, %v4721
    %v4723 = vrot.slane %v4718, 4
    %v4725 = vshrl.u32 %v4044, 16
    %v4727 = vrot.slane %v4725, 7
    %v4728 = vshll.u32 %v4044, 16
    %v4730 = vor.u32 %v4727, %v4728
    %v4731 = vsel %vm4049, %v4723, %v4730
    %v4733 = vshrl.u32 %v4045, 16
    %v4735 = vrot.slane %v4733, 7
    %v4736 = vrot.slane %v4735, 4
    %v4738 = vshrl.u32 %v4046, 16
    %v4740 = vrot.slane %v4738, 7
    %v4741 = vshll.u32 %v4046, 16
    %v4743 = vor.u32 %v4740, %v4741
    %v4744 = vsel %vm4049, %v4736, %v4743
    %v4745 = vrot.slane %v4740, 4
    %v4747 = vshrl.u32 %v4047, 16
    %v4749 = vrot.slane %v4747, 7
    %v4750 = vshll.u32 %v4047, 16
    %v4752 = vor.u32 %v4749, %v4750
    %v4753 = vsel %vm4049, %v4745, %v4752
    %v4754 = vld [vmem:[%s3] sm:$0xf]
    %v4755 = vld [vmem:[%s3 + $0x4] sm:$0xf]
    %v4756 = vld [vmem:[%s3 + $0x8] sm:$0xf]
    %v4757 = vld [vmem:[%s3 + $0xc] sm:$0xf]
    %v4758 = vld [vmem:[%s4] sm:$0x1]
    %v4760 = vlaneseq
    %v4761 = vshrl.u32 %v4760, 7
    %v4762 = vsub.s32 0, %v4761
    %v4763 = vrot.slane %v4758, %v4762
    %v4765 = vunpack.c.l.b16 %v4062
    %v4766 = vunpack.c.l.b16 %v4071
    %v4767 = vunpack.c.l.b16 %v4084
    %v4768 = vunpack.c.l.b16 %v4093
    %v4769 = vunpack.c.l.b16 %v4106
    %v4770 = vunpack.c.l.b16 %v4115
    %v4771 = vunpack.c.l.b16 %v4128
    %v4772 = vunpack.c.l.b16 %v4137
    %v4773 = vunpack.c.l.b16 %v4150
    %v4774 = vunpack.c.l.b16 %v4159
    %v4775 = vunpack.c.l.b16 %v4172
    %v4776 = vunpack.c.l.b16 %v4181
    %v4777 = vunpack.c.l.b16 %v4194
    %v4778 = vunpack.c.l.b16 %v4203
    %v4779 = vunpack.c.l.b16 %v4216
    %v4780 = vunpack.c.l.b16 %v4225
    %v4781 = vunpack.c.l.b16 %v4238
    %v4782 = vunpack.c.l.b16 %v4247
    %v4783 = vunpack.c.l.b16 %v4260
    %v4784 = vunpack.c.l.b16 %v4269
    %v4785 = vunpack.c.l.b16 %v4282
    %v4786 = vunpack.c.l.b16 %v4291
    %v4787 = vunpack.c.l.b16 %v4304
    %v4788 = vunpack.c.l.b16 %v4313
    %v4789 = vunpack.c.l.b16 %v4326
    %v4790 = vunpack.c.l.b16 %v4335
    %v4791 = vunpack.c.l.b16 %v4348
    %v4792 = vunpack.c.l.b16 %v4357
    %v4793 = vunpack.c.l.b16 %v4370
    %v4794 = vunpack.c.l.b16 %v4379
    %v4795 = vunpack.c.l.b16 %v4392
    %v4796 = vunpack.c.l.b16 %v4401
    %v4797 = vunpack.c.l.b16 %v4414
    %v4798 = vunpack.c.l.b16 %v4423
    %v4799 = vunpack.c.l.b16 %v4436
    %v4800 = vunpack.c.l.b16 %v4445
    %v4801 = vunpack.c.l.b16 %v4458
    %v4802 = vunpack.c.l.b16 %v4467
    %v4803 = vunpack.c.l.b16 %v4480
    %v4804 = vunpack.c.l.b16 %v4489
    %v4805 = vunpack.c.l.b16 %v4502
    %v4806 = vunpack.c.l.b16 %v4511
    %v4807 = vunpack.c.l.b16 %v4524
    %v4808 = vunpack.c.l.b16 %v4533
    %v4809 = vunpack.c.l.b16 %v4546
    %v4810 = vunpack.c.l.b16 %v4555
    %v4811 = vunpack.c.l.b16 %v4568
    %v4812 = vunpack.c.l.b16 %v4577
    %v4813 = vunpack.c.l.b16 %v4590
    %v4814 = vunpack.c.l.b16 %v4599
    %v4815 = vunpack.c.l.b16 %v4612
    %v4816 = vunpack.c.l.b16 %v4621
    %v4817 = vunpack.c.l.b16 %v4634
    %v4818 = vunpack.c.l.b16 %v4643
    %v4819 = vunpack.c.l.b16 %v4656
    %v4820 = vunpack.c.l.b16 %v4665
    %v4821 = vunpack.c.l.b16 %v4678
    %v4822 = vunpack.c.l.b16 %v4687
    %v4823 = vunpack.c.l.b16 %v4700
    %v4824 = vunpack.c.l.b16 %v4709
    %v4825 = vunpack.c.l.b16 %v4722
    %v4826 = vunpack.c.l.b16 %v4731
    %v4827 = vunpack.c.l.b16 %v4744
    %v4828 = vunpack.c.l.b16 %v4753
    %v4829 = vpack.c.b16 %v4766, %v4765
    %v4830 = vpack.c.b16 %v4768, %v4767
    %v4831 = vpack.c.b16 %v4770, %v4769
    %v4832 = vpack.c.b16 %v4772, %v4771
    %v4833 = vpack.c.b16 %v4774, %v4773
    %v4834 = vpack.c.b16 %v4776, %v4775
    %v4835 = vpack.c.b16 %v4778, %v4777
    %v4836 = vpack.c.b16 %v4780, %v4779
    %v4837 = vpack.c.b16 %v4782, %v4781
    %v4838 = vpack.c.b16 %v4784, %v4783
    %v4839 = vpack.c.b16 %v4786, %v4785
    %v4840 = vpack.c.b16 %v4788, %v4787
    %v4841 = vpack.c.b16 %v4790, %v4789
    %v4842 = vpack.c.b16 %v4792, %v4791
    %v4843 = vpack.c.b16 %v4794, %v4793
    %v4844 = vpack.c.b16 %v4796, %v4795
    %v4845 = vpack.c.b16 %v4798, %v4797
    %v4846 = vpack.c.b16 %v4800, %v4799
    %v4847 = vpack.c.b16 %v4802, %v4801
    %v4848 = vpack.c.b16 %v4804, %v4803
    %v4849 = vpack.c.b16 %v4806, %v4805
    %v4850 = vpack.c.b16 %v4808, %v4807
    %v4851 = vpack.c.b16 %v4810, %v4809
    %v4852 = vpack.c.b16 %v4812, %v4811
    %v4853 = vpack.c.b16 %v4814, %v4813
    %v4854 = vpack.c.b16 %v4816, %v4815
    %v4855 = vpack.c.b16 %v4818, %v4817
    %v4856 = vpack.c.b16 %v4820, %v4819
    %v4857 = vpack.c.b16 %v4822, %v4821
    %v4858 = vpack.c.b16 %v4824, %v4823
    %v4859 = vpack.c.b16 %v4826, %v4825
    %v4860 = vpack.c.b16 %v4828, %v4827
    %v4865 = vunpack.c.l.b16 %v4754
    %v4866 = vunpack.c.l.b16 %v4755
    %v4867 = vunpack.c.l.b16 %v4756
    %v4868 = vunpack.c.l.b16 %v4757
    %v4869 = vpack.c.b16 %v4866, %v4865
    %v4870 = vpack.c.b16 %v4868, %v4867
    %vm4873 = vcmask 261120
    %v4875 = vsel %vm4873, %v4829, 0
    %v4878 = vsel %vm4873, %v4830, 0
    %v4881 = vsel %vm4873, %v4831, 0
    %v4884 = vsel %vm4873, %v4832, 0
    %v4887 = vsel %vm4873, %v4833, 0
    %v4890 = vsel %vm4873, %v4834, 0
    %v4893 = vsel %vm4873, %v4835, 0
    %v4896 = vsel %vm4873, %v4836, 0
    %v4899 = vsel %vm4873, %v4837, 0
    %v4902 = vsel %vm4873, %v4838, 0
    %v4905 = vsel %vm4873, %v4839, 0
    %v4908 = vsel %vm4873, %v4840, 0
    %v4911 = vsel %vm4873, %v4841, 0
    %v4914 = vsel %vm4873, %v4842, 0
    %v4917 = vsel %vm4873, %v4843, 0
    %v4920 = vsel %vm4873, %v4844, 0
    %v4923 = vsel %vm4873, %v4845, 0
    %v4926 = vsel %vm4873, %v4846, 0
    %v4929 = vsel %vm4873, %v4847, 0
    %v4932 = vsel %vm4873, %v4848, 0
    %v4935 = vsel %vm4873, %v4849, 0
    %v4938 = vsel %vm4873, %v4850, 0
    %v4941 = vsel %vm4873, %v4851, 0
    %v4944 = vsel %vm4873, %v4852, 0
    %v4947 = vsel %vm4873, %v4853, 0
    %v4950 = vsel %vm4873, %v4854, 0
    %v4953 = vsel %vm4873, %v4855, 0
    %v4956 = vsel %vm4873, %v4856, 0
    %v4959 = vsel %vm4873, %v4857, 0
    %v4962 = vsel %vm4873, %v4858, 0
    %v4965 = vsel %vm4873, %v4859, 0
    %v4968 = vsel %vm4873, %v4860, 0
    %4970 = vmatprep.subr.bf16.mxu0 0
    %4971 = vmatpush1.bf16.msra.mxu0 %v4869
    %4972 = vmatprep.subr.bf16.mxu0 0
    %4973 = vmatpush1.bf16.msra.mxu0 %v4870
    %4974 = vmatprep.subr.bf16.mxu0 0
    %4975 = vmatpush1.bf16.msra.mxu0 0
    %4976 = vmatprep.subr.bf16.mxu0 0
    %4977 = vmatpush1.bf16.msra.mxu0 0
    %4978 = vmatprep.subr.bf16.mxu0 0
    %4979 = vmatpush1.bf16.msra.mxu0 0
    %4980 = vmatprep.subr.bf16.mxu0 0
    %4981 = vmatpush1.bf16.msra.mxu0 0
    %4982 = vmatprep.subr.bf16.mxu0 0
    %4983 = vmatpush1.bf16.msra.mxu0 0
    %4984 = vmatprep.subr.bf16.mxu0 0
    %4985 = vmatpush1.bf16.msra.mxu0 0
    %4986 = vmatprep.subr.bf16.mxu0 0
    %4987 = vmatpush1.bf16.msra.mxu0 0
    %4988 = vmatprep.subr.bf16.mxu0 0
    %4989 = vmatpush1.bf16.msra.mxu0 0
    %4990 = vmatprep.subr.bf16.mxu0 0
    %4991 = vmatpush1.bf16.msra.mxu0 0
    %4992 = vmatprep.subr.bf16.mxu0 0
    %4993 = vmatpush1.bf16.msra.mxu0 0
    %4994 = vmatprep.subr.bf16.mxu0 0
    %4995 = vmatpush1.bf16.msra.mxu0 0
    %4996 = vmatprep.subr.bf16.mxu0 0
    %4997 = vmatpush1.bf16.msra.mxu0 0
    %4998 = vmatprep.subr.bf16.mxu0 0
    %4999 = vmatpush1.bf16.msra.mxu0 0
    %5000 = vmatprep.subr.bf16.mxu0 0
    %5001 = vmatpush1.bf16.msra.mxu0 0
    %5002 = vmatprep.mubr.bf16.mxu0 0
    %5003 = vmatmul.mubr.bf16.gmra.mrb[0].mxu0 %v4875
    %v5004 = vpop.f32.mrb[0].mxu0
    %v5005 = vadd.f32 %v4763, %v5004
    %v5006 = vpop.f32.mrb[0].mxu0
    %v5007 = vpop.f32.mrb[0].mxu0
    %v5008 = vadd.f32 %v4763, %v5007
    %v5009 = vpop.f32.mrb[0].mxu0
    %5010 = vmatprep.mubr.bf16.mxu0 0
    %5011 = vmatmul.mubr.bf16.gmra.mrb[0].mxu0 %v4878
    %v5012 = vpop.f32.mrb[0].mxu0
    %v5013 = vadd.f32 %v4763, %v5012
    %v5014 = vpop.f32.mrb[0].mxu0
    %v5015 = vpop.f32.mrb[0].mxu0
    %v5016 = vadd.f32 %v4763, %v5015
    %v5017 = vpop.f32.mrb[0].mxu0
    %5018 = vmatprep.mubr.bf16.mxu0 0
    %5019 = vmatmul.mubr.bf16.gmra.mrb[0].mxu0 %v4881
    %v5020 = vpop.f32.mrb[0].mxu0
    %v5021 = vadd.f32 %v4763, %v5020
    %v5022 = vpop.f32.mrb[0].mxu0
    %v5023 = vpop.f32.mrb[0].mxu0
    %v5024 = vadd.f32 %v4763, %v5023
    %v5025 = vpop.f32.mrb[0].mxu0
    %5026 = vmatprep.mubr.bf16.mxu0 0
    %5027 = vmatmul.mubr.bf16.gmra.mrb[0].mxu0 %v4884
    %v5028 = vpop.f32.mrb[0].mxu0
    %v5029 = vadd.f32 %v4763, %v5028
    %v5030 = vpop.f32.mrb[0].mxu0
    %v5031 = vpop.f32.mrb[0].mxu0
    %v5032 = vadd.f32 %v4763, %v5031
    %v5033 = vpop.f32.mrb[0].mxu0
    %5034 = vmatprep.mubr.bf16.mxu0 0
    %5035 = vmatmul.mubr.bf16.gmra.mrb[0].mxu0 %v4887
    %v5036 = vpop.f32.mrb[0].mxu0
    %v5037 = vadd.f32 %v4763, %v5036
    %v5038 = vpop.f32.mrb[0].mxu0
    %v5039 = vpop.f32.mrb[0].mxu0
    %v5040 = vadd.f32 %v4763, %v5039
    %v5041 = vpop.f32.mrb[0].mxu0
    %5042 = vmatprep.mubr.bf16.mxu0 0
    %5043 = vmatmul.mubr.bf16.gmra.mrb[0].mxu0 %v4890
    %v5044 = vpop.f32.mrb[0].mxu0
    %v5045 = vadd.f32 %v4763, %v5044
    %v5046 = vpop.f32.mrb[0].mxu0
    %v5047 = vpop.f32.mrb[0].mxu0
    %v5048 = vadd.f32 %v4763, %v5047
    %v5049 = vpop.f32.mrb[0].mxu0
    %5050 = vmatprep.mubr.bf16.mxu0 0
    %5051 = vmatmul.mubr.bf16.gmra.mrb[0].mxu0 %v4893
    %v5052 = vpop.f32.mrb[0].mxu0
    %v5053 = vadd.f32 %v4763, %v5052
    %v5054 = vpop.f32.mrb[0].mxu0
    %v5055 = vpop.f32.mrb[0].mxu0
    %v5056 = vadd.f32 %v4763, %v5055
    %v5057 = vpop.f32.mrb[0].mxu0
    %5058 = vmatprep.mubr.bf16.mxu0 0
    %5059 = vmatmul.mubr.bf16.gmra.mrb[0].mxu0 %v4896
    %v5060 = vpop.f32.mrb[0].mxu0
    %v5061 = vadd.f32 %v4763, %v5060
    %v5062 = vpop.f32.mrb[0].mxu0
    %v5063 = vpop.f32.mrb[0].mxu0
    %v5064 = vadd.f32 %v4763, %v5063
    %v5065 = vpop.f32.mrb[0].mxu0
    %5066 = vmatprep.mubr.bf16.mxu0 0
    %5067 = vmatmul.mubr.bf16.gmra.mrb[0].mxu0 %v4899
    %v5068 = vpop.f32.mrb[0].mxu0
    %v5069 = vadd.f32 %v4763, %v5068
    %v5070 = vpop.f32.mrb[0].mxu0
    %v5071 = vpop.f32.mrb[0].mxu0
    %v5072 = vadd.f32 %v4763, %v5071
    %v5073 = vpop.f32.mrb[0].mxu0
    %5074 = vmatprep.mubr.bf16.mxu0 0
    %5075 = vmatmul.mubr.bf16.gmra.mrb[0].mxu0 %v4902
    %v5076 = vpop.f32.mrb[0].mxu0
    %v5077 = vadd.f32 %v4763, %v5076
    %v5078 = vpop.f32.mrb[0].mxu0
    %v5079 = vpop.f32.mrb[0].mxu0
    %v5080 = vadd.f32 %v4763, %v5079
    %v5081 = vpop.f32.mrb[0].mxu0
    %5082 = vmatprep.mubr.bf16.mxu0 0
    %5083 = vmatmul.mubr.bf16.gmra.mrb[0].mxu0 %v4905
    %v5084 = vpop.f32.mrb[0].mxu0
    %v5085 = vadd.f32 %v4763, %v5084
    %v5086 = vpop.f32.mrb[0].mxu0
    %v5087 = vpop.f32.mrb[0].mxu0
    %v5088 = vadd.f32 %v4763, %v5087
    %v5089 = vpop.f32.mrb[0].mxu0
    %5090 = vmatprep.mubr.bf16.mxu0 0
    %5091 = vmatmul.mubr.bf16.gmra.mrb[0].mxu0 %v4908
    %v5092 = vpop.f32.mrb[0].mxu0
    %v5093 = vadd.f32 %v4763, %v5092
    %v5094 = vpop.f32.mrb[0].mxu0
    %v5095 = vpop.f32.mrb[0].mxu0
    %v5096 = vadd.f32 %v4763, %v5095
    %v5097 = vpop.f32.mrb[0].mxu0
    %5098 = vmatprep.mubr.bf16.mxu0 0
    %5099 = vmatmul.mubr.bf16.gmra.mrb[0].mxu0 %v4911
    %v5100 = vpop.f32.mrb[0].mxu0
    %v5101 = vadd.f32 %v4763, %v5100
    %v5102 = vpop.f32.mrb[0].mxu0
    %v5103 = vpop.f32.mrb[0].mxu0
    %v5104 = vadd.f32 %v4763, %v5103
    %v5105 = vpop.f32.mrb[0].mxu0
    %5106 = vmatprep.mubr.bf16.mxu0 0
    %5107 = vmatmul.mubr.bf16.gmra.mrb[0].mxu0 %v4914
    %v5108 = vpop.f32.mrb[0].mxu0
    %v5109 = vadd.f32 %v4763, %v5108
    %v5110 = vpop.f32.mrb[0].mxu0
    %v5111 = vpop.f32.mrb[0].mxu0
    %v5112 = vadd.f32 %v4763, %v5111
    %v5113 = vpop.f32.mrb[0].mxu0
    %5114 = vmatprep.mubr.bf16.mxu0 0
    %5115 = vmatmul.mubr.bf16.gmra.mrb[0].mxu0 %v4917
    %v5116 = vpop.f32.mrb[0].mxu0
    %v5117 = vadd.f32 %v4763, %v5116
    %v5118 = vpop.f32.mrb[0].mxu0
    %v5119 = vpop.f32.mrb[0].mxu0
    %v5120 = vadd.f32 %v4763, %v5119
    %v5121 = vpop.f32.mrb[0].mxu0
    %5122 = vmatprep.mubr.bf16.mxu0 0
    %5123 = vmatmul.mubr.bf16.gmra.mrb[0].mxu0 %v4920
    %v5124 = vpop.f32.mrb[0].mxu0
    %v5125 = vadd.f32 %v4763, %v5124
    %v5126 = vpop.f32.mrb[0].mxu0
    %v5127 = vpop.f32.mrb[0].mxu0
    %v5128 = vadd.f32 %v4763, %v5127
    %v5129 = vpop.f32.mrb[0].mxu0
    %5130 = vmatprep.mubr.bf16.mxu0 0
    %5131 = vmatmul.mubr.bf16.gmra.mrb[0].mxu0 %v4923
    %v5132 = vpop.f32.mrb[0].mxu0
    %v5133 = vadd.f32 %v4763, %v5132
    %v5134 = vpop.f32.mrb[0].mxu0
    %v5135 = vpop.f32.mrb[0].mxu0
    %v5136 = vadd.f32 %v4763, %v5135
    %v5137 = vpop.f32.mrb[0].mxu0
    %5138 = vmatprep.mubr.bf16.mxu0 0
    %5139 = vmatmul.mubr.bf16.gmra.mrb[0].mxu0 %v4926
    %v5140 = vpop.f32.mrb[0].mxu0
    %v5141 = vadd.f32 %v4763, %v5140
    %v5142 = vpop.f32.mrb[0].mxu0
    %v5143 = vpop.f32.mrb[0].mxu0
    %v5144 = vadd.f32 %v4763, %v5143
    %v5145 = vpop.f32.mrb[0].mxu0
    %5146 = vmatprep.mubr.bf16.mxu0 0
    %5147 = vmatmul.mubr.bf16.gmra.mrb[0].mxu0 %v4929
    %v5148 = vpop.f32.mrb[0].mxu0
    %v5149 = vadd.f32 %v4763, %v5148
    %v5150 = vpop.f32.mrb[0].mxu0
    %v5151 = vpop.f32.mrb[0].mxu0
    %v5152 = vadd.f32 %v4763, %v5151
    %v5153 = vpop.f32.mrb[0].mxu0
    %5154 = vmatprep.mubr.bf16.mxu0 0
    %5155 = vmatmul.mubr.bf16.gmra.mrb[0].mxu0 %v4932
    %v5156 = vpop.f32.mrb[0].mxu0
    %v5157 = vadd.f32 %v4763, %v5156
    %v5158 = vpop.f32.mrb[0].mxu0
    %v5159 = vpop.f32.mrb[0].mxu0
    %v5160 = vadd.f32 %v4763, %v5159
    %v5161 = vpop.f32.mrb[0].mxu0
    %5162 = vmatprep.mubr.bf16.mxu0 0
    %5163 = vmatmul.mubr.bf16.gmra.mrb[0].mxu0 %v4935
    %v5164 = vpop.f32.mrb[0].mxu0
    %v5165 = vadd.f32 %v4763, %v5164
    %v5166 = vpop.f32.mrb[0].mxu0
    %v5167 = vpop.f32.mrb[0].mxu0
    %v5168 = vadd.f32 %v4763, %v5167
    %v5169 = vpop.f32.mrb[0].mxu0
    %5170 = vmatprep.mubr.bf16.mxu0 0
    %5171 = vmatmul.mubr.bf16.gmra.mrb[0].mxu0 %v4938
    %v5172 = vpop.f32.mrb[0].mxu0
    %v5173 = vadd.f32 %v4763, %v5172
    %v5174 = vpop.f32.mrb[0].mxu0
    %v5175 = vpop.f32.mrb[0].mxu0
    %v5176 = vadd.f32 %v4763, %v5175
    %v5177 = vpop.f32.mrb[0].mxu0
    %5178 = vmatprep.mubr.bf16.mxu0 0
    %5179 = vmatmul.mubr.bf16.gmra.mrb[0].mxu0 %v4941
    %v5180 = vpop.f32.mrb[0].mxu0
    %v5181 = vadd.f32 %v4763, %v5180
    %v5182 = vpop.f32.mrb[0].mxu0
    %v5183 = vpop.f32.mrb[0].mxu0
    %v5184 = vadd.f32 %v4763, %v5183
    %v5185 = vpop.f32.mrb[0].mxu0
    %5186 = vmatprep.mubr.bf16.mxu0 0
    %5187 = vmatmul.mubr.bf16.gmra.mrb[0].mxu0 %v4944
    %v5188 = vpop.f32.mrb[0].mxu0
    %v5189 = vadd.f32 %v4763, %v5188
    %v5190 = vpop.f32.mrb[0].mxu0
    %v5191 = vpop.f32.mrb[0].mxu0
    %v5192 = vadd.f32 %v4763, %v5191
    %v5193 = vpop.f32.mrb[0].mxu0
    %5194 = vmatprep.mubr.bf16.mxu0 0
    %5195 = vmatmul.mubr.bf16.gmra.mrb[0].mxu0 %v4947
    %v5196 = vpop.f32.mrb[0].mxu0
    %v5197 = vadd.f32 %v4763, %v5196
    %v5198 = vpop.f32.mrb[0].mxu0
    %v5199 = vpop.f32.mrb[0].mxu0
    %v5200 = vadd.f32 %v4763, %v5199
    %v5201 = vpop.f32.mrb[0].mxu0
    %5202 = vmatprep.mubr.bf16.mxu0 0
    %5203 = vmatmul.mubr.bf16.gmra.mrb[0].mxu0 %v4950
    %v5204 = vpop.f32.mrb[0].mxu0
    %v5205 = vadd.f32 %v4763, %v5204
    %v5206 = vpop.f32.mrb[0].mxu0
    %v5207 = vpop.f32.mrb[0].mxu0
    %v5208 = vadd.f32 %v4763, %v5207
    %v5209 = vpop.f32.mrb[0].mxu0
    %5210 = vmatprep.mubr.bf16.mxu0 0
    %5211 = vmatmul.mubr.bf16.gmra.mrb[0].mxu0 %v4953
    %v5212 = vpop.f32.mrb[0].mxu0
    %v5213 = vadd.f32 %v4763, %v5212
    %v5214 = vpop.f32.mrb[0].mxu0
    %v5215 = vpop.f32.mrb[0].mxu0
    %v5216 = vadd.f32 %v4763, %v5215
    %v5217 = vpop.f32.mrb[0].mxu0
    %5218 = vmatprep.mubr.bf16.mxu0 0
    %5219 = vmatmul.mubr.bf16.gmra.mrb[0].mxu0 %v4956
    %v5220 = vpop.f32.mrb[0].mxu0
    %v5221 = vadd.f32 %v4763, %v5220
    %v5222 = vpop.f32.mrb[0].mxu0
    %v5223 = vpop.f32.mrb[0].mxu0
    %v5224 = vadd.f32 %v4763, %v5223
    %v5225 = vpop.f32.mrb[0].mxu0
    %5226 = vmatprep.mubr.bf16.mxu0 0
    %5227 = vmatmul.mubr.bf16.gmra.mrb[0].mxu0 %v4959
    %v5228 = vpop.f32.mrb[0].mxu0
    %v5229 = vadd.f32 %v4763, %v5228
    %v5230 = vpop.f32.mrb[0].mxu0
    %v5231 = vpop.f32.mrb[0].mxu0
    %v5232 = vadd.f32 %v4763, %v5231
    %v5233 = vpop.f32.mrb[0].mxu0
    %5234 = vmatprep.mubr.bf16.mxu0 0
    %5235 = vmatmul.mubr.bf16.gmra.mrb[0].mxu0 %v4962
    %v5236 = vpop.f32.mrb[0].mxu0
    %v5237 = vadd.f32 %v4763, %v5236
    %v5238 = vpop.f32.mrb[0].mxu0
    %v5239 = vpop.f32.mrb[0].mxu0
    %v5240 = vadd.f32 %v4763, %v5239
    %v5241 = vpop.f32.mrb[0].mxu0
    %5242 = vmatprep.mubr.bf16.mxu0 0
    %5243 = vmatmul.mubr.bf16.gmra.mrb[0].mxu0 %v4965
    %v5244 = vpop.f32.mrb[0].mxu0
    %v5245 = vadd.f32 %v4763, %v5244
    %v5246 = vpop.f32.mrb[0].mxu0
    %v5247 = vpop.f32.mrb[0].mxu0
    %v5248 = vadd.f32 %v4763, %v5247
    %v5249 = vpop.f32.mrb[0].mxu0
    %5250 = vmatprep.mubr.bf16.mxu0 0
    %5251 = vmatmul.mubr.bf16.gmra.mrb[0].mxu0 %v4968
    %v5252 = vpop.f32.mrb[0].mxu0
    %v5253 = vadd.f32 %v4763, %v5252
    %v5254 = vpop.f32.mrb[0].mxu0
    %v5255 = vpop.f32.mrb[0].mxu0
    %v5256 = vadd.f32 %v4763, %v5255
    %v5257 = vpop.f32.mrb[0].mxu0
    %5258 = vdwg.mxu0
    %v5259 = vmax.f32 %v5005, 0.0
    %v5260 = vmax.f32 %v5008, 0.0
    %v5261 = vmax.f32 %v5013, 0.0
    %v5262 = vmax.f32 %v5016, 0.0
    %v5263 = vmax.f32 %v5021, 0.0
    %v5264 = vmax.f32 %v5024, 0.0
    %v5265 = vmax.f32 %v5029, 0.0
    %v5266 = vmax.f32 %v5032, 0.0
    %v5267 = vmax.f32 %v5037, 0.0
    %v5268 = vmax.f32 %v5040, 0.0
    %v5269 = vmax.f32 %v5045, 0.0
    %v5270 = vmax.f32 %v5048, 0.0
    %v5271 = vmax.f32 %v5053, 0.0
    %v5272 = vmax.f32 %v5056, 0.0
    %v5273 = vmax.f32 %v5061, 0.0
    %v5274 = vmax.f32 %v5064, 0.0
    %v5275 = vmax.f32 %v5069, 0.0
    %v5276 = vmax.f32 %v5072, 0.0
    %v5277 = vmax.f32 %v5077, 0.0
    %v5278 = vmax.f32 %v5080, 0.0
    %v5279 = vmax.f32 %v5085, 0.0
    %v5280 = vmax.f32 %v5088, 0.0
    %v5281 = vmax.f32 %v5093, 0.0
    %v5282 = vmax.f32 %v5096, 0.0
    %v5283 = vmax.f32 %v5101, 0.0
    %v5284 = vmax.f32 %v5104, 0.0
    %v5285 = vmax.f32 %v5109, 0.0
    %v5286 = vmax.f32 %v5112, 0.0
    %v5287 = vmax.f32 %v5117, 0.0
    %v5288 = vmax.f32 %v5120, 0.0
    %v5289 = vmax.f32 %v5125, 0.0
    %v5290 = vmax.f32 %v5128, 0.0
    %v5291 = vmax.f32 %v5133, 0.0
    %v5292 = vmax.f32 %v5136, 0.0
    %v5293 = vmax.f32 %v5141, 0.0
    %v5294 = vmax.f32 %v5144, 0.0
    %v5295 = vmax.f32 %v5149, 0.0
    %v5296 = vmax.f32 %v5152, 0.0
    %v5297 = vmax.f32 %v5157, 0.0
    %v5298 = vmax.f32 %v5160, 0.0
    %v5299 = vmax.f32 %v5165, 0.0
    %v5300 = vmax.f32 %v5168, 0.0
    %v5301 = vmax.f32 %v5173, 0.0
    %v5302 = vmax.f32 %v5176, 0.0
    %v5303 = vmax.f32 %v5181, 0.0
    %v5304 = vmax.f32 %v5184, 0.0
    %v5305 = vmax.f32 %v5189, 0.0
    %v5306 = vmax.f32 %v5192, 0.0
    %v5307 = vmax.f32 %v5197, 0.0
    %v5308 = vmax.f32 %v5200, 0.0
    %v5309 = vmax.f32 %v5205, 0.0
    %v5310 = vmax.f32 %v5208, 0.0
    %v5311 = vmax.f32 %v5213, 0.0
    %v5312 = vmax.f32 %v5216, 0.0
    %v5313 = vmax.f32 %v5221, 0.0
    %v5314 = vmax.f32 %v5224, 0.0
    %v5315 = vmax.f32 %v5229, 0.0
    %v5316 = vmax.f32 %v5232, 0.0
    %v5317 = vmax.f32 %v5237, 0.0
    %v5318 = vmax.f32 %v5240, 0.0
    %v5319 = vmax.f32 %v5245, 0.0
    %v5320 = vmax.f32 %v5248, 0.0
    %v5321 = vmax.f32 %v5253, 0.0
    %v5322 = vmax.f32 %v5256, 0.0
    %v5323 = vmin.f32 %v5259, 6.0
    %v5324 = vmin.f32 %v5260, 6.0
    %v5325 = vmin.f32 %v5261, 6.0
    %v5326 = vmin.f32 %v5262, 6.0
    %v5327 = vmin.f32 %v5263, 6.0
    %v5328 = vmin.f32 %v5264, 6.0
    %v5329 = vmin.f32 %v5265, 6.0
    %v5330 = vmin.f32 %v5266, 6.0
    %v5331 = vmin.f32 %v5267, 6.0
    %v5332 = vmin.f32 %v5268, 6.0
    %v5333 = vmin.f32 %v5269, 6.0
    %v5334 = vmin.f32 %v5270, 6.0
    %v5335 = vmin.f32 %v5271, 6.0
    %v5336 = vmin.f32 %v5272, 6.0
    %v5337 = vmin.f32 %v5273, 6.0
    %v5338 = vmin.f32 %v5274, 6.0
    %v5339 = vmin.f32 %v5275, 6.0
    %v5340 = vmin.f32 %v5276, 6.0
    %v5341 = vmin.f32 %v5277, 6.0
    %v5342 = vmin.f32 %v5278, 6.0
    %v5343 = vmin.f32 %v5279, 6.0
    %v5344 = vmin.f32 %v5280, 6.0
    %v5345 = vmin.f32 %v5281, 6.0
    %v5346 = vmin.f32 %v5282, 6.0
    %v5347 = vmin.f32 %v5283, 6.0
    %v5348 = vmin.f32 %v5284, 6.0
    %v5349 = vmin.f32 %v5285, 6.0
    %v5350 = vmin.f32 %v5286, 6.0
    %v5351 = vmin.f32 %v5287, 6.0
    %v5352 = vmin.f32 %v5288, 6.0
    %v5353 = vmin.f32 %v5289, 6.0
    %v5354 = vmin.f32 %v5290, 6.0
    %v5355 = vmin.f32 %v5291, 6.0
    %v5356 = vmin.f32 %v5292, 6.0
    %v5357 = vmin.f32 %v5293, 6.0
    %v5358 = vmin.f32 %v5294, 6.0
    %v5359 = vmin.f32 %v5295, 6.0
    %v5360 = vmin.f32 %v5296, 6.0
    %v5361 = vmin.f32 %v5297, 6.0
    %v5362 = vmin.f32 %v5298, 6.0
    %v5363 = vmin.f32 %v5299, 6.0
    %v5364 = vmin.f32 %v5300, 6.0
    %v5365 = vmin.f32 %v5301, 6.0
    %v5366 = vmin.f32 %v5302, 6.0
    %v5367 = vmin.f32 %v5303, 6.0
    %v5368 = vmin.f32 %v5304, 6.0
    %v5369 = vmin.f32 %v5305, 6.0
    %v5370 = vmin.f32 %v5306, 6.0
    %v5371 = vmin.f32 %v5307, 6.0
    %v5372 = vmin.f32 %v5308, 6.0
    %v5373 = vmin.f32 %v5309, 6.0
    %v5374 = vmin.f32 %v5310, 6.0
    %v5375 = vmin.f32 %v5311, 6.0
    %v5376 = vmin.f32 %v5312, 6.0
    %v5377 = vmin.f32 %v5313, 6.0
    %v5378 = vmin.f32 %v5314, 6.0
    %v5379 = vmin.f32 %v5315, 6.0
    %v5380 = vmin.f32 %v5316, 6.0
    %v5381 = vmin.f32 %v5317, 6.0
    %v5382 = vmin.f32 %v5318, 6.0
    %v5383 = vmin.f32 %v5319, 6.0
    %v5384 = vmin.f32 %v5320, 6.0
    %v5385 = vmin.f32 %v5321, 6.0
    %v5386 = vmin.f32 %v5322, 6.0
    %5387 = vst.msk [vmem:[#allocation3] sm:$0xf] %vm49, 0
    %5388 = vst.msk [vmem:[#allocation3 + $0x4] sm:$0xf] %vm49, 0
    %5389 = vst.msk [vmem:[#allocation3 + $0x8] sm:$0xf] %vm49, 0
    %v5390 = vld [vmem:[#allocation3 + $0xc] sm:$0x1]
    %v5391 = vsel %vm55, 0, %v5390
    %5392 = vst [vmem:[#allocation3 + $0xc] sm:$0x1] %v5391
    %5393 = vst.msk [vmem:[#allocation3 + $0x120] sm:$0xf] %vm49, 0
    %5394 = vst.msk [vmem:[#allocation3 + $0x124] sm:$0xf] %vm49, 0
    %5395 = vst.msk [vmem:[#allocation3 + $0x128] sm:$0xf] %vm49, 0
    %v5396 = vld [vmem:[#allocation3 + $0x12c] sm:$0x1]
    %v5397 = vsel %vm55, 0, %v5396
    %5398 = vst [vmem:[#allocation3 + $0x12c] sm:$0x1] %v5397
    %s5399 = scalar_lea.vmem [#allocation3], 272
    %5400 = vst.msk [vmem:[%s5399] sm:$0xf] %vm49, 0
    %5401 = vst.msk [vmem:[%s5399 + $0x4] sm:$0xf] %vm49, 0
    %5402 = vst.msk [vmem:[%s5399 + $0x8] sm:$0xf] %vm49, 0
    %v5403 = vld [vmem:[%s5399 + $0xc] sm:$0x1]
    %v5404 = vsel %vm55, 0, %v5403
    %5405 = vst [vmem:[%s5399 + $0xc] sm:$0x1] %v5404
    %5406 = vst.msk [vmem:[%s5399 + $0x120] sm:$0xf] %vm49, 0
    %5407 = vst.msk [vmem:[%s5399 + $0x124] sm:$0xf] %vm49, 0
    %5408 = vst.msk [vmem:[%s5399 + $0x128] sm:$0xf] %vm49, 0
    %v5409 = vld [vmem:[%s5399 + $0x12c] sm:$0x1]
    %v5410 = vsel %vm55, 0, %v5409
    %5411 = vst [vmem:[%s5399 + $0x12c] sm:$0x1] %v5410
    %v5412 = vld [vmem:[#allocation3] sm:$0x8]
    %v5413 = vsel %vm80, 0, %v5412
    %5414 = vst [vmem:[#allocation3] sm:$0x8] %v5413
    %v5415 = vld [vmem:[#allocation3 + $0x10] sm:$0x8]
    %v5416 = vsel %vm80, 0, %v5415
    %5417 = vst [vmem:[#allocation3 + $0x10] sm:$0x8] %v5416
    %v5418 = vld [vmem:[#allocation3 + $0x20] sm:$0x8]
    %v5419 = vsel %vm80, 0, %v5418
    %5420 = vst [vmem:[#allocation3 + $0x20] sm:$0x8] %v5419
    %v5421 = vld [vmem:[#allocation3 + $0x30] sm:$0x8]
    %v5422 = vsel %vm80, 0, %v5421
    %5423 = vst [vmem:[#allocation3 + $0x30] sm:$0x8] %v5422
    %v5424 = vld [vmem:[#allocation3 + $0x40] sm:$0x8]
    %v5425 = vsel %vm80, 0, %v5424
    %5426 = vst [vmem:[#allocation3 + $0x40] sm:$0x8] %v5425
    %v5427 = vld [vmem:[#allocation3 + $0x50] sm:$0x8]
    %v5428 = vsel %vm80, 0, %v5427
    %5429 = vst [vmem:[#allocation3 + $0x50] sm:$0x8] %v5428
    %v5430 = vld [vmem:[#allocation3 + $0x60] sm:$0x8]
    %v5431 = vsel %vm80, 0, %v5430
    %5432 = vst [vmem:[#allocation3 + $0x60] sm:$0x8] %v5431
    %v5433 = vld [vmem:[#allocation3 + $0x70] sm:$0x8]
    %v5434 = vsel %vm80, 0, %v5433
    %5435 = vst [vmem:[#allocation3 + $0x70] sm:$0x8] %v5434
    %v5436 = vld [vmem:[#allocation3 + $0x80] sm:$0x8]
    %v5437 = vsel %vm80, 0, %v5436
    %5438 = vst [vmem:[#allocation3 + $0x80] sm:$0x8] %v5437
    %v5439 = vld [vmem:[#allocation3 + $0x90] sm:$0x8]
    %v5440 = vsel %vm80, 0, %v5439
    %5441 = vst [vmem:[#allocation3 + $0x90] sm:$0x8] %v5440
    %v5442 = vld [vmem:[#allocation3 + $0xa0] sm:$0x8]
    %v5443 = vsel %vm80, 0, %v5442
    %5444 = vst [vmem:[#allocation3 + $0xa0] sm:$0x8] %v5443
    %v5445 = vld [vmem:[#allocation3 + $0xb0] sm:$0x8]
    %v5446 = vsel %vm80, 0, %v5445
    %5447 = vst [vmem:[#allocation3 + $0xb0] sm:$0x8] %v5446
    %v5448 = vld [vmem:[#allocation3 + $0xc0] sm:$0x8]
    %v5449 = vsel %vm80, 0, %v5448
    %5450 = vst [vmem:[#allocation3 + $0xc0] sm:$0x8] %v5449
    %v5451 = vld [vmem:[#allocation3 + $0xd0] sm:$0x8]
    %v5452 = vsel %vm80, 0, %v5451
    %5453 = vst [vmem:[#allocation3 + $0xd0] sm:$0x8] %v5452
    %v5454 = vld [vmem:[#allocation3 + $0xe0] sm:$0x8]
    %v5455 = vsel %vm80, 0, %v5454
    %5456 = vst [vmem:[#allocation3 + $0xe0] sm:$0x8] %v5455
    %v5457 = vld [vmem:[#allocation3 + $0xf0] sm:$0x8]
    %v5458 = vsel %vm80, 0, %v5457
    %5459 = vst [vmem:[#allocation3 + $0xf0] sm:$0x8] %v5458
    %v5460 = vld [vmem:[#allocation3 + $0x100] sm:$0x8]
    %v5461 = vsel %vm80, 0, %v5460
    %5462 = vst [vmem:[#allocation3 + $0x100] sm:$0x8] %v5461
    %v5463 = vld [vmem:[#allocation3 + $0x110] sm:$0x8]
    %v5464 = vsel %vm80, 0, %v5463
    %5465 = vst [vmem:[#allocation3 + $0x110] sm:$0x8] %v5464
    %v5466 = vld [vmem:[#allocation3 + $0x120] sm:$0x8]
    %v5467 = vsel %vm80, 0, %v5466
    %5468 = vst [vmem:[#allocation3 + $0x120] sm:$0x8] %v5467
    %v5469 = vld [vmem:[#allocation3 + $0x130] sm:$0x8]
    %v5470 = vsel %vm80, 0, %v5469
    %5471 = vst [vmem:[#allocation3 + $0x130] sm:$0x8] %v5470
    %v5472 = vld [vmem:[#allocation3 + $0x140] sm:$0x8]
    %v5473 = vsel %vm80, 0, %v5472
    %5474 = vst [vmem:[#allocation3 + $0x140] sm:$0x8] %v5473
    %v5475 = vld [vmem:[#allocation3 + $0x150] sm:$0x8]
    %v5476 = vsel %vm80, 0, %v5475
    %5477 = vst [vmem:[#allocation3 + $0x150] sm:$0x8] %v5476
    %v5478 = vld [vmem:[#allocation3 + $0x160] sm:$0x8]
    %v5479 = vsel %vm80, 0, %v5478
    %5480 = vst [vmem:[#allocation3 + $0x160] sm:$0x8] %v5479
    %v5481 = vld [vmem:[#allocation3 + $0x170] sm:$0x8]
    %v5482 = vsel %vm80, 0, %v5481
    %5483 = vst [vmem:[#allocation3 + $0x170] sm:$0x8] %v5482
    %v5484 = vld [vmem:[#allocation3 + $0x180] sm:$0x8]
    %v5485 = vsel %vm80, 0, %v5484
    %5486 = vst [vmem:[#allocation3 + $0x180] sm:$0x8] %v5485
    %v5487 = vld [vmem:[#allocation3 + $0x190] sm:$0x8]
    %v5488 = vsel %vm80, 0, %v5487
    %5489 = vst [vmem:[#allocation3 + $0x190] sm:$0x8] %v5488
    %v5490 = vld [vmem:[#allocation3 + $0x1a0] sm:$0x8]
    %v5491 = vsel %vm80, 0, %v5490
    %5492 = vst [vmem:[#allocation3 + $0x1a0] sm:$0x8] %v5491
    %v5493 = vld [vmem:[#allocation3 + $0x1b0] sm:$0x8]
    %v5494 = vsel %vm80, 0, %v5493
    %5495 = vst [vmem:[#allocation3 + $0x1b0] sm:$0x8] %v5494
    %v5496 = vld [vmem:[#allocation3 + $0x1c0] sm:$0x8]
    %v5497 = vsel %vm80, 0, %v5496
    %5498 = vst [vmem:[#allocation3 + $0x1c0] sm:$0x8] %v5497
    %v5499 = vld [vmem:[#allocation3 + $0x1d0] sm:$0x8]
    %v5500 = vsel %vm80, 0, %v5499
    %5501 = vst [vmem:[#allocation3 + $0x1d0] sm:$0x8] %v5500
    %v5502 = vld [vmem:[#allocation3 + $0x1e0] sm:$0x8]
    %v5503 = vsel %vm80, 0, %v5502
    %5504 = vst [vmem:[#allocation3 + $0x1e0] sm:$0x8] %v5503
    %v5505 = vld [vmem:[#allocation3 + $0x1f0] sm:$0x8]
    %v5506 = vsel %vm80, 0, %v5505
    %5507 = vst [vmem:[#allocation3 + $0x1f0] sm:$0x8] %v5506
    %v5508 = vld [vmem:[#allocation3 + $0x200] sm:$0x8]
    %v5509 = vsel %vm80, 0, %v5508
    %5510 = vst [vmem:[#allocation3 + $0x200] sm:$0x8] %v5509
    %v5511 = vld [vmem:[#allocation3 + $0x210] sm:$0x8]
    %v5512 = vsel %vm80, 0, %v5511
    %5513 = vst [vmem:[#allocation3 + $0x210] sm:$0x8] %v5512
    %v5514 = vld [vmem:[#allocation3 + $0x220] sm:$0x8]
    %v5515 = vsel %vm80, 0, %v5514
    %5516 = vst [vmem:[#allocation3 + $0x220] sm:$0x8] %v5515
    %v5517 = vld [vmem:[#allocation3 + $0x230] sm:$0x8]
    %v5518 = vsel %vm80, 0, %v5517
    %5519 = vst [vmem:[#allocation3 + $0x230] sm:$0x8] %v5518
    %v5520 = vld [vmem:[#allocation3 + $0xc] sm:$0x1]
    %v5521 = vsel %vm55, 0, %v5520
    %5522 = vst [vmem:[#allocation3 + $0xc] sm:$0x1] %v5521
    %v5523 = vld [vmem:[#allocation3 + $0x1c] sm:$0x1]
    %v5524 = vsel %vm55, 0, %v5523
    %5525 = vst [vmem:[#allocation3 + $0x1c] sm:$0x1] %v5524
    %v5526 = vld [vmem:[#allocation3 + $0x2c] sm:$0x1]
    %v5527 = vsel %vm55, 0, %v5526
    %5528 = vst [vmem:[#allocation3 + $0x2c] sm:$0x1] %v5527
    %v5529 = vld [vmem:[#allocation3 + $0x3c] sm:$0x1]
    %v5530 = vsel %vm55, 0, %v5529
    %5531 = vst [vmem:[#allocation3 + $0x3c] sm:$0x1] %v5530
    %v5532 = vld [vmem:[#allocation3 + $0x4c] sm:$0x1]
    %v5533 = vsel %vm55, 0, %v5532
    %5534 = vst [vmem:[#allocation3 + $0x4c] sm:$0x1] %v5533
    %v5535 = vld [vmem:[#allocation3 + $0x5c] sm:$0x1]
    %v5536 = vsel %vm55, 0, %v5535
    %5537 = vst [vmem:[#allocation3 + $0x5c] sm:$0x1] %v5536
    %v5538 = vld [vmem:[#allocation3 + $0x6c] sm:$0x1]
    %v5539 = vsel %vm55, 0, %v5538
    %5540 = vst [vmem:[#allocation3 + $0x6c] sm:$0x1] %v5539
    %v5541 = vld [vmem:[#allocation3 + $0x7c] sm:$0x1]
    %v5542 = vsel %vm55, 0, %v5541
    %5543 = vst [vmem:[#allocation3 + $0x7c] sm:$0x1] %v5542
    %v5544 = vld [vmem:[#allocation3 + $0x8c] sm:$0x1]
    %v5545 = vsel %vm55, 0, %v5544
    %5546 = vst [vmem:[#allocation3 + $0x8c] sm:$0x1] %v5545
    %v5547 = vld [vmem:[#allocation3 + $0x9c] sm:$0x1]
    %v5548 = vsel %vm55, 0, %v5547
    %5549 = vst [vmem:[#allocation3 + $0x9c] sm:$0x1] %v5548
    %v5550 = vld [vmem:[#allocation3 + $0xac] sm:$0x1]
    %v5551 = vsel %vm55, 0, %v5550
    %5552 = vst [vmem:[#allocation3 + $0xac] sm:$0x1] %v5551
    %v5553 = vld [vmem:[#allocation3 + $0xbc] sm:$0x1]
    %v5554 = vsel %vm55, 0, %v5553
    %5555 = vst [vmem:[#allocation3 + $0xbc] sm:$0x1] %v5554
    %v5556 = vld [vmem:[#allocation3 + $0xcc] sm:$0x1]
    %v5557 = vsel %vm55, 0, %v5556
    %5558 = vst [vmem:[#allocation3 + $0xcc] sm:$0x1] %v5557
    %v5559 = vld [vmem:[#allocation3 + $0xdc] sm:$0x1]
    %v5560 = vsel %vm55, 0, %v5559
    %5561 = vst [vmem:[#allocation3 + $0xdc] sm:$0x1] %v5560
    %v5562 = vld [vmem:[#allocation3 + $0xec] sm:$0x1]
    %v5563 = vsel %vm55, 0, %v5562
    %5564 = vst [vmem:[#allocation3 + $0xec] sm:$0x1] %v5563
    %v5565 = vld [vmem:[#allocation3 + $0xfc] sm:$0x1]
    %v5566 = vsel %vm55, 0, %v5565
    %5567 = vst [vmem:[#allocation3 + $0xfc] sm:$0x1] %v5566
    %v5568 = vld [vmem:[#allocation3 + $0x10c] sm:$0x1]
    %v5569 = vsel %vm55, 0, %v5568
    %5570 = vst [vmem:[#allocation3 + $0x10c] sm:$0x1] %v5569
    %v5571 = vld [vmem:[#allocation3 + $0x11c] sm:$0x1]
    %v5572 = vsel %vm55, 0, %v5571
    %5573 = vst [vmem:[#allocation3 + $0x11c] sm:$0x1] %v5572
    %v5574 = vld [vmem:[#allocation3 + $0x12c] sm:$0x1]
    %v5575 = vsel %vm55, 0, %v5574
    %5576 = vst [vmem:[#allocation3 + $0x12c] sm:$0x1] %v5575
    %v5577 = vld [vmem:[#allocation3 + $0x13c] sm:$0x1]
    %v5578 = vsel %vm55, 0, %v5577
    %5579 = vst [vmem:[#allocation3 + $0x13c] sm:$0x1] %v5578
    %v5580 = vld [vmem:[#allocation3 + $0x14c] sm:$0x1]
    %v5581 = vsel %vm55, 0, %v5580
    %5582 = vst [vmem:[#allocation3 + $0x14c] sm:$0x1] %v5581
    %v5583 = vld [vmem:[#allocation3 + $0x15c] sm:$0x1]
    %v5584 = vsel %vm55, 0, %v5583
    %5585 = vst [vmem:[#allocation3 + $0x15c] sm:$0x1] %v5584
    %v5586 = vld [vmem:[#allocation3 + $0x16c] sm:$0x1]
    %v5587 = vsel %vm55, 0, %v5586
    %5588 = vst [vmem:[#allocation3 + $0x16c] sm:$0x1] %v5587
    %v5589 = vld [vmem:[#allocation3 + $0x17c] sm:$0x1]
    %v5590 = vsel %vm55, 0, %v5589
    %5591 = vst [vmem:[#allocation3 + $0x17c] sm:$0x1] %v5590
    %v5592 = vld [vmem:[#allocation3 + $0x18c] sm:$0x1]
    %v5593 = vsel %vm55, 0, %v5592
    %5594 = vst [vmem:[#allocation3 + $0x18c] sm:$0x1] %v5593
    %v5595 = vld [vmem:[#allocation3 + $0x19c] sm:$0x1]
    %v5596 = vsel %vm55, 0, %v5595
    %5597 = vst [vmem:[#allocation3 + $0x19c] sm:$0x1] %v5596
    %v5598 = vld [vmem:[#allocation3 + $0x1ac] sm:$0x1]
    %v5599 = vsel %vm55, 0, %v5598
    %5600 = vst [vmem:[#allocation3 + $0x1ac] sm:$0x1] %v5599
    %v5601 = vld [vmem:[#allocation3 + $0x1bc] sm:$0x1]
    %v5602 = vsel %vm55, 0, %v5601
    %5603 = vst [vmem:[#allocation3 + $0x1bc] sm:$0x1] %v5602
    %v5604 = vld [vmem:[#allocation3 + $0x1cc] sm:$0x1]
    %v5605 = vsel %vm55, 0, %v5604
    %5606 = vst [vmem:[#allocation3 + $0x1cc] sm:$0x1] %v5605
    %v5607 = vld [vmem:[#allocation3 + $0x1dc] sm:$0x1]
    %v5608 = vsel %vm55, 0, %v5607
    %5609 = vst [vmem:[#allocation3 + $0x1dc] sm:$0x1] %v5608
    %v5610 = vld [vmem:[#allocation3 + $0x1ec] sm:$0x1]
    %v5611 = vsel %vm55, 0, %v5610
    %5612 = vst [vmem:[#allocation3 + $0x1ec] sm:$0x1] %v5611
    %v5613 = vld [vmem:[#allocation3 + $0x1fc] sm:$0x1]
    %v5614 = vsel %vm55, 0, %v5613
    %5615 = vst [vmem:[#allocation3 + $0x1fc] sm:$0x1] %v5614
    %v5616 = vld [vmem:[#allocation3 + $0x20c] sm:$0x1]
    %v5617 = vsel %vm55, 0, %v5616
    %5618 = vst [vmem:[#allocation3 + $0x20c] sm:$0x1] %v5617
    %v5619 = vld [vmem:[#allocation3 + $0x21c] sm:$0x1]
    %v5620 = vsel %vm55, 0, %v5619
    %5621 = vst [vmem:[#allocation3 + $0x21c] sm:$0x1] %v5620
    %v5622 = vld [vmem:[#allocation3 + $0x22c] sm:$0x1]
    %v5623 = vsel %vm55, 0, %v5622
    %5624 = vst [vmem:[#allocation3 + $0x22c] sm:$0x1] %v5623
    %v5625 = vld [vmem:[#allocation3 + $0x23c] sm:$0x1]
    %v5626 = vsel %vm55, 0, %v5625
    %5627 = vst [vmem:[#allocation3 + $0x23c] sm:$0x1] %v5626
    %v5628 = vpack.c.bf16 %v5324, %v5323
    %v5629 = vpack.c.bf16 %v5326, %v5325
    %v5630 = vpack.c.bf16 %v5328, %v5327
    %v5631 = vpack.c.bf16 %v5330, %v5329
    %v5632 = vpack.c.bf16 %v5332, %v5331
    %v5633 = vpack.c.bf16 %v5334, %v5333
    %v5634 = vpack.c.bf16 %v5336, %v5335
    %v5635 = vpack.c.bf16 %v5338, %v5337
    %v5636 = vpack.c.bf16 %v5340, %v5339
    %v5637 = vpack.c.bf16 %v5342, %v5341
    %v5638 = vpack.c.bf16 %v5344, %v5343
    %v5639 = vpack.c.bf16 %v5346, %v5345
    %v5640 = vpack.c.bf16 %v5348, %v5347
    %v5641 = vpack.c.bf16 %v5350, %v5349
    %v5642 = vpack.c.bf16 %v5352, %v5351
    %v5643 = vpack.c.bf16 %v5354, %v5353
    %v5644 = vpack.c.bf16 %v5356, %v5355
    %v5645 = vpack.c.bf16 %v5358, %v5357
    %v5646 = vpack.c.bf16 %v5360, %v5359
    %v5647 = vpack.c.bf16 %v5362, %v5361
    %v5648 = vpack.c.bf16 %v5364, %v5363
    %v5649 = vpack.c.bf16 %v5366, %v5365
    %v5650 = vpack.c.bf16 %v5368, %v5367
    %v5651 = vpack.c.bf16 %v5370, %v5369
    %v5652 = vpack.c.bf16 %v5372, %v5371
    %v5653 = vpack.c.bf16 %v5374, %v5373
    %v5654 = vpack.c.bf16 %v5376, %v5375
    %v5655 = vpack.c.bf16 %v5378, %v5377
    %v5656 = vpack.c.bf16 %v5380, %v5379
    %v5657 = vpack.c.bf16 %v5382, %v5381
    %v5658 = vpack.c.bf16 %v5384, %v5383
    %v5659 = vpack.c.bf16 %v5386, %v5385
    %v5692 = vunpack.c.l.b16 %v5628
    %v5693 = vunpack.c.h.b16 %v5628
    %v5694 = vunpack.c.l.b16 %v5629
    %v5695 = vunpack.c.h.b16 %v5629
    %v5696 = vunpack.c.l.b16 %v5630
    %v5697 = vunpack.c.h.b16 %v5630
    %v5698 = vunpack.c.l.b16 %v5631
    %v5699 = vunpack.c.h.b16 %v5631
    %v5700 = vunpack.c.l.b16 %v5632
    %v5701 = vunpack.c.h.b16 %v5632
    %v5702 = vunpack.c.l.b16 %v5633
    %v5703 = vunpack.c.h.b16 %v5633
    %v5704 = vunpack.c.l.b16 %v5634
    %v5705 = vunpack.c.h.b16 %v5634
    %v5706 = vunpack.c.l.b16 %v5635
    %v5707 = vunpack.c.h.b16 %v5635
    %v5708 = vunpack.c.l.b16 %v5636
    %v5709 = vunpack.c.h.b16 %v5636
    %v5710 = vunpack.c.l.b16 %v5637
    %v5711 = vunpack.c.h.b16 %v5637
    %v5712 = vunpack.c.l.b16 %v5638
    %v5713 = vunpack.c.h.b16 %v5638
    %v5714 = vunpack.c.l.b16 %v5639
    %v5715 = vunpack.c.h.b16 %v5639
    %v5716 = vunpack.c.l.b16 %v5640
    %v5717 = vunpack.c.h.b16 %v5640
    %v5718 = vunpack.c.l.b16 %v5641
    %v5719 = vunpack.c.h.b16 %v5641
    %v5720 = vunpack.c.l.b16 %v5642
    %v5721 = vunpack.c.h.b16 %v5642
    %v5722 = vunpack.c.l.b16 %v5643
    %v5723 = vunpack.c.h.b16 %v5643
    %v5724 = vunpack.c.l.b16 %v5644
    %v5725 = vunpack.c.h.b16 %v5644
    %v5726 = vunpack.c.l.b16 %v5645
    %v5727 = vunpack.c.h.b16 %v5645
    %v5728 = vunpack.c.l.b16 %v5646
    %v5729 = vunpack.c.h.b16 %v5646
    %v5730 = vunpack.c.l.b16 %v5647
    %v5731 = vunpack.c.h.b16 %v5647
    %v5732 = vunpack.c.l.b16 %v5648
    %v5733 = vunpack.c.h.b16 %v5648
    %v5734 = vunpack.c.l.b16 %v5649
    %v5735 = vunpack.c.h.b16 %v5649
    %v5736 = vunpack.c.l.b16 %v5650
    %v5737 = vunpack.c.h.b16 %v5650
    %v5738 = vunpack.c.l.b16 %v5651
    %v5739 = vunpack.c.h.b16 %v5651
    %v5740 = vunpack.c.l.b16 %v5652
    %v5741 = vunpack.c.h.b16 %v5652
    %v5742 = vunpack.c.l.b16 %v5653
    %v5743 = vunpack.c.h.b16 %v5653
    %v5744 = vunpack.c.l.b16 %v5654
    %v5745 = vunpack.c.h.b16 %v5654
    %v5746 = vunpack.c.l.b16 %v5655
    %v5747 = vunpack.c.h.b16 %v5655
    %v5748 = vunpack.c.l.b16 %v5656
    %v5749 = vunpack.c.h.b16 %v5656
    %v5750 = vunpack.c.l.b16 %v5657
    %v5751 = vunpack.c.h.b16 %v5657
    %v5752 = vunpack.c.l.b16 %v5658
    %v5753 = vunpack.c.h.b16 %v5658
    %v5754 = vunpack.c.l.b16 %v5659
    %v5755 = vunpack.c.h.b16 %v5659
    %v5756 = vpack.c.b16 %v5692, %v5692
    %v5757 = vpack.c.b16 %v5693, %v5693
    %v5758 = vpack.c.b16 %v5694, %v5694
    %v5759 = vpack.c.b16 %v5695, %v5695
    %v5760 = vpack.c.b16 %v5696, %v5696
    %v5761 = vpack.c.b16 %v5697, %v5697
    %v5762 = vpack.c.b16 %v5698, %v5698
    %v5763 = vpack.c.b16 %v5699, %v5699
    %v5764 = vpack.c.b16 %v5700, %v5700
    %v5765 = vpack.c.b16 %v5701, %v5701
    %v5766 = vpack.c.b16 %v5702, %v5702
    %v5767 = vpack.c.b16 %v5703, %v5703
    %v5768 = vpack.c.b16 %v5704, %v5704
    %v5769 = vpack.c.b16 %v5705, %v5705
    %v5770 = vpack.c.b16 %v5706, %v5706
    %v5771 = vpack.c.b16 %v5707, %v5707
    %v5772 = vpack.c.b16 %v5708, %v5708
    %v5773 = vpack.c.b16 %v5709, %v5709
    %v5774 = vpack.c.b16 %v5710, %v5710
    %v5775 = vpack.c.b16 %v5711, %v5711
    %v5776 = vpack.c.b16 %v5712, %v5712
    %v5777 = vpack.c.b16 %v5713, %v5713
    %v5778 = vpack.c.b16 %v5714, %v5714
    %v5779 = vpack.c.b16 %v5715, %v5715
    %v5780 = vpack.c.b16 %v5716, %v5716
    %v5781 = vpack.c.b16 %v5717, %v5717
    %v5782 = vpack.c.b16 %v5718, %v5718
    %v5783 = vpack.c.b16 %v5719, %v5719
    %v5784 = vpack.c.b16 %v5720, %v5720
    %v5785 = vpack.c.b16 %v5721, %v5721
    %v5786 = vpack.c.b16 %v5722, %v5722
    %v5787 = vpack.c.b16 %v5723, %v5723
    %v5788 = vpack.c.b16 %v5724, %v5724
    %v5789 = vpack.c.b16 %v5725, %v5725
    %v5790 = vpack.c.b16 %v5726, %v5726
    %v5791 = vpack.c.b16 %v5727, %v5727
    %v5792 = vpack.c.b16 %v5728, %v5728
    %v5793 = vpack.c.b16 %v5729, %v5729
    %v5794 = vpack.c.b16 %v5730, %v5730
    %v5795 = vpack.c.b16 %v5731, %v5731
    %v5796 = vpack.c.b16 %v5732, %v5732
    %v5797 = vpack.c.b16 %v5733, %v5733
    %v5798 = vpack.c.b16 %v5734, %v5734
    %v5799 = vpack.c.b16 %v5735, %v5735
    %v5800 = vpack.c.b16 %v5736, %v5736
    %v5801 = vpack.c.b16 %v5737, %v5737
    %v5802 = vpack.c.b16 %v5738, %v5738
    %v5803 = vpack.c.b16 %v5739, %v5739
    %v5804 = vpack.c.b16 %v5740, %v5740
    %v5805 = vpack.c.b16 %v5741, %v5741
    %v5806 = vpack.c.b16 %v5742, %v5742
    %v5807 = vpack.c.b16 %v5743, %v5743
    %v5808 = vpack.c.b16 %v5744, %v5744
    %v5809 = vpack.c.b16 %v5745, %v5745
    %v5810 = vpack.c.b16 %v5746, %v5746
    %v5811 = vpack.c.b16 %v5747, %v5747
    %v5812 = vpack.c.b16 %v5748, %v5748
    %v5813 = vpack.c.b16 %v5749, %v5749
    %v5814 = vpack.c.b16 %v5750, %v5750
    %v5815 = vpack.c.b16 %v5751, %v5751
    %v5816 = vpack.c.b16 %v5752, %v5752
    %v5817 = vpack.c.b16 %v5753, %v5753
    %v5818 = vpack.c.b16 %v5754, %v5754
    %v5819 = vpack.c.b16 %v5755, %v5755
    %s5884 = scalar_lea.vmem [#allocation3], 16
    %5885 = vst.msk [vmem:[%s5884 + $0x4] sm:$0xf] %vm49, %v5756
    %5886 = vst.msk [vmem:[%s5884 + $0x8] sm:$0xf] %vm49, %v5757
    %5887 = vst.msk [vmem:[%s5884 + $0x14] sm:$0xf] %vm49, %v5758
    %5888 = vst.msk [vmem:[%s5884 + $0x18] sm:$0xf] %vm49, %v5759
    %5889 = vst.msk [vmem:[%s5884 + $0x24] sm:$0xf] %vm49, %v5760
    %5890 = vst.msk [vmem:[%s5884 + $0x28] sm:$0xf] %vm49, %v5761
    %5891 = vst.msk [vmem:[%s5884 + $0x34] sm:$0xf] %vm49, %v5762
    %5892 = vst.msk [vmem:[%s5884 + $0x38] sm:$0xf] %vm49, %v5763
    %5893 = vst.msk [vmem:[%s5884 + $0x44] sm:$0xf] %vm49, %v5764
    %5894 = vst.msk [vmem:[%s5884 + $0x48] sm:$0xf] %vm49, %v5765
    %5895 = vst.msk [vmem:[%s5884 + $0x54] sm:$0xf] %vm49, %v5766
    %5896 = vst.msk [vmem:[%s5884 + $0x58] sm:$0xf] %vm49, %v5767
    %5897 = vst.msk [vmem:[%s5884 + $0x64] sm:$0xf] %vm49, %v5768
    %5898 = vst.msk [vmem:[%s5884 + $0x68] sm:$0xf] %vm49, %v5769
    %5899 = vst.msk [vmem:[%s5884 + $0x74] sm:$0xf] %vm49, %v5770
    %5900 = vst.msk [vmem:[%s5884 + $0x78] sm:$0xf] %vm49, %v5771
    %5901 = vst.msk [vmem:[%s5884 + $0x84] sm:$0xf] %vm49, %v5772
    %5902 = vst.msk [vmem:[%s5884 + $0x88] sm:$0xf] %vm49, %v5773
    %5903 = vst.msk [vmem:[%s5884 + $0x94] sm:$0xf] %vm49, %v5774
    %5904 = vst.msk [vmem:[%s5884 + $0x98] sm:$0xf] %vm49, %v5775
    %5905 = vst.msk [vmem:[%s5884 + $0xa4] sm:$0xf] %vm49, %v5776
    %5906 = vst.msk [vmem:[%s5884 + $0xa8] sm:$0xf] %vm49, %v5777
    %5907 = vst.msk [vmem:[%s5884 + $0xb4] sm:$0xf] %vm49, %v5778
    %5908 = vst.msk [vmem:[%s5884 + $0xb8] sm:$0xf] %vm49, %v5779
    %5909 = vst.msk [vmem:[%s5884 + $0xc4] sm:$0xf] %vm49, %v5780
    %5910 = vst.msk [vmem:[%s5884 + $0xc8] sm:$0xf] %vm49, %v5781
    %5911 = vst.msk [vmem:[%s5884 + $0xd4] sm:$0xf] %vm49, %v5782
    %5912 = vst.msk [vmem:[%s5884 + $0xd8] sm:$0xf] %vm49, %v5783
    %5913 = vst.msk [vmem:[%s5884 + $0xe4] sm:$0xf] %vm49, %v5784
    %5914 = vst.msk [vmem:[%s5884 + $0xe8] sm:$0xf] %vm49, %v5785
    %5915 = vst.msk [vmem:[%s5884 + $0xf4] sm:$0xf] %vm49, %v5786
    %5916 = vst.msk [vmem:[%s5884 + $0xf8] sm:$0xf] %vm49, %v5787
    %5917 = vst.msk [vmem:[%s5884 + $0x124] sm:$0xf] %vm49, %v5788
    %5918 = vst.msk [vmem:[%s5884 + $0x128] sm:$0xf] %vm49, %v5789
    %5919 = vst.msk [vmem:[%s5884 + $0x134] sm:$0xf] %vm49, %v5790
    %5920 = vst.msk [vmem:[%s5884 + $0x138] sm:$0xf] %vm49, %v5791
    %5921 = vst.msk [vmem:[%s5884 + $0x144] sm:$0xf] %vm49, %v5792
    %5922 = vst.msk [vmem:[%s5884 + $0x148] sm:$0xf] %vm49, %v5793
    %5923 = vst.msk [vmem:[%s5884 + $0x154] sm:$0xf] %vm49, %v5794
    %5924 = vst.msk [vmem:[%s5884 + $0x158] sm:$0xf] %vm49, %v5795
    %5925 = vst.msk [vmem:[%s5884 + $0x164] sm:$0xf] %vm49, %v5796
    %5926 = vst.msk [vmem:[%s5884 + $0x168] sm:$0xf] %vm49, %v5797
    %5927 = vst.msk [vmem:[%s5884 + $0x174] sm:$0xf] %vm49, %v5798
    %5928 = vst.msk [vmem:[%s5884 + $0x178] sm:$0xf] %vm49, %v5799
    %5929 = vst.msk [vmem:[%s5884 + $0x184] sm:$0xf] %vm49, %v5800
    %5930 = vst.msk [vmem:[%s5884 + $0x188] sm:$0xf] %vm49, %v5801
    %5931 = vst.msk [vmem:[%s5884 + $0x194] sm:$0xf] %vm49, %v5802
    %5932 = vst.msk [vmem:[%s5884 + $0x198] sm:$0xf] %vm49, %v5803
    %5933 = vst.msk [vmem:[%s5884 + $0x1a4] sm:$0xf] %vm49, %v5804
    %5934 = vst.msk [vmem:[%s5884 + $0x1a8] sm:$0xf] %vm49, %v5805
    %5935 = vst.msk [vmem:[%s5884 + $0x1b4] sm:$0xf] %vm49, %v5806
    %5936 = vst.msk [vmem:[%s5884 + $0x1b8] sm:$0xf] %vm49, %v5807
    %5937 = vst.msk [vmem:[%s5884 + $0x1c4] sm:$0xf] %vm49, %v5808
    %5938 = vst.msk [vmem:[%s5884 + $0x1c8] sm:$0xf] %vm49, %v5809
    %5939 = vst.msk [vmem:[%s5884 + $0x1d4] sm:$0xf] %vm49, %v5810
    %5940 = vst.msk [vmem:[%s5884 + $0x1d8] sm:$0xf] %vm49, %v5811
    %5941 = vst.msk [vmem:[%s5884 + $0x1e4] sm:$0xf] %vm49, %v5812
    %5942 = vst.msk [vmem:[%s5884 + $0x1e8] sm:$0xf] %vm49, %v5813
    %5943 = vst.msk [vmem:[%s5884 + $0x1f4] sm:$0xf] %vm49, %v5814
    %5944 = vst.msk [vmem:[%s5884 + $0x1f8] sm:$0xf] %vm49, %v5815
    %5945 = vst.msk [vmem:[%s5884 + $0x204] sm:$0xf] %vm49, %v5816
    %5946 = vst.msk [vmem:[%s5884 + $0x208] sm:$0xf] %vm49, %v5817
    %5947 = vst.msk [vmem:[%s5884 + $0x214] sm:$0xf] %vm49, %v5818
    %5948 = vst.msk [vmem:[%s5884 + $0x218] sm:$0xf] %vm49, %v5819
    %v5949 = vld [vmem:[%s5] sm:$0xf]
    %v5950 = vld [vmem:[%s5 + $0x4] sm:$0x1]
    %v5951 = vld [vmem:[%s6] sm:$0x1]
    %v5952 = vld [vmem:[#allocation3] sm:$0x8]
    %v5953 = vld [vmem:[#allocation3 + $0x4] sm:$0xf]
    %v5954 = vld [vmem:[#allocation3 + $0x8] sm:$0xf]
    %v5955 = vld [vmem:[#allocation3 + $0x10] sm:$0x8]
    %v5956 = vld [vmem:[#allocation3 + $0x14] sm:$0xf]
    %v5957 = vld [vmem:[#allocation3 + $0x18] sm:$0xf]
    %v5958 = vld [vmem:[#allocation3 + $0x20] sm:$0x8]
    %v5959 = vld [vmem:[#allocation3 + $0x24] sm:$0xf]
    %v5960 = vld [vmem:[#allocation3 + $0x28] sm:$0xf]
    %v5961 = vld [vmem:[#allocation3 + $0x30] sm:$0x8]
    %v5962 = vld [vmem:[#allocation3 + $0x34] sm:$0xf]
    %v5963 = vld [vmem:[#allocation3 + $0x38] sm:$0xf]
    %v5964 = vld [vmem:[#allocation3 + $0x40] sm:$0x8]
    %v5965 = vld [vmem:[#allocation3 + $0x44] sm:$0xf]
    %v5966 = vld [vmem:[#allocation3 + $0x48] sm:$0xf]
    %v5967 = vld [vmem:[#allocation3 + $0x50] sm:$0x8]
    %v5968 = vld [vmem:[#allocation3 + $0x54] sm:$0xf]
    %v5969 = vld [vmem:[#allocation3 + $0x58] sm:$0xf]
    %v5970 = vld [vmem:[#allocation3 + $0x60] sm:$0x8]
    %v5971 = vld [vmem:[#allocation3 + $0x64] sm:$0xf]
    %v5972 = vld [vmem:[#allocation3 + $0x68] sm:$0xf]
    %v5973 = vld [vmem:[#allocation3 + $0x70] sm:$0x8]
    %v5974 = vld [vmem:[#allocation3 + $0x74] sm:$0xf]
    %v5975 = vld [vmem:[#allocation3 + $0x78] sm:$0xf]
    %v5976 = vld [vmem:[#allocation3 + $0x80] sm:$0x8]
    %v5977 = vld [vmem:[#allocation3 + $0x84] sm:$0xf]
    %v5978 = vld [vmem:[#allocation3 + $0x88] sm:$0xf]
    %v5979 = vld [vmem:[#allocation3 + $0x90] sm:$0x8]
    %v5980 = vld [vmem:[#allocation3 + $0x94] sm:$0xf]
    %v5981 = vld [vmem:[#allocation3 + $0x98] sm:$0xf]
    %v5982 = vld [vmem:[#allocation3 + $0xa0] sm:$0x8]
    %v5983 = vld [vmem:[#allocation3 + $0xa4] sm:$0xf]
    %v5984 = vld [vmem:[#allocation3 + $0xa8] sm:$0xf]
    %v5985 = vld [vmem:[#allocation3 + $0xb0] sm:$0x8]
    %v5986 = vld [vmem:[#allocation3 + $0xb4] sm:$0xf]
    %v5987 = vld [vmem:[#allocation3 + $0xb8] sm:$0xf]
    %v5988 = vld [vmem:[#allocation3 + $0xc0] sm:$0x8]
    %v5989 = vld [vmem:[#allocation3 + $0xc4] sm:$0xf]
    %v5990 = vld [vmem:[#allocation3 + $0xc8] sm:$0xf]
    %v5991 = vld [vmem:[#allocation3 + $0xd0] sm:$0x8]
    %v5992 = vld [vmem:[#allocation3 + $0xd4] sm:$0xf]
    %v5993 = vld [vmem:[#allocation3 + $0xd8] sm:$0xf]
    %v5994 = vld [vmem:[#allocation3 + $0xe0] sm:$0x8]
    %v5995 = vld [vmem:[#allocation3 + $0xe4] sm:$0xf]
    %v5996 = vld [vmem:[#allocation3 + $0xe8] sm:$0xf]
    %v5997 = vld [vmem:[#allocation3 + $0xf0] sm:$0x8]
    %v5998 = vld [vmem:[#allocation3 + $0xf4] sm:$0xf]
    %v5999 = vld [vmem:[#allocation3 + $0xf8] sm:$0xf]
    %v6000 = vld [vmem:[#allocation3 + $0x120] sm:$0x8]
    %v6001 = vld [vmem:[#allocation3 + $0x124] sm:$0xf]
    %v6002 = vld [vmem:[#allocation3 + $0x128] sm:$0xf]
    %v6003 = vld [vmem:[#allocation3 + $0x130] sm:$0x8]
    %v6004 = vld [vmem:[#allocation3 + $0x134] sm:$0xf]
    %v6005 = vld [vmem:[#allocation3 + $0x138] sm:$0xf]
    %v6006 = vld [vmem:[#allocation3 + $0x140] sm:$0x8]
    %v6007 = vld [vmem:[#allocation3 + $0x144] sm:$0xf]
    %v6008 = vld [vmem:[#allocation3 + $0x148] sm:$0xf]
    %v6009 = vld [vmem:[#allocation3 + $0x150] sm:$0x8]
    %v6010 = vld [vmem:[#allocation3 + $0x154] sm:$0xf]
    %v6011 = vld [vmem:[#allocation3 + $0x158] sm:$0xf]
    %v6012 = vld [vmem:[#allocation3 + $0x160] sm:$0x8]
    %v6013 = vld [vmem:[#allocation3 + $0x164] sm:$0xf]
    %v6014 = vld [vmem:[#allocation3 + $0x168] sm:$0xf]
    %v6015 = vld [vmem:[#allocation3 + $0x170] sm:$0x8]
    %v6016 = vld [vmem:[#allocation3 + $0x174] sm:$0xf]
    %v6017 = vld [vmem:[#allocation3 + $0x178] sm:$0xf]
    %v6018 = vld [vmem:[#allocation3 + $0x180] sm:$0x8]
    %v6019 = vld [vmem:[#allocation3 + $0x184] sm:$0xf]
    %v6020 = vld [vmem:[#allocation3 + $0x188] sm:$0xf]
    %v6021 = vld [vmem:[#allocation3 + $0x190] sm:$0x8]
    %v6022 = vld [vmem:[#allocation3 + $0x194] sm:$0xf]
    %v6023 = vld [vmem:[#allocation3 + $0x198] sm:$0xf]
    %v6024 = vld [vmem:[#allocation3 + $0x1a0] sm:$0x8]
    %v6025 = vld [vmem:[#allocation3 + $0x1a4] sm:$0xf]
    %v6026 = vld [vmem:[#allocation3 + $0x1a8] sm:$0xf]
    %v6027 = vld [vmem:[#allocation3 + $0x1b0] sm:$0x8]
    %v6028 = vld [vmem:[#allocation3 + $0x1b4] sm:$0xf]
    %v6029 = vld [vmem:[#allocation3 + $0x1b8] sm:$0xf]
    %v6030 = vld [vmem:[#allocation3 + $0x1c0] sm:$0x8]
    %v6031 = vld [vmem:[#allocation3 + $0x1c4] sm:$0xf]
    %v6032 = vld [vmem:[#allocation3 + $0x1c8] sm:$0xf]
    %v6033 = vld [vmem:[#allocation3 + $0x1d0] sm:$0x8]
    %v6034 = vld [vmem:[#allocation3 + $0x1d4] sm:$0xf]
    %v6035 = vld [vmem:[#allocation3 + $0x1d8] sm:$0xf]
    %v6036 = vld [vmem:[#allocation3 + $0x1e0] sm:$0x8]
    %v6037 = vld [vmem:[#allocation3 + $0x1e4] sm:$0xf]
    %v6038 = vld [vmem:[#allocation3 + $0x1e8] sm:$0xf]
    %v6039 = vld [vmem:[#allocation3 + $0x1f0] sm:$0x8]
    %v6040 = vld [vmem:[#allocation3 + $0x1f4] sm:$0xf]
    %v6041 = vld [vmem:[#allocation3 + $0x1f8] sm:$0xf]
    %v6042 = vld [vmem:[#allocation3 + $0x200] sm:$0x8]
    %v6043 = vld [vmem:[#allocation3 + $0x204] sm:$0xf]
    %v6044 = vld [vmem:[#allocation3 + $0x208] sm:$0xf]
    %v6045 = vld [vmem:[#allocation3 + $0x210] sm:$0x8]
    %v6046 = vld [vmem:[#allocation3 + $0x214] sm:$0xf]
    %v6047 = vld [vmem:[#allocation3 + $0x218] sm:$0xf]
    %v6049 = vpack.i.b16 %v5949, %v5949
    %v6051 = vlaneseq
    %v6052 = vshrl.u32 %v6051, 7
    %v6053 = vsub.s32 0, %v6052
    %v6054 = vrot.slane %v6049, %v6053
    %v6056 = vunpack.c.l.b16 %v6054
    %v6057 = vpack.c.b16 %v6056, %v6056
    %v6059 = vmul.bf16 %v5952, %v6057
    %v6060 = vmul.bf16 %v5953, %v6057
    %v6061 = vmul.bf16 %v5954, %v6057
    %v6062 = vmul.bf16 %v5955, %v6057
    %v6063 = vmul.bf16 %v5956, %v6057
    %v6064 = vmul.bf16 %v5957, %v6057
    %v6065 = vmul.bf16 %v5958, %v6057
    %v6066 = vmul.bf16 %v5959, %v6057
    %v6067 = vmul.bf16 %v5960, %v6057
    %v6068 = vmul.bf16 %v5961, %v6057
    %v6069 = vmul.bf16 %v5962, %v6057
    %v6070 = vmul.bf16 %v5963, %v6057
    %v6071 = vmul.bf16 %v5964, %v6057
    %v6072 = vmul.bf16 %v5965, %v6057
    %v6073 = vmul.bf16 %v5966, %v6057
    %v6074 = vmul.bf16 %v5967, %v6057
    %v6075 = vmul.bf16 %v5968, %v6057
    %v6076 = vmul.bf16 %v5969, %v6057
    %v6077 = vmul.bf16 %v5970, %v6057
    %v6078 = vmul.bf16 %v5971, %v6057
    %v6079 = vmul.bf16 %v5972, %v6057
    %v6080 = vmul.bf16 %v5973, %v6057
    %v6081 = vmul.bf16 %v5974, %v6057
    %v6082 = vmul.bf16 %v5975, %v6057
    %v6083 = vmul.bf16 %v5976, %v6057
    %v6084 = vmul.bf16 %v5977, %v6057
    %v6085 = vmul.bf16 %v5978, %v6057
    %v6086 = vmul.bf16 %v5979, %v6057
    %v6087 = vmul.bf16 %v5980, %v6057
    %v6088 = vmul.bf16 %v5981, %v6057
    %v6089 = vmul.bf16 %v5982, %v6057
    %v6090 = vmul.bf16 %v5983, %v6057
    %v6091 = vmul.bf16 %v5984, %v6057
    %v6092 = vmul.bf16 %v5985, %v6057
    %v6093 = vmul.bf16 %v5986, %v6057
    %v6094 = vmul.bf16 %v5987, %v6057
    %v6095 = vmul.bf16 %v5988, %v6057
    %v6096 = vmul.bf16 %v5989, %v6057
    %v6097 = vmul.bf16 %v5990, %v6057
    %v6098 = vmul.bf16 %v5991, %v6057
    %v6099 = vmul.bf16 %v5992, %v6057
    %v6100 = vmul.bf16 %v5993, %v6057
    %v6101 = vmul.bf16 %v5994, %v6057
    %v6102 = vmul.bf16 %v5995, %v6057
    %v6103 = vmul.bf16 %v5996, %v6057
    %v6104 = vmul.bf16 %v5997, %v6057
    %v6105 = vmul.bf16 %v5998, %v6057
    %v6106 = vmul.bf16 %v5999, %v6057
    %v6107 = vmul.bf16 %v6000, %v6057
    %v6108 = vmul.bf16 %v6001, %v6057
    %v6109 = vmul.bf16 %v6002, %v6057
    %v6110 = vmul.bf16 %v6003, %v6057
    %v6111 = vmul.bf16 %v6004, %v6057
    %v6112 = vmul.bf16 %v6005, %v6057
    %v6113 = vmul.bf16 %v6006, %v6057
    %v6114 = vmul.bf16 %v6007, %v6057
    %v6115 = vmul.bf16 %v6008, %v6057
    %v6116 = vmul.bf16 %v6009, %v6057
    %v6117 = vmul.bf16 %v6010, %v6057
    %v6118 = vmul.bf16 %v6011, %v6057
    %v6119 = vmul.bf16 %v6012, %v6057
    %v6120 = vmul.bf16 %v6013, %v6057
    %v6121 = vmul.bf16 %v6014, %v6057
    %v6122 = vmul.bf16 %v6015, %v6057
    %v6123 = vmul.bf16 %v6016, %v6057
    %v6124 = vmul.bf16 %v6017, %v6057
    %v6125 = vmul.bf16 %v6018, %v6057
    %v6126 = vmul.bf16 %v6019, %v6057
    %v6127 = vmul.bf16 %v6020, %v6057
    %v6128 = vmul.bf16 %v6021, %v6057
    %v6129 = vmul.bf16 %v6022, %v6057
    %v6130 = vmul.bf16 %v6023, %v6057
    %v6131 = vmul.bf16 %v6024, %v6057
    %v6132 = vmul.bf16 %v6025, %v6057
    %v6133 = vmul.bf16 %v6026, %v6057
    %v6134 = vmul.bf16 %v6027, %v6057
    %v6135 = vmul.bf16 %v6028, %v6057
    %v6136 = vmul.bf16 %v6029, %v6057
    %v6137 = vmul.bf16 %v6030, %v6057
    %v6138 = vmul.bf16 %v6031, %v6057
    %v6139 = vmul.bf16 %v6032, %v6057
    %v6140 = vmul.bf16 %v6033, %v6057
    %v6141 = vmul.bf16 %v6034, %v6057
    %v6142 = vmul.bf16 %v6035, %v6057
    %v6143 = vmul.bf16 %v6036, %v6057
    %v6144 = vmul.bf16 %v6037, %v6057
    %v6145 = vmul.bf16 %v6038, %v6057
    %v6146 = vmul.bf16 %v6039, %v6057
    %v6147 = vmul.bf16 %v6040, %v6057
    %v6148 = vmul.bf16 %v6041, %v6057
    %v6149 = vmul.bf16 %v6042, %v6057
    %v6150 = vmul.bf16 %v6043, %v6057
    %v6151 = vmul.bf16 %v6044, %v6057
    %v6152 = vmul.bf16 %v6045, %v6057
    %v6153 = vmul.bf16 %v6046, %v6057
    %v6154 = vmul.bf16 %v6047, %v6057
    %v6155 = vshrl.u32 %v5949, 16
    %v6156 = vpack.i.b16 %v6155, %v6155
    %v6158 = vlaneseq
    %v6159 = vshrl.u32 %v6158, 7
    %v6160 = vsub.s32 0, %v6159
    %v6161 = vrot.slane %v6156, %v6160
    %v6163 = vunpack.c.l.b16 %v6161
    %v6164 = vpack.c.b16 %v6163, %v6163
    %v6166 = vmul.bf16 %v5953, %v6164
    %v6167 = vmul.bf16 %v5954, %v6164
    %v6168 = vmul.bf16 %v5956, %v6164
    %v6169 = vmul.bf16 %v5957, %v6164
    %v6170 = vmul.bf16 %v5959, %v6164
    %v6171 = vmul.bf16 %v5960, %v6164
    %v6172 = vmul.bf16 %v5962, %v6164
    %v6173 = vmul.bf16 %v5963, %v6164
    %v6174 = vmul.bf16 %v5965, %v6164
    %v6175 = vmul.bf16 %v5966, %v6164
    %v6176 = vmul.bf16 %v5968, %v6164
    %v6177 = vmul.bf16 %v5969, %v6164
    %v6178 = vmul.bf16 %v5971, %v6164
    %v6179 = vmul.bf16 %v5972, %v6164
    %v6180 = vmul.bf16 %v5974, %v6164
    %v6181 = vmul.bf16 %v5975, %v6164
    %v6182 = vmul.bf16 %v5977, %v6164
    %v6183 = vmul.bf16 %v5978, %v6164
    %v6184 = vmul.bf16 %v5980, %v6164
    %v6185 = vmul.bf16 %v5981, %v6164
    %v6186 = vmul.bf16 %v5983, %v6164
    %v6187 = vmul.bf16 %v5984, %v6164
    %v6188 = vmul.bf16 %v5986, %v6164
    %v6189 = vmul.bf16 %v5987, %v6164
    %v6190 = vmul.bf16 %v5989, %v6164
    %v6191 = vmul.bf16 %v5990, %v6164
    %v6192 = vmul.bf16 %v5992, %v6164
    %v6193 = vmul.bf16 %v5993, %v6164
    %v6194 = vmul.bf16 %v5995, %v6164
    %v6195 = vmul.bf16 %v5996, %v6164
    %v6196 = vmul.bf16 %v5998, %v6164
    %v6197 = vmul.bf16 %v5999, %v6164
    %v6198 = vmul.bf16 %v6001, %v6164
    %v6199 = vmul.bf16 %v6002, %v6164
    %v6200 = vmul.bf16 %v6004, %v6164
    %v6201 = vmul.bf16 %v6005, %v6164
    %v6202 = vmul.bf16 %v6007, %v6164
    %v6203 = vmul.bf16 %v6008, %v6164
    %v6204 = vmul.bf16 %v6010, %v6164
    %v6205 = vmul.bf16 %v6011, %v6164
    %v6206 = vmul.bf16 %v6013, %v6164
    %v6207 = vmul.bf16 %v6014, %v6164
    %v6208 = vmul.bf16 %v6016, %v6164
    %v6209 = vmul.bf16 %v6017, %v6164
    %v6210 = vmul.bf16 %v6019, %v6164
    %v6211 = vmul.bf16 %v6020, %v6164
    %v6212 = vmul.bf16 %v6022, %v6164
    %v6213 = vmul.bf16 %v6023, %v6164
    %v6214 = vmul.bf16 %v6025, %v6164
    %v6215 = vmul.bf16 %v6026, %v6164
    %v6216 = vmul.bf16 %v6028, %v6164
    %v6217 = vmul.bf16 %v6029, %v6164
    %v6218 = vmul.bf16 %v6031, %v6164
    %v6219 = vmul.bf16 %v6032, %v6164
    %v6220 = vmul.bf16 %v6034, %v6164
    %v6221 = vmul.bf16 %v6035, %v6164
    %v6222 = vmul.bf16 %v6037, %v6164
    %v6223 = vmul.bf16 %v6038, %v6164
    %v6224 = vmul.bf16 %v6040, %v6164
    %v6225 = vmul.bf16 %v6041, %v6164
    %v6226 = vmul.bf16 %v6043, %v6164
    %v6227 = vmul.bf16 %v6044, %v6164
    %v6228 = vmul.bf16 %v6046, %v6164
    %v6229 = vmul.bf16 %v6047, %v6164
    %v6230 = vld [vmem:[#allocation3 + $0xc] sm:$0x1]
    %v6231 = vld [vmem:[#allocation3 + $0x1c] sm:$0x1]
    %v6232 = vld [vmem:[#allocation3 + $0x2c] sm:$0x1]
    %v6233 = vld [vmem:[#allocation3 + $0x3c] sm:$0x1]
    %v6234 = vld [vmem:[#allocation3 + $0x4c] sm:$0x1]
    %v6235 = vld [vmem:[#allocation3 + $0x5c] sm:$0x1]
    %v6236 = vld [vmem:[#allocation3 + $0x6c] sm:$0x1]
    %v6237 = vld [vmem:[#allocation3 + $0x7c] sm:$0x1]
    %v6238 = vld [vmem:[#allocation3 + $0x8c] sm:$0x1]
    %v6239 = vld [vmem:[#allocation3 + $0x9c] sm:$0x1]
    %v6240 = vld [vmem:[#allocation3 + $0xac] sm:$0x1]
    %v6241 = vld [vmem:[#allocation3 + $0xbc] sm:$0x1]
    %v6242 = vld [vmem:[#allocation3 + $0xcc] sm:$0x1]
    %v6243 = vld [vmem:[#allocation3 + $0xdc] sm:$0x1]
    %v6244 = vld [vmem:[#allocation3 + $0xec] sm:$0x1]
    %v6245 = vld [vmem:[#allocation3 + $0xfc] sm:$0x1]
    %v6246 = vld [vmem:[#allocation3 + $0x12c] sm:$0x1]
    %v6247 = vld [vmem:[#allocation3 + $0x13c] sm:$0x1]
    %v6248 = vld [vmem:[#allocation3 + $0x14c] sm:$0x1]
    %v6249 = vld [vmem:[#allocation3 + $0x15c] sm:$0x1]
    %v6250 = vld [vmem:[#allocation3 + $0x16c] sm:$0x1]
    %v6251 = vld [vmem:[#allocation3 + $0x17c] sm:$0x1]
    %v6252 = vld [vmem:[#allocation3 + $0x18c] sm:$0x1]
    %v6253 = vld [vmem:[#allocation3 + $0x19c] sm:$0x1]
    %v6254 = vld [vmem:[#allocation3 + $0x1ac] sm:$0x1]
    %v6255 = vld [vmem:[#allocation3 + $0x1bc] sm:$0x1]
    %v6256 = vld [vmem:[#allocation3 + $0x1cc] sm:$0x1]
    %v6257 = vld [vmem:[#allocation3 + $0x1dc] sm:$0x1]
    %v6258 = vld [vmem:[#allocation3 + $0x1ec] sm:$0x1]
    %v6259 = vld [vmem:[#allocation3 + $0x1fc] sm:$0x1]
    %v6260 = vld [vmem:[#allocation3 + $0x20c] sm:$0x1]
    %v6261 = vld [vmem:[#allocation3 + $0x21c] sm:$0x1]
    %v6262 = vlaneseq
    %v6263 = vshrl.u32 %v6262, 7
    %v6264 = vsub.s32 1, %v6263
    %v6265 = vrot.slane %v6049, %v6264
    %v6267 = vunpack.c.l.b16 %v6265
    %v6268 = vpack.c.b16 %v6267, %v6267
    %v6270 = vmul.bf16 %v5953, %v6268
    %v6271 = vmul.bf16 %v5954, %v6268
    %v6272 = vmul.bf16 %v6230, %v6268
    %v6273 = vmul.bf16 %v5956, %v6268
    %v6274 = vmul.bf16 %v5957, %v6268
    %v6275 = vmul.bf16 %v6231, %v6268
    %v6276 = vmul.bf16 %v5959, %v6268
    %v6277 = vmul.bf16 %v5960, %v6268
    %v6278 = vmul.bf16 %v6232, %v6268
    %v6279 = vmul.bf16 %v5962, %v6268
    %v6280 = vmul.bf16 %v5963, %v6268
    %v6281 = vmul.bf16 %v6233, %v6268
    %v6282 = vmul.bf16 %v5965, %v6268
    %v6283 = vmul.bf16 %v5966, %v6268
    %v6284 = vmul.bf16 %v6234, %v6268
    %v6285 = vmul.bf16 %v5968, %v6268
    %v6286 = vmul.bf16 %v5969, %v6268
    %v6287 = vmul.bf16 %v6235, %v6268
    %v6288 = vmul.bf16 %v5971, %v6268
    %v6289 = vmul.bf16 %v5972, %v6268
    %v6290 = vmul.bf16 %v6236, %v6268
    %v6291 = vmul.bf16 %v5974, %v6268
    %v6292 = vmul.bf16 %v5975, %v6268
    %v6293 = vmul.bf16 %v6237, %v6268
    %v6294 = vmul.bf16 %v5977, %v6268
    %v6295 = vmul.bf16 %v5978, %v6268
    %v6296 = vmul.bf16 %v6238, %v6268
    %v6297 = vmul.bf16 %v5980, %v6268
    %v6298 = vmul.bf16 %v5981, %v6268
    %v6299 = vmul.bf16 %v6239, %v6268
    %v6300 = vmul.bf16 %v5983, %v6268
    %v6301 = vmul.bf16 %v5984, %v6268
    %v6302 = vmul.bf16 %v6240, %v6268
    %v6303 = vmul.bf16 %v5986, %v6268
    %v6304 = vmul.bf16 %v5987, %v6268
    %v6305 = vmul.bf16 %v6241, %v6268
    %v6306 = vmul.bf16 %v5989, %v6268
    %v6307 = vmul.bf16 %v5990, %v6268
    %v6308 = vmul.bf16 %v6242, %v6268
    %v6309 = vmul.bf16 %v5992, %v6268
    %v6310 = vmul.bf16 %v5993, %v6268
    %v6311 = vmul.bf16 %v6243, %v6268
    %v6312 = vmul.bf16 %v5995, %v6268
    %v6313 = vmul.bf16 %v5996, %v6268
    %v6314 = vmul.bf16 %v6244, %v6268
    %v6315 = vmul.bf16 %v5998, %v6268
    %v6316 = vmul.bf16 %v5999, %v6268
    %v6317 = vmul.bf16 %v6245, %v6268
    %v6318 = vmul.bf16 %v6001, %v6268
    %v6319 = vmul.bf16 %v6002, %v6268
    %v6320 = vmul.bf16 %v6246, %v6268
    %v6321 = vmul.bf16 %v6004, %v6268
    %v6322 = vmul.bf16 %v6005, %v6268
    %v6323 = vmul.bf16 %v6247, %v6268
    %v6324 = vmul.bf16 %v6007, %v6268
    %v6325 = vmul.bf16 %v6008, %v6268
    %v6326 = vmul.bf16 %v6248, %v6268
    %v6327 = vmul.bf16 %v6010, %v6268
    %v6328 = vmul.bf16 %v6011, %v6268
    %v6329 = vmul.bf16 %v6249, %v6268
    %v6330 = vmul.bf16 %v6013, %v6268
    %v6331 = vmul.bf16 %v6014, %v6268
    %v6332 = vmul.bf16 %v6250, %v6268
    %v6333 = vmul.bf16 %v6016, %v6268
    %v6334 = vmul.bf16 %v6017, %v6268
    %v6335 = vmul.bf16 %v6251, %v6268
    %v6336 = vmul.bf16 %v6019, %v6268
    %v6337 = vmul.bf16 %v6020, %v6268
    %v6338 = vmul.bf16 %v6252, %v6268
    %v6339 = vmul.bf16 %v6022, %v6268
    %v6340 = vmul.bf16 %v6023, %v6268
    %v6341 = vmul.bf16 %v6253, %v6268
    %v6342 = vmul.bf16 %v6025, %v6268
    %v6343 = vmul.bf16 %v6026, %v6268
    %v6344 = vmul.bf16 %v6254, %v6268
    %v6345 = vmul.bf16 %v6028, %v6268
    %v6346 = vmul.bf16 %v6029, %v6268
    %v6347 = vmul.bf16 %v6255, %v6268
    %v6348 = vmul.bf16 %v6031, %v6268
    %v6349 = vmul.bf16 %v6032, %v6268
    %v6350 = vmul.bf16 %v6256, %v6268
    %v6351 = vmul.bf16 %v6034, %v6268
    %v6352 = vmul.bf16 %v6035, %v6268
    %v6353 = vmul.bf16 %v6257, %v6268
    %v6354 = vmul.bf16 %v6037, %v6268
    %v6355 = vmul.bf16 %v6038, %v6268
    %v6356 = vmul.bf16 %v6258, %v6268
    %v6357 = vmul.bf16 %v6040, %v6268
    %v6358 = vmul.bf16 %v6041, %v6268
    %v6359 = vmul.bf16 %v6259, %v6268
    %v6360 = vmul.bf16 %v6043, %v6268
    %v6361 = vmul.bf16 %v6044, %v6268
    %v6362 = vmul.bf16 %v6260, %v6268
    %v6363 = vmul.bf16 %v6046, %v6268
    %v6364 = vmul.bf16 %v6047, %v6268
    %v6365 = vmul.bf16 %v6261, %v6268
    %v6366 = vld [vmem:[%s5884] sm:$0x8]
    %v6367 = vld [vmem:[%s5884 + $0x4] sm:$0xf]
    %v6368 = vld [vmem:[%s5884 + $0x8] sm:$0xf]
    %v6369 = vld [vmem:[%s5884 + $0x10] sm:$0x8]
    %v6370 = vld [vmem:[%s5884 + $0x14] sm:$0xf]
    %v6371 = vld [vmem:[%s5884 + $0x18] sm:$0xf]
    %v6372 = vld [vmem:[%s5884 + $0x20] sm:$0x8]
    %v6373 = vld [vmem:[%s5884 + $0x24] sm:$0xf]
    %v6374 = vld [vmem:[%s5884 + $0x28] sm:$0xf]
    %v6375 = vld [vmem:[%s5884 + $0x30] sm:$0x8]
    %v6376 = vld [vmem:[%s5884 + $0x34] sm:$0xf]
    %v6377 = vld [vmem:[%s5884 + $0x38] sm:$0xf]
    %v6378 = vld [vmem:[%s5884 + $0x40] sm:$0x8]
    %v6379 = vld [vmem:[%s5884 + $0x44] sm:$0xf]
    %v6380 = vld [vmem:[%s5884 + $0x48] sm:$0xf]
    %v6381 = vld [vmem:[%s5884 + $0x50] sm:$0x8]
    %v6382 = vld [vmem:[%s5884 + $0x54] sm:$0xf]
    %v6383 = vld [vmem:[%s5884 + $0x58] sm:$0xf]
    %v6384 = vld [vmem:[%s5884 + $0x60] sm:$0x8]
    %v6385 = vld [vmem:[%s5884 + $0x64] sm:$0xf]
    %v6386 = vld [vmem:[%s5884 + $0x68] sm:$0xf]
    %v6387 = vld [vmem:[%s5884 + $0x70] sm:$0x8]
    %v6388 = vld [vmem:[%s5884 + $0x74] sm:$0xf]
    %v6389 = vld [vmem:[%s5884 + $0x78] sm:$0xf]
    %v6390 = vld [vmem:[%s5884 + $0x80] sm:$0x8]
    %v6391 = vld [vmem:[%s5884 + $0x84] sm:$0xf]
    %v6392 = vld [vmem:[%s5884 + $0x88] sm:$0xf]
    %v6393 = vld [vmem:[%s5884 + $0x90] sm:$0x8]
    %v6394 = vld [vmem:[%s5884 + $0x94] sm:$0xf]
    %v6395 = vld [vmem:[%s5884 + $0x98] sm:$0xf]
    %v6396 = vld [vmem:[%s5884 + $0xa0] sm:$0x8]
    %v6397 = vld [vmem:[%s5884 + $0xa4] sm:$0xf]
    %v6398 = vld [vmem:[%s5884 + $0xa8] sm:$0xf]
    %v6399 = vld [vmem:[%s5884 + $0xb0] sm:$0x8]
    %v6400 = vld [vmem:[%s5884 + $0xb4] sm:$0xf]
    %v6401 = vld [vmem:[%s5884 + $0xb8] sm:$0xf]
    %v6402 = vld [vmem:[%s5884 + $0xc0] sm:$0x8]
    %v6403 = vld [vmem:[%s5884 + $0xc4] sm:$0xf]
    %v6404 = vld [vmem:[%s5884 + $0xc8] sm:$0xf]
    %v6405 = vld [vmem:[%s5884 + $0xd0] sm:$0x8]
    %v6406 = vld [vmem:[%s5884 + $0xd4] sm:$0xf]
    %v6407 = vld [vmem:[%s5884 + $0xd8] sm:$0xf]
    %v6408 = vld [vmem:[%s5884 + $0xe0] sm:$0x8]
    %v6409 = vld [vmem:[%s5884 + $0xe4] sm:$0xf]
    %v6410 = vld [vmem:[%s5884 + $0xe8] sm:$0xf]
    %v6411 = vld [vmem:[%s5884 + $0xf0] sm:$0x8]
    %v6412 = vld [vmem:[%s5884 + $0xf4] sm:$0xf]
    %v6413 = vld [vmem:[%s5884 + $0xf8] sm:$0xf]
    %v6414 = vld [vmem:[%s5884 + $0x120] sm:$0x8]
    %v6415 = vld [vmem:[%s5884 + $0x124] sm:$0xf]
    %v6416 = vld [vmem:[%s5884 + $0x128] sm:$0xf]
    %v6417 = vld [vmem:[%s5884 + $0x130] sm:$0x8]
    %v6418 = vld [vmem:[%s5884 + $0x134] sm:$0xf]
    %v6419 = vld [vmem:[%s5884 + $0x138] sm:$0xf]
    %v6420 = vld [vmem:[%s5884 + $0x140] sm:$0x8]
    %v6421 = vld [vmem:[%s5884 + $0x144] sm:$0xf]
    %v6422 = vld [vmem:[%s5884 + $0x148] sm:$0xf]
    %v6423 = vld [vmem:[%s5884 + $0x150] sm:$0x8]
    %v6424 = vld [vmem:[%s5884 + $0x154] sm:$0xf]
    %v6425 = vld [vmem:[%s5884 + $0x158] sm:$0xf]
    %v6426 = vld [vmem:[%s5884 + $0x160] sm:$0x8]
    %v6427 = vld [vmem:[%s5884 + $0x164] sm:$0xf]
    %v6428 = vld [vmem:[%s5884 + $0x168] sm:$0xf]
    %v6429 = vld [vmem:[%s5884 + $0x170] sm:$0x8]
    %v6430 = vld [vmem:[%s5884 + $0x174] sm:$0xf]
    %v6431 = vld [vmem:[%s5884 + $0x178] sm:$0xf]
    %v6432 = vld [vmem:[%s5884 + $0x180] sm:$0x8]
    %v6433 = vld [vmem:[%s5884 + $0x184] sm:$0xf]
    %v6434 = vld [vmem:[%s5884 + $0x188] sm:$0xf]
    %v6435 = vld [vmem:[%s5884 + $0x190] sm:$0x8]
    %v6436 = vld [vmem:[%s5884 + $0x194] sm:$0xf]
    %v6437 = vld [vmem:[%s5884 + $0x198] sm:$0xf]
    %v6438 = vld [vmem:[%s5884 + $0x1a0] sm:$0x8]
    %v6439 = vld [vmem:[%s5884 + $0x1a4] sm:$0xf]
    %v6440 = vld [vmem:[%s5884 + $0x1a8] sm:$0xf]
    %v6441 = vld [vmem:[%s5884 + $0x1b0] sm:$0x8]
    %v6442 = vld [vmem:[%s5884 + $0x1b4] sm:$0xf]
    %v6443 = vld [vmem:[%s5884 + $0x1b8] sm:$0xf]
    %v6444 = vld [vmem:[%s5884 + $0x1c0] sm:$0x8]
    %v6445 = vld [vmem:[%s5884 + $0x1c4] sm:$0xf]
    %v6446 = vld [vmem:[%s5884 + $0x1c8] sm:$0xf]
    %v6447 = vld [vmem:[%s5884 + $0x1d0] sm:$0x8]
    %v6448 = vld [vmem:[%s5884 + $0x1d4] sm:$0xf]
    %v6449 = vld [vmem:[%s5884 + $0x1d8] sm:$0xf]
    %v6450 = vld [vmem:[%s5884 + $0x1e0] sm:$0x8]
    %v6451 = vld [vmem:[%s5884 + $0x1e4] sm:$0xf]
    %v6452 = vld [vmem:[%s5884 + $0x1e8] sm:$0xf]
    %v6453 = vld [vmem:[%s5884 + $0x1f0] sm:$0x8]
    %v6454 = vld [vmem:[%s5884 + $0x1f4] sm:$0xf]
    %v6455 = vld [vmem:[%s5884 + $0x1f8] sm:$0xf]
    %v6456 = vld [vmem:[%s5884 + $0x200] sm:$0x8]
    %v6457 = vld [vmem:[%s5884 + $0x204] sm:$0xf]
    %v6458 = vld [vmem:[%s5884 + $0x208] sm:$0xf]
    %v6459 = vld [vmem:[%s5884 + $0x210] sm:$0x8]
    %v6460 = vld [vmem:[%s5884 + $0x214] sm:$0xf]
    %v6461 = vld [vmem:[%s5884 + $0x218] sm:$0xf]
    %v6462 = vlaneseq
    %v6463 = vshrl.u32 %v6462, 7
    %v6464 = vsub.s32 1, %v6463
    %v6465 = vrot.slane %v6156, %v6464
    %v6467 = vunpack.c.l.b16 %v6465
    %v6468 = vpack.c.b16 %v6467, %v6467
    %v6470 = vmul.bf16 %v6366, %v6468
    %v6471 = vmul.bf16 %v6367, %v6468
    %v6472 = vmul.bf16 %v6368, %v6468
    %v6473 = vmul.bf16 %v6369, %v6468
    %v6474 = vmul.bf16 %v6370, %v6468
    %v6475 = vmul.bf16 %v6371, %v6468
    %v6476 = vmul.bf16 %v6372, %v6468
    %v6477 = vmul.bf16 %v6373, %v6468
    %v6478 = vmul.bf16 %v6374, %v6468
    %v6479 = vmul.bf16 %v6375, %v6468
    %v6480 = vmul.bf16 %v6376, %v6468
    %v6481 = vmul.bf16 %v6377, %v6468
    %v6482 = vmul.bf16 %v6378, %v6468
    %v6483 = vmul.bf16 %v6379, %v6468
    %v6484 = vmul.bf16 %v6380, %v6468
    %v6485 = vmul.bf16 %v6381, %v6468
    %v6486 = vmul.bf16 %v6382, %v6468
    %v6487 = vmul.bf16 %v6383, %v6468
    %v6488 = vmul.bf16 %v6384, %v6468
    %v6489 = vmul.bf16 %v6385, %v6468
    %v6490 = vmul.bf16 %v6386, %v6468
    %v6491 = vmul.bf16 %v6387, %v6468
    %v6492 = vmul.bf16 %v6388, %v6468
    %v6493 = vmul.bf16 %v6389, %v6468
    %v6494 = vmul.bf16 %v6390, %v6468
    %v6495 = vmul.bf16 %v6391, %v6468
    %v6496 = vmul.bf16 %v6392, %v6468
    %v6497 = vmul.bf16 %v6393, %v6468
    %v6498 = vmul.bf16 %v6394, %v6468
    %v6499 = vmul.bf16 %v6395, %v6468
    %v6500 = vmul.bf16 %v6396, %v6468
    %v6501 = vmul.bf16 %v6397, %v6468
    %v6502 = vmul.bf16 %v6398, %v6468
    %v6503 = vmul.bf16 %v6399, %v6468
    %v6504 = vmul.bf16 %v6400, %v6468
    %v6505 = vmul.bf16 %v6401, %v6468
    %v6506 = vmul.bf16 %v6402, %v6468
    %v6507 = vmul.bf16 %v6403, %v6468
    %v6508 = vmul.bf16 %v6404, %v6468
    %v6509 = vmul.bf16 %v6405, %v6468
    %v6510 = vmul.bf16 %v6406, %v6468
    %v6511 = vmul.bf16 %v6407, %v6468
    %v6512 = vmul.bf16 %v6408, %v6468
    %v6513 = vmul.bf16 %v6409, %v6468
    %v6514 = vmul.bf16 %v6410, %v6468
    %v6515 = vmul.bf16 %v6411, %v6468
    %v6516 = vmul.bf16 %v6412, %v6468
    %v6517 = vmul.bf16 %v6413, %v6468
    %v6518 = vmul.bf16 %v6414, %v6468
    %v6519 = vmul.bf16 %v6415, %v6468
    %v6520 = vmul.bf16 %v6416, %v6468
    %v6521 = vmul.bf16 %v6417, %v6468
    %v6522 = vmul.bf16 %v6418, %v6468
    %v6523 = vmul.bf16 %v6419, %v6468
    %v6524 = vmul.bf16 %v6420, %v6468
    %v6525 = vmul.bf16 %v6421, %v6468
    %v6526 = vmul.bf16 %v6422, %v6468
    %v6527 = vmul.bf16 %v6423, %v6468
    %v6528 = vmul.bf16 %v6424, %v6468
    %v6529 = vmul.bf16 %v6425, %v6468
    %v6530 = vmul.bf16 %v6426, %v6468
    %v6531 = vmul.bf16 %v6427, %v6468
    %v6532 = vmul.bf16 %v6428, %v6468
    %v6533 = vmul.bf16 %v6429, %v6468
    %v6534 = vmul.bf16 %v6430, %v6468
    %v6535 = vmul.bf16 %v6431, %v6468
    %v6536 = vmul.bf16 %v6432, %v6468
    %v6537 = vmul.bf16 %v6433, %v6468
    %v6538 = vmul.bf16 %v6434, %v6468
    %v6539 = vmul.bf16 %v6435, %v6468
    %v6540 = vmul.bf16 %v6436, %v6468
    %v6541 = vmul.bf16 %v6437, %v6468
    %v6542 = vmul.bf16 %v6438, %v6468
    %v6543 = vmul.bf16 %v6439, %v6468
    %v6544 = vmul.bf16 %v6440, %v6468
    %v6545 = vmul.bf16 %v6441, %v6468
    %v6546 = vmul.bf16 %v6442, %v6468
    %v6547 = vmul.bf16 %v6443, %v6468
    %v6548 = vmul.bf16 %v6444, %v6468
    %v6549 = vmul.bf16 %v6445, %v6468
    %v6550 = vmul.bf16 %v6446, %v6468
    %v6551 = vmul.bf16 %v6447, %v6468
    %v6552 = vmul.bf16 %v6448, %v6468
    %v6553 = vmul.bf16 %v6449, %v6468
    %v6554 = vmul.bf16 %v6450, %v6468
    %v6555 = vmul.bf16 %v6451, %v6468
    %v6556 = vmul.bf16 %v6452, %v6468
    %v6557 = vmul.bf16 %v6453, %v6468
    %v6558 = vmul.bf16 %v6454, %v6468
    %v6559 = vmul.bf16 %v6455, %v6468
    %v6560 = vmul.bf16 %v6456, %v6468
    %v6561 = vmul.bf16 %v6457, %v6468
    %v6562 = vmul.bf16 %v6458, %v6468
    %v6563 = vmul.bf16 %v6459, %v6468
    %v6564 = vmul.bf16 %v6460, %v6468
    %v6565 = vmul.bf16 %v6461, %v6468
    %v6566 = vadd.bf16 %v6059, %v6470
    %v6567 = vadd.bf16 %v6060, %v6471
    %v6568 = vadd.bf16 %v6061, %v6472
    %v6569 = vadd.bf16 %v6062, %v6473
    %v6570 = vadd.bf16 %v6063, %v6474
    %v6571 = vadd.bf16 %v6064, %v6475
    %v6572 = vadd.bf16 %v6065, %v6476
    %v6573 = vadd.bf16 %v6066, %v6477
    %v6574 = vadd.bf16 %v6067, %v6478
    %v6575 = vadd.bf16 %v6068, %v6479
    %v6576 = vadd.bf16 %v6069, %v6480
    %v6577 = vadd.bf16 %v6070, %v6481
    %v6578 = vadd.bf16 %v6071, %v6482
    %v6579 = vadd.bf16 %v6072, %v6483
    %v6580 = vadd.bf16 %v6073, %v6484
    %v6581 = vadd.bf16 %v6074, %v6485
    %v6582 = vadd.bf16 %v6075, %v6486
    %v6583 = vadd.bf16 %v6076, %v6487
    %v6584 = vadd.bf16 %v6077, %v6488
    %v6585 = vadd.bf16 %v6078, %v6489
    %v6586 = vadd.bf16 %v6079, %v6490
    %v6587 = vadd.bf16 %v6080, %v6491
    %v6588 = vadd.bf16 %v6081, %v6492
    %v6589 = vadd.bf16 %v6082, %v6493
    %v6590 = vadd.bf16 %v6083, %v6494
    %v6591 = vadd.bf16 %v6084, %v6495
    %v6592 = vadd.bf16 %v6085, %v6496
    %v6593 = vadd.bf16 %v6086, %v6497
    %v6594 = vadd.bf16 %v6087, %v6498
    %v6595 = vadd.bf16 %v6088, %v6499
    %v6596 = vadd.bf16 %v6089, %v6500
    %v6597 = vadd.bf16 %v6090, %v6501
    %v6598 = vadd.bf16 %v6091, %v6502
    %v6599 = vadd.bf16 %v6092, %v6503
    %v6600 = vadd.bf16 %v6093, %v6504
    %v6601 = vadd.bf16 %v6094, %v6505
    %v6602 = vadd.bf16 %v6095, %v6506
    %v6603 = vadd.bf16 %v6096, %v6507
    %v6604 = vadd.bf16 %v6097, %v6508
    %v6605 = vadd.bf16 %v6098, %v6509
    %v6606 = vadd.bf16 %v6099, %v6510
    %v6607 = vadd.bf16 %v6100, %v6511
    %v6608 = vadd.bf16 %v6101, %v6512
    %v6609 = vadd.bf16 %v6102, %v6513
    %v6610 = vadd.bf16 %v6103, %v6514
    %v6611 = vadd.bf16 %v6104, %v6515
    %v6612 = vadd.bf16 %v6105, %v6516
    %v6613 = vadd.bf16 %v6106, %v6517
    %v6614 = vadd.bf16 %v6107, %v6518
    %v6615 = vadd.bf16 %v6108, %v6519
    %v6616 = vadd.bf16 %v6109, %v6520
    %v6617 = vadd.bf16 %v6110, %v6521
    %v6618 = vadd.bf16 %v6111, %v6522
    %v6619 = vadd.bf16 %v6112, %v6523
    %v6620 = vadd.bf16 %v6113, %v6524
    %v6621 = vadd.bf16 %v6114, %v6525
    %v6622 = vadd.bf16 %v6115, %v6526
    %v6623 = vadd.bf16 %v6116, %v6527
    %v6624 = vadd.bf16 %v6117, %v6528
    %v6625 = vadd.bf16 %v6118, %v6529
    %v6626 = vadd.bf16 %v6119, %v6530
    %v6627 = vadd.bf16 %v6120, %v6531
    %v6628 = vadd.bf16 %v6121, %v6532
    %v6629 = vadd.bf16 %v6122, %v6533
    %v6630 = vadd.bf16 %v6123, %v6534
    %v6631 = vadd.bf16 %v6124, %v6535
    %v6632 = vadd.bf16 %v6125, %v6536
    %v6633 = vadd.bf16 %v6126, %v6537
    %v6634 = vadd.bf16 %v6127, %v6538
    %v6635 = vadd.bf16 %v6128, %v6539
    %v6636 = vadd.bf16 %v6129, %v6540
    %v6637 = vadd.bf16 %v6130, %v6541
    %v6638 = vadd.bf16 %v6131, %v6542
    %v6639 = vadd.bf16 %v6132, %v6543
    %v6640 = vadd.bf16 %v6133, %v6544
    %v6641 = vadd.bf16 %v6134, %v6545
    %v6642 = vadd.bf16 %v6135, %v6546
    %v6643 = vadd.bf16 %v6136, %v6547
    %v6644 = vadd.bf16 %v6137, %v6548
    %v6645 = vadd.bf16 %v6138, %v6549
    %v6646 = vadd.bf16 %v6139, %v6550
    %v6647 = vadd.bf16 %v6140, %v6551
    %v6648 = vadd.bf16 %v6141, %v6552
    %v6649 = vadd.bf16 %v6142, %v6553
    %v6650 = vadd.bf16 %v6143, %v6554
    %v6651 = vadd.bf16 %v6144, %v6555
    %v6652 = vadd.bf16 %v6145, %v6556
    %v6653 = vadd.bf16 %v6146, %v6557
    %v6654 = vadd.bf16 %v6147, %v6558
    %v6655 = vadd.bf16 %v6148, %v6559
    %v6656 = vadd.bf16 %v6149, %v6560
    %v6657 = vadd.bf16 %v6150, %v6561
    %v6658 = vadd.bf16 %v6151, %v6562
    %v6659 = vadd.bf16 %v6152, %v6563
    %v6660 = vadd.bf16 %v6153, %v6564
    %v6661 = vadd.bf16 %v6154, %v6565
    %v6662 = vlaneseq
    %v6663 = vshrl.u32 %v6662, 7
    %v6664 = vsub.s32 2, %v6663
    %v6665 = vrot.slane %v6049, %v6664
    %v6667 = vunpack.c.l.b16 %v6665
    %v6668 = vpack.c.b16 %v6667, %v6667
    %v6670 = vmul.bf16 %v6367, %v6668
    %v6671 = vmul.bf16 %v6368, %v6668
    %v6672 = vmul.bf16 %v6370, %v6668
    %v6673 = vmul.bf16 %v6371, %v6668
    %v6674 = vmul.bf16 %v6373, %v6668
    %v6675 = vmul.bf16 %v6374, %v6668
    %v6676 = vmul.bf16 %v6376, %v6668
    %v6677 = vmul.bf16 %v6377, %v6668
    %v6678 = vmul.bf16 %v6379, %v6668
    %v6679 = vmul.bf16 %v6380, %v6668
    %v6680 = vmul.bf16 %v6382, %v6668
    %v6681 = vmul.bf16 %v6383, %v6668
    %v6682 = vmul.bf16 %v6385, %v6668
    %v6683 = vmul.bf16 %v6386, %v6668
    %v6684 = vmul.bf16 %v6388, %v6668
    %v6685 = vmul.bf16 %v6389, %v6668
    %v6686 = vmul.bf16 %v6391, %v6668
    %v6687 = vmul.bf16 %v6392, %v6668
    %v6688 = vmul.bf16 %v6394, %v6668
    %v6689 = vmul.bf16 %v6395, %v6668
    %v6690 = vmul.bf16 %v6397, %v6668
    %v6691 = vmul.bf16 %v6398, %v6668
    %v6692 = vmul.bf16 %v6400, %v6668
    %v6693 = vmul.bf16 %v6401, %v6668
    %v6694 = vmul.bf16 %v6403, %v6668
    %v6695 = vmul.bf16 %v6404, %v6668
    %v6696 = vmul.bf16 %v6406, %v6668
    %v6697 = vmul.bf16 %v6407, %v6668
    %v6698 = vmul.bf16 %v6409, %v6668
    %v6699 = vmul.bf16 %v6410, %v6668
    %v6700 = vmul.bf16 %v6412, %v6668
    %v6701 = vmul.bf16 %v6413, %v6668
    %v6702 = vmul.bf16 %v6415, %v6668
    %v6703 = vmul.bf16 %v6416, %v6668
    %v6704 = vmul.bf16 %v6418, %v6668
    %v6705 = vmul.bf16 %v6419, %v6668
    %v6706 = vmul.bf16 %v6421, %v6668
    %v6707 = vmul.bf16 %v6422, %v6668
    %v6708 = vmul.bf16 %v6424, %v6668
    %v6709 = vmul.bf16 %v6425, %v6668
    %v6710 = vmul.bf16 %v6427, %v6668
    %v6711 = vmul.bf16 %v6428, %v6668
    %v6712 = vmul.bf16 %v6430, %v6668
    %v6713 = vmul.bf16 %v6431, %v6668
    %v6714 = vmul.bf16 %v6433, %v6668
    %v6715 = vmul.bf16 %v6434, %v6668
    %v6716 = vmul.bf16 %v6436, %v6668
    %v6717 = vmul.bf16 %v6437, %v6668
    %v6718 = vmul.bf16 %v6439, %v6668
    %v6719 = vmul.bf16 %v6440, %v6668
    %v6720 = vmul.bf16 %v6442, %v6668
    %v6721 = vmul.bf16 %v6443, %v6668
    %v6722 = vmul.bf16 %v6445, %v6668
    %v6723 = vmul.bf16 %v6446, %v6668
    %v6724 = vmul.bf16 %v6448, %v6668
    %v6725 = vmul.bf16 %v6449, %v6668
    %v6726 = vmul.bf16 %v6451, %v6668
    %v6727 = vmul.bf16 %v6452, %v6668
    %v6728 = vmul.bf16 %v6454, %v6668
    %v6729 = vmul.bf16 %v6455, %v6668
    %v6730 = vmul.bf16 %v6457, %v6668
    %v6731 = vmul.bf16 %v6458, %v6668
    %v6732 = vmul.bf16 %v6460, %v6668
    %v6733 = vmul.bf16 %v6461, %v6668
    %v6734 = vadd.bf16 %v6166, %v6670
    %v6735 = vadd.bf16 %v6167, %v6671
    %v6736 = vadd.bf16 %v6168, %v6672
    %v6737 = vadd.bf16 %v6169, %v6673
    %v6738 = vadd.bf16 %v6170, %v6674
    %v6739 = vadd.bf16 %v6171, %v6675
    %v6740 = vadd.bf16 %v6172, %v6676
    %v6741 = vadd.bf16 %v6173, %v6677
    %v6742 = vadd.bf16 %v6174, %v6678
    %v6743 = vadd.bf16 %v6175, %v6679
    %v6744 = vadd.bf16 %v6176, %v6680
    %v6745 = vadd.bf16 %v6177, %v6681
    %v6746 = vadd.bf16 %v6178, %v6682
    %v6747 = vadd.bf16 %v6179, %v6683
    %v6748 = vadd.bf16 %v6180, %v6684
    %v6749 = vadd.bf16 %v6181, %v6685
    %v6750 = vadd.bf16 %v6182, %v6686
    %v6751 = vadd.bf16 %v6183, %v6687
    %v6752 = vadd.bf16 %v6184, %v6688
    %v6753 = vadd.bf16 %v6185, %v6689
    %v6754 = vadd.bf16 %v6186, %v6690
    %v6755 = vadd.bf16 %v6187, %v6691
    %v6756 = vadd.bf16 %v6188, %v6692
    %v6757 = vadd.bf16 %v6189, %v6693
    %v6758 = vadd.bf16 %v6190, %v6694
    %v6759 = vadd.bf16 %v6191, %v6695
    %v6760 = vadd.bf16 %v6192, %v6696
    %v6761 = vadd.bf16 %v6193, %v6697
    %v6762 = vadd.bf16 %v6194, %v6698
    %v6763 = vadd.bf16 %v6195, %v6699
    %v6764 = vadd.bf16 %v6196, %v6700
    %v6765 = vadd.bf16 %v6197, %v6701
    %v6766 = vadd.bf16 %v6198, %v6702
    %v6767 = vadd.bf16 %v6199, %v6703
    %v6768 = vadd.bf16 %v6200, %v6704
    %v6769 = vadd.bf16 %v6201, %v6705
    %v6770 = vadd.bf16 %v6202, %v6706
    %v6771 = vadd.bf16 %v6203, %v6707
    %v6772 = vadd.bf16 %v6204, %v6708
    %v6773 = vadd.bf16 %v6205, %v6709
    %v6774 = vadd.bf16 %v6206, %v6710
    %v6775 = vadd.bf16 %v6207, %v6711
    %v6776 = vadd.bf16 %v6208, %v6712
    %v6777 = vadd.bf16 %v6209, %v6713
    %v6778 = vadd.bf16 %v6210, %v6714
    %v6779 = vadd.bf16 %v6211, %v6715
    %v6780 = vadd.bf16 %v6212, %v6716
    %v6781 = vadd.bf16 %v6213, %v6717
    %v6782 = vadd.bf16 %v6214, %v6718
    %v6783 = vadd.bf16 %v6215, %v6719
    %v6784 = vadd.bf16 %v6216, %v6720
    %v6785 = vadd.bf16 %v6217, %v6721
    %v6786 = vadd.bf16 %v6218, %v6722
    %v6787 = vadd.bf16 %v6219, %v6723
    %v6788 = vadd.bf16 %v6220, %v6724
    %v6789 = vadd.bf16 %v6221, %v6725
    %v6790 = vadd.bf16 %v6222, %v6726
    %v6791 = vadd.bf16 %v6223, %v6727
    %v6792 = vadd.bf16 %v6224, %v6728
    %v6793 = vadd.bf16 %v6225, %v6729
    %v6794 = vadd.bf16 %v6226, %v6730
    %v6795 = vadd.bf16 %v6227, %v6731
    %v6796 = vadd.bf16 %v6228, %v6732
    %v6797 = vadd.bf16 %v6229, %v6733
    %v6798 = vld [vmem:[%s5884 + $0xc] sm:$0x1]
    %v6799 = vld [vmem:[%s5884 + $0x1c] sm:$0x1]
    %v6800 = vld [vmem:[%s5884 + $0x2c] sm:$0x1]
    %v6801 = vld [vmem:[%s5884 + $0x3c] sm:$0x1]
    %v6802 = vld [vmem:[%s5884 + $0x4c] sm:$0x1]
    %v6803 = vld [vmem:[%s5884 + $0x5c] sm:$0x1]
    %v6804 = vld [vmem:[%s5884 + $0x6c] sm:$0x1]
    %v6805 = vld [vmem:[%s5884 + $0x7c] sm:$0x1]
    %v6806 = vld [vmem:[%s5884 + $0x8c] sm:$0x1]
    %v6807 = vld [vmem:[%s5884 + $0x9c] sm:$0x1]
    %v6808 = vld [vmem:[%s5884 + $0xac] sm:$0x1]
    %v6809 = vld [vmem:[%s5884 + $0xbc] sm:$0x1]
    %v6810 = vld [vmem:[%s5884 + $0xcc] sm:$0x1]
    %v6811 = vld [vmem:[%s5884 + $0xdc] sm:$0x1]
    %v6812 = vld [vmem:[%s5884 + $0xec] sm:$0x1]
    %v6813 = vld [vmem:[%s5884 + $0xfc] sm:$0x1]
    %v6814 = vld [vmem:[%s5884 + $0x12c] sm:$0x1]
    %v6815 = vld [vmem:[%s5884 + $0x13c] sm:$0x1]
    %v6816 = vld [vmem:[%s5884 + $0x14c] sm:$0x1]
    %v6817 = vld [vmem:[%s5884 + $0x15c] sm:$0x1]
    %v6818 = vld [vmem:[%s5884 + $0x16c] sm:$0x1]
    %v6819 = vld [vmem:[%s5884 + $0x17c] sm:$0x1]
    %v6820 = vld [vmem:[%s5884 + $0x18c] sm:$0x1]
    %v6821 = vld [vmem:[%s5884 + $0x19c] sm:$0x1]
    %v6822 = vld [vmem:[%s5884 + $0x1ac] sm:$0x1]
    %v6823 = vld [vmem:[%s5884 + $0x1bc] sm:$0x1]
    %v6824 = vld [vmem:[%s5884 + $0x1cc] sm:$0x1]
    %v6825 = vld [vmem:[%s5884 + $0x1dc] sm:$0x1]
    %v6826 = vld [vmem:[%s5884 + $0x1ec] sm:$0x1]
    %v6827 = vld [vmem:[%s5884 + $0x1fc] sm:$0x1]
    %v6828 = vld [vmem:[%s5884 + $0x20c] sm:$0x1]
    %v6829 = vld [vmem:[%s5884 + $0x21c] sm:$0x1]
    %v6830 = vlaneseq
    %v6831 = vshrl.u32 %v6830, 7
    %v6832 = vsub.s32 2, %v6831
    %v6833 = vrot.slane %v6156, %v6832
    %v6835 = vunpack.c.l.b16 %v6833
    %v6836 = vpack.c.b16 %v6835, %v6835
    %v6838 = vmul.bf16 %v6367, %v6836
    %v6839 = vmul.bf16 %v6368, %v6836
    %v6840 = vmul.bf16 %v6798, %v6836
    %v6841 = vmul.bf16 %v6370, %v6836
    %v6842 = vmul.bf16 %v6371, %v6836
    %v6843 = vmul.bf16 %v6799, %v6836
    %v6844 = vmul.bf16 %v6373, %v6836
    %v6845 = vmul.bf16 %v6374, %v6836
    %v6846 = vmul.bf16 %v6800, %v6836
    %v6847 = vmul.bf16 %v6376, %v6836
    %v6848 = vmul.bf16 %v6377, %v6836
    %v6849 = vmul.bf16 %v6801, %v6836
    %v6850 = vmul.bf16 %v6379, %v6836
    %v6851 = vmul.bf16 %v6380, %v6836
    %v6852 = vmul.bf16 %v6802, %v6836
    %v6853 = vmul.bf16 %v6382, %v6836
    %v6854 = vmul.bf16 %v6383, %v6836
    %v6855 = vmul.bf16 %v6803, %v6836
    %v6856 = vmul.bf16 %v6385, %v6836
    %v6857 = vmul.bf16 %v6386, %v6836
    %v6858 = vmul.bf16 %v6804, %v6836
    %v6859 = vmul.bf16 %v6388, %v6836
    %v6860 = vmul.bf16 %v6389, %v6836
    %v6861 = vmul.bf16 %v6805, %v6836
    %v6862 = vmul.bf16 %v6391, %v6836
    %v6863 = vmul.bf16 %v6392, %v6836
    %v6864 = vmul.bf16 %v6806, %v6836
    %v6865 = vmul.bf16 %v6394, %v6836
    %v6866 = vmul.bf16 %v6395, %v6836
    %v6867 = vmul.bf16 %v6807, %v6836
    %v6868 = vmul.bf16 %v6397, %v6836
    %v6869 = vmul.bf16 %v6398, %v6836
    %v6870 = vmul.bf16 %v6808, %v6836
    %v6871 = vmul.bf16 %v6400, %v6836
    %v6872 = vmul.bf16 %v6401, %v6836
    %v6873 = vmul.bf16 %v6809, %v6836
    %v6874 = vmul.bf16 %v6403, %v6836
    %v6875 = vmul.bf16 %v6404, %v6836
    %v6876 = vmul.bf16 %v6810, %v6836
    %v6877 = vmul.bf16 %v6406, %v6836
    %v6878 = vmul.bf16 %v6407, %v6836
    %v6879 = vmul.bf16 %v6811, %v6836
    %v6880 = vmul.bf16 %v6409, %v6836
    %v6881 = vmul.bf16 %v6410, %v6836
    %v6882 = vmul.bf16 %v6812, %v6836
    %v6883 = vmul.bf16 %v6412, %v6836
    %v6884 = vmul.bf16 %v6413, %v6836
    %v6885 = vmul.bf16 %v6813, %v6836
    %v6886 = vmul.bf16 %v6415, %v6836
    %v6887 = vmul.bf16 %v6416, %v6836
    %v6888 = vmul.bf16 %v6814, %v6836
    %v6889 = vmul.bf16 %v6418, %v6836
    %v6890 = vmul.bf16 %v6419, %v6836
    %v6891 = vmul.bf16 %v6815, %v6836
    %v6892 = vmul.bf16 %v6421, %v6836
    %v6893 = vmul.bf16 %v6422, %v6836
    %v6894 = vmul.bf16 %v6816, %v6836
    %v6895 = vmul.bf16 %v6424, %v6836
    %v6896 = vmul.bf16 %v6425, %v6836
    %v6897 = vmul.bf16 %v6817, %v6836
    %v6898 = vmul.bf16 %v6427, %v6836
    %v6899 = vmul.bf16 %v6428, %v6836
    %v6900 = vmul.bf16 %v6818, %v6836
    %v6901 = vmul.bf16 %v6430, %v6836
    %v6902 = vmul.bf16 %v6431, %v6836
    %v6903 = vmul.bf16 %v6819, %v6836
    %v6904 = vmul.bf16 %v6433, %v6836
    %v6905 = vmul.bf16 %v6434, %v6836
    %v6906 = vmul.bf16 %v6820, %v6836
    %v6907 = vmul.bf16 %v6436, %v6836
    %v6908 = vmul.bf16 %v6437, %v6836
    %v6909 = vmul.bf16 %v6821, %v6836
    %v6910 = vmul.bf16 %v6439, %v6836
    %v6911 = vmul.bf16 %v6440, %v6836
    %v6912 = vmul.bf16 %v6822, %v6836
    %v6913 = vmul.bf16 %v6442, %v6836
    %v6914 = vmul.bf16 %v6443, %v6836
    %v6915 = vmul.bf16 %v6823, %v6836
    %v6916 = vmul.bf16 %v6445, %v6836
    %v6917 = vmul.bf16 %v6446, %v6836
    %v6918 = vmul.bf16 %v6824, %v6836
    %v6919 = vmul.bf16 %v6448, %v6836
    %v6920 = vmul.bf16 %v6449, %v6836
    %v6921 = vmul.bf16 %v6825, %v6836
    %v6922 = vmul.bf16 %v6451, %v6836
    %v6923 = vmul.bf16 %v6452, %v6836
    %v6924 = vmul.bf16 %v6826, %v6836
    %v6925 = vmul.bf16 %v6454, %v6836
    %v6926 = vmul.bf16 %v6455, %v6836
    %v6927 = vmul.bf16 %v6827, %v6836
    %v6928 = vmul.bf16 %v6457, %v6836
    %v6929 = vmul.bf16 %v6458, %v6836
    %v6930 = vmul.bf16 %v6828, %v6836
    %v6931 = vmul.bf16 %v6460, %v6836
    %v6932 = vmul.bf16 %v6461, %v6836
    %v6933 = vmul.bf16 %v6829, %v6836
    %v6934 = vadd.bf16 %v6270, %v6838
    %v6935 = vadd.bf16 %v6271, %v6839
    %v6936 = vadd.bf16 %v6272, %v6840
    %v6937 = vadd.bf16 %v6273, %v6841
    %v6938 = vadd.bf16 %v6274, %v6842
    %v6939 = vadd.bf16 %v6275, %v6843
    %v6940 = vadd.bf16 %v6276, %v6844
    %v6941 = vadd.bf16 %v6277, %v6845
    %v6942 = vadd.bf16 %v6278, %v6846
    %v6943 = vadd.bf16 %v6279, %v6847
    %v6944 = vadd.bf16 %v6280, %v6848
    %v6945 = vadd.bf16 %v6281, %v6849
    %v6946 = vadd.bf16 %v6282, %v6850
    %v6947 = vadd.bf16 %v6283, %v6851
    %v6948 = vadd.bf16 %v6284, %v6852
    %v6949 = vadd.bf16 %v6285, %v6853
    %v6950 = vadd.bf16 %v6286, %v6854
    %v6951 = vadd.bf16 %v6287, %v6855
    %v6952 = vadd.bf16 %v6288, %v6856
    %v6953 = vadd.bf16 %v6289, %v6857
    %v6954 = vadd.bf16 %v6290, %v6858
    %v6955 = vadd.bf16 %v6291, %v6859
    %v6956 = vadd.bf16 %v6292, %v6860
    %v6957 = vadd.bf16 %v6293, %v6861
    %v6958 = vadd.bf16 %v6294, %v6862
    %v6959 = vadd.bf16 %v6295, %v6863
    %v6960 = vadd.bf16 %v6296, %v6864
    %v6961 = vadd.bf16 %v6297, %v6865
    %v6962 = vadd.bf16 %v6298, %v6866
    %v6963 = vadd.bf16 %v6299, %v6867
    %v6964 = vadd.bf16 %v6300, %v6868
    %v6965 = vadd.bf16 %v6301, %v6869
    %v6966 = vadd.bf16 %v6302, %v6870
    %v6967 = vadd.bf16 %v6303, %v6871
    %v6968 = vadd.bf16 %v6304, %v6872
    %v6969 = vadd.bf16 %v6305, %v6873
    %v6970 = vadd.bf16 %v6306, %v6874
    %v6971 = vadd.bf16 %v6307, %v6875
    %v6972 = vadd.bf16 %v6308, %v6876
    %v6973 = vadd.bf16 %v6309, %v6877
    %v6974 = vadd.bf16 %v6310, %v6878
    %v6975 = vadd.bf16 %v6311, %v6879
    %v6976 = vadd.bf16 %v6312, %v6880
    %v6977 = vadd.bf16 %v6313, %v6881
    %v6978 = vadd.bf16 %v6314, %v6882
    %v6979 = vadd.bf16 %v6315, %v6883
    %v6980 = vadd.bf16 %v6316, %v6884
    %v6981 = vadd.bf16 %v6317, %v6885
    %v6982 = vadd.bf16 %v6318, %v6886
    %v6983 = vadd.bf16 %v6319, %v6887
    %v6984 = vadd.bf16 %v6320, %v6888
    %v6985 = vadd.bf16 %v6321, %v6889
    %v6986 = vadd.bf16 %v6322, %v6890
    %v6987 = vadd.bf16 %v6323, %v6891
    %v6988 = vadd.bf16 %v6324, %v6892
    %v6989 = vadd.bf16 %v6325, %v6893
    %v6990 = vadd.bf16 %v6326, %v6894
    %v6991 = vadd.bf16 %v6327, %v6895
    %v6992 = vadd.bf16 %v6328, %v6896
    %v6993 = vadd.bf16 %v6329, %v6897
    %v6994 = vadd.bf16 %v6330, %v6898
    %v6995 = vadd.bf16 %v6331, %v6899
    %v6996 = vadd.bf16 %v6332, %v6900
    %v6997 = vadd.bf16 %v6333, %v6901
    %v6998 = vadd.bf16 %v6334, %v6902
    %v6999 = vadd.bf16 %v6335, %v6903
    %v7000 = vadd.bf16 %v6336, %v6904
    %v7001 = vadd.bf16 %v6337, %v6905
    %v7002 = vadd.bf16 %v6338, %v6906
    %v7003 = vadd.bf16 %v6339, %v6907
    %v7004 = vadd.bf16 %v6340, %v6908
    %v7005 = vadd.bf16 %v6341, %v6909
    %v7006 = vadd.bf16 %v6342, %v6910
    %v7007 = vadd.bf16 %v6343, %v6911
    %v7008 = vadd.bf16 %v6344, %v6912
    %v7009 = vadd.bf16 %v6345, %v6913
    %v7010 = vadd.bf16 %v6346, %v6914
    %v7011 = vadd.bf16 %v6347, %v6915
    %v7012 = vadd.bf16 %v6348, %v6916
    %v7013 = vadd.bf16 %v6349, %v6917
    %v7014 = vadd.bf16 %v6350, %v6918
    %v7015 = vadd.bf16 %v6351, %v6919
    %v7016 = vadd.bf16 %v6352, %v6920
    %v7017 = vadd.bf16 %v6353, %v6921
    %v7018 = vadd.bf16 %v6354, %v6922
    %v7019 = vadd.bf16 %v6355, %v6923
    %v7020 = vadd.bf16 %v6356, %v6924
    %v7021 = vadd.bf16 %v6357, %v6925
    %v7022 = vadd.bf16 %v6358, %v6926
    %v7023 = vadd.bf16 %v6359, %v6927
    %v7024 = vadd.bf16 %v6360, %v6928
    %v7025 = vadd.bf16 %v6361, %v6929
    %v7026 = vadd.bf16 %v6362, %v6930
    %v7027 = vadd.bf16 %v6363, %v6931
    %v7028 = vadd.bf16 %v6364, %v6932
    %v7029 = vadd.bf16 %v6365, %v6933
    %s7030 = scalar_lea.vmem [#allocation3], 32
    %v7031 = vld [vmem:[%s7030] sm:$0x8]
    %v7032 = vld [vmem:[%s7030 + $0x4] sm:$0xf]
    %v7033 = vld [vmem:[%s7030 + $0x8] sm:$0xf]
    %v7034 = vld [vmem:[%s7030 + $0x10] sm:$0x8]
    %v7035 = vld [vmem:[%s7030 + $0x14] sm:$0xf]
    %v7036 = vld [vmem:[%s7030 + $0x18] sm:$0xf]
    %v7037 = vld [vmem:[%s7030 + $0x20] sm:$0x8]
    %v7038 = vld [vmem:[%s7030 + $0x24] sm:$0xf]
    %v7039 = vld [vmem:[%s7030 + $0x28] sm:$0xf]
    %v7040 = vld [vmem:[%s7030 + $0x30] sm:$0x8]
    %v7041 = vld [vmem:[%s7030 + $0x34] sm:$0xf]
    %v7042 = vld [vmem:[%s7030 + $0x38] sm:$0xf]
    %v7043 = vld [vmem:[%s7030 + $0x40] sm:$0x8]
    %v7044 = vld [vmem:[%s7030 + $0x44] sm:$0xf]
    %v7045 = vld [vmem:[%s7030 + $0x48] sm:$0xf]
    %v7046 = vld [vmem:[%s7030 + $0x50] sm:$0x8]
    %v7047 = vld [vmem:[%s7030 + $0x54] sm:$0xf]
    %v7048 = vld [vmem:[%s7030 + $0x58] sm:$0xf]
    %v7049 = vld [vmem:[%s7030 + $0x60] sm:$0x8]
    %v7050 = vld [vmem:[%s7030 + $0x64] sm:$0xf]
    %v7051 = vld [vmem:[%s7030 + $0x68] sm:$0xf]
    %v7052 = vld [vmem:[%s7030 + $0x70] sm:$0x8]
    %v7053 = vld [vmem:[%s7030 + $0x74] sm:$0xf]
    %v7054 = vld [vmem:[%s7030 + $0x78] sm:$0xf]
    %v7055 = vld [vmem:[%s7030 + $0x80] sm:$0x8]
    %v7056 = vld [vmem:[%s7030 + $0x84] sm:$0xf]
    %v7057 = vld [vmem:[%s7030 + $0x88] sm:$0xf]
    %v7058 = vld [vmem:[%s7030 + $0x90] sm:$0x8]
    %v7059 = vld [vmem:[%s7030 + $0x94] sm:$0xf]
    %v7060 = vld [vmem:[%s7030 + $0x98] sm:$0xf]
    %v7061 = vld [vmem:[%s7030 + $0xa0] sm:$0x8]
    %v7062 = vld [vmem:[%s7030 + $0xa4] sm:$0xf]
    %v7063 = vld [vmem:[%s7030 + $0xa8] sm:$0xf]
    %v7064 = vld [vmem:[%s7030 + $0xb0] sm:$0x8]
    %v7065 = vld [vmem:[%s7030 + $0xb4] sm:$0xf]
    %v7066 = vld [vmem:[%s7030 + $0xb8] sm:$0xf]
    %v7067 = vld [vmem:[%s7030 + $0xc0] sm:$0x8]
    %v7068 = vld [vmem:[%s7030 + $0xc4] sm:$0xf]
    %v7069 = vld [vmem:[%s7030 + $0xc8] sm:$0xf]
    %v7070 = vld [vmem:[%s7030 + $0xd0] sm:$0x8]
    %v7071 = vld [vmem:[%s7030 + $0xd4] sm:$0xf]
    %v7072 = vld [vmem:[%s7030 + $0xd8] sm:$0xf]
    %v7073 = vld [vmem:[%s7030 + $0xe0] sm:$0x8]
    %v7074 = vld [vmem:[%s7030 + $0xe4] sm:$0xf]
    %v7075 = vld [vmem:[%s7030 + $0xe8] sm:$0xf]
    %v7076 = vld [vmem:[%s7030 + $0xf0] sm:$0x8]
    %v7077 = vld [vmem:[%s7030 + $0xf4] sm:$0xf]
    %v7078 = vld [vmem:[%s7030 + $0xf8] sm:$0xf]
    %v7079 = vld [vmem:[%s7030 + $0x120] sm:$0x8]
    %v7080 = vld [vmem:[%s7030 + $0x124] sm:$0xf]
    %v7081 = vld [vmem:[%s7030 + $0x128] sm:$0xf]
    %v7082 = vld [vmem:[%s7030 + $0x130] sm:$0x8]
    %v7083 = vld [vmem:[%s7030 + $0x134] sm:$0xf]
    %v7084 = vld [vmem:[%s7030 + $0x138] sm:$0xf]
    %v7085 = vld [vmem:[%s7030 + $0x140] sm:$0x8]
    %v7086 = vld [vmem:[%s7030 + $0x144] sm:$0xf]
    %v7087 = vld [vmem:[%s7030 + $0x148] sm:$0xf]
    %v7088 = vld [vmem:[%s7030 + $0x150] sm:$0x8]
    %v7089 = vld [vmem:[%s7030 + $0x154] sm:$0xf]
    %v7090 = vld [vmem:[%s7030 + $0x158] sm:$0xf]
    %v7091 = vld [vmem:[%s7030 + $0x160] sm:$0x8]
    %v7092 = vld [vmem:[%s7030 + $0x164] sm:$0xf]
    %v7093 = vld [vmem:[%s7030 + $0x168] sm:$0xf]
    %v7094 = vld [vmem:[%s7030 + $0x170] sm:$0x8]
    %v7095 = vld [vmem:[%s7030 + $0x174] sm:$0xf]
    %v7096 = vld [vmem:[%s7030 + $0x178] sm:$0xf]
    %v7097 = vld [vmem:[%s7030 + $0x180] sm:$0x8]
    %v7098 = vld [vmem:[%s7030 + $0x184] sm:$0xf]
    %v7099 = vld [vmem:[%s7030 + $0x188] sm:$0xf]
    %v7100 = vld [vmem:[%s7030 + $0x190] sm:$0x8]
    %v7101 = vld [vmem:[%s7030 + $0x194] sm:$0xf]
    %v7102 = vld [vmem:[%s7030 + $0x198] sm:$0xf]
    %v7103 = vld [vmem:[%s7030 + $0x1a0] sm:$0x8]
    %v7104 = vld [vmem:[%s7030 + $0x1a4] sm:$0xf]
    %v7105 = vld [vmem:[%s7030 + $0x1a8] sm:$0xf]
    %v7106 = vld [vmem:[%s7030 + $0x1b0] sm:$0x8]
    %v7107 = vld [vmem:[%s7030 + $0x1b4] sm:$0xf]
    %v7108 = vld [vmem:[%s7030 + $0x1b8] sm:$0xf]
    %v7109 = vld [vmem:[%s7030 + $0x1c0] sm:$0x8]
    %v7110 = vld [vmem:[%s7030 + $0x1c4] sm:$0xf]
    %v7111 = vld [vmem:[%s7030 + $0x1c8] sm:$0xf]
    %v7112 = vld [vmem:[%s7030 + $0x1d0] sm:$0x8]
    %v7113 = vld [vmem:[%s7030 + $0x1d4] sm:$0xf]
    %v7114 = vld [vmem:[%s7030 + $0x1d8] sm:$0xf]
    %v7115 = vld [vmem:[%s7030 + $0x1e0] sm:$0x8]
    %v7116 = vld [vmem:[%s7030 + $0x1e4] sm:$0xf]
    %v7117 = vld [vmem:[%s7030 + $0x1e8] sm:$0xf]
    %v7118 = vld [vmem:[%s7030 + $0x1f0] sm:$0x8]
    %v7119 = vld [vmem:[%s7030 + $0x1f4] sm:$0xf]
    %v7120 = vld [vmem:[%s7030 + $0x1f8] sm:$0xf]
    %v7121 = vld [vmem:[%s7030 + $0x200] sm:$0x8]
    %v7122 = vld [vmem:[%s7030 + $0x204] sm:$0xf]
    %v7123 = vld [vmem:[%s7030 + $0x208] sm:$0xf]
    %v7124 = vld [vmem:[%s7030 + $0x210] sm:$0x8]
    %v7125 = vld [vmem:[%s7030 + $0x214] sm:$0xf]
    %v7126 = vld [vmem:[%s7030 + $0x218] sm:$0xf]
    %v7127 = vlaneseq
    %v7128 = vshrl.u32 %v7127, 7
    %v7129 = vsub.s32 3, %v7128
    %v7130 = vrot.slane %v6049, %v7129
    %v7132 = vunpack.c.l.b16 %v7130
    %v7133 = vpack.c.b16 %v7132, %v7132
    %v7135 = vmul.bf16 %v7031, %v7133
    %v7136 = vmul.bf16 %v7032, %v7133
    %v7137 = vmul.bf16 %v7033, %v7133
    %v7138 = vmul.bf16 %v7034, %v7133
    %v7139 = vmul.bf16 %v7035, %v7133
    %v7140 = vmul.bf16 %v7036, %v7133
    %v7141 = vmul.bf16 %v7037, %v7133
    %v7142 = vmul.bf16 %v7038, %v7133
    %v7143 = vmul.bf16 %v7039, %v7133
    %v7144 = vmul.bf16 %v7040, %v7133
    %v7145 = vmul.bf16 %v7041, %v7133
    %v7146 = vmul.bf16 %v7042, %v7133
    %v7147 = vmul.bf16 %v7043, %v7133
    %v7148 = vmul.bf16 %v7044, %v7133
    %v7149 = vmul.bf16 %v7045, %v7133
    %v7150 = vmul.bf16 %v7046, %v7133
    %v7151 = vmul.bf16 %v7047, %v7133
    %v7152 = vmul.bf16 %v7048, %v7133
    %v7153 = vmul.bf16 %v7049, %v7133
    %v7154 = vmul.bf16 %v7050, %v7133
    %v7155 = vmul.bf16 %v7051, %v7133
    %v7156 = vmul.bf16 %v7052, %v7133
    %v7157 = vmul.bf16 %v7053, %v7133
    %v7158 = vmul.bf16 %v7054, %v7133
    %v7159 = vmul.bf16 %v7055, %v7133
    %v7160 = vmul.bf16 %v7056, %v7133
    %v7161 = vmul.bf16 %v7057, %v7133
    %v7162 = vmul.bf16 %v7058, %v7133
    %v7163 = vmul.bf16 %v7059, %v7133
    %v7164 = vmul.bf16 %v7060, %v7133
    %v7165 = vmul.bf16 %v7061, %v7133
    %v7166 = vmul.bf16 %v7062, %v7133
    %v7167 = vmul.bf16 %v7063, %v7133
    %v7168 = vmul.bf16 %v7064, %v7133
    %v7169 = vmul.bf16 %v7065, %v7133
    %v7170 = vmul.bf16 %v7066, %v7133
    %v7171 = vmul.bf16 %v7067, %v7133
    %v7172 = vmul.bf16 %v7068, %v7133
    %v7173 = vmul.bf16 %v7069, %v7133
    %v7174 = vmul.bf16 %v7070, %v7133
    %v7175 = vmul.bf16 %v7071, %v7133
    %v7176 = vmul.bf16 %v7072, %v7133
    %v7177 = vmul.bf16 %v7073, %v7133
    %v7178 = vmul.bf16 %v7074, %v7133
    %v7179 = vmul.bf16 %v7075, %v7133
    %v7180 = vmul.bf16 %v7076, %v7133
    %v7181 = vmul.bf16 %v7077, %v7133
    %v7182 = vmul.bf16 %v7078, %v7133
    %v7183 = vmul.bf16 %v7079, %v7133
    %v7184 = vmul.bf16 %v7080, %v7133
    %v7185 = vmul.bf16 %v7081, %v7133
    %v7186 = vmul.bf16 %v7082, %v7133
    %v7187 = vmul.bf16 %v7083, %v7133
    %v7188 = vmul.bf16 %v7084, %v7133
    %v7189 = vmul.bf16 %v7085, %v7133
    %v7190 = vmul.bf16 %v7086, %v7133
    %v7191 = vmul.bf16 %v7087, %v7133
    %v7192 = vmul.bf16 %v7088, %v7133
    %v7193 = vmul.bf16 %v7089, %v7133
    %v7194 = vmul.bf16 %v7090, %v7133
    %v7195 = vmul.bf16 %v7091, %v7133
    %v7196 = vmul.bf16 %v7092, %v7133
    %v7197 = vmul.bf16 %v7093, %v7133
    %v7198 = vmul.bf16 %v7094, %v7133
    %v7199 = vmul.bf16 %v7095, %v7133
    %v7200 = vmul.bf16 %v7096, %v7133
    %v7201 = vmul.bf16 %v7097, %v7133
    %v7202 = vmul.bf16 %v7098, %v7133
    %v7203 = vmul.bf16 %v7099, %v7133
    %v7204 = vmul.bf16 %v7100, %v7133
    %v7205 = vmul.bf16 %v7101, %v7133
    %v7206 = vmul.bf16 %v7102, %v7133
    %v7207 = vmul.bf16 %v7103, %v7133
    %v7208 = vmul.bf16 %v7104, %v7133
    %v7209 = vmul.bf16 %v7105, %v7133
    %v7210 = vmul.bf16 %v7106, %v7133
    %v7211 = vmul.bf16 %v7107, %v7133
    %v7212 = vmul.bf16 %v7108, %v7133
    %v7213 = vmul.bf16 %v7109, %v7133
    %v7214 = vmul.bf16 %v7110, %v7133
    %v7215 = vmul.bf16 %v7111, %v7133
    %v7216 = vmul.bf16 %v7112, %v7133
    %v7217 = vmul.bf16 %v7113, %v7133
    %v7218 = vmul.bf16 %v7114, %v7133
    %v7219 = vmul.bf16 %v7115, %v7133
    %v7220 = vmul.bf16 %v7116, %v7133
    %v7221 = vmul.bf16 %v7117, %v7133
    %v7222 = vmul.bf16 %v7118, %v7133
    %v7223 = vmul.bf16 %v7119, %v7133
    %v7224 = vmul.bf16 %v7120, %v7133
    %v7225 = vmul.bf16 %v7121, %v7133
    %v7226 = vmul.bf16 %v7122, %v7133
    %v7227 = vmul.bf16 %v7123, %v7133
    %v7228 = vmul.bf16 %v7124, %v7133
    %v7229 = vmul.bf16 %v7125, %v7133
    %v7230 = vmul.bf16 %v7126, %v7133
    %v7231 = vadd.bf16 %v6566, %v7135
    %v7232 = vadd.bf16 %v6567, %v7136
    %v7233 = vadd.bf16 %v6568, %v7137
    %v7234 = vadd.bf16 %v6569, %v7138
    %v7235 = vadd.bf16 %v6570, %v7139
    %v7236 = vadd.bf16 %v6571, %v7140
    %v7237 = vadd.bf16 %v6572, %v7141
    %v7238 = vadd.bf16 %v6573, %v7142
    %v7239 = vadd.bf16 %v6574, %v7143
    %v7240 = vadd.bf16 %v6575, %v7144
    %v7241 = vadd.bf16 %v6576, %v7145
    %v7242 = vadd.bf16 %v6577, %v7146
    %v7243 = vadd.bf16 %v6578, %v7147
    %v7244 = vadd.bf16 %v6579, %v7148
    %v7245 = vadd.bf16 %v6580, %v7149
    %v7246 = vadd.bf16 %v6581, %v7150
    %v7247 = vadd.bf16 %v6582, %v7151
    %v7248 = vadd.bf16 %v6583, %v7152
    %v7249 = vadd.bf16 %v6584, %v7153
    %v7250 = vadd.bf16 %v6585, %v7154
    %v7251 = vadd.bf16 %v6586, %v7155
    %v7252 = vadd.bf16 %v6587, %v7156
    %v7253 = vadd.bf16 %v6588, %v7157
    %v7254 = vadd.bf16 %v6589, %v7158
    %v7255 = vadd.bf16 %v6590, %v7159
    %v7256 = vadd.bf16 %v6591, %v7160
    %v7257 = vadd.bf16 %v6592, %v7161
    %v7258 = vadd.bf16 %v6593, %v7162
    %v7259 = vadd.bf16 %v6594, %v7163
    %v7260 = vadd.bf16 %v6595, %v7164
    %v7261 = vadd.bf16 %v6596, %v7165
    %v7262 = vadd.bf16 %v6597, %v7166
    %v7263 = vadd.bf16 %v6598, %v7167
    %v7264 = vadd.bf16 %v6599, %v7168
    %v7265 = vadd.bf16 %v6600, %v7169
    %v7266 = vadd.bf16 %v6601, %v7170
    %v7267 = vadd.bf16 %v6602, %v7171
    %v7268 = vadd.bf16 %v6603, %v7172
    %v7269 = vadd.bf16 %v6604, %v7173
    %v7270 = vadd.bf16 %v6605, %v7174
    %v7271 = vadd.bf16 %v6606, %v7175
    %v7272 = vadd.bf16 %v6607, %v7176
    %v7273 = vadd.bf16 %v6608, %v7177
    %v7274 = vadd.bf16 %v6609, %v7178
    %v7275 = vadd.bf16 %v6610, %v7179
    %v7276 = vadd.bf16 %v6611, %v7180
    %v7277 = vadd.bf16 %v6612, %v7181
    %v7278 = vadd.bf16 %v6613, %v7182
    %v7279 = vadd.bf16 %v6614, %v7183
    %v7280 = vadd.bf16 %v6615, %v7184
    %v7281 = vadd.bf16 %v6616, %v7185
    %v7282 = vadd.bf16 %v6617, %v7186
    %v7283 = vadd.bf16 %v6618, %v7187
    %v7284 = vadd.bf16 %v6619, %v7188
    %v7285 = vadd.bf16 %v6620, %v7189
    %v7286 = vadd.bf16 %v6621, %v7190
    %v7287 = vadd.bf16 %v6622, %v7191
    %v7288 = vadd.bf16 %v6623, %v7192
    %v7289 = vadd.bf16 %v6624, %v7193
    %v7290 = vadd.bf16 %v6625, %v7194
    %v7291 = vadd.bf16 %v6626, %v7195
    %v7292 = vadd.bf16 %v6627, %v7196
    %v7293 = vadd.bf16 %v6628, %v7197
    %v7294 = vadd.bf16 %v6629, %v7198
    %v7295 = vadd.bf16 %v6630, %v7199
    %v7296 = vadd.bf16 %v6631, %v7200
    %v7297 = vadd.bf16 %v6632, %v7201
    %v7298 = vadd.bf16 %v6633, %v7202
    %v7299 = vadd.bf16 %v6634, %v7203
    %v7300 = vadd.bf16 %v6635, %v7204
    %v7301 = vadd.bf16 %v6636, %v7205
    %v7302 = vadd.bf16 %v6637, %v7206
    %v7303 = vadd.bf16 %v6638, %v7207
    %v7304 = vadd.bf16 %v6639, %v7208
    %v7305 = vadd.bf16 %v6640, %v7209
    %v7306 = vadd.bf16 %v6641, %v7210
    %v7307 = vadd.bf16 %v6642, %v7211
    %v7308 = vadd.bf16 %v6643, %v7212
    %v7309 = vadd.bf16 %v6644, %v7213
    %v7310 = vadd.bf16 %v6645, %v7214
    %v7311 = vadd.bf16 %v6646, %v7215
    %v7312 = vadd.bf16 %v6647, %v7216
    %v7313 = vadd.bf16 %v6648, %v7217
    %v7314 = vadd.bf16 %v6649, %v7218
    %v7315 = vadd.bf16 %v6650, %v7219
    %v7316 = vadd.bf16 %v6651, %v7220
    %v7317 = vadd.bf16 %v6652, %v7221
    %v7318 = vadd.bf16 %v6653, %v7222
    %v7319 = vadd.bf16 %v6654, %v7223
    %v7320 = vadd.bf16 %v6655, %v7224
    %v7321 = vadd.bf16 %v6656, %v7225
    %v7322 = vadd.bf16 %v6657, %v7226
    %v7323 = vadd.bf16 %v6658, %v7227
    %v7324 = vadd.bf16 %v6659, %v7228
    %v7325 = vadd.bf16 %v6660, %v7229
    %v7326 = vadd.bf16 %v6661, %v7230
    %v7327 = vlaneseq
    %v7328 = vshrl.u32 %v7327, 7
    %v7329 = vsub.s32 3, %v7328
    %v7330 = vrot.slane %v6156, %v7329
    %v7332 = vunpack.c.l.b16 %v7330
    %v7333 = vpack.c.b16 %v7332, %v7332
    %v7335 = vmul.bf16 %v7032, %v7333
    %v7336 = vmul.bf16 %v7033, %v7333
    %v7337 = vmul.bf16 %v7035, %v7333
    %v7338 = vmul.bf16 %v7036, %v7333
    %v7339 = vmul.bf16 %v7038, %v7333
    %v7340 = vmul.bf16 %v7039, %v7333
    %v7341 = vmul.bf16 %v7041, %v7333
    %v7342 = vmul.bf16 %v7042, %v7333
    %v7343 = vmul.bf16 %v7044, %v7333
    %v7344 = vmul.bf16 %v7045, %v7333
    %v7345 = vmul.bf16 %v7047, %v7333
    %v7346 = vmul.bf16 %v7048, %v7333
    %v7347 = vmul.bf16 %v7050, %v7333
    %v7348 = vmul.bf16 %v7051, %v7333
    %v7349 = vmul.bf16 %v7053, %v7333
    %v7350 = vmul.bf16 %v7054, %v7333
    %v7351 = vmul.bf16 %v7056, %v7333
    %v7352 = vmul.bf16 %v7057, %v7333
    %v7353 = vmul.bf16 %v7059, %v7333
    %v7354 = vmul.bf16 %v7060, %v7333
    %v7355 = vmul.bf16 %v7062, %v7333
    %v7356 = vmul.bf16 %v7063, %v7333
    %v7357 = vmul.bf16 %v7065, %v7333
    %v7358 = vmul.bf16 %v7066, %v7333
    %v7359 = vmul.bf16 %v7068, %v7333
    %v7360 = vmul.bf16 %v7069, %v7333
    %v7361 = vmul.bf16 %v7071, %v7333
    %v7362 = vmul.bf16 %v7072, %v7333
    %v7363 = vmul.bf16 %v7074, %v7333
    %v7364 = vmul.bf16 %v7075, %v7333
    %v7365 = vmul.bf16 %v7077, %v7333
    %v7366 = vmul.bf16 %v7078, %v7333
    %v7367 = vmul.bf16 %v7080, %v7333
    %v7368 = vmul.bf16 %v7081, %v7333
    %v7369 = vmul.bf16 %v7083, %v7333
    %v7370 = vmul.bf16 %v7084, %v7333
    %v7371 = vmul.bf16 %v7086, %v7333
    %v7372 = vmul.bf16 %v7087, %v7333
    %v7373 = vmul.bf16 %v7089, %v7333
    %v7374 = vmul.bf16 %v7090, %v7333
    %v7375 = vmul.bf16 %v7092, %v7333
    %v7376 = vmul.bf16 %v7093, %v7333
    %v7377 = vmul.bf16 %v7095, %v7333
    %v7378 = vmul.bf16 %v7096, %v7333
    %v7379 = vmul.bf16 %v7098, %v7333
    %v7380 = vmul.bf16 %v7099, %v7333
    %v7381 = vmul.bf16 %v7101, %v7333
    %v7382 = vmul.bf16 %v7102, %v7333
    %v7383 = vmul.bf16 %v7104, %v7333
    %v7384 = vmul.bf16 %v7105, %v7333
    %v7385 = vmul.bf16 %v7107, %v7333
    %v7386 = vmul.bf16 %v7108, %v7333
    %v7387 = vmul.bf16 %v7110, %v7333
    %v7388 = vmul.bf16 %v7111, %v7333
    %v7389 = vmul.bf16 %v7113, %v7333
    %v7390 = vmul.bf16 %v7114, %v7333
    %v7391 = vmul.bf16 %v7116, %v7333
    %v7392 = vmul.bf16 %v7117, %v7333
    %v7393 = vmul.bf16 %v7119, %v7333
    %v7394 = vmul.bf16 %v7120, %v7333
    %v7395 = vmul.bf16 %v7122, %v7333
    %v7396 = vmul.bf16 %v7123, %v7333
    %v7397 = vmul.bf16 %v7125, %v7333
    %v7398 = vmul.bf16 %v7126, %v7333
    %v7399 = vadd.bf16 %v6734, %v7335
    %v7400 = vadd.bf16 %v6735, %v7336
    %v7401 = vadd.bf16 %v6736, %v7337
    %v7402 = vadd.bf16 %v6737, %v7338
    %v7403 = vadd.bf16 %v6738, %v7339
    %v7404 = vadd.bf16 %v6739, %v7340
    %v7405 = vadd.bf16 %v6740, %v7341
    %v7406 = vadd.bf16 %v6741, %v7342
    %v7407 = vadd.bf16 %v6742, %v7343
    %v7408 = vadd.bf16 %v6743, %v7344
    %v7409 = vadd.bf16 %v6744, %v7345
    %v7410 = vadd.bf16 %v6745, %v7346
    %v7411 = vadd.bf16 %v6746, %v7347
    %v7412 = vadd.bf16 %v6747, %v7348
    %v7413 = vadd.bf16 %v6748, %v7349
    %v7414 = vadd.bf16 %v6749, %v7350
    %v7415 = vadd.bf16 %v6750, %v7351
    %v7416 = vadd.bf16 %v6751, %v7352
    %v7417 = vadd.bf16 %v6752, %v7353
    %v7418 = vadd.bf16 %v6753, %v7354
    %v7419 = vadd.bf16 %v6754, %v7355
    %v7420 = vadd.bf16 %v6755, %v7356
    %v7421 = vadd.bf16 %v6756, %v7357
    %v7422 = vadd.bf16 %v6757, %v7358
    %v7423 = vadd.bf16 %v6758, %v7359
    %v7424 = vadd.bf16 %v6759, %v7360
    %v7425 = vadd.bf16 %v6760, %v7361
    %v7426 = vadd.bf16 %v6761, %v7362
    %v7427 = vadd.bf16 %v6762, %v7363
    %v7428 = vadd.bf16 %v6763, %v7364
    %v7429 = vadd.bf16 %v6764, %v7365
    %v7430 = vadd.bf16 %v6765, %v7366
    %v7431 = vadd.bf16 %v6766, %v7367
    %v7432 = vadd.bf16 %v6767, %v7368
    %v7433 = vadd.bf16 %v6768, %v7369
    %v7434 = vadd.bf16 %v6769, %v7370
    %v7435 = vadd.bf16 %v6770, %v7371
    %v7436 = vadd.bf16 %v6771, %v7372
    %v7437 = vadd.bf16 %v6772, %v7373
    %v7438 = vadd.bf16 %v6773, %v7374
    %v7439 = vadd.bf16 %v6774, %v7375
    %v7440 = vadd.bf16 %v6775, %v7376
    %v7441 = vadd.bf16 %v6776, %v7377
    %v7442 = vadd.bf16 %v6777, %v7378
    %v7443 = vadd.bf16 %v6778, %v7379
    %v7444 = vadd.bf16 %v6779, %v7380
    %v7445 = vadd.bf16 %v6780, %v7381
    %v7446 = vadd.bf16 %v6781, %v7382
    %v7447 = vadd.bf16 %v6782, %v7383
    %v7448 = vadd.bf16 %v6783, %v7384
    %v7449 = vadd.bf16 %v6784, %v7385
    %v7450 = vadd.bf16 %v6785, %v7386
    %v7451 = vadd.bf16 %v6786, %v7387
    %v7452 = vadd.bf16 %v6787, %v7388
    %v7453 = vadd.bf16 %v6788, %v7389
    %v7454 = vadd.bf16 %v6789, %v7390
    %v7455 = vadd.bf16 %v6790, %v7391
    %v7456 = vadd.bf16 %v6791, %v7392
    %v7457 = vadd.bf16 %v6792, %v7393
    %v7458 = vadd.bf16 %v6793, %v7394
    %v7459 = vadd.bf16 %v6794, %v7395
    %v7460 = vadd.bf16 %v6795, %v7396
    %v7461 = vadd.bf16 %v6796, %v7397
    %v7462 = vadd.bf16 %v6797, %v7398
    %v7463 = vld [vmem:[%s7030 + $0xc] sm:$0x1]
    %v7464 = vld [vmem:[%s7030 + $0x1c] sm:$0x1]
    %v7465 = vld [vmem:[%s7030 + $0x2c] sm:$0x1]
    %v7466 = vld [vmem:[%s7030 + $0x3c] sm:$0x1]
    %v7467 = vld [vmem:[%s7030 + $0x4c] sm:$0x1]
    %v7468 = vld [vmem:[%s7030 + $0x5c] sm:$0x1]
    %v7469 = vld [vmem:[%s7030 + $0x6c] sm:$0x1]
    %v7470 = vld [vmem:[%s7030 + $0x7c] sm:$0x1]
    %v7471 = vld [vmem:[%s7030 + $0x8c] sm:$0x1]
    %v7472 = vld [vmem:[%s7030 + $0x9c] sm:$0x1]
    %v7473 = vld [vmem:[%s7030 + $0xac] sm:$0x1]
    %v7474 = vld [vmem:[%s7030 + $0xbc] sm:$0x1]
    %v7475 = vld [vmem:[%s7030 + $0xcc] sm:$0x1]
    %v7476 = vld [vmem:[%s7030 + $0xdc] sm:$0x1]
    %v7477 = vld [vmem:[%s7030 + $0xec] sm:$0x1]
    %v7478 = vld [vmem:[%s7030 + $0xfc] sm:$0x1]
    %v7479 = vld [vmem:[%s7030 + $0x12c] sm:$0x1]
    %v7480 = vld [vmem:[%s7030 + $0x13c] sm:$0x1]
    %v7481 = vld [vmem:[%s7030 + $0x14c] sm:$0x1]
    %v7482 = vld [vmem:[%s7030 + $0x15c] sm:$0x1]
    %v7483 = vld [vmem:[%s7030 + $0x16c] sm:$0x1]
    %v7484 = vld [vmem:[%s7030 + $0x17c] sm:$0x1]
    %v7485 = vld [vmem:[%s7030 + $0x18c] sm:$0x1]
    %v7486 = vld [vmem:[%s7030 + $0x19c] sm:$0x1]
    %v7487 = vld [vmem:[%s7030 + $0x1ac] sm:$0x1]
    %v7488 = vld [vmem:[%s7030 + $0x1bc] sm:$0x1]
    %v7489 = vld [vmem:[%s7030 + $0x1cc] sm:$0x1]
    %v7490 = vld [vmem:[%s7030 + $0x1dc] sm:$0x1]
    %v7491 = vld [vmem:[%s7030 + $0x1ec] sm:$0x1]
    %v7492 = vld [vmem:[%s7030 + $0x1fc] sm:$0x1]
    %v7493 = vld [vmem:[%s7030 + $0x20c] sm:$0x1]
    %v7494 = vld [vmem:[%s7030 + $0x21c] sm:$0x1]
    %v7496 = vpack.i.b16 %v5950, %v5950
    %v7498 = vlaneseq
    %v7499 = vshrl.u32 %v7498, 7
    %v7500 = vsub.s32 0, %v7499
    %v7501 = vrot.slane %v7496, %v7500
    %v7503 = vunpack.c.l.b16 %v7501
    %v7504 = vpack.c.b16 %v7503, %v7503
    %v7506 = vmul.bf16 %v7032, %v7504
    %v7507 = vmul.bf16 %v7033, %v7504
    %v7508 = vmul.bf16 %v7463, %v7504
    %v7509 = vmul.bf16 %v7035, %v7504
    %v7510 = vmul.bf16 %v7036, %v7504
    %v7511 = vmul.bf16 %v7464, %v7504
    %v7512 = vmul.bf16 %v7038, %v7504
    %v7513 = vmul.bf16 %v7039, %v7504
    %v7514 = vmul.bf16 %v7465, %v7504
    %v7515 = vmul.bf16 %v7041, %v7504
    %v7516 = vmul.bf16 %v7042, %v7504
    %v7517 = vmul.bf16 %v7466, %v7504
    %v7518 = vmul.bf16 %v7044, %v7504
    %v7519 = vmul.bf16 %v7045, %v7504
    %v7520 = vmul.bf16 %v7467, %v7504
    %v7521 = vmul.bf16 %v7047, %v7504
    %v7522 = vmul.bf16 %v7048, %v7504
    %v7523 = vmul.bf16 %v7468, %v7504
    %v7524 = vmul.bf16 %v7050, %v7504
    %v7525 = vmul.bf16 %v7051, %v7504
    %v7526 = vmul.bf16 %v7469, %v7504
    %v7527 = vmul.bf16 %v7053, %v7504
    %v7528 = vmul.bf16 %v7054, %v7504
    %v7529 = vmul.bf16 %v7470, %v7504
    %v7530 = vmul.bf16 %v7056, %v7504
    %v7531 = vmul.bf16 %v7057, %v7504
    %v7532 = vmul.bf16 %v7471, %v7504
    %v7533 = vmul.bf16 %v7059, %v7504
    %v7534 = vmul.bf16 %v7060, %v7504
    %v7535 = vmul.bf16 %v7472, %v7504
    %v7536 = vmul.bf16 %v7062, %v7504
    %v7537 = vmul.bf16 %v7063, %v7504
    %v7538 = vmul.bf16 %v7473, %v7504
    %v7539 = vmul.bf16 %v7065, %v7504
    %v7540 = vmul.bf16 %v7066, %v7504
    %v7541 = vmul.bf16 %v7474, %v7504
    %v7542 = vmul.bf16 %v7068, %v7504
    %v7543 = vmul.bf16 %v7069, %v7504
    %v7544 = vmul.bf16 %v7475, %v7504
    %v7545 = vmul.bf16 %v7071, %v7504
    %v7546 = vmul.bf16 %v7072, %v7504
    %v7547 = vmul.bf16 %v7476, %v7504
    %v7548 = vmul.bf16 %v7074, %v7504
    %v7549 = vmul.bf16 %v7075, %v7504
    %v7550 = vmul.bf16 %v7477, %v7504
    %v7551 = vmul.bf16 %v7077, %v7504
    %v7552 = vmul.bf16 %v7078, %v7504
    %v7553 = vmul.bf16 %v7478, %v7504
    %v7554 = vmul.bf16 %v7080, %v7504
    %v7555 = vmul.bf16 %v7081, %v7504
    %v7556 = vmul.bf16 %v7479, %v7504
    %v7557 = vmul.bf16 %v7083, %v7504
    %v7558 = vmul.bf16 %v7084, %v7504
    %v7559 = vmul.bf16 %v7480, %v7504
    %v7560 = vmul.bf16 %v7086, %v7504
    %v7561 = vmul.bf16 %v7087, %v7504
    %v7562 = vmul.bf16 %v7481, %v7504
    %v7563 = vmul.bf16 %v7089, %v7504
    %v7564 = vmul.bf16 %v7090, %v7504
    %v7565 = vmul.bf16 %v7482, %v7504
    %v7566 = vmul.bf16 %v7092, %v7504
    %v7567 = vmul.bf16 %v7093, %v7504
    %v7568 = vmul.bf16 %v7483, %v7504
    %v7569 = vmul.bf16 %v7095, %v7504
    %v7570 = vmul.bf16 %v7096, %v7504
    %v7571 = vmul.bf16 %v7484, %v7504
    %v7572 = vmul.bf16 %v7098, %v7504
    %v7573 = vmul.bf16 %v7099, %v7504
    %v7574 = vmul.bf16 %v7485, %v7504
    %v7575 = vmul.bf16 %v7101, %v7504
    %v7576 = vmul.bf16 %v7102, %v7504
    %v7577 = vmul.bf16 %v7486, %v7504
    %v7578 = vmul.bf16 %v7104, %v7504
    %v7579 = vmul.bf16 %v7105, %v7504
    %v7580 = vmul.bf16 %v7487, %v7504
    %v7581 = vmul.bf16 %v7107, %v7504
    %v7582 = vmul.bf16 %v7108, %v7504
    %v7583 = vmul.bf16 %v7488, %v7504
    %v7584 = vmul.bf16 %v7110, %v7504
    %v7585 = vmul.bf16 %v7111, %v7504
    %v7586 = vmul.bf16 %v7489, %v7504
    %v7587 = vmul.bf16 %v7113, %v7504
    %v7588 = vmul.bf16 %v7114, %v7504
    %v7589 = vmul.bf16 %v7490, %v7504
    %v7590 = vmul.bf16 %v7116, %v7504
    %v7591 = vmul.bf16 %v7117, %v7504
    %v7592 = vmul.bf16 %v7491, %v7504
    %v7593 = vmul.bf16 %v7119, %v7504
    %v7594 = vmul.bf16 %v7120, %v7504
    %v7595 = vmul.bf16 %v7492, %v7504
    %v7596 = vmul.bf16 %v7122, %v7504
    %v7597 = vmul.bf16 %v7123, %v7504
    %v7598 = vmul.bf16 %v7493, %v7504
    %v7599 = vmul.bf16 %v7125, %v7504
    %v7600 = vmul.bf16 %v7126, %v7504
    %v7601 = vmul.bf16 %v7494, %v7504
    %v7602 = vadd.bf16 %v6934, %v7506
    %v7603 = vadd.bf16 %v6935, %v7507
    %v7604 = vadd.bf16 %v6936, %v7508
    %v7605 = vadd.bf16 %v6937, %v7509
    %v7606 = vadd.bf16 %v6938, %v7510
    %v7607 = vadd.bf16 %v6939, %v7511
    %v7608 = vadd.bf16 %v6940, %v7512
    %v7609 = vadd.bf16 %v6941, %v7513
    %v7610 = vadd.bf16 %v6942, %v7514
    %v7611 = vadd.bf16 %v6943, %v7515
    %v7612 = vadd.bf16 %v6944, %v7516
    %v7613 = vadd.bf16 %v6945, %v7517
    %v7614 = vadd.bf16 %v6946, %v7518
    %v7615 = vadd.bf16 %v6947, %v7519
    %v7616 = vadd.bf16 %v6948, %v7520
    %v7617 = vadd.bf16 %v6949, %v7521
    %v7618 = vadd.bf16 %v6950, %v7522
    %v7619 = vadd.bf16 %v6951, %v7523
    %v7620 = vadd.bf16 %v6952, %v7524
    %v7621 = vadd.bf16 %v6953, %v7525
    %v7622 = vadd.bf16 %v6954, %v7526
    %v7623 = vadd.bf16 %v6955, %v7527
    %v7624 = vadd.bf16 %v6956, %v7528
    %v7625 = vadd.bf16 %v6957, %v7529
    %v7626 = vadd.bf16 %v6958, %v7530
    %v7627 = vadd.bf16 %v6959, %v7531
    %v7628 = vadd.bf16 %v6960, %v7532
    %v7629 = vadd.bf16 %v6961, %v7533
    %v7630 = vadd.bf16 %v6962, %v7534
    %v7631 = vadd.bf16 %v6963, %v7535
    %v7632 = vadd.bf16 %v6964, %v7536
    %v7633 = vadd.bf16 %v6965, %v7537
    %v7634 = vadd.bf16 %v6966, %v7538
    %v7635 = vadd.bf16 %v6967, %v7539
    %v7636 = vadd.bf16 %v6968, %v7540
    %v7637 = vadd.bf16 %v6969, %v7541
    %v7638 = vadd.bf16 %v6970, %v7542
    %v7639 = vadd.bf16 %v6971, %v7543
    %v7640 = vadd.bf16 %v6972, %v7544
    %v7641 = vadd.bf16 %v6973, %v7545
    %v7642 = vadd.bf16 %v6974, %v7546
    %v7643 = vadd.bf16 %v6975, %v7547
    %v7644 = vadd.bf16 %v6976, %v7548
    %v7645 = vadd.bf16 %v6977, %v7549
    %v7646 = vadd.bf16 %v6978, %v7550
    %v7647 = vadd.bf16 %v6979, %v7551
    %v7648 = vadd.bf16 %v6980, %v7552
    %v7649 = vadd.bf16 %v6981, %v7553
    %v7650 = vadd.bf16 %v6982, %v7554
    %v7651 = vadd.bf16 %v6983, %v7555
    %v7652 = vadd.bf16 %v6984, %v7556
    %v7653 = vadd.bf16 %v6985, %v7557
    %v7654 = vadd.bf16 %v6986, %v7558
    %v7655 = vadd.bf16 %v6987, %v7559
    %v7656 = vadd.bf16 %v6988, %v7560
    %v7657 = vadd.bf16 %v6989, %v7561
    %v7658 = vadd.bf16 %v6990, %v7562
    %v7659 = vadd.bf16 %v6991, %v7563
    %v7660 = vadd.bf16 %v6992, %v7564
    %v7661 = vadd.bf16 %v6993, %v7565
    %v7662 = vadd.bf16 %v6994, %v7566
    %v7663 = vadd.bf16 %v6995, %v7567
    %v7664 = vadd.bf16 %v6996, %v7568
    %v7665 = vadd.bf16 %v6997, %v7569
    %v7666 = vadd.bf16 %v6998, %v7570
    %v7667 = vadd.bf16 %v6999, %v7571
    %v7668 = vadd.bf16 %v7000, %v7572
    %v7669 = vadd.bf16 %v7001, %v7573
    %v7670 = vadd.bf16 %v7002, %v7574
    %v7671 = vadd.bf16 %v7003, %v7575
    %v7672 = vadd.bf16 %v7004, %v7576
    %v7673 = vadd.bf16 %v7005, %v7577
    %v7674 = vadd.bf16 %v7006, %v7578
    %v7675 = vadd.bf16 %v7007, %v7579
    %v7676 = vadd.bf16 %v7008, %v7580
    %v7677 = vadd.bf16 %v7009, %v7581
    %v7678 = vadd.bf16 %v7010, %v7582
    %v7679 = vadd.bf16 %v7011, %v7583
    %v7680 = vadd.bf16 %v7012, %v7584
    %v7681 = vadd.bf16 %v7013, %v7585
    %v7682 = vadd.bf16 %v7014, %v7586
    %v7683 = vadd.bf16 %v7015, %v7587
    %v7684 = vadd.bf16 %v7016, %v7588
    %v7685 = vadd.bf16 %v7017, %v7589
    %v7686 = vadd.bf16 %v7018, %v7590
    %v7687 = vadd.bf16 %v7019, %v7591
    %v7688 = vadd.bf16 %v7020, %v7592
    %v7689 = vadd.bf16 %v7021, %v7593
    %v7690 = vadd.bf16 %v7022, %v7594
    %v7691 = vadd.bf16 %v7023, %v7595
    %v7692 = vadd.bf16 %v7024, %v7596
    %v7693 = vadd.bf16 %v7025, %v7597
    %v7694 = vadd.bf16 %v7026, %v7598
    %v7695 = vadd.bf16 %v7027, %v7599
    %v7696 = vadd.bf16 %v7028, %v7600
    %v7697 = vadd.bf16 %v7029, %v7601
    %v7699 = vshll.u32 %v7399, 16
    %v7701 = vrot.slane %v7699, 5
    %v7702 = vshrl.u32 %v7399, 16
    %v7704 = vrot.slane %v7702, 4
    %v7705 = vor.u32 %v7704, %v7701
    %v7706 = vrot.slane %v7705, 4
    %v7708 = vshll.u32 %v7400, 16
    %v7710 = vrot.slane %v7708, 5
    %v7711 = vsel %vm2433, %v7706, %v7710
    %v7712 = vshrl.u32 %v7400, 16
    %v7714 = vrot.slane %v7712, 4
    %v7715 = vor.u32 %v7714, %v7710
    %v7716 = vrot.slane %v7715, 4
    %v7718 = vshll.u32 %v7401, 16
    %v7720 = vrot.slane %v7718, 5
    %v7721 = vshrl.u32 %v7401, 16
    %v7723 = vrot.slane %v7721, 4
    %v7724 = vor.u32 %v7723, %v7720
    %v7725 = vrot.slane %v7724, 4
    %v7727 = vshll.u32 %v7402, 16
    %v7729 = vrot.slane %v7727, 5
    %v7730 = vsel %vm2433, %v7725, %v7729
    %v7731 = vshrl.u32 %v7402, 16
    %v7733 = vrot.slane %v7731, 4
    %v7734 = vor.u32 %v7733, %v7729
    %v7735 = vrot.slane %v7734, 4
    %v7737 = vshll.u32 %v7403, 16
    %v7739 = vrot.slane %v7737, 5
    %v7740 = vshrl.u32 %v7403, 16
    %v7742 = vrot.slane %v7740, 4
    %v7743 = vor.u32 %v7742, %v7739
    %v7744 = vrot.slane %v7743, 4
    %v7746 = vshll.u32 %v7404, 16
    %v7748 = vrot.slane %v7746, 5
    %v7749 = vsel %vm2433, %v7744, %v7748
    %v7750 = vshrl.u32 %v7404, 16
    %v7752 = vrot.slane %v7750, 4
    %v7753 = vor.u32 %v7752, %v7748
    %v7754 = vrot.slane %v7753, 4
    %v7756 = vshll.u32 %v7405, 16
    %v7758 = vrot.slane %v7756, 5
    %v7759 = vshrl.u32 %v7405, 16
    %v7761 = vrot.slane %v7759, 4
    %v7762 = vor.u32 %v7761, %v7758
    %v7763 = vrot.slane %v7762, 4
    %v7765 = vshll.u32 %v7406, 16
    %v7767 = vrot.slane %v7765, 5
    %v7768 = vsel %vm2433, %v7763, %v7767
    %v7769 = vshrl.u32 %v7406, 16
    %v7771 = vrot.slane %v7769, 4
    %v7772 = vor.u32 %v7771, %v7767
    %v7773 = vrot.slane %v7772, 4
    %v7775 = vshll.u32 %v7407, 16
    %v7777 = vrot.slane %v7775, 5
    %v7778 = vshrl.u32 %v7407, 16
    %v7780 = vrot.slane %v7778, 4
    %v7781 = vor.u32 %v7780, %v7777
    %v7782 = vrot.slane %v7781, 4
    %v7784 = vshll.u32 %v7408, 16
    %v7786 = vrot.slane %v7784, 5
    %v7787 = vsel %vm2433, %v7782, %v7786
    %v7788 = vshrl.u32 %v7408, 16
    %v7790 = vrot.slane %v7788, 4
    %v7791 = vor.u32 %v7790, %v7786
    %v7792 = vrot.slane %v7791, 4
    %v7794 = vshll.u32 %v7409, 16
    %v7796 = vrot.slane %v7794, 5
    %v7797 = vshrl.u32 %v7409, 16
    %v7799 = vrot.slane %v7797, 4
    %v7800 = vor.u32 %v7799, %v7796
    %v7801 = vrot.slane %v7800, 4
    %v7803 = vshll.u32 %v7410, 16
    %v7805 = vrot.slane %v7803, 5
    %v7806 = vsel %vm2433, %v7801, %v7805
    %v7807 = vshrl.u32 %v7410, 16
    %v7809 = vrot.slane %v7807, 4
    %v7810 = vor.u32 %v7809, %v7805
    %v7811 = vrot.slane %v7810, 4
    %v7813 = vshll.u32 %v7411, 16
    %v7815 = vrot.slane %v7813, 5
    %v7816 = vshrl.u32 %v7411, 16
    %v7818 = vrot.slane %v7816, 4
    %v7819 = vor.u32 %v7818, %v7815
    %v7820 = vrot.slane %v7819, 4
    %v7822 = vshll.u32 %v7412, 16
    %v7824 = vrot.slane %v7822, 5
    %v7825 = vsel %vm2433, %v7820, %v7824
    %v7826 = vshrl.u32 %v7412, 16
    %v7828 = vrot.slane %v7826, 4
    %v7829 = vor.u32 %v7828, %v7824
    %v7830 = vrot.slane %v7829, 4
    %v7832 = vshll.u32 %v7413, 16
    %v7834 = vrot.slane %v7832, 5
    %v7835 = vshrl.u32 %v7413, 16
    %v7837 = vrot.slane %v7835, 4
    %v7838 = vor.u32 %v7837, %v7834
    %v7839 = vrot.slane %v7838, 4
    %v7841 = vshll.u32 %v7414, 16
    %v7843 = vrot.slane %v7841, 5
    %v7844 = vsel %vm2433, %v7839, %v7843
    %v7845 = vshrl.u32 %v7414, 16
    %v7847 = vrot.slane %v7845, 4
    %v7848 = vor.u32 %v7847, %v7843
    %v7849 = vrot.slane %v7848, 4
    %v7851 = vshll.u32 %v7415, 16
    %v7853 = vrot.slane %v7851, 5
    %v7854 = vshrl.u32 %v7415, 16
    %v7856 = vrot.slane %v7854, 4
    %v7857 = vor.u32 %v7856, %v7853
    %v7858 = vrot.slane %v7857, 4
    %v7860 = vshll.u32 %v7416, 16
    %v7862 = vrot.slane %v7860, 5
    %v7863 = vsel %vm2433, %v7858, %v7862
    %v7864 = vshrl.u32 %v7416, 16
    %v7866 = vrot.slane %v7864, 4
    %v7867 = vor.u32 %v7866, %v7862
    %v7868 = vrot.slane %v7867, 4
    %v7870 = vshll.u32 %v7417, 16
    %v7872 = vrot.slane %v7870, 5
    %v7873 = vshrl.u32 %v7417, 16
    %v7875 = vrot.slane %v7873, 4
    %v7876 = vor.u32 %v7875, %v7872
    %v7877 = vrot.slane %v7876, 4
    %v7879 = vshll.u32 %v7418, 16
    %v7881 = vrot.slane %v7879, 5
    %v7882 = vsel %vm2433, %v7877, %v7881
    %v7883 = vshrl.u32 %v7418, 16
    %v7885 = vrot.slane %v7883, 4
    %v7886 = vor.u32 %v7885, %v7881
    %v7887 = vrot.slane %v7886, 4
    %v7889 = vshll.u32 %v7419, 16
    %v7891 = vrot.slane %v7889, 5
    %v7892 = vshrl.u32 %v7419, 16
    %v7894 = vrot.slane %v7892, 4
    %v7895 = vor.u32 %v7894, %v7891
    %v7896 = vrot.slane %v7895, 4
    %v7898 = vshll.u32 %v7420, 16
    %v7900 = vrot.slane %v7898, 5
    %v7901 = vsel %vm2433, %v7896, %v7900
    %v7902 = vshrl.u32 %v7420, 16
    %v7904 = vrot.slane %v7902, 4
    %v7905 = vor.u32 %v7904, %v7900
    %v7906 = vrot.slane %v7905, 4
    %v7908 = vshll.u32 %v7421, 16
    %v7910 = vrot.slane %v7908, 5
    %v7911 = vshrl.u32 %v7421, 16
    %v7913 = vrot.slane %v7911, 4
    %v7914 = vor.u32 %v7913, %v7910
    %v7915 = vrot.slane %v7914, 4
    %v7917 = vshll.u32 %v7422, 16
    %v7919 = vrot.slane %v7917, 5
    %v7920 = vsel %vm2433, %v7915, %v7919
    %v7921 = vshrl.u32 %v7422, 16
    %v7923 = vrot.slane %v7921, 4
    %v7924 = vor.u32 %v7923, %v7919
    %v7925 = vrot.slane %v7924, 4
    %v7927 = vshll.u32 %v7423, 16
    %v7929 = vrot.slane %v7927, 5
    %v7930 = vshrl.u32 %v7423, 16
    %v7932 = vrot.slane %v7930, 4
    %v7933 = vor.u32 %v7932, %v7929
    %v7934 = vrot.slane %v7933, 4
    %v7936 = vshll.u32 %v7424, 16
    %v7938 = vrot.slane %v7936, 5
    %v7939 = vsel %vm2433, %v7934, %v7938
    %v7940 = vshrl.u32 %v7424, 16
    %v7942 = vrot.slane %v7940, 4
    %v7943 = vor.u32 %v7942, %v7938
    %v7944 = vrot.slane %v7943, 4
    %v7946 = vshll.u32 %v7425, 16
    %v7948 = vrot.slane %v7946, 5
    %v7949 = vshrl.u32 %v7425, 16
    %v7951 = vrot.slane %v7949, 4
    %v7952 = vor.u32 %v7951, %v7948
    %v7953 = vrot.slane %v7952, 4
    %v7955 = vshll.u32 %v7426, 16
    %v7957 = vrot.slane %v7955, 5
    %v7958 = vsel %vm2433, %v7953, %v7957
    %v7959 = vshrl.u32 %v7426, 16
    %v7961 = vrot.slane %v7959, 4
    %v7962 = vor.u32 %v7961, %v7957
    %v7963 = vrot.slane %v7962, 4
    %v7965 = vshll.u32 %v7427, 16
    %v7967 = vrot.slane %v7965, 5
    %v7968 = vshrl.u32 %v7427, 16
    %v7970 = vrot.slane %v7968, 4
    %v7971 = vor.u32 %v7970, %v7967
    %v7972 = vrot.slane %v7971, 4
    %v7974 = vshll.u32 %v7428, 16
    %v7976 = vrot.slane %v7974, 5
    %v7977 = vsel %vm2433, %v7972, %v7976
    %v7978 = vshrl.u32 %v7428, 16
    %v7980 = vrot.slane %v7978, 4
    %v7981 = vor.u32 %v7980, %v7976
    %v7982 = vrot.slane %v7981, 4
    %v7984 = vshll.u32 %v7429, 16
    %v7986 = vrot.slane %v7984, 5
    %v7987 = vshrl.u32 %v7429, 16
    %v7989 = vrot.slane %v7987, 4
    %v7990 = vor.u32 %v7989, %v7986
    %v7991 = vrot.slane %v7990, 4
    %v7993 = vshll.u32 %v7430, 16
    %v7995 = vrot.slane %v7993, 5
    %v7996 = vsel %vm2433, %v7991, %v7995
    %v7997 = vshrl.u32 %v7430, 16
    %v7999 = vrot.slane %v7997, 4
    %v8000 = vor.u32 %v7999, %v7995
    %v8001 = vrot.slane %v8000, 4
    %v8003 = vshll.u32 %v7431, 16
    %v8005 = vrot.slane %v8003, 5
    %v8006 = vshrl.u32 %v7431, 16
    %v8008 = vrot.slane %v8006, 4
    %v8009 = vor.u32 %v8008, %v8005
    %v8010 = vrot.slane %v8009, 4
    %v8012 = vshll.u32 %v7432, 16
    %v8014 = vrot.slane %v8012, 5
    %v8015 = vsel %vm2433, %v8010, %v8014
    %v8016 = vshrl.u32 %v7432, 16
    %v8018 = vrot.slane %v8016, 4
    %v8019 = vor.u32 %v8018, %v8014
    %v8020 = vrot.slane %v8019, 4
    %v8022 = vshll.u32 %v7433, 16
    %v8024 = vrot.slane %v8022, 5
    %v8025 = vshrl.u32 %v7433, 16
    %v8027 = vrot.slane %v8025, 4
    %v8028 = vor.u32 %v8027, %v8024
    %v8029 = vrot.slane %v8028, 4
    %v8031 = vshll.u32 %v7434, 16
    %v8033 = vrot.slane %v8031, 5
    %v8034 = vsel %vm2433, %v8029, %v8033
    %v8035 = vshrl.u32 %v7434, 16
    %v8037 = vrot.slane %v8035, 4
    %v8038 = vor.u32 %v8037, %v8033
    %v8039 = vrot.slane %v8038, 4
    %v8041 = vshll.u32 %v7435, 16
    %v8043 = vrot.slane %v8041, 5
    %v8044 = vshrl.u32 %v7435, 16
    %v8046 = vrot.slane %v8044, 4
    %v8047 = vor.u32 %v8046, %v8043
    %v8048 = vrot.slane %v8047, 4
    %v8050 = vshll.u32 %v7436, 16
    %v8052 = vrot.slane %v8050, 5
    %v8053 = vsel %vm2433, %v8048, %v8052
    %v8054 = vshrl.u32 %v7436, 16
    %v8056 = vrot.slane %v8054, 4
    %v8057 = vor.u32 %v8056, %v8052
    %v8058 = vrot.slane %v8057, 4
    %v8060 = vshll.u32 %v7437, 16
    %v8062 = vrot.slane %v8060, 5
    %v8063 = vshrl.u32 %v7437, 16
    %v8065 = vrot.slane %v8063, 4
    %v8066 = vor.u32 %v8065, %v8062
    %v8067 = vrot.slane %v8066, 4
    %v8069 = vshll.u32 %v7438, 16
    %v8071 = vrot.slane %v8069, 5
    %v8072 = vsel %vm2433, %v8067, %v8071
    %v8073 = vshrl.u32 %v7438, 16
    %v8075 = vrot.slane %v8073, 4
    %v8076 = vor.u32 %v8075, %v8071
    %v8077 = vrot.slane %v8076, 4
    %v8079 = vshll.u32 %v7439, 16
    %v8081 = vrot.slane %v8079, 5
    %v8082 = vshrl.u32 %v7439, 16
    %v8084 = vrot.slane %v8082, 4
    %v8085 = vor.u32 %v8084, %v8081
    %v8086 = vrot.slane %v8085, 4
    %v8088 = vshll.u32 %v7440, 16
    %v8090 = vrot.slane %v8088, 5
    %v8091 = vsel %vm2433, %v8086, %v8090
    %v8092 = vshrl.u32 %v7440, 16
    %v8094 = vrot.slane %v8092, 4
    %v8095 = vor.u32 %v8094, %v8090
    %v8096 = vrot.slane %v8095, 4
    %v8098 = vshll.u32 %v7441, 16
    %v8100 = vrot.slane %v8098, 5
    %v8101 = vshrl.u32 %v7441, 16
    %v8103 = vrot.slane %v8101, 4
    %v8104 = vor.u32 %v8103, %v8100
    %v8105 = vrot.slane %v8104, 4
    %v8107 = vshll.u32 %v7442, 16
    %v8109 = vrot.slane %v8107, 5
    %v8110 = vsel %vm2433, %v8105, %v8109
    %v8111 = vshrl.u32 %v7442, 16
    %v8113 = vrot.slane %v8111, 4
    %v8114 = vor.u32 %v8113, %v8109
    %v8115 = vrot.slane %v8114, 4
    %v8117 = vshll.u32 %v7443, 16
    %v8119 = vrot.slane %v8117, 5
    %v8120 = vshrl.u32 %v7443, 16
    %v8122 = vrot.slane %v8120, 4
    %v8123 = vor.u32 %v8122, %v8119
    %v8124 = vrot.slane %v8123, 4
    %v8126 = vshll.u32 %v7444, 16
    %v8128 = vrot.slane %v8126, 5
    %v8129 = vsel %vm2433, %v8124, %v8128
    %v8130 = vshrl.u32 %v7444, 16
    %v8132 = vrot.slane %v8130, 4
    %v8133 = vor.u32 %v8132, %v8128
    %v8134 = vrot.slane %v8133, 4
    %v8136 = vshll.u32 %v7445, 16
    %v8138 = vrot.slane %v8136, 5
    %v8139 = vshrl.u32 %v7445, 16
    %v8141 = vrot.slane %v8139, 4
    %v8142 = vor.u32 %v8141, %v8138
    %v8143 = vrot.slane %v8142, 4
    %v8145 = vshll.u32 %v7446, 16
    %v8147 = vrot.slane %v8145, 5
    %v8148 = vsel %vm2433, %v8143, %v8147
    %v8149 = vshrl.u32 %v7446, 16
    %v8151 = vrot.slane %v8149, 4
    %v8152 = vor.u32 %v8151, %v8147
    %v8153 = vrot.slane %v8152, 4
    %v8155 = vshll.u32 %v7447, 16
    %v8157 = vrot.slane %v8155, 5
    %v8158 = vshrl.u32 %v7447, 16
    %v8160 = vrot.slane %v8158, 4
    %v8161 = vor.u32 %v8160, %v8157
    %v8162 = vrot.slane %v8161, 4
    %v8164 = vshll.u32 %v7448, 16
    %v8166 = vrot.slane %v8164, 5
    %v8167 = vsel %vm2433, %v8162, %v8166
    %v8168 = vshrl.u32 %v7448, 16
    %v8170 = vrot.slane %v8168, 4
    %v8171 = vor.u32 %v8170, %v8166
    %v8172 = vrot.slane %v8171, 4
    %v8174 = vshll.u32 %v7449, 16
    %v8176 = vrot.slane %v8174, 5
    %v8177 = vshrl.u32 %v7449, 16
    %v8179 = vrot.slane %v8177, 4
    %v8180 = vor.u32 %v8179, %v8176
    %v8181 = vrot.slane %v8180, 4
    %v8183 = vshll.u32 %v7450, 16
    %v8185 = vrot.slane %v8183, 5
    %v8186 = vsel %vm2433, %v8181, %v8185
    %v8187 = vshrl.u32 %v7450, 16
    %v8189 = vrot.slane %v8187, 4
    %v8190 = vor.u32 %v8189, %v8185
    %v8191 = vrot.slane %v8190, 4
    %v8193 = vshll.u32 %v7451, 16
    %v8195 = vrot.slane %v8193, 5
    %v8196 = vshrl.u32 %v7451, 16
    %v8198 = vrot.slane %v8196, 4
    %v8199 = vor.u32 %v8198, %v8195
    %v8200 = vrot.slane %v8199, 4
    %v8202 = vshll.u32 %v7452, 16
    %v8204 = vrot.slane %v8202, 5
    %v8205 = vsel %vm2433, %v8200, %v8204
    %v8206 = vshrl.u32 %v7452, 16
    %v8208 = vrot.slane %v8206, 4
    %v8209 = vor.u32 %v8208, %v8204
    %v8210 = vrot.slane %v8209, 4
    %v8212 = vshll.u32 %v7453, 16
    %v8214 = vrot.slane %v8212, 5
    %v8215 = vshrl.u32 %v7453, 16
    %v8217 = vrot.slane %v8215, 4
    %v8218 = vor.u32 %v8217, %v8214
    %v8219 = vrot.slane %v8218, 4
    %v8221 = vshll.u32 %v7454, 16
    %v8223 = vrot.slane %v8221, 5
    %v8224 = vsel %vm2433, %v8219, %v8223
    %v8225 = vshrl.u32 %v7454, 16
    %v8227 = vrot.slane %v8225, 4
    %v8228 = vor.u32 %v8227, %v8223
    %v8229 = vrot.slane %v8228, 4
    %v8231 = vshll.u32 %v7455, 16
    %v8233 = vrot.slane %v8231, 5
    %v8234 = vshrl.u32 %v7455, 16
    %v8236 = vrot.slane %v8234, 4
    %v8237 = vor.u32 %v8236, %v8233
    %v8238 = vrot.slane %v8237, 4
    %v8240 = vshll.u32 %v7456, 16
    %v8242 = vrot.slane %v8240, 5
    %v8243 = vsel %vm2433, %v8238, %v8242
    %v8244 = vshrl.u32 %v7456, 16
    %v8246 = vrot.slane %v8244, 4
    %v8247 = vor.u32 %v8246, %v8242
    %v8248 = vrot.slane %v8247, 4
    %v8250 = vshll.u32 %v7457, 16
    %v8252 = vrot.slane %v8250, 5
    %v8253 = vshrl.u32 %v7457, 16
    %v8255 = vrot.slane %v8253, 4
    %v8256 = vor.u32 %v8255, %v8252
    %v8257 = vrot.slane %v8256, 4
    %v8259 = vshll.u32 %v7458, 16
    %v8261 = vrot.slane %v8259, 5
    %v8262 = vsel %vm2433, %v8257, %v8261
    %v8263 = vshrl.u32 %v7458, 16
    %v8265 = vrot.slane %v8263, 4
    %v8266 = vor.u32 %v8265, %v8261
    %v8267 = vrot.slane %v8266, 4
    %v8269 = vshll.u32 %v7459, 16
    %v8271 = vrot.slane %v8269, 5
    %v8272 = vshrl.u32 %v7459, 16
    %v8274 = vrot.slane %v8272, 4
    %v8275 = vor.u32 %v8274, %v8271
    %v8276 = vrot.slane %v8275, 4
    %v8278 = vshll.u32 %v7460, 16
    %v8280 = vrot.slane %v8278, 5
    %v8281 = vsel %vm2433, %v8276, %v8280
    %v8282 = vshrl.u32 %v7460, 16
    %v8284 = vrot.slane %v8282, 4
    %v8285 = vor.u32 %v8284, %v8280
    %v8286 = vrot.slane %v8285, 4
    %v8288 = vshll.u32 %v7461, 16
    %v8290 = vrot.slane %v8288, 5
    %v8291 = vshrl.u32 %v7461, 16
    %v8293 = vrot.slane %v8291, 4
    %v8294 = vor.u32 %v8293, %v8290
    %v8295 = vrot.slane %v8294, 4
    %v8297 = vshll.u32 %v7462, 16
    %v8299 = vrot.slane %v8297, 5
    %v8300 = vsel %vm2433, %v8295, %v8299
    %v8301 = vshrl.u32 %v7462, 16
    %v8303 = vrot.slane %v8301, 4
    %v8304 = vor.u32 %v8303, %v8299
    %v8305 = vrot.slane %v8304, 4
    %v8402 = vadd.bf16 %v7231, %v7701
    %v8403 = vadd.bf16 %v7232, %v7711
    %v8404 = vadd.bf16 %v7233, %v7716
    %v8405 = vadd.bf16 %v7234, %v7720
    %v8406 = vadd.bf16 %v7235, %v7730
    %v8407 = vadd.bf16 %v7236, %v7735
    %v8408 = vadd.bf16 %v7237, %v7739
    %v8409 = vadd.bf16 %v7238, %v7749
    %v8410 = vadd.bf16 %v7239, %v7754
    %v8411 = vadd.bf16 %v7240, %v7758
    %v8412 = vadd.bf16 %v7241, %v7768
    %v8413 = vadd.bf16 %v7242, %v7773
    %v8414 = vadd.bf16 %v7243, %v7777
    %v8415 = vadd.bf16 %v7244, %v7787
    %v8416 = vadd.bf16 %v7245, %v7792
    %v8417 = vadd.bf16 %v7246, %v7796
    %v8418 = vadd.bf16 %v7247, %v7806
    %v8419 = vadd.bf16 %v7248, %v7811
    %v8420 = vadd.bf16 %v7249, %v7815
    %v8421 = vadd.bf16 %v7250, %v7825
    %v8422 = vadd.bf16 %v7251, %v7830
    %v8423 = vadd.bf16 %v7252, %v7834
    %v8424 = vadd.bf16 %v7253, %v7844
    %v8425 = vadd.bf16 %v7254, %v7849
    %v8426 = vadd.bf16 %v7255, %v7853
    %v8427 = vadd.bf16 %v7256, %v7863
    %v8428 = vadd.bf16 %v7257, %v7868
    %v8429 = vadd.bf16 %v7258, %v7872
    %v8430 = vadd.bf16 %v7259, %v7882
    %v8431 = vadd.bf16 %v7260, %v7887
    %v8432 = vadd.bf16 %v7261, %v7891
    %v8433 = vadd.bf16 %v7262, %v7901
    %v8434 = vadd.bf16 %v7263, %v7906
    %v8435 = vadd.bf16 %v7264, %v7910
    %v8436 = vadd.bf16 %v7265, %v7920
    %v8437 = vadd.bf16 %v7266, %v7925
    %v8438 = vadd.bf16 %v7267, %v7929
    %v8439 = vadd.bf16 %v7268, %v7939
    %v8440 = vadd.bf16 %v7269, %v7944
    %v8441 = vadd.bf16 %v7270, %v7948
    %v8442 = vadd.bf16 %v7271, %v7958
    %v8443 = vadd.bf16 %v7272, %v7963
    %v8444 = vadd.bf16 %v7273, %v7967
    %v8445 = vadd.bf16 %v7274, %v7977
    %v8446 = vadd.bf16 %v7275, %v7982
    %v8447 = vadd.bf16 %v7276, %v7986
    %v8448 = vadd.bf16 %v7277, %v7996
    %v8449 = vadd.bf16 %v7278, %v8001
    %v8450 = vadd.bf16 %v7279, %v8005
    %v8451 = vadd.bf16 %v7280, %v8015
    %v8452 = vadd.bf16 %v7281, %v8020
    %v8453 = vadd.bf16 %v7282, %v8024
    %v8454 = vadd.bf16 %v7283, %v8034
    %v8455 = vadd.bf16 %v7284, %v8039
    %v8456 = vadd.bf16 %v7285, %v8043
    %v8457 = vadd.bf16 %v7286, %v8053
    %v8458 = vadd.bf16 %v7287, %v8058
    %v8459 = vadd.bf16 %v7288, %v8062
    %v8460 = vadd.bf16 %v7289, %v8072
    %v8461 = vadd.bf16 %v7290, %v8077
    %v8462 = vadd.bf16 %v7291, %v8081
    %v8463 = vadd.bf16 %v7292, %v8091
    %v8464 = vadd.bf16 %v7293, %v8096
    %v8465 = vadd.bf16 %v7294, %v8100
    %v8466 = vadd.bf16 %v7295, %v8110
    %v8467 = vadd.bf16 %v7296, %v8115
    %v8468 = vadd.bf16 %v7297, %v8119
    %v8469 = vadd.bf16 %v7298, %v8129
    %v8470 = vadd.bf16 %v7299, %v8134
    %v8471 = vadd.bf16 %v7300, %v8138
    %v8472 = vadd.bf16 %v7301, %v8148
    %v8473 = vadd.bf16 %v7302, %v8153
    %v8474 = vadd.bf16 %v7303, %v8157
    %v8475 = vadd.bf16 %v7304, %v8167
    %v8476 = vadd.bf16 %v7305, %v8172
    %v8477 = vadd.bf16 %v7306, %v8176
    %v8478 = vadd.bf16 %v7307, %v8186
    %v8479 = vadd.bf16 %v7308, %v8191
    %v8480 = vadd.bf16 %v7309, %v8195
    %v8481 = vadd.bf16 %v7310, %v8205
    %v8482 = vadd.bf16 %v7311, %v8210
    %v8483 = vadd.bf16 %v7312, %v8214
    %v8484 = vadd.bf16 %v7313, %v8224
    %v8485 = vadd.bf16 %v7314, %v8229
    %v8486 = vadd.bf16 %v7315, %v8233
    %v8487 = vadd.bf16 %v7316, %v8243
    %v8488 = vadd.bf16 %v7317, %v8248
    %v8489 = vadd.bf16 %v7318, %v8252
    %v8490 = vadd.bf16 %v7319, %v8262
    %v8491 = vadd.bf16 %v7320, %v8267
    %v8492 = vadd.bf16 %v7321, %v8271
    %v8493 = vadd.bf16 %v7322, %v8281
    %v8494 = vadd.bf16 %v7323, %v8286
    %v8495 = vadd.bf16 %v7324, %v8290
    %v8496 = vadd.bf16 %v7325, %v8300
    %v8497 = vadd.bf16 %v7326, %v8305
    %v8594 = vrot.slane %v7602, 5
    %v8595 = vrot.slane %v8594, 4
    %v8596 = vrot.slane %v7603, 5
    %v8597 = vsel %vm3332, %v8595, %v8596
    %v8598 = vrot.slane %v8596, 4
    %v8599 = vrot.slane %v7604, 5
    %v8600 = vsel %vm3332, %v8598, %v8599
    %v8601 = vrot.slane %v7605, 5
    %v8602 = vrot.slane %v8601, 4
    %v8603 = vrot.slane %v7606, 5
    %v8604 = vsel %vm3332, %v8602, %v8603
    %v8605 = vrot.slane %v8603, 4
    %v8606 = vrot.slane %v7607, 5
    %v8607 = vsel %vm3332, %v8605, %v8606
    %v8608 = vrot.slane %v7608, 5
    %v8609 = vrot.slane %v8608, 4
    %v8610 = vrot.slane %v7609, 5
    %v8611 = vsel %vm3332, %v8609, %v8610
    %v8612 = vrot.slane %v8610, 4
    %v8613 = vrot.slane %v7610, 5
    %v8614 = vsel %vm3332, %v8612, %v8613
    %v8615 = vrot.slane %v7611, 5
    %v8616 = vrot.slane %v8615, 4
    %v8617 = vrot.slane %v7612, 5
    %v8618 = vsel %vm3332, %v8616, %v8617
    %v8619 = vrot.slane %v8617, 4
    %v8620 = vrot.slane %v7613, 5
    %v8621 = vsel %vm3332, %v8619, %v8620
    %v8622 = vrot.slane %v7614, 5
    %v8623 = vrot.slane %v8622, 4
    %v8624 = vrot.slane %v7615, 5
    %v8625 = vsel %vm3332, %v8623, %v8624
    %v8626 = vrot.slane %v8624, 4
    %v8627 = vrot.slane %v7616, 5
    %v8628 = vsel %vm3332, %v8626, %v8627
    %v8629 = vrot.slane %v7617, 5
    %v8630 = vrot.slane %v8629, 4
    %v8631 = vrot.slane %v7618, 5
    %v8632 = vsel %vm3332, %v8630, %v8631
    %v8633 = vrot.slane %v8631, 4
    %v8634 = vrot.slane %v7619, 5
    %v8635 = vsel %vm3332, %v8633, %v8634
    %v8636 = vrot.slane %v7620, 5
    %v8637 = vrot.slane %v8636, 4
    %v8638 = vrot.slane %v7621, 5
    %v8639 = vsel %vm3332, %v8637, %v8638
    %v8640 = vrot.slane %v8638, 4
    %v8641 = vrot.slane %v7622, 5
    %v8642 = vsel %vm3332, %v8640, %v8641
    %v8643 = vrot.slane %v7623, 5
    %v8644 = vrot.slane %v8643, 4
    %v8645 = vrot.slane %v7624, 5
    %v8646 = vsel %vm3332, %v8644, %v8645
    %v8647 = vrot.slane %v8645, 4
    %v8648 = vrot.slane %v7625, 5
    %v8649 = vsel %vm3332, %v8647, %v8648
    %v8650 = vrot.slane %v7626, 5
    %v8651 = vrot.slane %v8650, 4
    %v8652 = vrot.slane %v7627, 5
    %v8653 = vsel %vm3332, %v8651, %v8652
    %v8654 = vrot.slane %v8652, 4
    %v8655 = vrot.slane %v7628, 5
    %v8656 = vsel %vm3332, %v8654, %v8655
    %v8657 = vrot.slane %v7629, 5
    %v8658 = vrot.slane %v8657, 4
    %v8659 = vrot.slane %v7630, 5
    %v8660 = vsel %vm3332, %v8658, %v8659
    %v8661 = vrot.slane %v8659, 4
    %v8662 = vrot.slane %v7631, 5
    %v8663 = vsel %vm3332, %v8661, %v8662
    %v8664 = vrot.slane %v7632, 5
    %v8665 = vrot.slane %v8664, 4
    %v8666 = vrot.slane %v7633, 5
    %v8667 = vsel %vm3332, %v8665, %v8666
    %v8668 = vrot.slane %v8666, 4
    %v8669 = vrot.slane %v7634, 5
    %v8670 = vsel %vm3332, %v8668, %v8669
    %v8671 = vrot.slane %v7635, 5
    %v8672 = vrot.slane %v8671, 4
    %v8673 = vrot.slane %v7636, 5
    %v8674 = vsel %vm3332, %v8672, %v8673
    %v8675 = vrot.slane %v8673, 4
    %v8676 = vrot.slane %v7637, 5
    %v8677 = vsel %vm3332, %v8675, %v8676
    %v8678 = vrot.slane %v7638, 5
    %v8679 = vrot.slane %v8678, 4
    %v8680 = vrot.slane %v7639, 5
    %v8681 = vsel %vm3332, %v8679, %v8680
    %v8682 = vrot.slane %v8680, 4
    %v8683 = vrot.slane %v7640, 5
    %v8684 = vsel %vm3332, %v8682, %v8683
    %v8685 = vrot.slane %v7641, 5
    %v8686 = vrot.slane %v8685, 4
    %v8687 = vrot.slane %v7642, 5
    %v8688 = vsel %vm3332, %v8686, %v8687
    %v8689 = vrot.slane %v8687, 4
    %v8690 = vrot.slane %v7643, 5
    %v8691 = vsel %vm3332, %v8689, %v8690
    %v8692 = vrot.slane %v7644, 5
    %v8693 = vrot.slane %v8692, 4
    %v8694 = vrot.slane %v7645, 5
    %v8695 = vsel %vm3332, %v8693, %v8694
    %v8696 = vrot.slane %v8694, 4
    %v8697 = vrot.slane %v7646, 5
    %v8698 = vsel %vm3332, %v8696, %v8697
    %v8699 = vrot.slane %v7647, 5
    %v8700 = vrot.slane %v8699, 4
    %v8701 = vrot.slane %v7648, 5
    %v8702 = vsel %vm3332, %v8700, %v8701
    %v8703 = vrot.slane %v8701, 4
    %v8704 = vrot.slane %v7649, 5
    %v8705 = vsel %vm3332, %v8703, %v8704
    %v8706 = vrot.slane %v7650, 5
    %v8707 = vrot.slane %v8706, 4
    %v8708 = vrot.slane %v7651, 5
    %v8709 = vsel %vm3332, %v8707, %v8708
    %v8710 = vrot.slane %v8708, 4
    %v8711 = vrot.slane %v7652, 5
    %v8712 = vsel %vm3332, %v8710, %v8711
    %v8713 = vrot.slane %v7653, 5
    %v8714 = vrot.slane %v8713, 4
    %v8715 = vrot.slane %v7654, 5
    %v8716 = vsel %vm3332, %v8714, %v8715
    %v8717 = vrot.slane %v8715, 4
    %v8718 = vrot.slane %v7655, 5
    %v8719 = vsel %vm3332, %v8717, %v8718
    %v8720 = vrot.slane %v7656, 5
    %v8721 = vrot.slane %v8720, 4
    %v8722 = vrot.slane %v7657, 5
    %v8723 = vsel %vm3332, %v8721, %v8722
    %v8724 = vrot.slane %v8722, 4
    %v8725 = vrot.slane %v7658, 5
    %v8726 = vsel %vm3332, %v8724, %v8725
    %v8727 = vrot.slane %v7659, 5
    %v8728 = vrot.slane %v8727, 4
    %v8729 = vrot.slane %v7660, 5
    %v8730 = vsel %vm3332, %v8728, %v8729
    %v8731 = vrot.slane %v8729, 4
    %v8732 = vrot.slane %v7661, 5
    %v8733 = vsel %vm3332, %v8731, %v8732
    %v8734 = vrot.slane %v7662, 5
    %v8735 = vrot.slane %v8734, 4
    %v8736 = vrot.slane %v7663, 5
    %v8737 = vsel %vm3332, %v8735, %v8736
    %v8738 = vrot.slane %v8736, 4
    %v8739 = vrot.slane %v7664, 5
    %v8740 = vsel %vm3332, %v8738, %v8739
    %v8741 = vrot.slane %v7665, 5
    %v8742 = vrot.slane %v8741, 4
    %v8743 = vrot.slane %v7666, 5
    %v8744 = vsel %vm3332, %v8742, %v8743
    %v8745 = vrot.slane %v8743, 4
    %v8746 = vrot.slane %v7667, 5
    %v8747 = vsel %vm3332, %v8745, %v8746
    %v8748 = vrot.slane %v7668, 5
    %v8749 = vrot.slane %v8748, 4
    %v8750 = vrot.slane %v7669, 5
    %v8751 = vsel %vm3332, %v8749, %v8750
    %v8752 = vrot.slane %v8750, 4
    %v8753 = vrot.slane %v7670, 5
    %v8754 = vsel %vm3332, %v8752, %v8753
    %v8755 = vrot.slane %v7671, 5
    %v8756 = vrot.slane %v8755, 4
    %v8757 = vrot.slane %v7672, 5
    %v8758 = vsel %vm3332, %v8756, %v8757
    %v8759 = vrot.slane %v8757, 4
    %v8760 = vrot.slane %v7673, 5
    %v8761 = vsel %vm3332, %v8759, %v8760
    %v8762 = vrot.slane %v7674, 5
    %v8763 = vrot.slane %v8762, 4
    %v8764 = vrot.slane %v7675, 5
    %v8765 = vsel %vm3332, %v8763, %v8764
    %v8766 = vrot.slane %v8764, 4
    %v8767 = vrot.slane %v7676, 5
    %v8768 = vsel %vm3332, %v8766, %v8767
    %v8769 = vrot.slane %v7677, 5
    %v8770 = vrot.slane %v8769, 4
    %v8771 = vrot.slane %v7678, 5
    %v8772 = vsel %vm3332, %v8770, %v8771
    %v8773 = vrot.slane %v8771, 4
    %v8774 = vrot.slane %v7679, 5
    %v8775 = vsel %vm3332, %v8773, %v8774
    %v8776 = vrot.slane %v7680, 5
    %v8777 = vrot.slane %v8776, 4
    %v8778 = vrot.slane %v7681, 5
    %v8779 = vsel %vm3332, %v8777, %v8778
    %v8780 = vrot.slane %v8778, 4
    %v8781 = vrot.slane %v7682, 5
    %v8782 = vsel %vm3332, %v8780, %v8781
    %v8783 = vrot.slane %v7683, 5
    %v8784 = vrot.slane %v8783, 4
    %v8785 = vrot.slane %v7684, 5
    %v8786 = vsel %vm3332, %v8784, %v8785
    %v8787 = vrot.slane %v8785, 4
    %v8788 = vrot.slane %v7685, 5
    %v8789 = vsel %vm3332, %v8787, %v8788
    %v8790 = vrot.slane %v7686, 5
    %v8791 = vrot.slane %v8790, 4
    %v8792 = vrot.slane %v7687, 5
    %v8793 = vsel %vm3332, %v8791, %v8792
    %v8794 = vrot.slane %v8792, 4
    %v8795 = vrot.slane %v7688, 5
    %v8796 = vsel %vm3332, %v8794, %v8795
    %v8797 = vrot.slane %v7689, 5
    %v8798 = vrot.slane %v8797, 4
    %v8799 = vrot.slane %v7690, 5
    %v8800 = vsel %vm3332, %v8798, %v8799
    %v8801 = vrot.slane %v8799, 4
    %v8802 = vrot.slane %v7691, 5
    %v8803 = vsel %vm3332, %v8801, %v8802
    %v8804 = vrot.slane %v7692, 5
    %v8805 = vrot.slane %v8804, 4
    %v8806 = vrot.slane %v7693, 5
    %v8807 = vsel %vm3332, %v8805, %v8806
    %v8808 = vrot.slane %v8806, 4
    %v8809 = vrot.slane %v7694, 5
    %v8810 = vsel %vm3332, %v8808, %v8809
    %v8811 = vrot.slane %v7695, 5
    %v8812 = vrot.slane %v8811, 4
    %v8813 = vrot.slane %v7696, 5
    %v8814 = vsel %vm3332, %v8812, %v8813
    %v8815 = vrot.slane %v8813, 4
    %v8816 = vrot.slane %v7697, 5
    %v8817 = vsel %vm3332, %v8815, %v8816
    %v8914 = vadd.bf16 %v8402, %v8594
    %v8915 = vadd.bf16 %v8403, %v8597
    %v8916 = vadd.bf16 %v8404, %v8600
    %v8917 = vadd.bf16 %v8405, %v8601
    %v8918 = vadd.bf16 %v8406, %v8604
    %v8919 = vadd.bf16 %v8407, %v8607
    %v8920 = vadd.bf16 %v8408, %v8608
    %v8921 = vadd.bf16 %v8409, %v8611
    %v8922 = vadd.bf16 %v8410, %v8614
    %v8923 = vadd.bf16 %v8411, %v8615
    %v8924 = vadd.bf16 %v8412, %v8618
    %v8925 = vadd.bf16 %v8413, %v8621
    %v8926 = vadd.bf16 %v8414, %v8622
    %v8927 = vadd.bf16 %v8415, %v8625
    %v8928 = vadd.bf16 %v8416, %v8628
    %v8929 = vadd.bf16 %v8417, %v8629
    %v8930 = vadd.bf16 %v8418, %v8632
    %v8931 = vadd.bf16 %v8419, %v8635
    %v8932 = vadd.bf16 %v8420, %v8636
    %v8933 = vadd.bf16 %v8421, %v8639
    %v8934 = vadd.bf16 %v8422, %v8642
    %v8935 = vadd.bf16 %v8423, %v8643
    %v8936 = vadd.bf16 %v8424, %v8646
    %v8937 = vadd.bf16 %v8425, %v8649
    %v8938 = vadd.bf16 %v8426, %v8650
    %v8939 = vadd.bf16 %v8427, %v8653
    %v8940 = vadd.bf16 %v8428, %v8656
    %v8941 = vadd.bf16 %v8429, %v8657
    %v8942 = vadd.bf16 %v8430, %v8660
    %v8943 = vadd.bf16 %v8431, %v8663
    %v8944 = vadd.bf16 %v8432, %v8664
    %v8945 = vadd.bf16 %v8433, %v8667
    %v8946 = vadd.bf16 %v8434, %v8670
    %v8947 = vadd.bf16 %v8435, %v8671
    %v8948 = vadd.bf16 %v8436, %v8674
    %v8949 = vadd.bf16 %v8437, %v8677
    %v8950 = vadd.bf16 %v8438, %v8678
    %v8951 = vadd.bf16 %v8439, %v8681
    %v8952 = vadd.bf16 %v8440, %v8684
    %v8953 = vadd.bf16 %v8441, %v8685
    %v8954 = vadd.bf16 %v8442, %v8688
    %v8955 = vadd.bf16 %v8443, %v8691
    %v8956 = vadd.bf16 %v8444, %v8692
    %v8957 = vadd.bf16 %v8445, %v8695
    %v8958 = vadd.bf16 %v8446, %v8698
    %v8959 = vadd.bf16 %v8447, %v8699
    %v8960 = vadd.bf16 %v8448, %v8702
    %v8961 = vadd.bf16 %v8449, %v8705
    %v8962 = vadd.bf16 %v8450, %v8706
    %v8963 = vadd.bf16 %v8451, %v8709
    %v8964 = vadd.bf16 %v8452, %v8712
    %v8965 = vadd.bf16 %v8453, %v8713
    %v8966 = vadd.bf16 %v8454, %v8716
    %v8967 = vadd.bf16 %v8455, %v8719
    %v8968 = vadd.bf16 %v8456, %v8720
    %v8969 = vadd.bf16 %v8457, %v8723
    %v8970 = vadd.bf16 %v8458, %v8726
    %v8971 = vadd.bf16 %v8459, %v8727
    %v8972 = vadd.bf16 %v8460, %v8730
    %v8973 = vadd.bf16 %v8461, %v8733
    %v8974 = vadd.bf16 %v8462, %v8734
    %v8975 = vadd.bf16 %v8463, %v8737
    %v8976 = vadd.bf16 %v8464, %v8740
    %v8977 = vadd.bf16 %v8465, %v8741
    %v8978 = vadd.bf16 %v8466, %v8744
    %v8979 = vadd.bf16 %v8467, %v8747
    %v8980 = vadd.bf16 %v8468, %v8748
    %v8981 = vadd.bf16 %v8469, %v8751
    %v8982 = vadd.bf16 %v8470, %v8754
    %v8983 = vadd.bf16 %v8471, %v8755
    %v8984 = vadd.bf16 %v8472, %v8758
    %v8985 = vadd.bf16 %v8473, %v8761
    %v8986 = vadd.bf16 %v8474, %v8762
    %v8987 = vadd.bf16 %v8475, %v8765
    %v8988 = vadd.bf16 %v8476, %v8768
    %v8989 = vadd.bf16 %v8477, %v8769
    %v8990 = vadd.bf16 %v8478, %v8772
    %v8991 = vadd.bf16 %v8479, %v8775
    %v8992 = vadd.bf16 %v8480, %v8776
    %v8993 = vadd.bf16 %v8481, %v8779
    %v8994 = vadd.bf16 %v8482, %v8782
    %v8995 = vadd.bf16 %v8483, %v8783
    %v8996 = vadd.bf16 %v8484, %v8786
    %v8997 = vadd.bf16 %v8485, %v8789
    %v8998 = vadd.bf16 %v8486, %v8790
    %v8999 = vadd.bf16 %v8487, %v8793
    %v9000 = vadd.bf16 %v8488, %v8796
    %v9001 = vadd.bf16 %v8489, %v8797
    %v9002 = vadd.bf16 %v8490, %v8800
    %v9003 = vadd.bf16 %v8491, %v8803
    %v9004 = vadd.bf16 %v8492, %v8804
    %v9005 = vadd.bf16 %v8493, %v8807
    %v9006 = vadd.bf16 %v8494, %v8810
    %v9007 = vadd.bf16 %v8495, %v8811
    %v9008 = vadd.bf16 %v8496, %v8814
    %v9009 = vadd.bf16 %v8497, %v8817
    %v9011 = vpack.i.b16 %v5951, %v5951
    %v9013 = vlaneseq
    %v9014 = vshrl.u32 %v9013, 7
    %v9015 = vsub.s32 0, %v9014
    %v9016 = vrot.slane %v9011, %v9015
    %v9018 = vunpack.c.l.b16 %v9016
    %v9019 = vpack.c.b16 %v9018, %v9018
    %v9021 = vadd.bf16 %v8914, %v9019
    %v9022 = vadd.bf16 %v8915, %v9019
    %v9023 = vadd.bf16 %v8916, %v9019
    %v9024 = vadd.bf16 %v8917, %v9019
    %v9025 = vadd.bf16 %v8918, %v9019
    %v9026 = vadd.bf16 %v8919, %v9019
    %v9027 = vadd.bf16 %v8920, %v9019
    %v9028 = vadd.bf16 %v8921, %v9019
    %v9029 = vadd.bf16 %v8922, %v9019
    %v9030 = vadd.bf16 %v8923, %v9019
    %v9031 = vadd.bf16 %v8924, %v9019
    %v9032 = vadd.bf16 %v8925, %v9019
    %v9033 = vadd.bf16 %v8926, %v9019
    %v9034 = vadd.bf16 %v8927, %v9019
    %v9035 = vadd.bf16 %v8928, %v9019
    %v9036 = vadd.bf16 %v8929, %v9019
    %v9037 = vadd.bf16 %v8930, %v9019
    %v9038 = vadd.bf16 %v8931, %v9019
    %v9039 = vadd.bf16 %v8932, %v9019
    %v9040 = vadd.bf16 %v8933, %v9019
    %v9041 = vadd.bf16 %v8934, %v9019
    %v9042 = vadd.bf16 %v8935, %v9019
    %v9043 = vadd.bf16 %v8936, %v9019
    %v9044 = vadd.bf16 %v8937, %v9019
    %v9045 = vadd.bf16 %v8938, %v9019
    %v9046 = vadd.bf16 %v8939, %v9019
    %v9047 = vadd.bf16 %v8940, %v9019
    %v9048 = vadd.bf16 %v8941, %v9019
    %v9049 = vadd.bf16 %v8942, %v9019
    %v9050 = vadd.bf16 %v8943, %v9019
    %v9051 = vadd.bf16 %v8944, %v9019
    %v9052 = vadd.bf16 %v8945, %v9019
    %v9053 = vadd.bf16 %v8946, %v9019
    %v9054 = vadd.bf16 %v8947, %v9019
    %v9055 = vadd.bf16 %v8948, %v9019
    %v9056 = vadd.bf16 %v8949, %v9019
    %v9057 = vadd.bf16 %v8950, %v9019
    %v9058 = vadd.bf16 %v8951, %v9019
    %v9059 = vadd.bf16 %v8952, %v9019
    %v9060 = vadd.bf16 %v8953, %v9019
    %v9061 = vadd.bf16 %v8954, %v9019
    %v9062 = vadd.bf16 %v8955, %v9019
    %v9063 = vadd.bf16 %v8956, %v9019
    %v9064 = vadd.bf16 %v8957, %v9019
    %v9065 = vadd.bf16 %v8958, %v9019
    %v9066 = vadd.bf16 %v8959, %v9019
    %v9067 = vadd.bf16 %v8960, %v9019
    %v9068 = vadd.bf16 %v8961, %v9019
    %v9069 = vadd.bf16 %v8962, %v9019
    %v9070 = vadd.bf16 %v8963, %v9019
    %v9071 = vadd.bf16 %v8964, %v9019
    %v9072 = vadd.bf16 %v8965, %v9019
    %v9073 = vadd.bf16 %v8966, %v9019
    %v9074 = vadd.bf16 %v8967, %v9019
    %v9075 = vadd.bf16 %v8968, %v9019
    %v9076 = vadd.bf16 %v8969, %v9019
    %v9077 = vadd.bf16 %v8970, %v9019
    %v9078 = vadd.bf16 %v8971, %v9019
    %v9079 = vadd.bf16 %v8972, %v9019
    %v9080 = vadd.bf16 %v8973, %v9019
    %v9081 = vadd.bf16 %v8974, %v9019
    %v9082 = vadd.bf16 %v8975, %v9019
    %v9083 = vadd.bf16 %v8976, %v9019
    %v9084 = vadd.bf16 %v8977, %v9019
    %v9085 = vadd.bf16 %v8978, %v9019
    %v9086 = vadd.bf16 %v8979, %v9019
    %v9087 = vadd.bf16 %v8980, %v9019
    %v9088 = vadd.bf16 %v8981, %v9019
    %v9089 = vadd.bf16 %v8982, %v9019
    %v9090 = vadd.bf16 %v8983, %v9019
    %v9091 = vadd.bf16 %v8984, %v9019
    %v9092 = vadd.bf16 %v8985, %v9019
    %v9093 = vadd.bf16 %v8986, %v9019
    %v9094 = vadd.bf16 %v8987, %v9019
    %v9095 = vadd.bf16 %v8988, %v9019
    %v9096 = vadd.bf16 %v8989, %v9019
    %v9097 = vadd.bf16 %v8990, %v9019
    %v9098 = vadd.bf16 %v8991, %v9019
    %v9099 = vadd.bf16 %v8992, %v9019
    %v9100 = vadd.bf16 %v8993, %v9019
    %v9101 = vadd.bf16 %v8994, %v9019
    %v9102 = vadd.bf16 %v8995, %v9019
    %v9103 = vadd.bf16 %v8996, %v9019
    %v9104 = vadd.bf16 %v8997, %v9019
    %v9105 = vadd.bf16 %v8998, %v9019
    %v9106 = vadd.bf16 %v8999, %v9019
    %v9107 = vadd.bf16 %v9000, %v9019
    %v9108 = vadd.bf16 %v9001, %v9019
    %v9109 = vadd.bf16 %v9002, %v9019
    %v9110 = vadd.bf16 %v9003, %v9019
    %v9111 = vadd.bf16 %v9004, %v9019
    %v9112 = vadd.bf16 %v9005, %v9019
    %v9113 = vadd.bf16 %v9006, %v9019
    %v9114 = vadd.bf16 %v9007, %v9019
    %v9115 = vadd.bf16 %v9008, %v9019
    %v9116 = vadd.bf16 %v9009, %v9019
    %v9117 = vmax.bf16 %v9021, 0
    %v9118 = vmax.bf16 %v9022, 0
    %v9119 = vmax.bf16 %v9023, 0
    %v9120 = vmax.bf16 %v9024, 0
    %v9121 = vmax.bf16 %v9025, 0
    %v9122 = vmax.bf16 %v9026, 0
    %v9123 = vmax.bf16 %v9027, 0
    %v9124 = vmax.bf16 %v9028, 0
    %v9125 = vmax.bf16 %v9029, 0
    %v9126 = vmax.bf16 %v9030, 0
    %v9127 = vmax.bf16 %v9031, 0
    %v9128 = vmax.bf16 %v9032, 0
    %v9129 = vmax.bf16 %v9033, 0
    %v9130 = vmax.bf16 %v9034, 0
    %v9131 = vmax.bf16 %v9035, 0
    %v9132 = vmax.bf16 %v9036, 0
    %v9133 = vmax.bf16 %v9037, 0
    %v9134 = vmax.bf16 %v9038, 0
    %v9135 = vmax.bf16 %v9039, 0
    %v9136 = vmax.bf16 %v9040, 0
    %v9137 = vmax.bf16 %v9041, 0
    %v9138 = vmax.bf16 %v9042, 0
    %v9139 = vmax.bf16 %v9043, 0
    %v9140 = vmax.bf16 %v9044, 0
    %v9141 = vmax.bf16 %v9045, 0
    %v9142 = vmax.bf16 %v9046, 0
    %v9143 = vmax.bf16 %v9047, 0
    %v9144 = vmax.bf16 %v9048, 0
    %v9145 = vmax.bf16 %v9049, 0
    %v9146 = vmax.bf16 %v9050, 0
    %v9147 = vmax.bf16 %v9051, 0
    %v9148 = vmax.bf16 %v9052, 0
    %v9149 = vmax.bf16 %v9053, 0
    %v9150 = vmax.bf16 %v9054, 0
    %v9151 = vmax.bf16 %v9055, 0
    %v9152 = vmax.bf16 %v9056, 0
    %v9153 = vmax.bf16 %v9057, 0
    %v9154 = vmax.bf16 %v9058, 0
    %v9155 = vmax.bf16 %v9059, 0
    %v9156 = vmax.bf16 %v9060, 0
    %v9157 = vmax.bf16 %v9061, 0
    %v9158 = vmax.bf16 %v9062, 0
    %v9159 = vmax.bf16 %v9063, 0
    %v9160 = vmax.bf16 %v9064, 0
    %v9161 = vmax.bf16 %v9065, 0
    %v9162 = vmax.bf16 %v9066, 0
    %v9163 = vmax.bf16 %v9067, 0
    %v9164 = vmax.bf16 %v9068, 0
    %v9165 = vmax.bf16 %v9069, 0
    %v9166 = vmax.bf16 %v9070, 0
    %v9167 = vmax.bf16 %v9071, 0
    %v9168 = vmax.bf16 %v9072, 0
    %v9169 = vmax.bf16 %v9073, 0
    %v9170 = vmax.bf16 %v9074, 0
    %v9171 = vmax.bf16 %v9075, 0
    %v9172 = vmax.bf16 %v9076, 0
    %v9173 = vmax.bf16 %v9077, 0
    %v9174 = vmax.bf16 %v9078, 0
    %v9175 = vmax.bf16 %v9079, 0
    %v9176 = vmax.bf16 %v9080, 0
    %v9177 = vmax.bf16 %v9081, 0
    %v9178 = vmax.bf16 %v9082, 0
    %v9179 = vmax.bf16 %v9083, 0
    %v9180 = vmax.bf16 %v9084, 0
    %v9181 = vmax.bf16 %v9085, 0
    %v9182 = vmax.bf16 %v9086, 0
    %v9183 = vmax.bf16 %v9087, 0
    %v9184 = vmax.bf16 %v9088, 0
    %v9185 = vmax.bf16 %v9089, 0
    %v9186 = vmax.bf16 %v9090, 0
    %v9187 = vmax.bf16 %v9091, 0
    %v9188 = vmax.bf16 %v9092, 0
    %v9189 = vmax.bf16 %v9093, 0
    %v9190 = vmax.bf16 %v9094, 0
    %v9191 = vmax.bf16 %v9095, 0
    %v9192 = vmax.bf16 %v9096, 0
    %v9193 = vmax.bf16 %v9097, 0
    %v9194 = vmax.bf16 %v9098, 0
    %v9195 = vmax.bf16 %v9099, 0
    %v9196 = vmax.bf16 %v9100, 0
    %v9197 = vmax.bf16 %v9101, 0
    %v9198 = vmax.bf16 %v9102, 0
    %v9199 = vmax.bf16 %v9103, 0
    %v9200 = vmax.bf16 %v9104, 0
    %v9201 = vmax.bf16 %v9105, 0
    %v9202 = vmax.bf16 %v9106, 0
    %v9203 = vmax.bf16 %v9107, 0
    %v9204 = vmax.bf16 %v9108, 0
    %v9205 = vmax.bf16 %v9109, 0
    %v9206 = vmax.bf16 %v9110, 0
    %v9207 = vmax.bf16 %v9111, 0
    %v9208 = vmax.bf16 %v9112, 0
    %v9209 = vmax.bf16 %v9113, 0
    %v9210 = vmax.bf16 %v9114, 0
    %v9211 = vmax.bf16 %v9115, 0
    %v9212 = vmax.bf16 %v9116, 0
    %v9213 = vmin.bf16 %v9117, 1086341312
    %v9214 = vmin.bf16 %v9118, 1086341312
    %v9215 = vmin.bf16 %v9119, 1086341312
    %v9216 = vmin.bf16 %v9120, 1086341312
    %v9217 = vmin.bf16 %v9121, 1086341312
    %v9218 = vmin.bf16 %v9122, 1086341312
    %v9219 = vmin.bf16 %v9123, 1086341312
    %v9220 = vmin.bf16 %v9124, 1086341312
    %v9221 = vmin.bf16 %v9125, 1086341312
    %v9222 = vmin.bf16 %v9126, 1086341312
    %v9223 = vmin.bf16 %v9127, 1086341312
    %v9224 = vmin.bf16 %v9128, 1086341312
    %v9225 = vmin.bf16 %v9129, 1086341312
    %v9226 = vmin.bf16 %v9130, 1086341312
    %v9227 = vmin.bf16 %v9131, 1086341312
    %v9228 = vmin.bf16 %v9132, 1086341312
    %v9229 = vmin.bf16 %v9133, 1086341312
    %v9230 = vmin.bf16 %v9134, 1086341312
    %v9231 = vmin.bf16 %v9135, 1086341312
    %v9232 = vmin.bf16 %v9136, 1086341312
    %v9233 = vmin.bf16 %v9137, 1086341312
    %v9234 = vmin.bf16 %v9138, 1086341312
    %v9235 = vmin.bf16 %v9139, 1086341312
    %v9236 = vmin.bf16 %v9140, 1086341312
    %v9237 = vmin.bf16 %v9141, 1086341312
    %v9238 = vmin.bf16 %v9142, 1086341312
    %v9239 = vmin.bf16 %v9143, 1086341312
    %v9240 = vmin.bf16 %v9144, 1086341312
    %v9241 = vmin.bf16 %v9145, 1086341312
    %v9242 = vmin.bf16 %v9146, 1086341312
    %v9243 = vmin.bf16 %v9147, 1086341312
    %v9244 = vmin.bf16 %v9148, 1086341312
    %v9245 = vmin.bf16 %v9149, 1086341312
    %v9246 = vmin.bf16 %v9150, 1086341312
    %v9247 = vmin.bf16 %v9151, 1086341312
    %v9248 = vmin.bf16 %v9152, 1086341312
    %v9249 = vmin.bf16 %v9153, 1086341312
    %v9250 = vmin.bf16 %v9154, 1086341312
    %v9251 = vmin.bf16 %v9155, 1086341312
    %v9252 = vmin.bf16 %v9156, 1086341312
    %v9253 = vmin.bf16 %v9157, 1086341312
    %v9254 = vmin.bf16 %v9158, 1086341312
    %v9255 = vmin.bf16 %v9159, 1086341312
    %v9256 = vmin.bf16 %v9160, 1086341312
    %v9257 = vmin.bf16 %v9161, 1086341312
    %v9258 = vmin.bf16 %v9162, 1086341312
    %v9259 = vmin.bf16 %v9163, 1086341312
    %v9260 = vmin.bf16 %v9164, 1086341312
    %v9261 = vmin.bf16 %v9165, 1086341312
    %v9262 = vmin.bf16 %v9166, 1086341312
    %v9263 = vmin.bf16 %v9167, 1086341312
    %v9264 = vmin.bf16 %v9168, 1086341312
    %v9265 = vmin.bf16 %v9169, 1086341312
    %v9266 = vmin.bf16 %v9170, 1086341312
    %v9267 = vmin.bf16 %v9171, 1086341312
    %v9268 = vmin.bf16 %v9172, 1086341312
    %v9269 = vmin.bf16 %v9173, 1086341312
    %v9270 = vmin.bf16 %v9174, 1086341312
    %v9271 = vmin.bf16 %v9175, 1086341312
    %v9272 = vmin.bf16 %v9176, 1086341312
    %v9273 = vmin.bf16 %v9177, 1086341312
    %v9274 = vmin.bf16 %v9178, 1086341312
    %v9275 = vmin.bf16 %v9179, 1086341312
    %v9276 = vmin.bf16 %v9180, 1086341312
    %v9277 = vmin.bf16 %v9181, 1086341312
    %v9278 = vmin.bf16 %v9182, 1086341312
    %v9279 = vmin.bf16 %v9183, 1086341312
    %v9280 = vmin.bf16 %v9184, 1086341312
    %v9281 = vmin.bf16 %v9185, 1086341312
    %v9282 = vmin.bf16 %v9186, 1086341312
    %v9283 = vmin.bf16 %v9187, 1086341312
    %v9284 = vmin.bf16 %v9188, 1086341312
    %v9285 = vmin.bf16 %v9189, 1086341312
    %v9286 = vmin.bf16 %v9190, 1086341312
    %v9287 = vmin.bf16 %v9191, 1086341312
    %v9288 = vmin.bf16 %v9192, 1086341312
    %v9289 = vmin.bf16 %v9193, 1086341312
    %v9290 = vmin.bf16 %v9194, 1086341312
    %v9291 = vmin.bf16 %v9195, 1086341312
    %v9292 = vmin.bf16 %v9196, 1086341312
    %v9293 = vmin.bf16 %v9197, 1086341312
    %v9294 = vmin.bf16 %v9198, 1086341312
    %v9295 = vmin.bf16 %v9199, 1086341312
    %v9296 = vmin.bf16 %v9200, 1086341312
    %v9297 = vmin.bf16 %v9201, 1086341312
    %v9298 = vmin.bf16 %v9202, 1086341312
    %v9299 = vmin.bf16 %v9203, 1086341312
    %v9300 = vmin.bf16 %v9204, 1086341312
    %v9301 = vmin.bf16 %v9205, 1086341312
    %v9302 = vmin.bf16 %v9206, 1086341312
    %v9303 = vmin.bf16 %v9207, 1086341312
    %v9304 = vmin.bf16 %v9208, 1086341312
    %v9305 = vmin.bf16 %v9209, 1086341312
    %v9306 = vmin.bf16 %v9210, 1086341312
    %v9307 = vmin.bf16 %v9211, 1086341312
    %v9308 = vmin.bf16 %v9212, 1086341312
    %v9310 = vshrl.u32 %v9213, 16
    %v9312 = vrot.slane %v9310, 7
    %v9313 = vrot.slane %v9312, 4
    %v9315 = vshrl.u32 %v9214, 16
    %v9317 = vrot.slane %v9315, 7
    %v9318 = vshll.u32 %v9214, 16
    %v9320 = vor.u32 %v9317, %v9318
    %v9321 = vsel %vm4049, %v9313, %v9320
    %v9322 = vrot.slane %v9317, 4
    %v9324 = vshrl.u32 %v9215, 16
    %v9326 = vrot.slane %v9324, 7
    %v9327 = vshll.u32 %v9215, 16
    %v9329 = vor.u32 %v9326, %v9327
    %v9330 = vsel %vm4049, %v9322, %v9329
    %v9332 = vshrl.u32 %v9216, 16
    %v9334 = vrot.slane %v9332, 7
    %v9335 = vrot.slane %v9334, 4
    %v9337 = vshrl.u32 %v9217, 16
    %v9339 = vrot.slane %v9337, 7
    %v9340 = vshll.u32 %v9217, 16
    %v9342 = vor.u32 %v9339, %v9340
    %v9343 = vsel %vm4049, %v9335, %v9342
    %v9344 = vrot.slane %v9339, 4
    %v9346 = vshrl.u32 %v9218, 16
    %v9348 = vrot.slane %v9346, 7
    %v9349 = vshll.u32 %v9218, 16
    %v9351 = vor.u32 %v9348, %v9349
    %v9352 = vsel %vm4049, %v9344, %v9351
    %v9354 = vshrl.u32 %v9219, 16
    %v9356 = vrot.slane %v9354, 7
    %v9357 = vrot.slane %v9356, 4
    %v9359 = vshrl.u32 %v9220, 16
    %v9361 = vrot.slane %v9359, 7
    %v9362 = vshll.u32 %v9220, 16
    %v9364 = vor.u32 %v9361, %v9362
    %v9365 = vsel %vm4049, %v9357, %v9364
    %v9366 = vrot.slane %v9361, 4
    %v9368 = vshrl.u32 %v9221, 16
    %v9370 = vrot.slane %v9368, 7
    %v9371 = vshll.u32 %v9221, 16
    %v9373 = vor.u32 %v9370, %v9371
    %v9374 = vsel %vm4049, %v9366, %v9373
    %v9376 = vshrl.u32 %v9222, 16
    %v9378 = vrot.slane %v9376, 7
    %v9379 = vrot.slane %v9378, 4
    %v9381 = vshrl.u32 %v9223, 16
    %v9383 = vrot.slane %v9381, 7
    %v9384 = vshll.u32 %v9223, 16
    %v9386 = vor.u32 %v9383, %v9384
    %v9387 = vsel %vm4049, %v9379, %v9386
    %v9388 = vrot.slane %v9383, 4
    %v9390 = vshrl.u32 %v9224, 16
    %v9392 = vrot.slane %v9390, 7
    %v9393 = vshll.u32 %v9224, 16
    %v9395 = vor.u32 %v9392, %v9393
    %v9396 = vsel %vm4049, %v9388, %v9395
    %v9398 = vshrl.u32 %v9225, 16
    %v9400 = vrot.slane %v9398, 7
    %v9401 = vrot.slane %v9400, 4
    %v9403 = vshrl.u32 %v9226, 16
    %v9405 = vrot.slane %v9403, 7
    %v9406 = vshll.u32 %v9226, 16
    %v9408 = vor.u32 %v9405, %v9406
    %v9409 = vsel %vm4049, %v9401, %v9408
    %v9410 = vrot.slane %v9405, 4
    %v9412 = vshrl.u32 %v9227, 16
    %v9414 = vrot.slane %v9412, 7
    %v9415 = vshll.u32 %v9227, 16
    %v9417 = vor.u32 %v9414, %v9415
    %v9418 = vsel %vm4049, %v9410, %v9417
    %v9420 = vshrl.u32 %v9228, 16
    %v9422 = vrot.slane %v9420, 7
    %v9423 = vrot.slane %v9422, 4
    %v9425 = vshrl.u32 %v9229, 16
    %v9427 = vrot.slane %v9425, 7
    %v9428 = vshll.u32 %v9229, 16
    %v9430 = vor.u32 %v9427, %v9428
    %v9431 = vsel %vm4049, %v9423, %v9430
    %v9432 = vrot.slane %v9427, 4
    %v9434 = vshrl.u32 %v9230, 16
    %v9436 = vrot.slane %v9434, 7
    %v9437 = vshll.u32 %v9230, 16
    %v9439 = vor.u32 %v9436, %v9437
    %v9440 = vsel %vm4049, %v9432, %v9439
    %v9442 = vshrl.u32 %v9231, 16
    %v9444 = vrot.slane %v9442, 7
    %v9445 = vrot.slane %v9444, 4
    %v9447 = vshrl.u32 %v9232, 16
    %v9449 = vrot.slane %v9447, 7
    %v9450 = vshll.u32 %v9232, 16
    %v9452 = vor.u32 %v9449, %v9450
    %v9453 = vsel %vm4049, %v9445, %v9452
    %v9454 = vrot.slane %v9449, 4
    %v9456 = vshrl.u32 %v9233, 16
    %v9458 = vrot.slane %v9456, 7
    %v9459 = vshll.u32 %v9233, 16
    %v9461 = vor.u32 %v9458, %v9459
    %v9462 = vsel %vm4049, %v9454, %v9461
    %v9464 = vshrl.u32 %v9234, 16
    %v9466 = vrot.slane %v9464, 7
    %v9467 = vrot.slane %v9466, 4
    %v9469 = vshrl.u32 %v9235, 16
    %v9471 = vrot.slane %v9469, 7
    %v9472 = vshll.u32 %v9235, 16
    %v9474 = vor.u32 %v9471, %v9472
    %v9475 = vsel %vm4049, %v9467, %v9474
    %v9476 = vrot.slane %v9471, 4
    %v9478 = vshrl.u32 %v9236, 16
    %v9480 = vrot.slane %v9478, 7
    %v9481 = vshll.u32 %v9236, 16
    %v9483 = vor.u32 %v9480, %v9481
    %v9484 = vsel %vm4049, %v9476, %v9483
    %v9486 = vshrl.u32 %v9237, 16
    %v9488 = vrot.slane %v9486, 7
    %v9489 = vrot.slane %v9488, 4
    %v9491 = vshrl.u32 %v9238, 16
    %v9493 = vrot.slane %v9491, 7
    %v9494 = vshll.u32 %v9238, 16
    %v9496 = vor.u32 %v9493, %v9494
    %v9497 = vsel %vm4049, %v9489, %v9496
    %v9498 = vrot.slane %v9493, 4
    %v9500 = vshrl.u32 %v9239, 16
    %v9502 = vrot.slane %v9500, 7
    %v9503 = vshll.u32 %v9239, 16
    %v9505 = vor.u32 %v9502, %v9503
    %v9506 = vsel %vm4049, %v9498, %v9505
    %v9508 = vshrl.u32 %v9240, 16
    %v9510 = vrot.slane %v9508, 7
    %v9511 = vrot.slane %v9510, 4
    %v9513 = vshrl.u32 %v9241, 16
    %v9515 = vrot.slane %v9513, 7
    %v9516 = vshll.u32 %v9241, 16
    %v9518 = vor.u32 %v9515, %v9516
    %v9519 = vsel %vm4049, %v9511, %v9518
    %v9520 = vrot.slane %v9515, 4
    %v9522 = vshrl.u32 %v9242, 16
    %v9524 = vrot.slane %v9522, 7
    %v9525 = vshll.u32 %v9242, 16
    %v9527 = vor.u32 %v9524, %v9525
    %v9528 = vsel %vm4049, %v9520, %v9527
    %v9530 = vshrl.u32 %v9243, 16
    %v9532 = vrot.slane %v9530, 7
    %v9533 = vrot.slane %v9532, 4
    %v9535 = vshrl.u32 %v9244, 16
    %v9537 = vrot.slane %v9535, 7
    %v9538 = vshll.u32 %v9244, 16
    %v9540 = vor.u32 %v9537, %v9538
    %v9541 = vsel %vm4049, %v9533, %v9540
    %v9542 = vrot.slane %v9537, 4
    %v9544 = vshrl.u32 %v9245, 16
    %v9546 = vrot.slane %v9544, 7
    %v9547 = vshll.u32 %v9245, 16
    %v9549 = vor.u32 %v9546, %v9547
    %v9550 = vsel %vm4049, %v9542, %v9549
    %v9552 = vshrl.u32 %v9246, 16
    %v9554 = vrot.slane %v9552, 7
    %v9555 = vrot.slane %v9554, 4
    %v9557 = vshrl.u32 %v9247, 16
    %v9559 = vrot.slane %v9557, 7
    %v9560 = vshll.u32 %v9247, 16
    %v9562 = vor.u32 %v9559, %v9560
    %v9563 = vsel %vm4049, %v9555, %v9562
    %v9564 = vrot.slane %v9559, 4
    %v9566 = vshrl.u32 %v9248, 16
    %v9568 = vrot.slane %v9566, 7
    %v9569 = vshll.u32 %v9248, 16
    %v9571 = vor.u32 %v9568, %v9569
    %v9572 = vsel %vm4049, %v9564, %v9571
    %v9574 = vshrl.u32 %v9249, 16
    %v9576 = vrot.slane %v9574, 7
    %v9577 = vrot.slane %v9576, 4
    %v9579 = vshrl.u32 %v9250, 16
    %v9581 = vrot.slane %v9579, 7
    %v9582 = vshll.u32 %v9250, 16
    %v9584 = vor.u32 %v9581, %v9582
    %v9585 = vsel %vm4049, %v9577, %v9584
    %v9586 = vrot.slane %v9581, 4
    %v9588 = vshrl.u32 %v9251, 16
    %v9590 = vrot.slane %v9588, 7
    %v9591 = vshll.u32 %v9251, 16
    %v9593 = vor.u32 %v9590, %v9591
    %v9594 = vsel %vm4049, %v9586, %v9593
    %v9596 = vshrl.u32 %v9252, 16
    %v9598 = vrot.slane %v9596, 7
    %v9599 = vrot.slane %v9598, 4
    %v9601 = vshrl.u32 %v9253, 16
    %v9603 = vrot.slane %v9601, 7
    %v9604 = vshll.u32 %v9253, 16
    %v9606 = vor.u32 %v9603, %v9604
    %v9607 = vsel %vm4049, %v9599, %v9606
    %v9608 = vrot.slane %v9603, 4
    %v9610 = vshrl.u32 %v9254, 16
    %v9612 = vrot.slane %v9610, 7
    %v9613 = vshll.u32 %v9254, 16
    %v9615 = vor.u32 %v9612, %v9613
    %v9616 = vsel %vm4049, %v9608, %v9615
    %v9618 = vshrl.u32 %v9255, 16
    %v9620 = vrot.slane %v9618, 7
    %v9621 = vrot.slane %v9620, 4
    %v9623 = vshrl.u32 %v9256, 16
    %v9625 = vrot.slane %v9623, 7
    %v9626 = vshll.u32 %v9256, 16
    %v9628 = vor.u32 %v9625, %v9626
    %v9629 = vsel %vm4049, %v9621, %v9628
    %v9630 = vrot.slane %v9625, 4
    %v9632 = vshrl.u32 %v9257, 16
    %v9634 = vrot.slane %v9632, 7
    %v9635 = vshll.u32 %v9257, 16
    %v9637 = vor.u32 %v9634, %v9635
    %v9638 = vsel %vm4049, %v9630, %v9637
    %v9640 = vshrl.u32 %v9258, 16
    %v9642 = vrot.slane %v9640, 7
    %v9643 = vrot.slane %v9642, 4
    %v9645 = vshrl.u32 %v9259, 16
    %v9647 = vrot.slane %v9645, 7
    %v9648 = vshll.u32 %v9259, 16
    %v9650 = vor.u32 %v9647, %v9648
    %v9651 = vsel %vm4049, %v9643, %v9650
    %v9652 = vrot.slane %v9647, 4
    %v9654 = vshrl.u32 %v9260, 16
    %v9656 = vrot.slane %v9654, 7
    %v9657 = vshll.u32 %v9260, 16
    %v9659 = vor.u32 %v9656, %v9657
    %v9660 = vsel %vm4049, %v9652, %v9659
    %v9662 = vshrl.u32 %v9261, 16
    %v9664 = vrot.slane %v9662, 7
    %v9665 = vrot.slane %v9664, 4
    %v9667 = vshrl.u32 %v9262, 16
    %v9669 = vrot.slane %v9667, 7
    %v9670 = vshll.u32 %v9262, 16
    %v9672 = vor.u32 %v9669, %v9670
    %v9673 = vsel %vm4049, %v9665, %v9672
    %v9674 = vrot.slane %v9669, 4
    %v9676 = vshrl.u32 %v9263, 16
    %v9678 = vrot.slane %v9676, 7
    %v9679 = vshll.u32 %v9263, 16
    %v9681 = vor.u32 %v9678, %v9679
    %v9682 = vsel %vm4049, %v9674, %v9681
    %v9684 = vshrl.u32 %v9264, 16
    %v9686 = vrot.slane %v9684, 7
    %v9687 = vrot.slane %v9686, 4
    %v9689 = vshrl.u32 %v9265, 16
    %v9691 = vrot.slane %v9689, 7
    %v9692 = vshll.u32 %v9265, 16
    %v9694 = vor.u32 %v9691, %v9692
    %v9695 = vsel %vm4049, %v9687, %v9694
    %v9696 = vrot.slane %v9691, 4
    %v9698 = vshrl.u32 %v9266, 16
    %v9700 = vrot.slane %v9698, 7
    %v9701 = vshll.u32 %v9266, 16
    %v9703 = vor.u32 %v9700, %v9701
    %v9704 = vsel %vm4049, %v9696, %v9703
    %v9706 = vshrl.u32 %v9267, 16
    %v9708 = vrot.slane %v9706, 7
    %v9709 = vrot.slane %v9708, 4
    %v9711 = vshrl.u32 %v9268, 16
    %v9713 = vrot.slane %v9711, 7
    %v9714 = vshll.u32 %v9268, 16
    %v9716 = vor.u32 %v9713, %v9714
    %v9717 = vsel %vm4049, %v9709, %v9716
    %v9718 = vrot.slane %v9713, 4
    %v9720 = vshrl.u32 %v9269, 16
    %v9722 = vrot.slane %v9720, 7
    %v9723 = vshll.u32 %v9269, 16
    %v9725 = vor.u32 %v9722, %v9723
    %v9726 = vsel %vm4049, %v9718, %v9725
    %v9728 = vshrl.u32 %v9270, 16
    %v9730 = vrot.slane %v9728, 7
    %v9731 = vrot.slane %v9730, 4
    %v9733 = vshrl.u32 %v9271, 16
    %v9735 = vrot.slane %v9733, 7
    %v9736 = vshll.u32 %v9271, 16
    %v9738 = vor.u32 %v9735, %v9736
    %v9739 = vsel %vm4049, %v9731, %v9738
    %v9740 = vrot.slane %v9735, 4
    %v9742 = vshrl.u32 %v9272, 16
    %v9744 = vrot.slane %v9742, 7
    %v9745 = vshll.u32 %v9272, 16
    %v9747 = vor.u32 %v9744, %v9745
    %v9748 = vsel %vm4049, %v9740, %v9747
    %v9750 = vshrl.u32 %v9273, 16
    %v9752 = vrot.slane %v9750, 7
    %v9753 = vrot.slane %v9752, 4
    %v9755 = vshrl.u32 %v9274, 16
    %v9757 = vrot.slane %v9755, 7
    %v9758 = vshll.u32 %v9274, 16
    %v9760 = vor.u32 %v9757, %v9758
    %v9761 = vsel %vm4049, %v9753, %v9760
    %v9762 = vrot.slane %v9757, 4
    %v9764 = vshrl.u32 %v9275, 16
    %v9766 = vrot.slane %v9764, 7
    %v9767 = vshll.u32 %v9275, 16
    %v9769 = vor.u32 %v9766, %v9767
    %v9770 = vsel %vm4049, %v9762, %v9769
    %v9772 = vshrl.u32 %v9276, 16
    %v9774 = vrot.slane %v9772, 7
    %v9775 = vrot.slane %v9774, 4
    %v9777 = vshrl.u32 %v9277, 16
    %v9779 = vrot.slane %v9777, 7
    %v9780 = vshll.u32 %v9277, 16
    %v9782 = vor.u32 %v9779, %v9780
    %v9783 = vsel %vm4049, %v9775, %v9782
    %v9784 = vrot.slane %v9779, 4
    %v9786 = vshrl.u32 %v9278, 16
    %v9788 = vrot.slane %v9786, 7
    %v9789 = vshll.u32 %v9278, 16
    %v9791 = vor.u32 %v9788, %v9789
    %v9792 = vsel %vm4049, %v9784, %v9791
    %v9794 = vshrl.u32 %v9279, 16
    %v9796 = vrot.slane %v9794, 7
    %v9797 = vrot.slane %v9796, 4
    %v9799 = vshrl.u32 %v9280, 16
    %v9801 = vrot.slane %v9799, 7
    %v9802 = vshll.u32 %v9280, 16
    %v9804 = vor.u32 %v9801, %v9802
    %v9805 = vsel %vm4049, %v9797, %v9804
    %v9806 = vrot.slane %v9801, 4
    %v9808 = vshrl.u32 %v9281, 16
    %v9810 = vrot.slane %v9808, 7
    %v9811 = vshll.u32 %v9281, 16
    %v9813 = vor.u32 %v9810, %v9811
    %v9814 = vsel %vm4049, %v9806, %v9813
    %v9816 = vshrl.u32 %v9282, 16
    %v9818 = vrot.slane %v9816, 7
    %v9819 = vrot.slane %v9818, 4
    %v9821 = vshrl.u32 %v9283, 16
    %v9823 = vrot.slane %v9821, 7
    %v9824 = vshll.u32 %v9283, 16
    %v9826 = vor.u32 %v9823, %v9824
    %v9827 = vsel %vm4049, %v9819, %v9826
    %v9828 = vrot.slane %v9823, 4
    %v9830 = vshrl.u32 %v9284, 16
    %v9832 = vrot.slane %v9830, 7
    %v9833 = vshll.u32 %v9284, 16
    %v9835 = vor.u32 %v9832, %v9833
    %v9836 = vsel %vm4049, %v9828, %v9835
    %v9838 = vshrl.u32 %v9285, 16
    %v9840 = vrot.slane %v9838, 7
    %v9841 = vrot.slane %v9840, 4
    %v9843 = vshrl.u32 %v9286, 16
    %v9845 = vrot.slane %v9843, 7
    %v9846 = vshll.u32 %v9286, 16
    %v9848 = vor.u32 %v9845, %v9846
    %v9849 = vsel %vm4049, %v9841, %v9848
    %v9850 = vrot.slane %v9845, 4
    %v9852 = vshrl.u32 %v9287, 16
    %v9854 = vrot.slane %v9852, 7
    %v9855 = vshll.u32 %v9287, 16
    %v9857 = vor.u32 %v9854, %v9855
    %v9858 = vsel %vm4049, %v9850, %v9857
    %v9860 = vshrl.u32 %v9288, 16
    %v9862 = vrot.slane %v9860, 7
    %v9863 = vrot.slane %v9862, 4
    %v9865 = vshrl.u32 %v9289, 16
    %v9867 = vrot.slane %v9865, 7
    %v9868 = vshll.u32 %v9289, 16
    %v9870 = vor.u32 %v9867, %v9868
    %v9871 = vsel %vm4049, %v9863, %v9870
    %v9872 = vrot.slane %v9867, 4
    %v9874 = vshrl.u32 %v9290, 16
    %v9876 = vrot.slane %v9874, 7
    %v9877 = vshll.u32 %v9290, 16
    %v9879 = vor.u32 %v9876, %v9877
    %v9880 = vsel %vm4049, %v9872, %v9879
    %v9882 = vshrl.u32 %v9291, 16
    %v9884 = vrot.slane %v9882, 7
    %v9885 = vrot.slane %v9884, 4
    %v9887 = vshrl.u32 %v9292, 16
    %v9889 = vrot.slane %v9887, 7
    %v9890 = vshll.u32 %v9292, 16
    %v9892 = vor.u32 %v9889, %v9890
    %v9893 = vsel %vm4049, %v9885, %v9892
    %v9894 = vrot.slane %v9889, 4
    %v9896 = vshrl.u32 %v9293, 16
    %v9898 = vrot.slane %v9896, 7
    %v9899 = vshll.u32 %v9293, 16
    %v9901 = vor.u32 %v9898, %v9899
    %v9902 = vsel %vm4049, %v9894, %v9901
    %v9904 = vshrl.u32 %v9294, 16
    %v9906 = vrot.slane %v9904, 7
    %v9907 = vrot.slane %v9906, 4
    %v9909 = vshrl.u32 %v9295, 16
    %v9911 = vrot.slane %v9909, 7
    %v9912 = vshll.u32 %v9295, 16
    %v9914 = vor.u32 %v9911, %v9912
    %v9915 = vsel %vm4049, %v9907, %v9914
    %v9916 = vrot.slane %v9911, 4
    %v9918 = vshrl.u32 %v9296, 16
    %v9920 = vrot.slane %v9918, 7
    %v9921 = vshll.u32 %v9296, 16
    %v9923 = vor.u32 %v9920, %v9921
    %v9924 = vsel %vm4049, %v9916, %v9923
    %v9926 = vshrl.u32 %v9297, 16
    %v9928 = vrot.slane %v9926, 7
    %v9929 = vrot.slane %v9928, 4
    %v9931 = vshrl.u32 %v9298, 16
    %v9933 = vrot.slane %v9931, 7
    %v9934 = vshll.u32 %v9298, 16
    %v9936 = vor.u32 %v9933, %v9934
    %v9937 = vsel %vm4049, %v9929, %v9936
    %v9938 = vrot.slane %v9933, 4
    %v9940 = vshrl.u32 %v9299, 16
    %v9942 = vrot.slane %v9940, 7
    %v9943 = vshll.u32 %v9299, 16
    %v9945 = vor.u32 %v9942, %v9943
    %v9946 = vsel %vm4049, %v9938, %v9945
    %v9948 = vshrl.u32 %v9300, 16
    %v9950 = vrot.slane %v9948, 7
    %v9951 = vrot.slane %v9950, 4
    %v9953 = vshrl.u32 %v9301, 16
    %v9955 = vrot.slane %v9953, 7
    %v9956 = vshll.u32 %v9301, 16
    %v9958 = vor.u32 %v9955, %v9956
    %v9959 = vsel %vm4049, %v9951, %v9958
    %v9960 = vrot.slane %v9955, 4
    %v9962 = vshrl.u32 %v9302, 16
    %v9964 = vrot.slane %v9962, 7
    %v9965 = vshll.u32 %v9302, 16
    %v9967 = vor.u32 %v9964, %v9965
    %v9968 = vsel %vm4049, %v9960, %v9967
    %v9970 = vshrl.u32 %v9303, 16
    %v9972 = vrot.slane %v9970, 7
    %v9973 = vrot.slane %v9972, 4
    %v9975 = vshrl.u32 %v9304, 16
    %v9977 = vrot.slane %v9975, 7
    %v9978 = vshll.u32 %v9304, 16
    %v9980 = vor.u32 %v9977, %v9978
    %v9981 = vsel %vm4049, %v9973, %v9980
    %v9982 = vrot.slane %v9977, 4
    %v9984 = vshrl.u32 %v9305, 16
    %v9986 = vrot.slane %v9984, 7
    %v9987 = vshll.u32 %v9305, 16
    %v9989 = vor.u32 %v9986, %v9987
    %v9990 = vsel %vm4049, %v9982, %v9989
    %v9992 = vshrl.u32 %v9306, 16
    %v9994 = vrot.slane %v9992, 7
    %v9995 = vrot.slane %v9994, 4
    %v9997 = vshrl.u32 %v9307, 16
    %v9999 = vrot.slane %v9997, 7
    %v10000 = vshll.u32 %v9307, 16
    %v10002 = vor.u32 %v9999, %v10000
    %v10003 = vsel %vm4049, %v9995, %v10002
    %v10004 = vrot.slane %v9999, 4
    %v10006 = vshrl.u32 %v9308, 16
    %v10008 = vrot.slane %v10006, 7
    %v10009 = vshll.u32 %v9308, 16
    %v10011 = vor.u32 %v10008, %v10009
    %v10012 = vsel %vm4049, %v10004, %v10011
    %v10013 = vld [vmem:[%s7] sm:$0xf]
    %v10014 = vld [vmem:[%s7 + $0x4] sm:$0xf]
    %v10015 = vld [vmem:[%s7 + $0x8] sm:$0xf]
    %v10016 = vld [vmem:[%s7 + $0xc] sm:$0xf]
    %v10017 = vld [vmem:[%s8] sm:$0x1]
    %v10019 = vlaneseq
    %v10020 = vshrl.u32 %v10019, 7
    %v10021 = vsub.s32 0, %v10020
    %v10022 = vrot.slane %v10017, %v10021
    %v10024 = vunpack.c.l.b16 %v9321
    %v10025 = vunpack.c.l.b16 %v9330
    %v10026 = vunpack.c.l.b16 %v9343
    %v10027 = vunpack.c.l.b16 %v9352
    %v10028 = vunpack.c.l.b16 %v9365
    %v10029 = vunpack.c.l.b16 %v9374
    %v10030 = vunpack.c.l.b16 %v9387
    %v10031 = vunpack.c.l.b16 %v9396
    %v10032 = vunpack.c.l.b16 %v9409
    %v10033 = vunpack.c.l.b16 %v9418
    %v10034 = vunpack.c.l.b16 %v9431
    %v10035 = vunpack.c.l.b16 %v9440
    %v10036 = vunpack.c.l.b16 %v9453
    %v10037 = vunpack.c.l.b16 %v9462
    %v10038 = vunpack.c.l.b16 %v9475
    %v10039 = vunpack.c.l.b16 %v9484
    %v10040 = vunpack.c.l.b16 %v9497
    %v10041 = vunpack.c.l.b16 %v9506
    %v10042 = vunpack.c.l.b16 %v9519
    %v10043 = vunpack.c.l.b16 %v9528
    %v10044 = vunpack.c.l.b16 %v9541
    %v10045 = vunpack.c.l.b16 %v9550
    %v10046 = vunpack.c.l.b16 %v9563
    %v10047 = vunpack.c.l.b16 %v9572
    %v10048 = vunpack.c.l.b16 %v9585
    %v10049 = vunpack.c.l.b16 %v9594
    %v10050 = vunpack.c.l.b16 %v9607
    %v10051 = vunpack.c.l.b16 %v9616
    %v10052 = vunpack.c.l.b16 %v9629
    %v10053 = vunpack.c.l.b16 %v9638
    %v10054 = vunpack.c.l.b16 %v9651
    %v10055 = vunpack.c.l.b16 %v9660
    %v10056 = vunpack.c.l.b16 %v9673
    %v10057 = vunpack.c.l.b16 %v9682
    %v10058 = vunpack.c.l.b16 %v9695
    %v10059 = vunpack.c.l.b16 %v9704
    %v10060 = vunpack.c.l.b16 %v9717
    %v10061 = vunpack.c.l.b16 %v9726
    %v10062 = vunpack.c.l.b16 %v9739
    %v10063 = vunpack.c.l.b16 %v9748
    %v10064 = vunpack.c.l.b16 %v9761
    %v10065 = vunpack.c.l.b16 %v9770
    %v10066 = vunpack.c.l.b16 %v9783
    %v10067 = vunpack.c.l.b16 %v9792
    %v10068 = vunpack.c.l.b16 %v9805
    %v10069 = vunpack.c.l.b16 %v9814
    %v10070 = vunpack.c.l.b16 %v9827
    %v10071 = vunpack.c.l.b16 %v9836
    %v10072 = vunpack.c.l.b16 %v9849
    %v10073 = vunpack.c.l.b16 %v9858
    %v10074 = vunpack.c.l.b16 %v9871
    %v10075 = vunpack.c.l.b16 %v9880
    %v10076 = vunpack.c.l.b16 %v9893
    %v10077 = vunpack.c.l.b16 %v9902
    %v10078 = vunpack.c.l.b16 %v9915
    %v10079 = vunpack.c.l.b16 %v9924
    %v10080 = vunpack.c.l.b16 %v9937
    %v10081 = vunpack.c.l.b16 %v9946
    %v10082 = vunpack.c.l.b16 %v9959
    %v10083 = vunpack.c.l.b16 %v9968
    %v10084 = vunpack.c.l.b16 %v9981
    %v10085 = vunpack.c.l.b16 %v9990
    %v10086 = vunpack.c.l.b16 %v10003
    %v10087 = vunpack.c.l.b16 %v10012
    %v10088 = vpack.c.b16 %v10025, %v10024
    %v10089 = vpack.c.b16 %v10027, %v10026
    %v10090 = vpack.c.b16 %v10029, %v10028
    %v10091 = vpack.c.b16 %v10031, %v10030
    %v10092 = vpack.c.b16 %v10033, %v10032
    %v10093 = vpack.c.b16 %v10035, %v10034
    %v10094 = vpack.c.b16 %v10037, %v10036
    %v10095 = vpack.c.b16 %v10039, %v10038
    %v10096 = vpack.c.b16 %v10041, %v10040
    %v10097 = vpack.c.b16 %v10043, %v10042
    %v10098 = vpack.c.b16 %v10045, %v10044
    %v10099 = vpack.c.b16 %v10047, %v10046
    %v10100 = vpack.c.b16 %v10049, %v10048
    %v10101 = vpack.c.b16 %v10051, %v10050
    %v10102 = vpack.c.b16 %v10053, %v10052
    %v10103 = vpack.c.b16 %v10055, %v10054
    %v10104 = vpack.c.b16 %v10057, %v10056
    %v10105 = vpack.c.b16 %v10059, %v10058
    %v10106 = vpack.c.b16 %v10061, %v10060
    %v10107 = vpack.c.b16 %v10063, %v10062
    %v10108 = vpack.c.b16 %v10065, %v10064
    %v10109 = vpack.c.b16 %v10067, %v10066
    %v10110 = vpack.c.b16 %v10069, %v10068
    %v10111 = vpack.c.b16 %v10071, %v10070
    %v10112 = vpack.c.b16 %v10073, %v10072
    %v10113 = vpack.c.b16 %v10075, %v10074
    %v10114 = vpack.c.b16 %v10077, %v10076
    %v10115 = vpack.c.b16 %v10079, %v10078
    %v10116 = vpack.c.b16 %v10081, %v10080
    %v10117 = vpack.c.b16 %v10083, %v10082
    %v10118 = vpack.c.b16 %v10085, %v10084
    %v10119 = vpack.c.b16 %v10087, %v10086
    %v10124 = vunpack.c.l.b16 %v10013
    %v10125 = vunpack.c.l.b16 %v10014
    %v10126 = vunpack.c.l.b16 %v10015
    %v10127 = vunpack.c.l.b16 %v10016
    %v10128 = vpack.c.b16 %v10125, %v10124
    %v10129 = vpack.c.b16 %v10127, %v10126
    %v10133 = vsel %vm4873, %v10088, 0
    %v10136 = vsel %vm4873, %v10089, 0
    %v10139 = vsel %vm4873, %v10090, 0
    %v10142 = vsel %vm4873, %v10091, 0
    %v10145 = vsel %vm4873, %v10092, 0
    %v10148 = vsel %vm4873, %v10093, 0
    %v10151 = vsel %vm4873, %v10094, 0
    %v10154 = vsel %vm4873, %v10095, 0
    %v10157 = vsel %vm4873, %v10096, 0
    %v10160 = vsel %vm4873, %v10097, 0
    %v10163 = vsel %vm4873, %v10098, 0
    %v10166 = vsel %vm4873, %v10099, 0
    %v10169 = vsel %vm4873, %v10100, 0
    %v10172 = vsel %vm4873, %v10101, 0
    %v10175 = vsel %vm4873, %v10102, 0
    %v10178 = vsel %vm4873, %v10103, 0
    %v10181 = vsel %vm4873, %v10104, 0
    %v10184 = vsel %vm4873, %v10105, 0
    %v10187 = vsel %vm4873, %v10106, 0
    %v10190 = vsel %vm4873, %v10107, 0
    %v10193 = vsel %vm4873, %v10108, 0
    %v10196 = vsel %vm4873, %v10109, 0
    %v10199 = vsel %vm4873, %v10110, 0
    %v10202 = vsel %vm4873, %v10111, 0
    %v10205 = vsel %vm4873, %v10112, 0
    %v10208 = vsel %vm4873, %v10113, 0
    %v10211 = vsel %vm4873, %v10114, 0
    %v10214 = vsel %vm4873, %v10115, 0
    %v10217 = vsel %vm4873, %v10116, 0
    %v10220 = vsel %vm4873, %v10117, 0
    %v10223 = vsel %vm4873, %v10118, 0
    %v10226 = vsel %vm4873, %v10119, 0
    %10228 = vmatprep.subr.bf16.mxu0 0
    %10229 = vmatpush1.bf16.msra.mxu0 %v10128
    %10230 = vmatprep.subr.bf16.mxu0 0
    %10231 = vmatpush1.bf16.msra.mxu0 %v10129
    %10232 = vmatprep.subr.bf16.mxu0 0
    %10233 = vmatpush1.bf16.msra.mxu0 0
    %10234 = vmatprep.subr.bf16.mxu0 0
    %10235 = vmatpush1.bf16.msra.mxu0 0
    %10236 = vmatprep.subr.bf16.mxu0 0
    %10237 = vmatpush1.bf16.msra.mxu0 0
    %10238 = vmatprep.subr.bf16.mxu0 0
    %10239 = vmatpush1.bf16.msra.mxu0 0
    %10240 = vmatprep.subr.bf16.mxu0 0
    %10241 = vmatpush1.bf16.msra.mxu0 0
    %10242 = vmatprep.subr.bf16.mxu0 0
    %10243 = vmatpush1.bf16.msra.mxu0 0
    %10244 = vmatprep.subr.bf16.mxu0 0
    %10245 = vmatpush1.bf16.msra.mxu0 0
    %10246 = vmatprep.subr.bf16.mxu0 0
    %10247 = vmatpush1.bf16.msra.mxu0 0
    %10248 = vmatprep.subr.bf16.mxu0 0
    %10249 = vmatpush1.bf16.msra.mxu0 0
    %10250 = vmatprep.subr.bf16.mxu0 0
    %10251 = vmatpush1.bf16.msra.mxu0 0
    %10252 = vmatprep.subr.bf16.mxu0 0
    %10253 = vmatpush1.bf16.msra.mxu0 0
    %10254 = vmatprep.subr.bf16.mxu0 0
    %10255 = vmatpush1.bf16.msra.mxu0 0
    %10256 = vmatprep.subr.bf16.mxu0 0
    %10257 = vmatpush1.bf16.msra.mxu0 0
    %10258 = vmatprep.subr.bf16.mxu0 0
    %10259 = vmatpush1.bf16.msra.mxu0 0
    %10260 = vmatprep.mubr.bf16.mxu0 0
    %10261 = vmatmul.mubr.bf16.gmra.mrb[0].mxu0 %v10133
    %v10262 = vpop.f32.mrb[0].mxu0
    %v10263 = vadd.f32 %v10022, %v10262
    %v10264 = vpop.f32.mrb[0].mxu0
    %v10265 = vpop.f32.mrb[0].mxu0
    %v10266 = vadd.f32 %v10022, %v10265
    %v10267 = vpop.f32.mrb[0].mxu0
    %10268 = vmatprep.mubr.bf16.mxu0 0
    %10269 = vmatmul.mubr.bf16.gmra.mrb[0].mxu0 %v10136
    %v10270 = vpop.f32.mrb[0].mxu0
    %v10271 = vadd.f32 %v10022, %v10270
    %v10272 = vpop.f32.mrb[0].mxu0
    %v10273 = vpop.f32.mrb[0].mxu0
    %v10274 = vadd.f32 %v10022, %v10273
    %v10275 = vpop.f32.mrb[0].mxu0
    %10276 = vmatprep.mubr.bf16.mxu0 0
    %10277 = vmatmul.mubr.bf16.gmra.mrb[0].mxu0 %v10139
    %v10278 = vpop.f32.mrb[0].mxu0
    %v10279 = vadd.f32 %v10022, %v10278
    %v10280 = vpop.f32.mrb[0].mxu0
    %v10281 = vpop.f32.mrb[0].mxu0
    %v10282 = vadd.f32 %v10022, %v10281
    %v10283 = vpop.f32.mrb[0].mxu0
    %10284 = vmatprep.mubr.bf16.mxu0 0
    %10285 = vmatmul.mubr.bf16.gmra.mrb[0].mxu0 %v10142
    %v10286 = vpop.f32.mrb[0].mxu0
    %v10287 = vadd.f32 %v10022, %v10286
    %v10288 = vpop.f32.mrb[0].mxu0
    %v10289 = vpop.f32.mrb[0].mxu0
    %v10290 = vadd.f32 %v10022, %v10289
    %v10291 = vpop.f32.mrb[0].mxu0
    %10292 = vmatprep.mubr.bf16.mxu0 0
    %10293 = vmatmul.mubr.bf16.gmra.mrb[0].mxu0 %v10145
    %v10294 = vpop.f32.mrb[0].mxu0
    %v10295 = vadd.f32 %v10022, %v10294
    %v10296 = vpop.f32.mrb[0].mxu0
    %v10297 = vpop.f32.mrb[0].mxu0
    %v10298 = vadd.f32 %v10022, %v10297
    %v10299 = vpop.f32.mrb[0].mxu0
    %10300 = vmatprep.mubr.bf16.mxu0 0
    %10301 = vmatmul.mubr.bf16.gmra.mrb[0].mxu0 %v10148
    %v10302 = vpop.f32.mrb[0].mxu0
    %v10303 = vadd.f32 %v10022, %v10302
    %v10304 = vpop.f32.mrb[0].mxu0
    %v10305 = vpop.f32.mrb[0].mxu0
    %v10306 = vadd.f32 %v10022, %v10305
    %v10307 = vpop.f32.mrb[0].mxu0
    %10308 = vmatprep.mubr.bf16.mxu0 0
    %10309 = vmatmul.mubr.bf16.gmra.mrb[0].mxu0 %v10151
    %v10310 = vpop.f32.mrb[0].mxu0
    %v10311 = vadd.f32 %v10022, %v10310
    %v10312 = vpop.f32.mrb[0].mxu0
    %v10313 = vpop.f32.mrb[0].mxu0
    %v10314 = vadd.f32 %v10022, %v10313
    %v10315 = vpop.f32.mrb[0].mxu0
    %10316 = vmatprep.mubr.bf16.mxu0 0
    %10317 = vmatmul.mubr.bf16.gmra.mrb[0].mxu0 %v10154
    %v10318 = vpop.f32.mrb[0].mxu0
    %v10319 = vadd.f32 %v10022, %v10318
    %v10320 = vpop.f32.mrb[0].mxu0
    %v10321 = vpop.f32.mrb[0].mxu0
    %v10322 = vadd.f32 %v10022, %v10321
    %v10323 = vpop.f32.mrb[0].mxu0
    %10324 = vmatprep.mubr.bf16.mxu0 0
    %10325 = vmatmul.mubr.bf16.gmra.mrb[0].mxu0 %v10157
    %v10326 = vpop.f32.mrb[0].mxu0
    %v10327 = vadd.f32 %v10022, %v10326
    %v10328 = vpop.f32.mrb[0].mxu0
    %v10329 = vpop.f32.mrb[0].mxu0
    %v10330 = vadd.f32 %v10022, %v10329
    %v10331 = vpop.f32.mrb[0].mxu0
    %10332 = vmatprep.mubr.bf16.mxu0 0
    %10333 = vmatmul.mubr.bf16.gmra.mrb[0].mxu0 %v10160
    %v10334 = vpop.f32.mrb[0].mxu0
    %v10335 = vadd.f32 %v10022, %v10334
    %v10336 = vpop.f32.mrb[0].mxu0
    %v10337 = vpop.f32.mrb[0].mxu0
    %v10338 = vadd.f32 %v10022, %v10337
    %v10339 = vpop.f32.mrb[0].mxu0
    %10340 = vmatprep.mubr.bf16.mxu0 0
    %10341 = vmatmul.mubr.bf16.gmra.mrb[0].mxu0 %v10163
    %v10342 = vpop.f32.mrb[0].mxu0
    %v10343 = vadd.f32 %v10022, %v10342
    %v10344 = vpop.f32.mrb[0].mxu0
    %v10345 = vpop.f32.mrb[0].mxu0
    %v10346 = vadd.f32 %v10022, %v10345
    %v10347 = vpop.f32.mrb[0].mxu0
    %10348 = vmatprep.mubr.bf16.mxu0 0
    %10349 = vmatmul.mubr.bf16.gmra.mrb[0].mxu0 %v10166
    %v10350 = vpop.f32.mrb[0].mxu0
    %v10351 = vadd.f32 %v10022, %v10350
    %v10352 = vpop.f32.mrb[0].mxu0
    %v10353 = vpop.f32.mrb[0].mxu0
    %v10354 = vadd.f32 %v10022, %v10353
    %v10355 = vpop.f32.mrb[0].mxu0
    %10356 = vmatprep.mubr.bf16.mxu0 0
    %10357 = vmatmul.mubr.bf16.gmra.mrb[0].mxu0 %v10169
    %v10358 = vpop.f32.mrb[0].mxu0
    %v10359 = vadd.f32 %v10022, %v10358
    %v10360 = vpop.f32.mrb[0].mxu0
    %v10361 = vpop.f32.mrb[0].mxu0
    %v10362 = vadd.f32 %v10022, %v10361
    %v10363 = vpop.f32.mrb[0].mxu0
    %10364 = vmatprep.mubr.bf16.mxu0 0
    %10365 = vmatmul.mubr.bf16.gmra.mrb[0].mxu0 %v10172
    %v10366 = vpop.f32.mrb[0].mxu0
    %v10367 = vadd.f32 %v10022, %v10366
    %v10368 = vpop.f32.mrb[0].mxu0
    %v10369 = vpop.f32.mrb[0].mxu0
    %v10370 = vadd.f32 %v10022, %v10369
    %v10371 = vpop.f32.mrb[0].mxu0
    %10372 = vmatprep.mubr.bf16.mxu0 0
    %10373 = vmatmul.mubr.bf16.gmra.mrb[0].mxu0 %v10175
    %v10374 = vpop.f32.mrb[0].mxu0
    %v10375 = vadd.f32 %v10022, %v10374
    %v10376 = vpop.f32.mrb[0].mxu0
    %v10377 = vpop.f32.mrb[0].mxu0
    %v10378 = vadd.f32 %v10022, %v10377
    %v10379 = vpop.f32.mrb[0].mxu0
    %10380 = vmatprep.mubr.bf16.mxu0 0
    %10381 = vmatmul.mubr.bf16.gmra.mrb[0].mxu0 %v10178
    %v10382 = vpop.f32.mrb[0].mxu0
    %v10383 = vadd.f32 %v10022, %v10382
    %v10384 = vpop.f32.mrb[0].mxu0
    %v10385 = vpop.f32.mrb[0].mxu0
    %v10386 = vadd.f32 %v10022, %v10385
    %v10387 = vpop.f32.mrb[0].mxu0
    %10388 = vmatprep.mubr.bf16.mxu0 0
    %10389 = vmatmul.mubr.bf16.gmra.mrb[0].mxu0 %v10181
    %v10390 = vpop.f32.mrb[0].mxu0
    %v10391 = vadd.f32 %v10022, %v10390
    %v10392 = vpop.f32.mrb[0].mxu0
    %v10393 = vpop.f32.mrb[0].mxu0
    %v10394 = vadd.f32 %v10022, %v10393
    %v10395 = vpop.f32.mrb[0].mxu0
    %10396 = vmatprep.mubr.bf16.mxu0 0
    %10397 = vmatmul.mubr.bf16.gmra.mrb[0].mxu0 %v10184
    %v10398 = vpop.f32.mrb[0].mxu0
    %v10399 = vadd.f32 %v10022, %v10398
    %v10400 = vpop.f32.mrb[0].mxu0
    %v10401 = vpop.f32.mrb[0].mxu0
    %v10402 = vadd.f32 %v10022, %v10401
    %v10403 = vpop.f32.mrb[0].mxu0
    %10404 = vmatprep.mubr.bf16.mxu0 0
    %10405 = vmatmul.mubr.bf16.gmra.mrb[0].mxu0 %v10187
    %v10406 = vpop.f32.mrb[0].mxu0
    %v10407 = vadd.f32 %v10022, %v10406
    %v10408 = vpop.f32.mrb[0].mxu0
    %v10409 = vpop.f32.mrb[0].mxu0
    %v10410 = vadd.f32 %v10022, %v10409
    %v10411 = vpop.f32.mrb[0].mxu0
    %10412 = vmatprep.mubr.bf16.mxu0 0
    %10413 = vmatmul.mubr.bf16.gmra.mrb[0].mxu0 %v10190
    %v10414 = vpop.f32.mrb[0].mxu0
    %v10415 = vadd.f32 %v10022, %v10414
    %v10416 = vpop.f32.mrb[0].mxu0
    %v10417 = vpop.f32.mrb[0].mxu0
    %v10418 = vadd.f32 %v10022, %v10417
    %v10419 = vpop.f32.mrb[0].mxu0
    %10420 = vmatprep.mubr.bf16.mxu0 0
    %10421 = vmatmul.mubr.bf16.gmra.mrb[0].mxu0 %v10193
    %v10422 = vpop.f32.mrb[0].mxu0
    %v10423 = vadd.f32 %v10022, %v10422
    %v10424 = vpop.f32.mrb[0].mxu0
    %v10425 = vpop.f32.mrb[0].mxu0
    %v10426 = vadd.f32 %v10022, %v10425
    %v10427 = vpop.f32.mrb[0].mxu0
    %10428 = vmatprep.mubr.bf16.mxu0 0
    %10429 = vmatmul.mubr.bf16.gmra.mrb[0].mxu0 %v10196
    %v10430 = vpop.f32.mrb[0].mxu0
    %v10431 = vadd.f32 %v10022, %v10430
    %v10432 = vpop.f32.mrb[0].mxu0
    %v10433 = vpop.f32.mrb[0].mxu0
    %v10434 = vadd.f32 %v10022, %v10433
    %v10435 = vpop.f32.mrb[0].mxu0
    %10436 = vmatprep.mubr.bf16.mxu0 0
    %10437 = vmatmul.mubr.bf16.gmra.mrb[0].mxu0 %v10199
    %v10438 = vpop.f32.mrb[0].mxu0
    %v10439 = vadd.f32 %v10022, %v10438
    %v10440 = vpop.f32.mrb[0].mxu0
    %v10441 = vpop.f32.mrb[0].mxu0
    %v10442 = vadd.f32 %v10022, %v10441
    %v10443 = vpop.f32.mrb[0].mxu0
    %10444 = vmatprep.mubr.bf16.mxu0 0
    %10445 = vmatmul.mubr.bf16.gmra.mrb[0].mxu0 %v10202
    %v10446 = vpop.f32.mrb[0].mxu0
    %v10447 = vadd.f32 %v10022, %v10446
    %v10448 = vpop.f32.mrb[0].mxu0
    %v10449 = vpop.f32.mrb[0].mxu0
    %v10450 = vadd.f32 %v10022, %v10449
    %v10451 = vpop.f32.mrb[0].mxu0
    %10452 = vmatprep.mubr.bf16.mxu0 0
    %10453 = vmatmul.mubr.bf16.gmra.mrb[0].mxu0 %v10205
    %v10454 = vpop.f32.mrb[0].mxu0
    %v10455 = vadd.f32 %v10022, %v10454
    %v10456 = vpop.f32.mrb[0].mxu0
    %v10457 = vpop.f32.mrb[0].mxu0
    %v10458 = vadd.f32 %v10022, %v10457
    %v10459 = vpop.f32.mrb[0].mxu0
    %10460 = vmatprep.mubr.bf16.mxu0 0
    %10461 = vmatmul.mubr.bf16.gmra.mrb[0].mxu0 %v10208
    %v10462 = vpop.f32.mrb[0].mxu0
    %v10463 = vadd.f32 %v10022, %v10462
    %v10464 = vpop.f32.mrb[0].mxu0
    %v10465 = vpop.f32.mrb[0].mxu0
    %v10466 = vadd.f32 %v10022, %v10465
    %v10467 = vpop.f32.mrb[0].mxu0
    %10468 = vmatprep.mubr.bf16.mxu0 0
    %10469 = vmatmul.mubr.bf16.gmra.mrb[0].mxu0 %v10211
    %v10470 = vpop.f32.mrb[0].mxu0
    %v10471 = vadd.f32 %v10022, %v10470
    %v10472 = vpop.f32.mrb[0].mxu0
    %v10473 = vpop.f32.mrb[0].mxu0
    %v10474 = vadd.f32 %v10022, %v10473
    %v10475 = vpop.f32.mrb[0].mxu0
    %10476 = vmatprep.mubr.bf16.mxu0 0
    %10477 = vmatmul.mubr.bf16.gmra.mrb[0].mxu0 %v10214
    %v10478 = vpop.f32.mrb[0].mxu0
    %v10479 = vadd.f32 %v10022, %v10478
    %v10480 = vpop.f32.mrb[0].mxu0
    %v10481 = vpop.f32.mrb[0].mxu0
    %v10482 = vadd.f32 %v10022, %v10481
    %v10483 = vpop.f32.mrb[0].mxu0
    %10484 = vmatprep.mubr.bf16.mxu0 0
    %10485 = vmatmul.mubr.bf16.gmra.mrb[0].mxu0 %v10217
    %v10486 = vpop.f32.mrb[0].mxu0
    %v10487 = vadd.f32 %v10022, %v10486
    %v10488 = vpop.f32.mrb[0].mxu0
    %v10489 = vpop.f32.mrb[0].mxu0
    %v10490 = vadd.f32 %v10022, %v10489
    %v10491 = vpop.f32.mrb[0].mxu0
    %10492 = vmatprep.mubr.bf16.mxu0 0
    %10493 = vmatmul.mubr.bf16.gmra.mrb[0].mxu0 %v10220
    %v10494 = vpop.f32.mrb[0].mxu0
    %v10495 = vadd.f32 %v10022, %v10494
    %v10496 = vpop.f32.mrb[0].mxu0
    %v10497 = vpop.f32.mrb[0].mxu0
    %v10498 = vadd.f32 %v10022, %v10497
    %v10499 = vpop.f32.mrb[0].mxu0
    %10500 = vmatprep.mubr.bf16.mxu0 0
    %10501 = vmatmul.mubr.bf16.gmra.mrb[0].mxu0 %v10223
    %v10502 = vpop.f32.mrb[0].mxu0
    %v10503 = vadd.f32 %v10022, %v10502
    %v10504 = vpop.f32.mrb[0].mxu0
    %v10505 = vpop.f32.mrb[0].mxu0
    %v10506 = vadd.f32 %v10022, %v10505
    %v10507 = vpop.f32.mrb[0].mxu0
    %10508 = vmatprep.mubr.bf16.mxu0 0
    %10509 = vmatmul.mubr.bf16.gmra.mrb[0].mxu0 %v10226
    %v10510 = vpop.f32.mrb[0].mxu0
    %v10511 = vadd.f32 %v10022, %v10510
    %v10512 = vpop.f32.mrb[0].mxu0
    %v10513 = vpop.f32.mrb[0].mxu0
    %v10514 = vadd.f32 %v10022, %v10513
    %v10515 = vpop.f32.mrb[0].mxu0
    %10516 = vdwg.mxu0
    %v10517 = vld [vmem:[#allocation4] sm:$0xff]
    %v10518 = vld [vmem:[#allocation4 + $0x8] sm:$0xff]
    %v10519 = vld [vmem:[#allocation4 + $0x10] sm:$0xff]
    %v10520 = vld [vmem:[#allocation4 + $0x18] sm:$0xff]
    %v10521 = vld [vmem:[#allocation4 + $0x20] sm:$0xff]
    %v10522 = vld [vmem:[#allocation4 + $0x28] sm:$0xff]
    %v10523 = vld [vmem:[#allocation4 + $0x30] sm:$0xff]
    %v10524 = vld [vmem:[#allocation4 + $0x38] sm:$0xff]
    %v10525 = vld [vmem:[#allocation4 + $0x40] sm:$0xff]
    %v10526 = vld [vmem:[#allocation4 + $0x48] sm:$0xff]
    %v10527 = vld [vmem:[#allocation4 + $0x50] sm:$0xff]
    %v10528 = vld [vmem:[#allocation4 + $0x58] sm:$0xff]
    %v10529 = vld [vmem:[#allocation4 + $0x60] sm:$0xff]
    %v10530 = vld [vmem:[#allocation4 + $0x68] sm:$0xff]
    %v10531 = vld [vmem:[#allocation4 + $0x70] sm:$0xff]
    %v10532 = vld [vmem:[#allocation4 + $0x78] sm:$0xff]
    %v10533 = vld [vmem:[#allocation4 + $0x80] sm:$0xff]
    %v10534 = vld [vmem:[#allocation4 + $0x88] sm:$0xff]
    %v10535 = vld [vmem:[#allocation4 + $0x90] sm:$0xff]
    %v10536 = vld [vmem:[#allocation4 + $0x98] sm:$0xff]
    %v10537 = vld [vmem:[#allocation4 + $0xa0] sm:$0xff]
    %v10538 = vld [vmem:[#allocation4 + $0xa8] sm:$0xff]
    %v10539 = vld [vmem:[#allocation4 + $0xb0] sm:$0xff]
    %v10540 = vld [vmem:[#allocation4 + $0xb8] sm:$0xff]
    %v10541 = vld [vmem:[#allocation4 + $0xc0] sm:$0xff]
    %v10542 = vld [vmem:[#allocation4 + $0xc8] sm:$0xff]
    %v10543 = vld [vmem:[#allocation4 + $0xd0] sm:$0xff]
    %v10544 = vld [vmem:[#allocation4 + $0xd8] sm:$0xff]
    %v10545 = vld [vmem:[#allocation4 + $0xe0] sm:$0xff]
    %v10546 = vld [vmem:[#allocation4 + $0xe8] sm:$0xff]
    %v10547 = vld [vmem:[#allocation4 + $0xf0] sm:$0xff]
    %v10548 = vld [vmem:[#allocation4 + $0xf8] sm:$0xff]
    %v10549 = vld [vmem:[#allocation4 + $0x100] sm:$0xff]
    %v10550 = vld [vmem:[#allocation4 + $0x108] sm:$0xff]
    %v10551 = vld [vmem:[#allocation4 + $0x110] sm:$0xff]
    %v10552 = vld [vmem:[#allocation4 + $0x118] sm:$0xff]
    %v10553 = vld [vmem:[#allocation4 + $0x120] sm:$0xff]
    %v10554 = vld [vmem:[#allocation4 + $0x128] sm:$0xff]
    %v10555 = vld [vmem:[#allocation4 + $0x130] sm:$0xff]
    %v10556 = vld [vmem:[#allocation4 + $0x138] sm:$0xff]
    %v10557 = vld [vmem:[#allocation4 + $0x140] sm:$0xff]
    %v10558 = vld [vmem:[#allocation4 + $0x148] sm:$0xff]
    %v10559 = vld [vmem:[#allocation4 + $0x150] sm:$0xff]
    %v10560 = vld [vmem:[#allocation4 + $0x158] sm:$0xff]
    %v10561 = vld [vmem:[#allocation4 + $0x160] sm:$0xff]
    %v10562 = vld [vmem:[#allocation4 + $0x168] sm:$0xff]
    %v10563 = vld [vmem:[#allocation4 + $0x170] sm:$0xff]
    %v10564 = vld [vmem:[#allocation4 + $0x178] sm:$0xff]
    %v10565 = vld [vmem:[#allocation4 + $0x180] sm:$0xff]
    %v10566 = vld [vmem:[#allocation4 + $0x188] sm:$0xff]
    %v10567 = vld [vmem:[#allocation4 + $0x190] sm:$0xff]
    %v10568 = vld [vmem:[#allocation4 + $0x198] sm:$0xff]
    %v10569 = vld [vmem:[#allocation4 + $0x1a0] sm:$0xff]
    %v10570 = vld [vmem:[#allocation4 + $0x1a8] sm:$0xff]
    %v10571 = vld [vmem:[#allocation4 + $0x1b0] sm:$0xff]
    %v10572 = vld [vmem:[#allocation4 + $0x1b8] sm:$0xff]
    %v10573 = vld [vmem:[#allocation4 + $0x1c0] sm:$0xff]
    %v10574 = vld [vmem:[#allocation4 + $0x1c8] sm:$0xff]
    %v10575 = vld [vmem:[#allocation4 + $0x1d0] sm:$0xff]
    %v10576 = vld [vmem:[#allocation4 + $0x1d8] sm:$0xff]
    %v10577 = vld [vmem:[#allocation4 + $0x1e0] sm:$0xff]
    %v10578 = vld [vmem:[#allocation4 + $0x1e8] sm:$0xff]
    %v10579 = vld [vmem:[#allocation4 + $0x1f0] sm:$0xff]
    %v10580 = vld [vmem:[#allocation4 + $0x1f8] sm:$0xff]
    %v10581 = vadd.f32 %v10263, %v10517
    %v10582 = vadd.f32 %v10266, %v10518
    %v10583 = vadd.f32 %v10271, %v10519
    %v10584 = vadd.f32 %v10274, %v10520
    %v10585 = vadd.f32 %v10279, %v10521
    %v10586 = vadd.f32 %v10282, %v10522
    %v10587 = vadd.f32 %v10287, %v10523
    %v10588 = vadd.f32 %v10290, %v10524
    %v10589 = vadd.f32 %v10295, %v10525
    %v10590 = vadd.f32 %v10298, %v10526
    %v10591 = vadd.f32 %v10303, %v10527
    %v10592 = vadd.f32 %v10306, %v10528
    %v10593 = vadd.f32 %v10311, %v10529
    %v10594 = vadd.f32 %v10314, %v10530
    %v10595 = vadd.f32 %v10319, %v10531
    %v10596 = vadd.f32 %v10322, %v10532
    %v10597 = vadd.f32 %v10327, %v10533
    %v10598 = vadd.f32 %v10330, %v10534
    %v10599 = vadd.f32 %v10335, %v10535
    %v10600 = vadd.f32 %v10338, %v10536
    %v10601 = vadd.f32 %v10343, %v10537
    %v10602 = vadd.f32 %v10346, %v10538
    %v10603 = vadd.f32 %v10351, %v10539
    %v10604 = vadd.f32 %v10354, %v10540
    %v10605 = vadd.f32 %v10359, %v10541
    %v10606 = vadd.f32 %v10362, %v10542
    %v10607 = vadd.f32 %v10367, %v10543
    %v10608 = vadd.f32 %v10370, %v10544
    %v10609 = vadd.f32 %v10375, %v10545
    %v10610 = vadd.f32 %v10378, %v10546
    %v10611 = vadd.f32 %v10383, %v10547
    %v10612 = vadd.f32 %v10386, %v10548
    %v10613 = vadd.f32 %v10391, %v10549
    %v10614 = vadd.f32 %v10394, %v10550
    %v10615 = vadd.f32 %v10399, %v10551
    %v10616 = vadd.f32 %v10402, %v10552
    %v10617 = vadd.f32 %v10407, %v10553
    %v10618 = vadd.f32 %v10410, %v10554
    %v10619 = vadd.f32 %v10415, %v10555
    %v10620 = vadd.f32 %v10418, %v10556
    %v10621 = vadd.f32 %v10423, %v10557
    %v10622 = vadd.f32 %v10426, %v10558
    %v10623 = vadd.f32 %v10431, %v10559
    %v10624 = vadd.f32 %v10434, %v10560
    %v10625 = vadd.f32 %v10439, %v10561
    %v10626 = vadd.f32 %v10442, %v10562
    %v10627 = vadd.f32 %v10447, %v10563
    %v10628 = vadd.f32 %v10450, %v10564
    %v10629 = vadd.f32 %v10455, %v10565
    %v10630 = vadd.f32 %v10458, %v10566
    %v10631 = vadd.f32 %v10463, %v10567
    %v10632 = vadd.f32 %v10466, %v10568
    %v10633 = vadd.f32 %v10471, %v10569
    %v10634 = vadd.f32 %v10474, %v10570
    %v10635 = vadd.f32 %v10479, %v10571
    %v10636 = vadd.f32 %v10482, %v10572
    %v10637 = vadd.f32 %v10487, %v10573
    %v10638 = vadd.f32 %v10490, %v10574
    %v10639 = vadd.f32 %v10495, %v10575
    %v10640 = vadd.f32 %v10498, %v10576
    %v10641 = vadd.f32 %v10503, %v10577
    %v10642 = vadd.f32 %v10506, %v10578
    %v10643 = vadd.f32 %v10511, %v10579
    %v10644 = vadd.f32 %v10514, %v10580
    %10645 = vst.msk [vmem:[#allocation7] sm:$0xff] %vm4873, %v10581
    %10646 = vst.msk [vmem:[#allocation7 + $0x8] sm:$0xff] %vm4873, %v10582
    %10647 = vst.msk [vmem:[#allocation7 + $0x10] sm:$0xff] %vm4873, %v10583
    %10648 = vst.msk [vmem:[#allocation7 + $0x18] sm:$0xff] %vm4873, %v10584
    %10649 = vst.msk [vmem:[#allocation7 + $0x20] sm:$0xff] %vm4873, %v10585
    %10650 = vst.msk [vmem:[#allocation7 + $0x28] sm:$0xff] %vm4873, %v10586
    %10651 = vst.msk [vmem:[#allocation7 + $0x30] sm:$0xff] %vm4873, %v10587
    %10652 = vst.msk [vmem:[#allocation7 + $0x38] sm:$0xff] %vm4873, %v10588
    %10653 = vst.msk [vmem:[#allocation7 + $0x40] sm:$0xff] %vm4873, %v10589
    %10654 = vst.msk [vmem:[#allocation7 + $0x48] sm:$0xff] %vm4873, %v10590
    %10655 = vst.msk [vmem:[#allocation7 + $0x50] sm:$0xff] %vm4873, %v10591
    %10656 = vst.msk [vmem:[#allocation7 + $0x58] sm:$0xff] %vm4873, %v10592
    %10657 = vst.msk [vmem:[#allocation7 + $0x60] sm:$0xff] %vm4873, %v10593
    %10658 = vst.msk [vmem:[#allocation7 + $0x68] sm:$0xff] %vm4873, %v10594
    %10659 = vst.msk [vmem:[#allocation7 + $0x70] sm:$0xff] %vm4873, %v10595
    %10660 = vst.msk [vmem:[#allocation7 + $0x78] sm:$0xff] %vm4873, %v10596
    %10661 = vst.msk [vmem:[#allocation7 + $0x80] sm:$0xff] %vm4873, %v10597
    %10662 = vst.msk [vmem:[#allocation7 + $0x88] sm:$0xff] %vm4873, %v10598
    %10663 = vst.msk [vmem:[#allocation7 + $0x90] sm:$0xff] %vm4873, %v10599
    %10664 = vst.msk [vmem:[#allocation7 + $0x98] sm:$0xff] %vm4873, %v10600
    %10665 = vst.msk [vmem:[#allocation7 + $0xa0] sm:$0xff] %vm4873, %v10601
    %10666 = vst.msk [vmem:[#allocation7 + $0xa8] sm:$0xff] %vm4873, %v10602
    %10667 = vst.msk [vmem:[#allocation7 + $0xb0] sm:$0xff] %vm4873, %v10603
    %10668 = vst.msk [vmem:[#allocation7 + $0xb8] sm:$0xff] %vm4873, %v10604
    %10669 = vst.msk [vmem:[#allocation7 + $0xc0] sm:$0xff] %vm4873, %v10605
    %10670 = vst.msk [vmem:[#allocation7 + $0xc8] sm:$0xff] %vm4873, %v10606
    %10671 = vst.msk [vmem:[#allocation7 + $0xd0] sm:$0xff] %vm4873, %v10607
    %10672 = vst.msk [vmem:[#allocation7 + $0xd8] sm:$0xff] %vm4873, %v10608
    %10673 = vst.msk [vmem:[#allocation7 + $0xe0] sm:$0xff] %vm4873, %v10609
    %10674 = vst.msk [vmem:[#allocation7 + $0xe8] sm:$0xff] %vm4873, %v10610
    %10675 = vst.msk [vmem:[#allocation7 + $0xf0] sm:$0xff] %vm4873, %v10611
    %10676 = vst.msk [vmem:[#allocation7 + $0xf8] sm:$0xff] %vm4873, %v10612
    %10677 = vst.msk [vmem:[#allocation7 + $0x100] sm:$0xff] %vm4873, %v10613
    %10678 = vst.msk [vmem:[#allocation7 + $0x108] sm:$0xff] %vm4873, %v10614
    %10679 = vst.msk [vmem:[#allocation7 + $0x110] sm:$0xff] %vm4873, %v10615
    %10680 = vst.msk [vmem:[#allocation7 + $0x118] sm:$0xff] %vm4873, %v10616
    %10681 = vst.msk [vmem:[#allocation7 + $0x120] sm:$0xff] %vm4873, %v10617
    %10682 = vst.msk [vmem:[#allocation7 + $0x128] sm:$0xff] %vm4873, %v10618
    %10683 = vst.msk [vmem:[#allocation7 + $0x130] sm:$0xff] %vm4873, %v10619
    %10684 = vst.msk [vmem:[#allocation7 + $0x138] sm:$0xff] %vm4873, %v10620
    %10685 = vst.msk [vmem:[#allocation7 + $0x140] sm:$0xff] %vm4873, %v10621
    %10686 = vst.msk [vmem:[#allocation7 + $0x148] sm:$0xff] %vm4873, %v10622
    %10687 = vst.msk [vmem:[#allocation7 + $0x150] sm:$0xff] %vm4873, %v10623
    %10688 = vst.msk [vmem:[#allocation7 + $0x158] sm:$0xff] %vm4873, %v10624
    %10689 = vst.msk [vmem:[#allocation7 + $0x160] sm:$0xff] %vm4873, %v10625
    %10690 = vst.msk [vmem:[#allocation7 + $0x168] sm:$0xff] %vm4873, %v10626
    %10691 = vst.msk [vmem:[#allocation7 + $0x170] sm:$0xff] %vm4873, %v10627
    %10692 = vst.msk [vmem:[#allocation7 + $0x178] sm:$0xff] %vm4873, %v10628
    %10693 = vst.msk [vmem:[#allocation7 + $0x180] sm:$0xff] %vm4873, %v10629
    %10694 = vst.msk [vmem:[#allocation7 + $0x188] sm:$0xff] %vm4873, %v10630
    %10695 = vst.msk [vmem:[#allocation7 + $0x190] sm:$0xff] %vm4873, %v10631
    %10696 = vst.msk [vmem:[#allocation7 + $0x198] sm:$0xff] %vm4873, %v10632
    %10697 = vst.msk [vmem:[#allocation7 + $0x1a0] sm:$0xff] %vm4873, %v10633
    %10698 = vst.msk [vmem:[#allocation7 + $0x1a8] sm:$0xff] %vm4873, %v10634
    %10699 = vst.msk [vmem:[#allocation7 + $0x1b0] sm:$0xff] %vm4873, %v10635
    %10700 = vst.msk [vmem:[#allocation7 + $0x1b8] sm:$0xff] %vm4873, %v10636
    %10701 = vst.msk [vmem:[#allocation7 + $0x1c0] sm:$0xff] %vm4873, %v10637
    %10702 = vst.msk [vmem:[#allocation7 + $0x1c8] sm:$0xff] %vm4873, %v10638
    %10703 = vst.msk [vmem:[#allocation7 + $0x1d0] sm:$0xff] %vm4873, %v10639
    %10704 = vst.msk [vmem:[#allocation7 + $0x1d8] sm:$0xff] %vm4873, %v10640
    %10705 = vst.msk [vmem:[#allocation7 + $0x1e0] sm:$0xff] %vm4873, %v10641
    %10706 = vst.msk [vmem:[#allocation7 + $0x1e8] sm:$0xff] %vm4873, %v10642
    %10707 = vst.msk [vmem:[#allocation7 + $0x1f0] sm:$0xff] %vm4873, %v10643
    %10708 = vst.msk [vmem:[#allocation7 + $0x1f8] sm:$0xff] %vm4873, %v10644
    // Predicated region
    $region42: #{_mobilev1_residual_forward.1} parent=1 // pred_check
      _
    $region43: #{_mobilev1_residual_forward.1} parent=1 // pred_check_branch
      %10710 = sbr.rel (0) target = $region45
    $region44: #{_mobilev1_residual_forward.1} parent=1 // pred_region
      %s10712 = ssub.s32 8192, 8192
      %10713 = vsyncadd [#allocation6], %s10712
      %s10714 = sshll.u32 [#allocation7], 4
      %s10715 = int_to_ptr.vmem [resolvable:$true] %s10714
      %10720 = dma.vmem_to_hbm [thread:$0]  %s10715, 8192, %s9, [#allocation6], 128, 128, 8
    $region45: #{_mobilev1_residual_forward.1} parent=1 // pred_fallthru
      _
    // Predicated region
    $region46: #{_mobilev1_residual_forward.1} parent=1 // pred_check
      _
    $region47: #{_mobilev1_residual_forward.1} parent=1 // pred_check_branch
      %10722 = sbr.rel (0) target = $region49
    $region48: #{_mobilev1_residual_forward.1} parent=1 // pred_region
      %10723 = dma.done [#allocation6], 8192
    $region49: #{_mobilev1_residual_forward.1} parent=1 // pred_fallthru
      _
    %10724 = vsyncpa [#allocation5], 1
    %10725 = vsyncpa [#allocation6], 1

</llo_original>
